<compile_context>
chip_gen: v6e
topology: v6e:2x2x1
jax: 0.10.0
libtpu: 0.0.40
codegen_flags: <defaults>
</compile_context>

<pallas_src>
import jax
import jax.numpy as jnp
from jax import lax
from jax.experimental import pallas as pl
from jax.experimental.pallas import tpu as pltpu

# --- model hyper-params (from the PyTorch module; vocab shrunk for a synthetic run) ---
N_EMBED = 256
N_HEADS = 4
N_LAYERS = 4
HEAD_SIZE = N_EMBED // N_HEADS          # 64
BLOCK_SIZE = 1024 * 3 // 4              # 768 (positional-embedding table size)
VOCAB = 512                             # synthetic stand-in for tokenizer_.n_vocab
LN_EPS = 1e-5
NEG_INF = -1e30


def _layernorm(x, g, b):
    mu = jnp.mean(x, axis=-1, keepdims=True)
    var = jnp.mean(jnp.square(x - mu), axis=-1, keepdims=True)
    return (x - mu) * lax.rsqrt(var + LN_EPS) * g + b


# ----------------------------------------------------------------------------------
# Fused kernel: for batch element b, iterate the layer axis sequentially keeping the
# (T, C) activation resident in VMEM scratch; emit logits on the last layer step.
# ----------------------------------------------------------------------------------
def _gpt_kernel(x_ref, mask_ref,
                ln1g_ref, ln1b_ref, wqkv_ref, wo_ref, bo_ref,
                ln2g_ref, ln2b_ref, w1_ref, b1_ref, w2_ref, b2_ref,
                lnmg_ref, lnmb_ref, projw_ref, projb_ref,
                out_ref, x_acc):
    layer = pl.program_id(1)

    @pl.when(layer == 0)
    def _():
        x_acc[...] = x_ref[0]

    x = x_acc[...]                                   # (T, C) float32, resident
    T, C = x.shape

    # ---- multi-head causal self-attention on ln1(x) ----
    xn = _layernorm(x, ln1g_ref[0], ln1b_ref[0]).astype(jnp.bfloat16)
    qkv = jnp.dot(xn, wqkv_ref[0], preferred_element_type=jnp.float32)   # (T, 3C) f32
    scale = jnp.float32(HEAD_SIZE ** -0.5)
    q = qkv[:, :C] * scale                           # pre-scale q once
    k = qkv[:, C:2 * C]
    v = qkv[:, 2 * C:]

    bias = mask_ref[...]                             # (T, T) additive causal bias
    wo = wo_ref[0]                                   # (C, C) bf16

    y = jnp.zeros((T, C), jnp.float32)
    for h in range(N_HEADS):                         # static unroll over 4 heads
        lo, hi = h * HEAD_SIZE, (h + 1) * HEAD_SIZE
        qh = q[:, lo:hi].astype(jnp.bfloat16)
        kh = k[:, lo:hi].astype(jnp.bfloat16)
        vh = v[:, lo:hi].astype(jnp.bfloat16)
        s = jnp.dot(qh, kh.T, preferred_element_type=jnp.float32) + bias
        s = s - jnp.max(s, axis=-1, keepdims=True)
        p = jnp.exp(s)                               # unnormalized probs (dropout = identity)
        inv = pl.reciprocal(jnp.sum(p, axis=-1, keepdims=True), approx=True)
        ov = jnp.dot(p.astype(jnp.bfloat16), vh,
                     preferred_element_type=jnp.float32) * inv           # (T, HS)
        # fold the output projection per head (no concat, lane-dense N=256 matmul)
        y = y + jnp.dot(ov.astype(jnp.bfloat16), wo[lo:hi, :],
                        preferred_element_type=jnp.float32)
    x = x + y + bo_ref[0]                            # residual 1 (+ proj bias)

    # ---- feed-forward on ln2(x) ----
    xn2 = _layernorm(x, ln2g_ref[0], ln2b_ref[0]).astype(jnp.bfloat16)
    h1 = jnp.dot(xn2, w1_ref[0], preferred_element_type=jnp.float32) + b1_ref[0]
    h1 = jnp.maximum(h1, 0.0).astype(jnp.bfloat16)   # ReLU
    h2 = jnp.dot(h1, w2_ref[0], preferred_element_type=jnp.float32) + b2_ref[0]
    x = x + h2                                       # residual 2
    x_acc[...] = x

    # ---- final LayerNorm + vocab projection, only on the last layer step ----
    @pl.when(layer == pl.num_programs(1) - 1)
    def _():
        xf = _layernorm(x, lnmg_ref[...], lnmb_ref[...]).astype(jnp.bfloat16)
        out_ref[0] = (jnp.dot(xf, projw_ref[...], preferred_element_type=jnp.float32)
                      + projb_ref[...])


# ----------------------------------------------------------------------------------
# Parameter init (deterministic, matches shapes implied by the PyTorch __init__).
# Linear weights ~ N(0, 0.02) (stored bf16 for MXU), biases = 0, LN gamma=1 beta=0,
# Embeddings ~ N(0, 0.02). Per-layer tensors are stacked on a leading layer axis.
# ----------------------------------------------------------------------------------
def init_params(key):
    keys = iter(jax.random.split(key, 64))
    nrm = lambda shape: jax.random.normal(next(keys), shape, jnp.float32) * 0.02

    params = {
        "tok_emb": nrm((VOCAB, N_EMBED)),
        "pos_emb": nrm((BLOCK_SIZE, N_EMBED)),
        "lnm_g": jnp.ones((1, N_EMBED), jnp.float32),
        "lnm_b": jnp.zeros((1, N_EMBED), jnp.float32),
        "proj_w": nrm((N_EMBED, VOCAB)).astype(jnp.bfloat16),
        "proj_b": jnp.zeros((1, VOCAB), jnp.float32),
    }

    ln1_g, ln1_b, wqkv, wo, bo = [], [], [], [], []
    ln2_g, ln2_b, w1, b1, w2, b2 = [], [], [], [], [], []
    for _ in range(N_LAYERS):
        ln1_g.append(jnp.ones((1, N_EMBED), jnp.float32))
        ln1_b.append(jnp.zeros((1, N_EMBED), jnp.float32))
        wq, wk, wv = nrm((N_EMBED, N_EMBED)), nrm((N_EMBED, N_EMBED)), nrm((N_EMBED, N_EMBED))
        wqkv.append(jnp.concatenate([wq, wk, wv], axis=1).astype(jnp.bfloat16))  # (C, 3C)
        wo.append(nrm((N_EMBED, N_EMBED)).astype(jnp.bfloat16))
        bo.append(jnp.zeros((1, N_EMBED), jnp.float32))
        ln2_g.append(jnp.ones((1, N_EMBED), jnp.float32))
        ln2_b.append(jnp.zeros((1, N_EMBED), jnp.float32))
        w1.append(nrm((N_EMBED, 4 * N_EMBED)).astype(jnp.bfloat16))
        b1.append(jnp.zeros((1, 4 * N_EMBED), jnp.float32))
        w2.append(nrm((4 * N_EMBED, N_EMBED)).astype(jnp.bfloat16))
        b2.append(jnp.zeros((1, N_EMBED), jnp.float32))

    params["layers"] = {
        "ln1_g": jnp.stack(ln1_g), "ln1_b": jnp.stack(ln1_b),
        "wqkv": jnp.stack(wqkv), "wo": jnp.stack(wo), "bo": jnp.stack(bo),
        "ln2_g": jnp.stack(ln2_g), "ln2_b": jnp.stack(ln2_b),
        "w1": jnp.stack(w1), "b1": jnp.stack(b1),
        "w2": jnp.stack(w2), "b2": jnp.stack(b2),
    }
    return params


@jax.jit
def gpt_forward(inputs, params):
    """inputs: (B, T) int32 token ids -> logits (B, T, VOCAB). loss=None path."""
    B, T = inputs.shape
    C = N_EMBED
    V = params["proj_w"].shape[1]
    if T > BLOCK_SIZE:
        raise ValueError(f"sequence length {T} exceeds block_size {BLOCK_SIZE}")
    if T % 8 != 0:
        raise ValueError(f"sequence length {T} must be a multiple of 8 for TPU tiling")

    lyr = params["layers"]

    # plain-JAX glue: embedding gathers + positional add
    tok_emb = jnp.take(params["tok_emb"], inputs, axis=0)           # (B, T, C)
    pos_emb = params["pos_emb"][:T]                                 # (T, C)
    x = (tok_emb + pos_emb[None, :, :]).astype(jnp.float32)

    # precomputed additive causal bias (the "tril" buffer, in additive form)
    row = lax.broadcasted_iota(jnp.int32, (T, T), 0)
    col = lax.broadcasted_iota(jnp.int32, (T, T), 1)
    mask_bias = jnp.where(col <= row, 0.0, NEG_INF).astype(jnp.float32)

    def layered(a):
        return pl.BlockSpec((1,) + a.shape[1:],
                            lambda b, l, _nd=a.ndim: (l,) + (0,) * (_nd - 1))

    def const(a):
        return pl.BlockSpec(a.shape, lambda b, l, _nd=a.ndim: (0,) * _nd)

    in_specs = [
        pl.BlockSpec((1, T, C), lambda b, l: (b, 0, 0)),   # x (read at layer 0)
        const(mask_bias),
        layered(lyr["ln1_g"]), layered(lyr["ln1_b"]),
        layered(lyr["wqkv"]), layered(lyr["wo"]), layered(lyr["bo"]),
        layered(lyr["ln2_g"]), layered(lyr["ln2_b"]),
        layered(lyr["w1"]), layered(lyr["b1"]),
        layered(lyr["w2"]), layered(lyr["b2"]),
        const(params["lnm_g"]), const(params["lnm_b"]),
        const(params["proj_w"]), const(params["proj_b"]),
    ]

    logits = pl.pallas_call(
        _gpt_kernel,
        out_shape=jax.ShapeDtypeStruct((B, T, V), jnp.float32),
        grid=(B, N_LAYERS),
        in_specs=in_specs,
        out_specs=pl.BlockSpec((1, T, V), lambda b, l: (b, 0, 0)),
        scratch_shapes=[pltpu.VMEM((T, C), jnp.float32)],
        compiler_params=pltpu.CompilerParams(
            dimension_semantics=("parallel", "arbitrary")),
    )(x, mask_bias,
      lyr["ln1_g"], lyr["ln1_b"], lyr["wqkv"], lyr["wo"], lyr["bo"],
      lyr["ln2_g"], lyr["ln2_b"], lyr["w1"], lyr["b1"], lyr["w2"], lyr["b2"],
      params["lnm_g"], params["lnm_b"], params["proj_w"], params["proj_b"])
    return logits
    # TODO(synk): cross-entropy loss branch (targets is not None) not implemented; forward returns logits only.


if __name__ == "__main__":
    B, T = 2, 64
    key = jax.random.PRNGKey(0)
    pkey, ikey = jax.random.split(key)
    params = init_params(pkey)
    inputs = jax.random.randint(ikey, (B, T), 0, VOCAB, dtype=jnp.int32)

    logits = gpt_forward(inputs, params)
    logits = jax.block_until_ready(logits)
    assert logits.shape == (B, T, VOCAB) and logits.dtype == jnp.float32
    assert bool(jnp.all(jnp.isfinite(logits)))
    print("KERNEL_OK")
</pallas_src>

<mosaic_0001>
module attributes {stable_mosaic.version = 11 : i64} {
  func.func @_gpt_kernel(%arg0: i32, %arg1: i32, %arg2: memref<1x64x256xf32, #tpu.memory_space<vmem>>, %arg3: memref<64x64xf32, #tpu.memory_space<vmem>>, %arg4: memref<1x1x256xf32, #tpu.memory_space<vmem>>, %arg5: memref<1x1x256xf32, #tpu.memory_space<vmem>>, %arg6: memref<1x256x768xbf16, #tpu.memory_space<vmem>>, %arg7: memref<1x256x256xbf16, #tpu.memory_space<vmem>>, %arg8: memref<1x1x256xf32, #tpu.memory_space<vmem>>, %arg9: memref<1x1x256xf32, #tpu.memory_space<vmem>>, %arg10: memref<1x1x256xf32, #tpu.memory_space<vmem>>, %arg11: memref<1x256x1024xbf16, #tpu.memory_space<vmem>>, %arg12: memref<1x1x1024xf32, #tpu.memory_space<vmem>>, %arg13: memref<1x1024x256xbf16, #tpu.memory_space<vmem>>, %arg14: memref<1x1x256xf32, #tpu.memory_space<vmem>>, %arg15: memref<1x256xf32, #tpu.memory_space<vmem>>, %arg16: memref<1x256xf32, #tpu.memory_space<vmem>>, %arg17: memref<256x512xbf16, #tpu.memory_space<vmem>>, %arg18: memref<1x512xf32, #tpu.memory_space<vmem>>, %arg19: memref<1x64x512xf32, #tpu.memory_space<vmem>>, %arg20: memref<64x256xf32, #tpu.memory_space<vmem>>) attributes {dimension_semantics = [#tpu.dimension_semantics<parallel>, #tpu.dimension_semantics<arbitrary>], iteration_bounds = array<i64: 2, 4>, scalar_prefetch = 0 : i64, scratch_operands = 1 : i64, tpu.core_type = #tpu.core_type<tc>, window_params = [{transform_indices = @transform_0, window_bounds = array<i64: 1, 64, 256>}, {pipeline_mode = #tpu.pipeline_mode<synchronous>, transform_indices = @transform_1, window_bounds = array<i64: 64, 64>}, {transform_indices = @transform_2, window_bounds = array<i64: 1, 1, 256>}, {transform_indices = @transform_3, window_bounds = array<i64: 1, 1, 256>}, {transform_indices = @transform_4, window_bounds = array<i64: 1, 256, 768>}, {transform_indices = @transform_5, window_bounds = array<i64: 1, 256, 256>}, {transform_indices = @transform_6, window_bounds = array<i64: 1, 1, 256>}, {transform_indices = @transform_7, window_bounds = array<i64: 1, 1, 256>}, {transform_indices = @transform_8, window_bounds = array<i64: 1, 1, 256>}, {transform_indices = @transform_9, window_bounds = array<i64: 1, 256, 1024>}, {transform_indices = @transform_10, window_bounds = array<i64: 1, 1, 1024>}, {transform_indices = @transform_11, window_bounds = array<i64: 1, 1024, 256>}, {transform_indices = @transform_12, window_bounds = array<i64: 1, 1, 256>}, {pipeline_mode = #tpu.pipeline_mode<synchronous>, transform_indices = @transform_13, window_bounds = array<i64: 1, 256>}, {pipeline_mode = #tpu.pipeline_mode<synchronous>, transform_indices = @transform_14, window_bounds = array<i64: 1, 256>}, {pipeline_mode = #tpu.pipeline_mode<synchronous>, transform_indices = @transform_15, window_bounds = array<i64: 256, 512>}, {pipeline_mode = #tpu.pipeline_mode<synchronous>, transform_indices = @transform_16, window_bounds = array<i64: 1, 512>}, {transform_indices = @transform_17, window_bounds = array<i64: 1, 64, 512>}]} {
    %c0_i32 = arith.constant 0 : i32
    %0 = arith.cmpi eq, %arg1, %c0_i32 : i32
    %1 = arith.extui %0 : i1 to i32
    %c0_i32_0 = arith.constant 0 : i32
    %2 = arith.cmpi ne, %1, %c0_i32_0 : i32
    scf.if %2 {
      %c0_75 = arith.constant 0 : index
      %c0_76 = arith.constant 0 : index
      %c0_77 = arith.constant 0 : index
      %197 = vector.load %arg2[%c0_75, %c0_76, %c0_77] : memref<1x64x256xf32, #tpu.memory_space<vmem>>, vector<1x64x256xf32>
      %198 = vector.shape_cast %197 : vector<1x64x256xf32> to vector<64x256xf32>
      %c0_78 = arith.constant 0 : index
      %c0_79 = arith.constant 0 : index
      %199 = vector.load %arg20[%c0_78, %c0_79] : memref<64x256xf32, #tpu.memory_space<vmem>>, vector<64x256xf32>
      tpu.vector_store %arg20[%c0_78, %c0_79], %198 {strides = array<i32>} : memref<64x256xf32, #tpu.memory_space<vmem>>, vector<64x256xf32>,
    } else {
    }
    %c0 = arith.constant 0 : index
    %c0_1 = arith.constant 0 : index
    %3 = vector.load %arg20[%c0, %c0_1] : memref<64x256xf32, #tpu.memory_space<vmem>>, vector<64x256xf32>
    %c0_2 = arith.constant 0 : index
    %c0_3 = arith.constant 0 : index
    %c0_4 = arith.constant 0 : index
    %4 = vector.load %arg4[%c0_2, %c0_3, %c0_4] : memref<1x1x256xf32, #tpu.memory_space<vmem>>, vector<1x1x256xf32>
    %5 = vector.shape_cast %4 : vector<1x1x256xf32> to vector<1x256xf32>
    %c0_5 = arith.constant 0 : index
    %c0_6 = arith.constant 0 : index
    %c0_7 = arith.constant 0 : index
    %6 = vector.load %arg5[%c0_5, %c0_6, %c0_7] : memref<1x1x256xf32, #tpu.memory_space<vmem>>, vector<1x1x256xf32>
    %7 = vector.shape_cast %6 : vector<1x1x256xf32> to vector<1x256xf32>
    %cst = arith.constant dense<0.000000e+00> : vector<64xf32>
    %8 = vector.multi_reduction <add>, %3, %cst [1] : vector<64x256xf32> to vector<64xf32>
    %9 = vector.shape_cast %8 : vector<64xf32> to vector<64x1xf32>
    %cst_8 = arith.constant 2.560000e+02 : f32
    %10 = vector.broadcast %cst_8 : f32 to vector<64x1xf32>
    %11 = arith.divf %9, %10 : vector<64x1xf32>
    %12 = vector.broadcast %11 : vector<64x1xf32> to vector<64x256xf32>
    %13 = arith.subf %3, %12 : vector<64x256xf32>
    %14 = arith.mulf %13, %13 : vector<64x256xf32>
    %cst_9 = arith.constant dense<0.000000e+00> : vector<64xf32>
    %15 = vector.multi_reduction <add>, %14, %cst_9 [1] : vector<64x256xf32> to vector<64xf32>
    %16 = vector.shape_cast %15 : vector<64xf32> to vector<64x1xf32>
    %cst_10 = arith.constant 2.560000e+02 : f32
    %17 = vector.broadcast %cst_10 : f32 to vector<64x1xf32>
    %18 = arith.divf %16, %17 : vector<64x1xf32>
    %19 = vector.broadcast %11 : vector<64x1xf32> to vector<64x256xf32>
    %20 = arith.subf %3, %19 : vector<64x256xf32>
    %cst_11 = arith.constant 9.99999974E-6 : f32
    %21 = vector.broadcast %cst_11 : f32 to vector<64x1xf32>
    %22 = arith.addf %18, %21 : vector<64x1xf32>
    %23 = math.rsqrt %22 : vector<64x1xf32>
    %24 = vector.broadcast %23 : vector<64x1xf32> to vector<64x256xf32>
    %25 = arith.mulf %20, %24 : vector<64x256xf32>
    %26 = vector.broadcast %5 : vector<1x256xf32> to vector<64x256xf32>
    %27 = arith.mulf %25, %26 : vector<64x256xf32>
    %28 = vector.broadcast %7 : vector<1x256xf32> to vector<64x256xf32>
    %29 = arith.addf %27, %28 : vector<64x256xf32>
    %30 = arith.truncf %29 : vector<64x256xf32> to vector<64x256xbf16>
    %c0_12 = arith.constant 0 : index
    %c0_13 = arith.constant 0 : index
    %c0_14 = arith.constant 0 : index
    %31 = vector.load %arg6[%c0_12, %c0_13, %c0_14] : memref<1x256x768xbf16, #tpu.memory_space<vmem>>, vector<1x256x768xbf16>
    %32 = vector.shape_cast %31 : vector<1x256x768xbf16> to vector<256x768xbf16>
    %cst_15 = arith.constant dense<0.000000e+00> : vector<64x768xf32>
    %33 = tpu.matmul %30, %32, %cst_15 {dimension_numbers = #tpu.dot_dimension_numbers<[1], [0], [0], [1], [0, 0, 1, 1], [], []>} : vector<64x256xbf16>, vector<256x768xbf16>, vector<64x768xf32> -> vector<64x768xf32>
    %34 = vector.extract_strided_slice %33 {offsets = [0, 0], sizes = [64, 256], strides = [1, 1]} : vector<64x768xf32> to vector<64x256xf32>
    %cst_16 = arith.constant 1.250000e-01 : f32
    %35 = vector.broadcast %cst_16 : f32 to vector<64x256xf32>
    %36 = arith.mulf %34, %35 : vector<64x256xf32>
    %37 = vector.extract_strided_slice %33 {offsets = [0, 256], sizes = [64, 256], strides = [1, 1]} : vector<64x768xf32> to vector<64x256xf32>
    %38 = vector.extract_strided_slice %33 {offsets = [0, 512], sizes = [64, 256], strides = [1, 1]} : vector<64x768xf32> to vector<64x256xf32>
    %c0_17 = arith.constant 0 : index
    %c0_18 = arith.constant 0 : index
    %39 = vector.load %arg3[%c0_17, %c0_18] : memref<64x64xf32, #tpu.memory_space<vmem>>, vector<64x64xf32>
    %c0_19 = arith.constant 0 : index
    %c0_20 = arith.constant 0 : index
    %c0_21 = arith.constant 0 : index
    %40 = vector.load %arg7[%c0_19, %c0_20, %c0_21] : memref<1x256x256xbf16, #tpu.memory_space<vmem>>, vector<1x256x256xbf16>
    %41 = vector.shape_cast %40 : vector<1x256x256xbf16> to vector<256x256xbf16>
    %cst_22 = arith.constant 0.000000e+00 : f32
    %42 = vector.broadcast %cst_22 : f32 to vector<64x256xf32>
    %43 = vector.extract_strided_slice %36 {offsets = [0, 0], sizes = [64, 64], strides = [1, 1]} : vector<64x256xf32> to vector<64x64xf32>
    %44 = arith.truncf %43 : vector<64x64xf32> to vector<64x64xbf16>
    %45 = vector.extract_strided_slice %37 {offsets = [0, 0], sizes = [64, 64], strides = [1, 1]} : vector<64x256xf32> to vector<64x64xf32>
    %46 = arith.truncf %45 : vector<64x64xf32> to vector<64x64xbf16>
    %47 = vector.extract_strided_slice %38 {offsets = [0, 0], sizes = [64, 64], strides = [1, 1]} : vector<64x256xf32> to vector<64x64xf32>
    %48 = arith.truncf %47 : vector<64x64xf32> to vector<64x64xbf16>
    %49 = tpu.transpose %46, [1, 0] : vector<64x64xbf16> -> vector<64x64xbf16>
    %cst_23 = arith.constant dense<0.000000e+00> : vector<64x64xf32>
    %50 = tpu.matmul %44, %49, %cst_23 {dimension_numbers = #tpu.dot_dimension_numbers<[1], [0], [0], [1], [0, 0, 1, 1], [], []>} : vector<64x64xbf16>, vector<64x64xbf16>, vector<64x64xf32> -> vector<64x64xf32>
    %51 = arith.addf %50, %39 : vector<64x64xf32>
    %cst_24 = arith.constant dense<0xFF800000> : vector<64xf32>
    %52 = vector.multi_reduction <maximumf>, %51, %cst_24 [1] : vector<64x64xf32> to vector<64xf32>
    %53 = vector.shape_cast %52 : vector<64xf32> to vector<64x1xf32>
    %54 = vector.broadcast %53 : vector<64x1xf32> to vector<64x64xf32>
    %55 = arith.subf %51, %54 : vector<64x64xf32>
    %56 = math.exp %55 : vector<64x64xf32>
    %cst_25 = arith.constant dense<0.000000e+00> : vector<64xf32>
    %57 = vector.multi_reduction <add>, %56, %cst_25 [1] : vector<64x64xf32> to vector<64xf32>
    %58 = vector.shape_cast %57 : vector<64xf32> to vector<64x1xf32>
    %59 = tpu.reciprocal %58 {approx = true} : vector<64x1xf32> -> vector<64x1xf32>
    %60 = arith.truncf %56 : vector<64x64xf32> to vector<64x64xbf16>
    %cst_26 = arith.constant dense<0.000000e+00> : vector<64x64xf32>
    %61 = tpu.matmul %60, %48, %cst_26 {dimension_numbers = #tpu.dot_dimension_numbers<[1], [0], [0], [1], [0, 0, 1, 1], [], []>} : vector<64x64xbf16>, vector<64x64xbf16>, vector<64x64xf32> -> vector<64x64xf32>
    %62 = vector.broadcast %59 : vector<64x1xf32> to vector<64x64xf32>
    %63 = arith.mulf %61, %62 : vector<64x64xf32>
    %64 = arith.truncf %63 : vector<64x64xf32> to vector<64x64xbf16>
    %65 = vector.extract_strided_slice %41 {offsets = [0, 0], sizes = [64, 256], strides = [1, 1]} : vector<256x256xbf16> to vector<64x256xbf16>
    %cst_27 = arith.constant dense<0.000000e+00> : vector<64x256xf32>
    %66 = tpu.matmul %64, %65, %cst_27 {dimension_numbers = #tpu.dot_dimension_numbers<[1], [0], [0], [1], [0, 0, 1, 1], [], []>} : vector<64x64xbf16>, vector<64x256xbf16>, vector<64x256xf32> -> vector<64x256xf32>
    %67 = arith.addf %42, %66 : vector<64x256xf32>
    %68 = vector.extract_strided_slice %36 {offsets = [0, 64], sizes = [64, 64], strides = [1, 1]} : vector<64x256xf32> to vector<64x64xf32>
    %69 = arith.truncf %68 : vector<64x64xf32> to vector<64x64xbf16>
    %70 = vector.extract_strided_slice %37 {offsets = [0, 64], sizes = [64, 64], strides = [1, 1]} : vector<64x256xf32> to vector<64x64xf32>
    %71 = arith.truncf %70 : vector<64x64xf32> to vector<64x64xbf16>
    %72 = vector.extract_strided_slice %38 {offsets = [0, 64], sizes = [64, 64], strides = [1, 1]} : vector<64x256xf32> to vector<64x64xf32>
    %73 = arith.truncf %72 : vector<64x64xf32> to vector<64x64xbf16>
    %74 = tpu.transpose %71, [1, 0] : vector<64x64xbf16> -> vector<64x64xbf16>
    %cst_28 = arith.constant dense<0.000000e+00> : vector<64x64xf32>
    %75 = tpu.matmul %69, %74, %cst_28 {dimension_numbers = #tpu.dot_dimension_numbers<[1], [0], [0], [1], [0, 0, 1, 1], [], []>} : vector<64x64xbf16>, vector<64x64xbf16>, vector<64x64xf32> -> vector<64x64xf32>
    %76 = arith.addf %75, %39 : vector<64x64xf32>
    %cst_29 = arith.constant dense<0xFF800000> : vector<64xf32>
    %77 = vector.multi_reduction <maximumf>, %76, %cst_29 [1] : vector<64x64xf32> to vector<64xf32>
    %78 = vector.shape_cast %77 : vector<64xf32> to vector<64x1xf32>
    %79 = vector.broadcast %78 : vector<64x1xf32> to vector<64x64xf32>
    %80 = arith.subf %76, %79 : vector<64x64xf32>
    %81 = math.exp %80 : vector<64x64xf32>
    %cst_30 = arith.constant dense<0.000000e+00> : vector<64xf32>
    %82 = vector.multi_reduction <add>, %81, %cst_30 [1] : vector<64x64xf32> to vector<64xf32>
    %83 = vector.shape_cast %82 : vector<64xf32> to vector<64x1xf32>
    %84 = tpu.reciprocal %83 {approx = true} : vector<64x1xf32> -> vector<64x1xf32>
    %85 = arith.truncf %81 : vector<64x64xf32> to vector<64x64xbf16>
    %cst_31 = arith.constant dense<0.000000e+00> : vector<64x64xf32>
    %86 = tpu.matmul %85, %73, %cst_31 {dimension_numbers = #tpu.dot_dimension_numbers<[1], [0], [0], [1], [0, 0, 1, 1], [], []>} : vector<64x64xbf16>, vector<64x64xbf16>, vector<64x64xf32> -> vector<64x64xf32>
    %87 = vector.broadcast %84 : vector<64x1xf32> to vector<64x64xf32>
    %88 = arith.mulf %86, %87 : vector<64x64xf32>
    %89 = arith.truncf %88 : vector<64x64xf32> to vector<64x64xbf16>
    %90 = vector.extract_strided_slice %41 {offsets = [64, 0], sizes = [64, 256], strides = [1, 1]} : vector<256x256xbf16> to vector<64x256xbf16>
    %cst_32 = arith.constant dense<0.000000e+00> : vector<64x256xf32>
    %91 = tpu.matmul %89, %90, %cst_32 {dimension_numbers = #tpu.dot_dimension_numbers<[1], [0], [0], [1], [0, 0, 1, 1], [], []>} : vector<64x64xbf16>, vector<64x256xbf16>, vector<64x256xf32> -> vector<64x256xf32>
    %92 = arith.addf %67, %91 : vector<64x256xf32>
    %93 = vector.extract_strided_slice %36 {offsets = [0, 128], sizes = [64, 64], strides = [1, 1]} : vector<64x256xf32> to vector<64x64xf32>
    %94 = arith.truncf %93 : vector<64x64xf32> to vector<64x64xbf16>
    %95 = vector.extract_strided_slice %37 {offsets = [0, 128], sizes = [64, 64], strides = [1, 1]} : vector<64x256xf32> to vector<64x64xf32>
    %96 = arith.truncf %95 : vector<64x64xf32> to vector<64x64xbf16>
    %97 = vector.extract_strided_slice %38 {offsets = [0, 128], sizes = [64, 64], strides = [1, 1]} : vector<64x256xf32> to vector<64x64xf32>
    %98 = arith.truncf %97 : vector<64x64xf32> to vector<64x64xbf16>
    %99 = tpu.transpose %96, [1, 0] : vector<64x64xbf16> -> vector<64x64xbf16>
    %cst_33 = arith.constant dense<0.000000e+00> : vector<64x64xf32>
    %100 = tpu.matmul %94, %99, %cst_33 {dimension_numbers = #tpu.dot_dimension_numbers<[1], [0], [0], [1], [0, 0, 1, 1], [], []>} : vector<64x64xbf16>, vector<64x64xbf16>, vector<64x64xf32> -> vector<64x64xf32>
    %101 = arith.addf %100, %39 : vector<64x64xf32>
    %cst_34 = arith.constant dense<0xFF800000> : vector<64xf32>
    %102 = vector.multi_reduction <maximumf>, %101, %cst_34 [1] : vector<64x64xf32> to vector<64xf32>
    %103 = vector.shape_cast %102 : vector<64xf32> to vector<64x1xf32>
    %104 = vector.broadcast %103 : vector<64x1xf32> to vector<64x64xf32>
    %105 = arith.subf %101, %104 : vector<64x64xf32>
    %106 = math.exp %105 : vector<64x64xf32>
    %cst_35 = arith.constant dense<0.000000e+00> : vector<64xf32>
    %107 = vector.multi_reduction <add>, %106, %cst_35 [1] : vector<64x64xf32> to vector<64xf32>
    %108 = vector.shape_cast %107 : vector<64xf32> to vector<64x1xf32>
    %109 = tpu.reciprocal %108 {approx = true} : vector<64x1xf32> -> vector<64x1xf32>
    %110 = arith.truncf %106 : vector<64x64xf32> to vector<64x64xbf16>
    %cst_36 = arith.constant dense<0.000000e+00> : vector<64x64xf32>
    %111 = tpu.matmul %110, %98, %cst_36 {dimension_numbers = #tpu.dot_dimension_numbers<[1], [0], [0], [1], [0, 0, 1, 1], [], []>} : vector<64x64xbf16>, vector<64x64xbf16>, vector<64x64xf32> -> vector<64x64xf32>
    %112 = vector.broadcast %109 : vector<64x1xf32> to vector<64x64xf32>
    %113 = arith.mulf %111, %112 : vector<64x64xf32>
    %114 = arith.truncf %113 : vector<64x64xf32> to vector<64x64xbf16>
    %115 = vector.extract_strided_slice %41 {offsets = [128, 0], sizes = [64, 256], strides = [1, 1]} : vector<256x256xbf16> to vector<64x256xbf16>
    %cst_37 = arith.constant dense<0.000000e+00> : vector<64x256xf32>
    %116 = tpu.matmul %114, %115, %cst_37 {dimension_numbers = #tpu.dot_dimension_numbers<[1], [0], [0], [1], [0, 0, 1, 1], [], []>} : vector<64x64xbf16>, vector<64x256xbf16>, vector<64x256xf32> -> vector<64x256xf32>
    %117 = arith.addf %92, %116 : vector<64x256xf32>
    %118 = vector.extract_strided_slice %36 {offsets = [0, 192], sizes = [64, 64], strides = [1, 1]} : vector<64x256xf32> to vector<64x64xf32>
    %119 = arith.truncf %118 : vector<64x64xf32> to vector<64x64xbf16>
    %120 = vector.extract_strided_slice %37 {offsets = [0, 192], sizes = [64, 64], strides = [1, 1]} : vector<64x256xf32> to vector<64x64xf32>
    %121 = arith.truncf %120 : vector<64x64xf32> to vector<64x64xbf16>
    %122 = vector.extract_strided_slice %38 {offsets = [0, 192], sizes = [64, 64], strides = [1, 1]} : vector<64x256xf32> to vector<64x64xf32>
    %123 = arith.truncf %122 : vector<64x64xf32> to vector<64x64xbf16>
    %124 = tpu.transpose %121, [1, 0] : vector<64x64xbf16> -> vector<64x64xbf16>
    %cst_38 = arith.constant dense<0.000000e+00> : vector<64x64xf32>
    %125 = tpu.matmul %119, %124, %cst_38 {dimension_numbers = #tpu.dot_dimension_numbers<[1], [0], [0], [1], [0, 0, 1, 1], [], []>} : vector<64x64xbf16>, vector<64x64xbf16>, vector<64x64xf32> -> vector<64x64xf32>
    %126 = arith.addf %125, %39 : vector<64x64xf32>
    %cst_39 = arith.constant dense<0xFF800000> : vector<64xf32>
    %127 = vector.multi_reduction <maximumf>, %126, %cst_39 [1] : vector<64x64xf32> to vector<64xf32>
    %128 = vector.shape_cast %127 : vector<64xf32> to vector<64x1xf32>
    %129 = vector.broadcast %128 : vector<64x1xf32> to vector<64x64xf32>
    %130 = arith.subf %126, %129 : vector<64x64xf32>
    %131 = math.exp %130 : vector<64x64xf32>
    %cst_40 = arith.constant dense<0.000000e+00> : vector<64xf32>
    %132 = vector.multi_reduction <add>, %131, %cst_40 [1] : vector<64x64xf32> to vector<64xf32>
    %133 = vector.shape_cast %132 : vector<64xf32> to vector<64x1xf32>
    %134 = tpu.reciprocal %133 {approx = true} : vector<64x1xf32> -> vector<64x1xf32>
    %135 = arith.truncf %131 : vector<64x64xf32> to vector<64x64xbf16>
    %cst_41 = arith.constant dense<0.000000e+00> : vector<64x64xf32>
    %136 = tpu.matmul %135, %123, %cst_41 {dimension_numbers = #tpu.dot_dimension_numbers<[1], [0], [0], [1], [0, 0, 1, 1], [], []>} : vector<64x64xbf16>, vector<64x64xbf16>, vector<64x64xf32> -> vector<64x64xf32>
    %137 = vector.broadcast %134 : vector<64x1xf32> to vector<64x64xf32>
    %138 = arith.mulf %136, %137 : vector<64x64xf32>
    %139 = arith.truncf %138 : vector<64x64xf32> to vector<64x64xbf16>
    %140 = vector.extract_strided_slice %41 {offsets = [192, 0], sizes = [64, 256], strides = [1, 1]} : vector<256x256xbf16> to vector<64x256xbf16>
    %cst_42 = arith.constant dense<0.000000e+00> : vector<64x256xf32>
    %141 = tpu.matmul %139, %140, %cst_42 {dimension_numbers = #tpu.dot_dimension_numbers<[1], [0], [0], [1], [0, 0, 1, 1], [], []>} : vector<64x64xbf16>, vector<64x256xbf16>, vector<64x256xf32> -> vector<64x256xf32>
    %142 = arith.addf %117, %141 : vector<64x256xf32>
    %143 = arith.addf %3, %142 : vector<64x256xf32>
    %c0_43 = arith.constant 0 : index
    %c0_44 = arith.constant 0 : index
    %c0_45 = arith.constant 0 : index
    %144 = vector.load %arg8[%c0_43, %c0_44, %c0_45] : memref<1x1x256xf32, #tpu.memory_space<vmem>>, vector<1x1x256xf32>
    %145 = vector.shape_cast %144 : vector<1x1x256xf32> to vector<1x256xf32>
    %146 = vector.broadcast %145 : vector<1x256xf32> to vector<64x256xf32>
    %147 = arith.addf %143, %146 : vector<64x256xf32>
    %c0_46 = arith.constant 0 : index
    %c0_47 = arith.constant 0 : index
    %c0_48 = arith.constant 0 : index
    %148 = vector.load %arg9[%c0_46, %c0_47, %c0_48] : memref<1x1x256xf32, #tpu.memory_space<vmem>>, vector<1x1x256xf32>
    %149 = vector.shape_cast %148 : vector<1x1x256xf32> to vector<1x256xf32>
    %c0_49 = arith.constant 0 : index
    %c0_50 = arith.constant 0 : index
    %c0_51 = arith.constant 0 : index
    %150 = vector.load %arg10[%c0_49, %c0_50, %c0_51] : memref<1x1x256xf32, #tpu.memory_space<vmem>>, vector<1x1x256xf32>
    %151 = vector.shape_cast %150 : vector<1x1x256xf32> to vector<1x256xf32>
    %cst_52 = arith.constant dense<0.000000e+00> : vector<64xf32>
    %152 = vector.multi_reduction <add>, %147, %cst_52 [1] : vector<64x256xf32> to vector<64xf32>
    %153 = vector.shape_cast %152 : vector<64xf32> to vector<64x1xf32>
    %cst_53 = arith.constant 2.560000e+02 : f32
    %154 = vector.broadcast %cst_53 : f32 to vector<64x1xf32>
    %155 = arith.divf %153, %154 : vector<64x1xf32>
    %156 = vector.broadcast %155 : vector<64x1xf32> to vector<64x256xf32>
    %157 = arith.subf %147, %156 : vector<64x256xf32>
    %158 = arith.mulf %157, %157 : vector<64x256xf32>
    %cst_54 = arith.constant dense<0.000000e+00> : vector<64xf32>
    %159 = vector.multi_reduction <add>, %158, %cst_54 [1] : vector<64x256xf32> to vector<64xf32>
    %160 = vector.shape_cast %159 : vector<64xf32> to vector<64x1xf32>
    %cst_55 = arith.constant 2.560000e+02 : f32
    %161 = vector.broadcast %cst_55 : f32 to vector<64x1xf32>
    %162 = arith.divf %160, %161 : vector<64x1xf32>
    %163 = vector.broadcast %155 : vector<64x1xf32> to vector<64x256xf32>
    %164 = arith.subf %147, %163 : vector<64x256xf32>
    %cst_56 = arith.constant 9.99999974E-6 : f32
    %165 = vector.broadcast %cst_56 : f32 to vector<64x1xf32>
    %166 = arith.addf %162, %165 : vector<64x1xf32>
    %167 = math.rsqrt %166 : vector<64x1xf32>
    %168 = vector.broadcast %167 : vector<64x1xf32> to vector<64x256xf32>
    %169 = arith.mulf %164, %168 : vector<64x256xf32>
    %170 = vector.broadcast %149 : vector<1x256xf32> to vector<64x256xf32>
    %171 = arith.mulf %169, %170 : vector<64x256xf32>
    %172 = vector.broadcast %151 : vector<1x256xf32> to vector<64x256xf32>
    %173 = arith.addf %171, %172 : vector<64x256xf32>
    %174 = arith.truncf %173 : vector<64x256xf32> to vector<64x256xbf16>
    %c0_57 = arith.constant 0 : index
    %c0_58 = arith.constant 0 : index
    %c0_59 = arith.constant 0 : index
    %175 = vector.load %arg11[%c0_57, %c0_58, %c0_59] : memref<1x256x1024xbf16, #tpu.memory_space<vmem>>, vector<1x256x1024xbf16>
    %176 = vector.shape_cast %175 : vector<1x256x1024xbf16> to vector<256x1024xbf16>
    %cst_60 = arith.constant dense<0.000000e+00> : vector<64x1024xf32>
    %177 = tpu.matmul %174, %176, %cst_60 {dimension_numbers = #tpu.dot_dimension_numbers<[1], [0], [0], [1], [0, 0, 1, 1], [], []>} : vector<64x256xbf16>, vector<256x1024xbf16>, vector<64x1024xf32> -> vector<64x1024xf32>
    %c0_61 = arith.constant 0 : index
    %c0_62 = arith.constant 0 : index
    %c0_63 = arith.constant 0 : index
    %178 = vector.load %arg12[%c0_61, %c0_62, %c0_63] : memref<1x1x1024xf32, #tpu.memory_space<vmem>>, vector<1x1x1024xf32>
    %179 = vector.shape_cast %178 : vector<1x1x1024xf32> to vector<1x1024xf32>
    %180 = vector.broadcast %179 : vector<1x1024xf32> to vector<64x1024xf32>
    %181 = arith.addf %177, %180 : vector<64x1024xf32>
    %cst_64 = arith.constant 0.000000e+00 : f32
    %182 = vector.broadcast %cst_64 : f32 to vector<64x1024xf32>
    %183 = arith.maximumf %181, %182 : vector<64x1024xf32>
    %184 = arith.truncf %183 : vector<64x1024xf32> to vector<64x1024xbf16>
    %c0_65 = arith.constant 0 : index
    %c0_66 = arith.constant 0 : index
    %c0_67 = arith.constant 0 : index
    %185 = vector.load %arg13[%c0_65, %c0_66, %c0_67] : memref<1x1024x256xbf16, #tpu.memory_space<vmem>>, vector<1x1024x256xbf16>
    %186 = vector.shape_cast %185 : vector<1x1024x256xbf16> to vector<1024x256xbf16>
    %cst_68 = arith.constant dense<0.000000e+00> : vector<64x256xf32>
    %187 = tpu.matmul %184, %186, %cst_68 {dimension_numbers = #tpu.dot_dimension_numbers<[1], [0], [0], [1], [0, 0, 1, 1], [], []>} : vector<64x1024xbf16>, vector<1024x256xbf16>, vector<64x256xf32> -> vector<64x256xf32>
    %c0_69 = arith.constant 0 : index
    %c0_70 = arith.constant 0 : index
    %c0_71 = arith.constant 0 : index
    %188 = vector.load %arg14[%c0_69, %c0_70, %c0_71] : memref<1x1x256xf32, #tpu.memory_space<vmem>>, vector<1x1x256xf32>
    %189 = vector.shape_cast %188 : vector<1x1x256xf32> to vector<1x256xf32>
    %190 = vector.broadcast %189 : vector<1x256xf32> to vector<64x256xf32>
    %191 = arith.addf %187, %190 : vector<64x256xf32>
    %192 = arith.addf %147, %191 : vector<64x256xf32>
    %c0_72 = arith.constant 0 : index
    %c0_73 = arith.constant 0 : index
    %193 = vector.load %arg20[%c0_72, %c0_73] : memref<64x256xf32, #tpu.memory_space<vmem>>, vector<64x256xf32>
    tpu.vector_store %arg20[%c0_72, %c0_73], %192 {strides = array<i32>} : memref<64x256xf32, #tpu.memory_space<vmem>>, vector<64x256xf32>,
    %c3_i32 = arith.constant 3 : i32
    %194 = arith.cmpi eq, %arg1, %c3_i32 : i32
    %195 = arith.extui %194 : i1 to i32
    %c0_i32_74 = arith.constant 0 : i32
    %196 = arith.cmpi ne, %195, %c0_i32_74 : i32
    scf.if %196 {
      %c0_75 = arith.constant 0 : index
      %c0_76 = arith.constant 0 : index
      %197 = vector.load %arg15[%c0_75, %c0_76] : memref<1x256xf32, #tpu.memory_space<vmem>>, vector<1x256xf32>
      %c0_77 = arith.constant 0 : index
      %c0_78 = arith.constant 0 : index
      %198 = vector.load %arg16[%c0_77, %c0_78] : memref<1x256xf32, #tpu.memory_space<vmem>>, vector<1x256xf32>
      %cst_79 = arith.constant dense<0.000000e+00> : vector<64xf32>
      %199 = vector.multi_reduction <add>, %192, %cst_79 [1] : vector<64x256xf32> to vector<64xf32>
      %200 = vector.shape_cast %199 : vector<64xf32> to vector<64x1xf32>
      %cst_80 = arith.constant 2.560000e+02 : f32
      %201 = vector.broadcast %cst_80 : f32 to vector<64x1xf32>
      %202 = arith.divf %200, %201 : vector<64x1xf32>
      %203 = vector.broadcast %202 : vector<64x1xf32> to vector<64x256xf32>
      %204 = arith.subf %192, %203 : vector<64x256xf32>
      %205 = arith.mulf %204, %204 : vector<64x256xf32>
      %cst_81 = arith.constant dense<0.000000e+00> : vector<64xf32>
      %206 = vector.multi_reduction <add>, %205, %cst_81 [1] : vector<64x256xf32> to vector<64xf32>
      %207 = vector.shape_cast %206 : vector<64xf32> to vector<64x1xf32>
      %cst_82 = arith.constant 2.560000e+02 : f32
      %208 = vector.broadcast %cst_82 : f32 to vector<64x1xf32>
      %209 = arith.divf %207, %208 : vector<64x1xf32>
      %210 = vector.broadcast %202 : vector<64x1xf32> to vector<64x256xf32>
      %211 = arith.subf %192, %210 : vector<64x256xf32>
      %cst_83 = arith.constant 9.99999974E-6 : f32
      %212 = vector.broadcast %cst_83 : f32 to vector<64x1xf32>
      %213 = arith.addf %209, %212 : vector<64x1xf32>
      %214 = math.rsqrt %213 : vector<64x1xf32>
      %215 = vector.broadcast %214 : vector<64x1xf32> to vector<64x256xf32>
      %216 = arith.mulf %211, %215 : vector<64x256xf32>
      %217 = vector.broadcast %197 : vector<1x256xf32> to vector<64x256xf32>
      %218 = arith.mulf %216, %217 : vector<64x256xf32>
      %219 = vector.broadcast %198 : vector<1x256xf32> to vector<64x256xf32>
      %220 = arith.addf %218, %219 : vector<64x256xf32>
      %221 = arith.truncf %220 : vector<64x256xf32> to vector<64x256xbf16>
      %c0_84 = arith.constant 0 : index
      %c0_85 = arith.constant 0 : index
      %222 = vector.load %arg17[%c0_84, %c0_85] : memref<256x512xbf16, #tpu.memory_space<vmem>>, vector<256x512xbf16>
      %cst_86 = arith.constant dense<0.000000e+00> : vector<64x512xf32>
      %223 = tpu.matmul %221, %222, %cst_86 {dimension_numbers = #tpu.dot_dimension_numbers<[1], [0], [0], [1], [0, 0, 1, 1], [], []>} : vector<64x256xbf16>, vector<256x512xbf16>, vector<64x512xf32> -> vector<64x512xf32>
      %c0_87 = arith.constant 0 : index
      %c0_88 = arith.constant 0 : index
      %224 = vector.load %arg18[%c0_87, %c0_88] : memref<1x512xf32, #tpu.memory_space<vmem>>, vector<1x512xf32>
      %225 = vector.broadcast %224 : vector<1x512xf32> to vector<64x512xf32>
      %226 = arith.addf %223, %225 : vector<64x512xf32>
      %c0_89 = arith.constant 0 : index
      %c0_90 = arith.constant 0 : index
      %c0_91 = arith.constant 0 : index
      %227 = vector.load %arg19[%c0_89, %c0_90, %c0_91] : memref<1x64x512xf32, #tpu.memory_space<vmem>>, vector<1x64x512xf32>
      %228 = vector.shape_cast %227 : vector<1x64x512xf32> to vector<64x512xf32>
      %229 = vector.shape_cast %226 : vector<64x512xf32> to vector<1x64x512xf32>
      tpu.vector_store %arg19[%c0_89, %c0_90, %c0_91], %229 {strides = array<i32>} : memref<1x64x512xf32, #tpu.memory_space<vmem>>, vector<1x64x512xf32>,
    } else {
    }
    return
  }
  func.func @transform_0(%arg0: i32, %arg1: i32) -> (i32, i32, i32) {
    %c0_i32 = arith.constant 0 : i32
    %c0_i32_0 = arith.constant 0 : i32
    %c0_i32_1 = arith.constant 0 : i32
    return %arg0, %c0_i32, %c0_i32_0 : i32, i32, i32
  }
  func.func @transform_1(%arg0: i32, %arg1: i32) -> (i32, i32) {
    %c0_i32 = arith.constant 0 : i32
    %c0_i32_0 = arith.constant 0 : i32
    %c0_i32_1 = arith.constant 0 : i32
    return %c0_i32, %c0_i32_0 : i32, i32
  }
  func.func @transform_2(%arg0: i32, %arg1: i32) -> (i32, i32, i32) {
    %c0_i32 = arith.constant 0 : i32
    %c0_i32_0 = arith.constant 0 : i32
    %c0_i32_1 = arith.constant 0 : i32
    return %arg1, %c0_i32, %c0_i32_0 : i32, i32, i32
  }
  func.func @transform_3(%arg0: i32, %arg1: i32) -> (i32, i32, i32) {
    %c0_i32 = arith.constant 0 : i32
    %c0_i32_0 = arith.constant 0 : i32
    %c0_i32_1 = arith.constant 0 : i32
    return %arg1, %c0_i32, %c0_i32_0 : i32, i32, i32
  }
  func.func @transform_4(%arg0: i32, %arg1: i32) -> (i32, i32, i32) {
    %c0_i32 = arith.constant 0 : i32
    %c0_i32_0 = arith.constant 0 : i32
    %c0_i32_1 = arith.constant 0 : i32
    return %arg1, %c0_i32, %c0_i32_0 : i32, i32, i32
  }
  func.func @transform_5(%arg0: i32, %arg1: i32) -> (i32, i32, i32) {
    %c0_i32 = arith.constant 0 : i32
    %c0_i32_0 = arith.constant 0 : i32
    %c0_i32_1 = arith.constant 0 : i32
    return %arg1, %c0_i32, %c0_i32_0 : i32, i32, i32
  }
  func.func @transform_6(%arg0: i32, %arg1: i32) -> (i32, i32, i32) {
    %c0_i32 = arith.constant 0 : i32
    %c0_i32_0 = arith.constant 0 : i32
    %c0_i32_1 = arith.constant 0 : i32
    return %arg1, %c0_i32, %c0_i32_0 : i32, i32, i32
  }
  func.func @transform_7(%arg0: i32, %arg1: i32) -> (i32, i32, i32) {
    %c0_i32 = arith.constant 0 : i32
    %c0_i32_0 = arith.constant 0 : i32
    %c0_i32_1 = arith.constant 0 : i32
    return %arg1, %c0_i32, %c0_i32_0 : i32, i32, i32
  }
  func.func @transform_8(%arg0: i32, %arg1: i32) -> (i32, i32, i32) {
    %c0_i32 = arith.constant 0 : i32
    %c0_i32_0 = arith.constant 0 : i32
    %c0_i32_1 = arith.constant 0 : i32
    return %arg1, %c0_i32, %c0_i32_0 : i32, i32, i32
  }
  func.func @transform_9(%arg0: i32, %arg1: i32) -> (i32, i32, i32) {
    %c0_i32 = arith.constant 0 : i32
    %c0_i32_0 = arith.constant 0 : i32
    %c0_i32_1 = arith.constant 0 : i32
    return %arg1, %c0_i32, %c0_i32_0 : i32, i32, i32
  }
  func.func @transform_10(%arg0: i32, %arg1: i32) -> (i32, i32, i32) {
    %c0_i32 = arith.constant 0 : i32
    %c0_i32_0 = arith.constant 0 : i32
    %c0_i32_1 = arith.constant 0 : i32
    return %arg1, %c0_i32, %c0_i32_0 : i32, i32, i32
  }
  func.func @transform_11(%arg0: i32, %arg1: i32) -> (i32, i32, i32) {
    %c0_i32 = arith.constant 0 : i32
    %c0_i32_0 = arith.constant 0 : i32
    %c0_i32_1 = arith.constant 0 : i32
    return %arg1, %c0_i32, %c0_i32_0 : i32, i32, i32
  }
  func.func @transform_12(%arg0: i32, %arg1: i32) -> (i32, i32, i32) {
    %c0_i32 = arith.constant 0 : i32
    %c0_i32_0 = arith.constant 0 : i32
    %c0_i32_1 = arith.constant 0 : i32
    return %arg1, %c0_i32, %c0_i32_0 : i32, i32, i32
  }
  func.func @transform_13(%arg0: i32, %arg1: i32) -> (i32, i32) {
    %c0_i32 = arith.constant 0 : i32
    %c0_i32_0 = arith.constant 0 : i32
    %c0_i32_1 = arith.constant 0 : i32
    return %c0_i32, %c0_i32_0 : i32, i32
  }
  func.func @transform_14(%arg0: i32, %arg1: i32) -> (i32, i32) {
    %c0_i32 = arith.constant 0 : i32
    %c0_i32_0 = arith.constant 0 : i32
    %c0_i32_1 = arith.constant 0 : i32
    return %c0_i32, %c0_i32_0 : i32, i32
  }
  func.func @transform_15(%arg0: i32, %arg1: i32) -> (i32, i32) {
    %c0_i32 = arith.constant 0 : i32
    %c0_i32_0 = arith.constant 0 : i32
    %c0_i32_1 = arith.constant 0 : i32
    return %c0_i32, %c0_i32_0 : i32, i32
  }
  func.func @transform_16(%arg0: i32, %arg1: i32) -> (i32, i32) {
    %c0_i32 = arith.constant 0 : i32
    %c0_i32_0 = arith.constant 0 : i32
    %c0_i32_1 = arith.constant 0 : i32
    return %c0_i32, %c0_i32_0 : i32, i32
  }
  func.func @transform_17(%arg0: i32, %arg1: i32) -> (i32, i32, i32) {
    %c0_i32 = arith.constant 0 : i32
    %c0_i32_0 = arith.constant 0 : i32
    %c0_i32_1 = arith.constant 0 : i32
    return %arg0, %c0_i32, %c0_i32_0 : i32, i32, i32
  }
}

</mosaic_0001>

<llo_original>
// kernel: gpt_forward.1
$region0: #{gpt_forward.1}
  #allocation0 [shape = 'u32[]', space=smem, size = 0x4, offset = 0x4, fixed_abs, tag = 'smem constant byte address 0x4 - core index']
  #allocation1 [shape = 'u32[144,128]{1,0:T(1,128)}', space=vmem, size = 0x12000, scoped, tag = 'internal scratch']
  #allocation2 [shape = 'f32[64,256]{1,0:T(8,128)}', space=vmem, size = 0x10000, scoped, tag = 'scratch operand']
  %s0 = inlined_call_operand.vmem [shape: f32[2,64,256], index: 0, kind: input, shape index: {}]
  %s1 = inlined_call_operand.vmem [shape: f32[64,64], index: 1, kind: input, shape index: {}]
  %s2 = inlined_call_operand.hbm [shape: f32[4,1,256], index: 2, kind: input, shape index: {}]
  %s3 = inlined_call_operand.hbm [shape: f32[4,1,256], index: 3, kind: input, shape index: {}]
  %s4 = inlined_call_operand.vmem [shape: bf16[4,256,768], index: 4, kind: input, shape index: {}]
  %s5 = inlined_call_operand.hbm [shape: bf16[4,256,256], index: 5, kind: input, shape index: {}]
  %s6 = inlined_call_operand.hbm [shape: f32[4,1,256], index: 6, kind: input, shape index: {}]
  %s7 = inlined_call_operand.hbm [shape: f32[4,1,256], index: 7, kind: input, shape index: {}]
  %s8 = inlined_call_operand.hbm [shape: f32[4,1,256], index: 8, kind: input, shape index: {}]
  %s9 = inlined_call_operand.hbm [shape: bf16[4,256,1024], index: 9, kind: input, shape index: {}]
  %s10 = inlined_call_operand.hbm [shape: f32[4,1,1024], index: 10, kind: input, shape index: {}]
  %s11 = inlined_call_operand.hbm [shape: bf16[4,1024,256], index: 11, kind: input, shape index: {}]
  %s12 = inlined_call_operand.hbm [shape: f32[4,1,256], index: 12, kind: input, shape index: {}]
  %s13 = inlined_call_operand.hbm [shape: f32[1,256], index: 13, kind: input, shape index: {}]
  %s14 = inlined_call_operand.hbm [shape: f32[1,256], index: 14, kind: input, shape index: {}]
  %s15 = inlined_call_operand.hbm [shape: bf16[256,512], index: 15, kind: input, shape index: {}]
  %s16 = inlined_call_operand.hbm [shape: f32[1,512], index: 16, kind: input, shape index: {}]
  %s17 = inlined_call_operand.hbm [shape: f32[2,64,512], index: 17, kind: output, shape index: {}]
  %s18 = sld [smem:[#allocation0]]
  $region165: #{gpt_forward.1} parent=0
    _
  %s20 = ssub.s32 1, %s18
  %s21 = scalar_select 0, %s20, %s18
  $region1: #{gpt_forward.1} parent=0
    #allocation3 [shape = 'u8[2048]{0}', space=vmem, size = 0x800, scoped, tag = 'input window, operand 2']
    #allocation4 [shape = 's32[2]{0}', space=sflag, size = 0x8, scoped, tag = 'scoped memory for gpt_forward.1']
    #allocation5 [shape = 's32[2]{0}', space=sflag, size = 0x8, scoped, tag = 'scoped memory for gpt_forward.1']
    #allocation6 [shape = 'u8[2048]{0}', space=vmem, size = 0x800, scoped, tag = 'input window, operand 3']
    #allocation7 [shape = 's32[2]{0}', space=sflag, size = 0x8, scoped, tag = 'scoped memory for gpt_forward.1']
    #allocation8 [shape = 'u8[262144]{0}', space=vmem, size = 0x40000, scoped, tag = 'input window, operand 5']
    #allocation9 [shape = 'u8[2048]{0}', space=vmem, size = 0x800, scoped, tag = 'input window, operand 6']
    #allocation10 [shape = 's32[2]{0}', space=sflag, size = 0x8, scoped, tag = 'scoped memory for gpt_forward.1']
    #allocation11 [shape = 'u8[2048]{0}', space=vmem, size = 0x800, scoped, tag = 'input window, operand 7']
    #allocation12 [shape = 'u8[2048]{0}', space=vmem, size = 0x800, scoped, tag = 'input window, operand 8']
    #allocation13 [shape = 's32[2]{0}', space=sflag, size = 0x8, scoped, tag = 'scoped memory for gpt_forward.1']
    #allocation14 [shape = 'u8[1048576]{0}', space=vmem, size = 0x100000, scoped, tag = 'input window, operand 9']
    #allocation15 [shape = 'u8[8192]{0}', space=vmem, size = 0x2000, scoped, tag = 'input window, operand 10']
    #allocation16 [shape = 's32[2]{0}', space=sflag, size = 0x8, scoped, tag = 'scoped memory for gpt_forward.1']
    #allocation17 [shape = 'u8[1048576]{0}', space=vmem, size = 0x100000, scoped, tag = 'input window, operand 11']
    #allocation18 [shape = 'u8[2048]{0}', space=vmem, size = 0x800, scoped, tag = 'input window, operand 12']
    #allocation19 [shape = 's32[2]{0}', space=sflag, size = 0x8, scoped, tag = 'scoped memory for gpt_forward.1']
    #allocation20 [shape = 'u8[1024]{0}', space=vmem, size = 0x400, scoped, tag = 'input window, operand 13, single buffered']
    #allocation21 [shape = 'u8[1024]{0}', space=vmem, size = 0x400, scoped, tag = 'input window, operand 14, single buffered']
    #allocation22 [shape = 's32[1]{0}', space=sflag, size = 0x4, scoped, tag = 'scoped memory for gpt_forward.1']
    #allocation23 [shape = 'u8[262144]{0}', space=vmem, size = 0x40000, scoped, tag = 'input window, operand 15, single buffered']
    #allocation24 [shape = 'u8[2048]{0}', space=vmem, size = 0x800, scoped, tag = 'input window, operand 16, single buffered']
    #allocation25 [shape = 's32[1]{0}', space=sflag, size = 0x4, scoped, tag = 'scoped memory for gpt_forward.1']
    #allocation26 [shape = 'u8[262144]{0}', space=vmem, size = 0x40000, scoped, tag = 'output window, operand 0']
    %22 = vsyncpa [#allocation4], 0
    %s23 = scalar_lea.sflag [#allocation4], 1
    %24 = vsyncpa %s23, 0
    %25 = vsyncpa [#allocation7], 0
    %s26 = scalar_lea.sflag [#allocation7], 1
    %27 = vsyncpa %s26, 0
    %28 = vsyncpa [#allocation10], 0
    %s29 = scalar_lea.sflag [#allocation10], 1
    %30 = vsyncpa %s29, 0
    %31 = vsyncpa [#allocation13], 0
    %s32 = scalar_lea.sflag [#allocation13], 1
    %33 = vsyncpa %s32, 0
    %34 = vsyncpa [#allocation16], 0
    %s35 = scalar_lea.sflag [#allocation16], 1
    %36 = vsyncpa %s35, 0
    %37 = vsyncpa [#allocation19], 0
    %s38 = scalar_lea.sflag [#allocation19], 1
    %39 = vsyncpa %s38, 0
    %40 = vsyncpa [#allocation22], 0
    %41 = vsyncpa [#allocation25], 0
    %42 = vsyncpa [#allocation5], 0
    %s43 = scalar_lea.sflag [#allocation5], 1
    %44 = vsyncpa %s43, 0
    loop: start=0, step=1, limit=10
    $region2: #{gpt_forward.1} parent=1 // loop_pre_header
      _
    $region3: #{gpt_forward.1} parent=1 // loop_header
      %s46 = sphi 0, %s50
      %p47 = scmp.ge.s32.totalorder %s46, 10
      %s53 = sphi 0, %s65
      %s54 = sphi 0, %s61
      %s55 = sphi 0, %s53
      %s56 = sphi 0, %s54
      %s57 = sphi 0, %s55
      %s58 = sphi 0, %s56
      %s68 = sphi 0, %s70
      %s71 = sphi 0, %s68
      %s72 = sphi 0, %s71
      %s88 = sphi 0, %s72
      %s92 = sphi 0, %s92
      %s94 = sphi 0, %s92
      %s95 = sphi 0, %s94
      %s109 = sphi 0, %s95
      %s115 = sphi 0, %s117
      %s118 = sphi 0, %s115
      %s119 = sphi 0, %s118
      %s135 = sphi 0, %s119
      %s141 = sphi 0, %s143
      %s144 = sphi 0, %s141
      %s145 = sphi 0, %s144
      %s161 = sphi 0, %s145
      %s167 = sphi 0, %s169
      %s170 = sphi 0, %s167
      %s171 = sphi 0, %s170
      %s187 = sphi 0, %s171
      %s193 = sphi 0, %s195
      %s196 = sphi 0, %s193
      %s197 = sphi 0, %s196
      %s213 = sphi 0, %s197
      %s219 = sphi 0, %s221
      %s222 = sphi 0, %s219
      %s223 = sphi 0, %s222
      %s239 = sphi 0, %s223
      %s245 = sphi 0, %s247
      %s248 = sphi 0, %s245
      %s249 = sphi 0, %s248
      %s265 = sphi 0, %s249
      %s271 = sphi 0, %s273
      %s274 = sphi 0, %s271
      %s275 = sphi 0, %s274
      %s291 = sphi 0, %s275
      %s297 = sphi 0, %s299
      %s300 = sphi 0, %s297
      %s301 = sphi 0, %s300
      %s317 = sphi 0, %s301
      %s323 = sphi 0, %s325
      %s326 = sphi 0, %s323
      %s327 = sphi 0, %s326
      %s343 = sphi 0, %s327
      %s349 = sphi 0, %s351
      %s352 = sphi 0, %s349
      %s353 = sphi 0, %s352
      %s369 = sphi 0, %s353
      %s375 = sphi 0, %s377
      %s378 = sphi 0, %s375
      %s379 = sphi 0, %s378
      %s395 = sphi 0, %s379
      %s399 = sphi 0, %s399
      %s401 = sphi 0, %s399
      %s402 = sphi 0, %s401
      %s416 = sphi 0, %s402
      %s420 = sphi 0, %s420
      %s422 = sphi 0, %s420
      %s423 = sphi 0, %s422
      %s437 = sphi 0, %s423
      %s441 = sphi 0, %s441
      %s443 = sphi 0, %s441
      %s444 = sphi 0, %s443
      %s458 = sphi 0, %s444
      %s462 = sphi 0, %s462
      %s464 = sphi 0, %s462
      %s465 = sphi 0, %s464
      %s479 = sphi 0, %s465
      %s485 = sphi 0, %s487
      %s488 = sphi 0, %s485
      %s489 = sphi 0, %s488
      %s505 = sphi 0, %s489
    $region4: #{gpt_forward.1} parent=1 // loop_header_branch
      %49 = sbr.rel (%p47) target = $region8
    $region5: #{gpt_forward.1} parent=1 // loop_body
      %s51 = ssub.s32 %s46, 1
      %s52 = ssub.s32 %s46, 2
      %s59 = sadd.s32 1, %s54
      %p60 = scmp.ge.s32.totalorder %s59, 4
      %s61 = scalar_select %p60, 0, %s59
      %s62 = sadd.s32 1, %s53
      %s63 = scalar_select %p60, %s62, %s53
      %p64 = scmp.ge.s32.totalorder %s63, 2
      %s65 = scalar_select %p64, 0, %s63
      %s66 = ssub.s32 %s53, %s65
      %p67 = scmp.eq.s32.totalorder %s66, 0
      %s69 = sadd.s32 %s68, 1
      %s70 = scalar_select %p67, %s68, %s69
      %p73 = pneg %p67
      %p74 = scmp.eq.s32.totalorder %s46, 7
      %p75 = por %p73, %p74
      %p76 = scmp.ne.s32.totalorder %s68, %s71
      %p77 = scmp.eq.s32.totalorder %s46, 0
      %p78 = por %p76, %p77
      %p79 = scmp.ne.s32.totalorder %s68, %s71
      %p80 = scmp.eq.s32.totalorder %s51, 7
      %p81 = por %p79, %p80
      %p82 = scmp.ne.s32.totalorder %s71, %s72
      %p83 = scmp.eq.s32.totalorder %s51, 0
      %p84 = por %p82, %p83
      %p85 = scmp.ne.s32.totalorder %s71, %s72
      %p86 = scmp.eq.s32.totalorder %s52, 7
      %p87 = por %p85, %p86
      %p89 = scmp.ne.s32.totalorder %s72, %s88
      %p90 = scmp.eq.s32.totalorder %s52, 0
      %p91 = por %p89, %p90
      %s93 = sadd.s32 %s92, 1
      %p96 = scmp.eq.s32.totalorder %s46, 7
      %p97 = scmp.ne.s32.totalorder %s92, %s94
      %p98 = scmp.eq.s32.totalorder %s46, 0
      %p99 = por %p97, %p98
      %p100 = scmp.ne.s32.totalorder %s92, %s94
      %p101 = scmp.eq.s32.totalorder %s51, 7
      %p102 = por %p100, %p101
      %p103 = scmp.ne.s32.totalorder %s94, %s95
      %p104 = scmp.eq.s32.totalorder %s51, 0
      %p105 = por %p103, %p104
      %p106 = scmp.ne.s32.totalorder %s94, %s95
      %p107 = scmp.eq.s32.totalorder %s52, 7
      %p108 = por %p106, %p107
      %p110 = scmp.ne.s32.totalorder %s95, %s109
      %p111 = scmp.eq.s32.totalorder %s52, 0
      %p112 = por %p110, %p111
      %s113 = ssub.s32 %s54, %s61
      %p114 = scmp.eq.s32.totalorder %s113, 0
      %s116 = sadd.s32 %s115, 1
      %s117 = scalar_select %p114, %s115, %s116
      %p120 = pneg %p114
      %p121 = scmp.eq.s32.totalorder %s46, 7
      %p122 = por %p120, %p121
      %p123 = scmp.ne.s32.totalorder %s115, %s118
      %p124 = scmp.eq.s32.totalorder %s46, 0
      %p125 = por %p123, %p124
      %p126 = scmp.ne.s32.totalorder %s115, %s118
      %p127 = scmp.eq.s32.totalorder %s51, 7
      %p128 = por %p126, %p127
      %p129 = scmp.ne.s32.totalorder %s118, %s119
      %p130 = scmp.eq.s32.totalorder %s51, 0
      %p131 = por %p129, %p130
      %p132 = scmp.ne.s32.totalorder %s118, %s119
      %p133 = scmp.eq.s32.totalorder %s52, 7
      %p134 = por %p132, %p133
      %p136 = scmp.ne.s32.totalorder %s119, %s135
      %p137 = scmp.eq.s32.totalorder %s52, 0
      %p138 = por %p136, %p137
      %s139 = ssub.s32 %s54, %s61
      %p140 = scmp.eq.s32.totalorder %s139, 0
      %s142 = sadd.s32 %s141, 1
      %s143 = scalar_select %p140, %s141, %s142
      %p146 = pneg %p140
      %p147 = scmp.eq.s32.totalorder %s46, 7
      %p148 = por %p146, %p147
      %p149 = scmp.ne.s32.totalorder %s141, %s144
      %p150 = scmp.eq.s32.totalorder %s46, 0
      %p151 = por %p149, %p150
      %p152 = scmp.ne.s32.totalorder %s141, %s144
      %p153 = scmp.eq.s32.totalorder %s51, 7
      %p154 = por %p152, %p153
      %p155 = scmp.ne.s32.totalorder %s144, %s145
      %p156 = scmp.eq.s32.totalorder %s51, 0
      %p157 = por %p155, %p156
      %p158 = scmp.ne.s32.totalorder %s144, %s145
      %p159 = scmp.eq.s32.totalorder %s52, 7
      %p160 = por %p158, %p159
      %p162 = scmp.ne.s32.totalorder %s145, %s161
      %p163 = scmp.eq.s32.totalorder %s52, 0
      %p164 = por %p162, %p163
      %s165 = ssub.s32 %s54, %s61
      %p166 = scmp.eq.s32.totalorder %s165, 0
      %s168 = sadd.s32 %s167, 1
      %s169 = scalar_select %p166, %s167, %s168
      %p172 = pneg %p166
      %p173 = scmp.eq.s32.totalorder %s46, 7
      %p174 = por %p172, %p173
      %p175 = scmp.ne.s32.totalorder %s167, %s170
      %p176 = scmp.eq.s32.totalorder %s46, 0
      %p177 = por %p175, %p176
      %p178 = scmp.ne.s32.totalorder %s167, %s170
      %p179 = scmp.eq.s32.totalorder %s51, 7
      %p180 = por %p178, %p179
      %p181 = scmp.ne.s32.totalorder %s170, %s171
      %p182 = scmp.eq.s32.totalorder %s51, 0
      %p183 = por %p181, %p182
      %p184 = scmp.ne.s32.totalorder %s170, %s171
      %p185 = scmp.eq.s32.totalorder %s52, 7
      %p186 = por %p184, %p185
      %p188 = scmp.ne.s32.totalorder %s171, %s187
      %p189 = scmp.eq.s32.totalorder %s52, 0
      %p190 = por %p188, %p189
      %s191 = ssub.s32 %s54, %s61
      %p192 = scmp.eq.s32.totalorder %s191, 0
      %s194 = sadd.s32 %s193, 1
      %s195 = scalar_select %p192, %s193, %s194
      %p198 = pneg %p192
      %p199 = scmp.eq.s32.totalorder %s46, 7
      %p200 = por %p198, %p199
      %p201 = scmp.ne.s32.totalorder %s193, %s196
      %p202 = scmp.eq.s32.totalorder %s46, 0
      %p203 = por %p201, %p202
      %p204 = scmp.ne.s32.totalorder %s193, %s196
      %p205 = scmp.eq.s32.totalorder %s51, 7
      %p206 = por %p204, %p205
      %p207 = scmp.ne.s32.totalorder %s196, %s197
      %p208 = scmp.eq.s32.totalorder %s51, 0
      %p209 = por %p207, %p208
      %p210 = scmp.ne.s32.totalorder %s196, %s197
      %p211 = scmp.eq.s32.totalorder %s52, 7
      %p212 = por %p210, %p211
      %p214 = scmp.ne.s32.totalorder %s197, %s213
      %p215 = scmp.eq.s32.totalorder %s52, 0
      %p216 = por %p214, %p215
      %s217 = ssub.s32 %s54, %s61
      %p218 = scmp.eq.s32.totalorder %s217, 0
      %s220 = sadd.s32 %s219, 1
      %s221 = scalar_select %p218, %s219, %s220
      %p224 = pneg %p218
      %p225 = scmp.eq.s32.totalorder %s46, 7
      %p226 = por %p224, %p225
      %p227 = scmp.ne.s32.totalorder %s219, %s222
      %p228 = scmp.eq.s32.totalorder %s46, 0
      %p229 = por %p227, %p228
      %p230 = scmp.ne.s32.totalorder %s219, %s222
      %p231 = scmp.eq.s32.totalorder %s51, 7
      %p232 = por %p230, %p231
      %p233 = scmp.ne.s32.totalorder %s222, %s223
      %p234 = scmp.eq.s32.totalorder %s51, 0
      %p235 = por %p233, %p234
      %p236 = scmp.ne.s32.totalorder %s222, %s223
      %p237 = scmp.eq.s32.totalorder %s52, 7
      %p238 = por %p236, %p237
      %p240 = scmp.ne.s32.totalorder %s223, %s239
      %p241 = scmp.eq.s32.totalorder %s52, 0
      %p242 = por %p240, %p241
      %s243 = ssub.s32 %s54, %s61
      %p244 = scmp.eq.s32.totalorder %s243, 0
      %s246 = sadd.s32 %s245, 1
      %s247 = scalar_select %p244, %s245, %s246
      %p250 = pneg %p244
      %p251 = scmp.eq.s32.totalorder %s46, 7
      %p252 = por %p250, %p251
      %p253 = scmp.ne.s32.totalorder %s245, %s248
      %p254 = scmp.eq.s32.totalorder %s46, 0
      %p255 = por %p253, %p254
      %p256 = scmp.ne.s32.totalorder %s245, %s248
      %p257 = scmp.eq.s32.totalorder %s51, 7
      %p258 = por %p256, %p257
      %p259 = scmp.ne.s32.totalorder %s248, %s249
      %p260 = scmp.eq.s32.totalorder %s51, 0
      %p261 = por %p259, %p260
      %p262 = scmp.ne.s32.totalorder %s248, %s249
      %p263 = scmp.eq.s32.totalorder %s52, 7
      %p264 = por %p262, %p263
      %p266 = scmp.ne.s32.totalorder %s249, %s265
      %p267 = scmp.eq.s32.totalorder %s52, 0
      %p268 = por %p266, %p267
      %s269 = ssub.s32 %s54, %s61
      %p270 = scmp.eq.s32.totalorder %s269, 0
      %s272 = sadd.s32 %s271, 1
      %s273 = scalar_select %p270, %s271, %s272
      %p276 = pneg %p270
      %p277 = scmp.eq.s32.totalorder %s46, 7
      %p278 = por %p276, %p277
      %p279 = scmp.ne.s32.totalorder %s271, %s274
      %p280 = scmp.eq.s32.totalorder %s46, 0
      %p281 = por %p279, %p280
      %p282 = scmp.ne.s32.totalorder %s271, %s274
      %p283 = scmp.eq.s32.totalorder %s51, 7
      %p284 = por %p282, %p283
      %p285 = scmp.ne.s32.totalorder %s274, %s275
      %p286 = scmp.eq.s32.totalorder %s51, 0
      %p287 = por %p285, %p286
      %p288 = scmp.ne.s32.totalorder %s274, %s275
      %p289 = scmp.eq.s32.totalorder %s52, 7
      %p290 = por %p288, %p289
      %p292 = scmp.ne.s32.totalorder %s275, %s291
      %p293 = scmp.eq.s32.totalorder %s52, 0
      %p294 = por %p292, %p293
      %s295 = ssub.s32 %s54, %s61
      %p296 = scmp.eq.s32.totalorder %s295, 0
      %s298 = sadd.s32 %s297, 1
      %s299 = scalar_select %p296, %s297, %s298
      %p302 = pneg %p296
      %p303 = scmp.eq.s32.totalorder %s46, 7
      %p304 = por %p302, %p303
      %p305 = scmp.ne.s32.totalorder %s297, %s300
      %p306 = scmp.eq.s32.totalorder %s46, 0
      %p307 = por %p305, %p306
      %p308 = scmp.ne.s32.totalorder %s297, %s300
      %p309 = scmp.eq.s32.totalorder %s51, 7
      %p310 = por %p308, %p309
      %p311 = scmp.ne.s32.totalorder %s300, %s301
      %p312 = scmp.eq.s32.totalorder %s51, 0
      %p313 = por %p311, %p312
      %p314 = scmp.ne.s32.totalorder %s300, %s301
      %p315 = scmp.eq.s32.totalorder %s52, 7
      %p316 = por %p314, %p315
      %p318 = scmp.ne.s32.totalorder %s301, %s317
      %p319 = scmp.eq.s32.totalorder %s52, 0
      %p320 = por %p318, %p319
      %s321 = ssub.s32 %s54, %s61
      %p322 = scmp.eq.s32.totalorder %s321, 0
      %s324 = sadd.s32 %s323, 1
      %s325 = scalar_select %p322, %s323, %s324
      %p328 = pneg %p322
      %p329 = scmp.eq.s32.totalorder %s46, 7
      %p330 = por %p328, %p329
      %p331 = scmp.ne.s32.totalorder %s323, %s326
      %p332 = scmp.eq.s32.totalorder %s46, 0
      %p333 = por %p331, %p332
      %p334 = scmp.ne.s32.totalorder %s323, %s326
      %p335 = scmp.eq.s32.totalorder %s51, 7
      %p336 = por %p334, %p335
      %p337 = scmp.ne.s32.totalorder %s326, %s327
      %p338 = scmp.eq.s32.totalorder %s51, 0
      %p339 = por %p337, %p338
      %p340 = scmp.ne.s32.totalorder %s326, %s327
      %p341 = scmp.eq.s32.totalorder %s52, 7
      %p342 = por %p340, %p341
      %p344 = scmp.ne.s32.totalorder %s327, %s343
      %p345 = scmp.eq.s32.totalorder %s52, 0
      %p346 = por %p344, %p345
      %s347 = ssub.s32 %s54, %s61
      %p348 = scmp.eq.s32.totalorder %s347, 0
      %s350 = sadd.s32 %s349, 1
      %s351 = scalar_select %p348, %s349, %s350
      %p354 = pneg %p348
      %p355 = scmp.eq.s32.totalorder %s46, 7
      %p356 = por %p354, %p355
      %p357 = scmp.ne.s32.totalorder %s349, %s352
      %p358 = scmp.eq.s32.totalorder %s46, 0
      %p359 = por %p357, %p358
      %p360 = scmp.ne.s32.totalorder %s349, %s352
      %p361 = scmp.eq.s32.totalorder %s51, 7
      %p362 = por %p360, %p361
      %p363 = scmp.ne.s32.totalorder %s352, %s353
      %p364 = scmp.eq.s32.totalorder %s51, 0
      %p365 = por %p363, %p364
      %p366 = scmp.ne.s32.totalorder %s352, %s353
      %p367 = scmp.eq.s32.totalorder %s52, 7
      %p368 = por %p366, %p367
      %p370 = scmp.ne.s32.totalorder %s353, %s369
      %p371 = scmp.eq.s32.totalorder %s52, 0
      %p372 = por %p370, %p371
      %s373 = ssub.s32 %s54, %s61
      %p374 = scmp.eq.s32.totalorder %s373, 0
      %s376 = sadd.s32 %s375, 1
      %s377 = scalar_select %p374, %s375, %s376
      %p380 = pneg %p374
      %p381 = scmp.eq.s32.totalorder %s46, 7
      %p382 = por %p380, %p381
      %p383 = scmp.ne.s32.totalorder %s375, %s378
      %p384 = scmp.eq.s32.totalorder %s46, 0
      %p385 = por %p383, %p384
      %p386 = scmp.ne.s32.totalorder %s375, %s378
      %p387 = scmp.eq.s32.totalorder %s51, 7
      %p388 = por %p386, %p387
      %p389 = scmp.ne.s32.totalorder %s378, %s379
      %p390 = scmp.eq.s32.totalorder %s51, 0
      %p391 = por %p389, %p390
      %p392 = scmp.ne.s32.totalorder %s378, %s379
      %p393 = scmp.eq.s32.totalorder %s52, 7
      %p394 = por %p392, %p393
      %p396 = scmp.ne.s32.totalorder %s379, %s395
      %p397 = scmp.eq.s32.totalorder %s52, 0
      %p398 = por %p396, %p397
      %s400 = sadd.s32 %s399, 1
      %p403 = scmp.eq.s32.totalorder %s46, 7
      %p404 = scmp.ne.s32.totalorder %s399, %s401
      %p405 = scmp.eq.s32.totalorder %s46, 0
      %p406 = por %p404, %p405
      %p407 = scmp.ne.s32.totalorder %s399, %s401
      %p408 = scmp.eq.s32.totalorder %s51, 7
      %p409 = por %p407, %p408
      %p410 = scmp.ne.s32.totalorder %s401, %s402
      %p411 = scmp.eq.s32.totalorder %s51, 0
      %p412 = por %p410, %p411
      %p413 = scmp.ne.s32.totalorder %s401, %s402
      %p414 = scmp.eq.s32.totalorder %s52, 7
      %p415 = por %p413, %p414
      %p417 = scmp.ne.s32.totalorder %s402, %s416
      %p418 = scmp.eq.s32.totalorder %s52, 0
      %p419 = por %p417, %p418
      %s421 = sadd.s32 %s420, 1
      %p424 = scmp.eq.s32.totalorder %s46, 7
      %p425 = scmp.ne.s32.totalorder %s420, %s422
      %p426 = scmp.eq.s32.totalorder %s46, 0
      %p427 = por %p425, %p426
      %p428 = scmp.ne.s32.totalorder %s420, %s422
      %p429 = scmp.eq.s32.totalorder %s51, 7
      %p430 = por %p428, %p429
      %p431 = scmp.ne.s32.totalorder %s422, %s423
      %p432 = scmp.eq.s32.totalorder %s51, 0
      %p433 = por %p431, %p432
      %p434 = scmp.ne.s32.totalorder %s422, %s423
      %p435 = scmp.eq.s32.totalorder %s52, 7
      %p436 = por %p434, %p435
      %p438 = scmp.ne.s32.totalorder %s423, %s437
      %p439 = scmp.eq.s32.totalorder %s52, 0
      %p440 = por %p438, %p439
      %s442 = sadd.s32 %s441, 1
      %p445 = scmp.eq.s32.totalorder %s46, 7
      %p446 = scmp.ne.s32.totalorder %s441, %s443
      %p447 = scmp.eq.s32.totalorder %s46, 0
      %p448 = por %p446, %p447
      %p449 = scmp.ne.s32.totalorder %s441, %s443
      %p450 = scmp.eq.s32.totalorder %s51, 7
      %p451 = por %p449, %p450
      %p452 = scmp.ne.s32.totalorder %s443, %s444
      %p453 = scmp.eq.s32.totalorder %s51, 0
      %p454 = por %p452, %p453
      %p455 = scmp.ne.s32.totalorder %s443, %s444
      %p456 = scmp.eq.s32.totalorder %s52, 7
      %p457 = por %p455, %p456
      %p459 = scmp.ne.s32.totalorder %s444, %s458
      %p460 = scmp.eq.s32.totalorder %s52, 0
      %p461 = por %p459, %p460
      %s463 = sadd.s32 %s462, 1
      %p466 = scmp.eq.s32.totalorder %s46, 7
      %p467 = scmp.ne.s32.totalorder %s462, %s464
      %p468 = scmp.eq.s32.totalorder %s46, 0
      %p469 = por %p467, %p468
      %p470 = scmp.ne.s32.totalorder %s462, %s464
      %p471 = scmp.eq.s32.totalorder %s51, 7
      %p472 = por %p470, %p471
      %p473 = scmp.ne.s32.totalorder %s464, %s465
      %p474 = scmp.eq.s32.totalorder %s51, 0
      %p475 = por %p473, %p474
      %p476 = scmp.ne.s32.totalorder %s464, %s465
      %p477 = scmp.eq.s32.totalorder %s52, 7
      %p478 = por %p476, %p477
      %p480 = scmp.ne.s32.totalorder %s465, %s479
      %p481 = scmp.eq.s32.totalorder %s52, 0
      %p482 = por %p480, %p481
      %s483 = ssub.s32 %s53, %s65
      %p484 = scmp.eq.s32.totalorder %s483, 0
      %s486 = sadd.s32 %s485, 1
      %s487 = scalar_select %p484, %s485, %s486
      %p490 = pneg %p484
      %p491 = scmp.eq.s32.totalorder %s46, 7
      %p492 = por %p490, %p491
      %p493 = scmp.ne.s32.totalorder %s485, %s488
      %p494 = scmp.eq.s32.totalorder %s46, 0
      %p495 = por %p493, %p494
      %p496 = scmp.ne.s32.totalorder %s485, %s488
      %p497 = scmp.eq.s32.totalorder %s51, 7
      %p498 = por %p496, %p497
      %p499 = scmp.ne.s32.totalorder %s488, %s489
      %p500 = scmp.eq.s32.totalorder %s51, 0
      %p501 = por %p499, %p500
      %p502 = scmp.ne.s32.totalorder %s488, %s489
      %p503 = scmp.eq.s32.totalorder %s52, 7
      %p504 = por %p502, %p503
      %p506 = scmp.ne.s32.totalorder %s489, %s505
      %p507 = scmp.eq.s32.totalorder %s52, 0
      %p508 = por %p506, %p507
      %p509 = scmp.le.s32.totalorder 1, %s46
      %p510 = scmp.lt.s32.totalorder %s46, 9
      %p511 = pnand %p509, %p510
      %p512 = pneg %p511
      // Predicated region
      $region9: #{gpt_forward.1} parent=5 // pred_check
        _
      $region10: #{gpt_forward.1} parent=5 // pred_check_branch
        %514 = sbr.rel (%p511) target = $region12
      $region11: #{gpt_forward.1} parent=5 // pred_region
        %s515 = ssub.s32 %s46, 1
        // Predicated region
        $region13: #{gpt_forward.1} parent=11 // pred_check
          %p516 = pneg %p105
        $region14: #{gpt_forward.1} parent=11 // pred_check_branch
          %518 = sbr.rel (%p516) target = $region16
        $region15: #{gpt_forward.1} parent=11 // pred_region
          _
        $region16: #{gpt_forward.1} parent=11 // pred_fallthru
          _
        // Predicated region
        $region17: #{gpt_forward.1} parent=11 // pred_check
          %p519 = pneg %p412
        $region18: #{gpt_forward.1} parent=11 // pred_check_branch
          %521 = sbr.rel (%p519) target = $region20
        $region19: #{gpt_forward.1} parent=11 // pred_region
          %s523 = ssub.s32 32, 32
          %524 = vsyncadd [#allocation19], %s523
          %s526 = sshll.u32 [#allocation20], 4
          %s527 = int_to_ptr.vmem [resolvable:$true] %s526
          %529 = dma.hbm_to_vmem [thread:$0]  %s13, 32, %s527, [#allocation19]
        $region20: #{gpt_forward.1} parent=11 // pred_fallthru
          _
        // Predicated region
        $region21: #{gpt_forward.1} parent=11 // pred_check
          %p530 = pneg %p433
        $region22: #{gpt_forward.1} parent=11 // pred_check_branch
          %532 = sbr.rel (%p530) target = $region24
        $region23: #{gpt_forward.1} parent=11 // pred_region
          %s534 = ssub.s32 32, 32
          %535 = vsyncadd [#allocation22], %s534
          %s537 = sshll.u32 [#allocation21], 4
          %s538 = int_to_ptr.vmem [resolvable:$true] %s537
          %540 = dma.hbm_to_vmem [thread:$0]  %s14, 32, %s538, [#allocation22]
        $region24: #{gpt_forward.1} parent=11 // pred_fallthru
          _
        // Predicated region
        $region25: #{gpt_forward.1} parent=11 // pred_check
          %p541 = pneg %p454
        $region26: #{gpt_forward.1} parent=11 // pred_check_branch
          %543 = sbr.rel (%p541) target = $region28
        $region27: #{gpt_forward.1} parent=11 // pred_region
          %s545 = ssub.s32 8192, 8192
          %546 = vsyncadd [#allocation22], %s545
          %s547 = sshll.u32 [#allocation23], 4
          %s548 = int_to_ptr.vmem [resolvable:$true] %s547
          %553 = dma.hbm_to_vmem [thread:$0]  %s15, 8192, %s548, [#allocation22], 256, 256, 16
        $region28: #{gpt_forward.1} parent=11 // pred_fallthru
          _
        // Predicated region
        $region29: #{gpt_forward.1} parent=11 // pred_check
          %p554 = pneg %p475
        $region30: #{gpt_forward.1} parent=11 // pred_check_branch
          %556 = sbr.rel (%p554) target = $region32
        $region31: #{gpt_forward.1} parent=11 // pred_region
          %s558 = ssub.s32 64, 64
          %559 = vsyncadd [#allocation25], %s558
          %s561 = sshll.u32 [#allocation24], 4
          %s562 = int_to_ptr.vmem [resolvable:$true] %s561
          %564 = dma.hbm_to_vmem [thread:$0]  %s16, 64, %s562, [#allocation25]
        $region32: #{gpt_forward.1} parent=11 // pred_fallthru
          _
      $region12: #{gpt_forward.1} parent=5 // pred_fallthru
        _
      %p565 = scmp.lt.s32.totalorder %s46, 8
      // Predicated region
      $region33: #{gpt_forward.1} parent=5 // pred_check
        %p566 = pneg %p565
      $region34: #{gpt_forward.1} parent=5 // pred_check_branch
        %568 = sbr.rel (%p566) target = $region36
      $region35: #{gpt_forward.1} parent=5 // pred_region
        // Predicated region
        $region37: #{gpt_forward.1} parent=35 // pred_check
          %p569 = pneg %p78
        $region38: #{gpt_forward.1} parent=35 // pred_check_branch
          %571 = sbr.rel (%p569) target = $region40
        $region39: #{gpt_forward.1} parent=35 // pred_region
          %p572 = scmp.lt.s32.totalorder %s53, 1
          %s573 = scalar_select %p572, %s53, 1
          %s574 = smul.addr %s573, 16
          %s575 = smul.addr %s574, 8
          %s576 = scalar_lea.vmem %s0, %s575
        $region40: #{gpt_forward.1} parent=35 // pred_fallthru
          _
        // Predicated region
        $region41: #{gpt_forward.1} parent=35 // pred_check
          %p577 = pneg %p125
        $region42: #{gpt_forward.1} parent=35 // pred_check_branch
          %579 = sbr.rel (%p577) target = $region44
        $region43: #{gpt_forward.1} parent=35 // pred_region
          %s580 = sand.u32 %s115, 1
          %s581 = scalar_lea.sflag [#allocation4], %s580
          %s582 = sand.u32 %s115, 1
          %s583 = smul.addr %s582, 2
          %s584 = scalar_lea.vmem [#allocation3], %s583
          %s586 = ssub.s32 32, 32
          %587 = vsyncadd %s581, %s586
          %s588 = smul.addr %s54, 2
          %s589 = smul.addr %s588, 16
          %s590 = scalar_lea.hbm %s2, %s589
          %s592 = sshll.u32 %s584, 4
          %s593 = int_to_ptr.vmem [resolvable:$true] %s592
          %595 = dma.hbm_to_vmem [thread:$0]  %s590, 32, %s593, %s581
        $region44: #{gpt_forward.1} parent=35 // pred_fallthru
          _
        // Predicated region
        $region45: #{gpt_forward.1} parent=35 // pred_check
          %p596 = pneg %p151
        $region46: #{gpt_forward.1} parent=35 // pred_check_branch
          %598 = sbr.rel (%p596) target = $region48
        $region47: #{gpt_forward.1} parent=35 // pred_region
          %s599 = sand.u32 %s46, 1
          %s600 = scalar_lea.sflag [#allocation7], %s599
          %s601 = sand.u32 %s141, 1
          %s602 = smul.addr %s601, 2
          %s603 = scalar_lea.vmem [#allocation6], %s602
          %s605 = ssub.s32 32, 32
          %606 = vsyncadd %s600, %s605
          %s607 = smul.addr %s54, 2
          %s608 = smul.addr %s607, 16
          %s609 = scalar_lea.hbm %s3, %s608
          %s611 = sshll.u32 %s603, 4
          %s612 = int_to_ptr.vmem [resolvable:$true] %s611
          %614 = dma.hbm_to_vmem [thread:$0]  %s609, 32, %s612, %s600
        $region48: #{gpt_forward.1} parent=35 // pred_fallthru
          _
        // Predicated region
        $region49: #{gpt_forward.1} parent=35 // pred_check
          %p615 = pneg %p177
        $region50: #{gpt_forward.1} parent=35 // pred_check_branch
          %617 = sbr.rel (%p615) target = $region52
        $region51: #{gpt_forward.1} parent=35 // pred_region
          %p618 = scmp.lt.s32.totalorder %s54, 3
          %s619 = scalar_select %p618, %s54, 3
          %s620 = smul.addr %s619, 192
          %s621 = smul.addr %s620, 4
          %s622 = scalar_lea.vmem %s4, %s621
        $region52: #{gpt_forward.1} parent=35 // pred_fallthru
          _
        // Predicated region
        $region53: #{gpt_forward.1} parent=35 // pred_check
          %p623 = pneg %p203
        $region54: #{gpt_forward.1} parent=35 // pred_check_branch
          %625 = sbr.rel (%p623) target = $region56
        $region55: #{gpt_forward.1} parent=35 // pred_region
          %s626 = sand.u32 %s46, 1
          %s627 = scalar_lea.sflag [#allocation7], %s626
          %s628 = sand.u32 %s193, 1
          %s629 = smul.addr %s628, 256
          %s630 = scalar_lea.vmem [#allocation8], %s629
          %s632 = ssub.s32 4096, 4096
          %633 = vsyncadd %s627, %s632
          %s634 = smul.addr %s54, 64
          %s635 = smul.addr %s634, 64
          %s636 = scalar_lea.hbm %s5, %s635
          %s637 = sshll.u32 %s630, 4
          %s638 = int_to_ptr.vmem [resolvable:$true] %s637
          %643 = dma.hbm_to_vmem [thread:$0]  %s636, 4096, %s638, %s627, 128, 128, 8
        $region56: #{gpt_forward.1} parent=35 // pred_fallthru
          _
        // Predicated region
        $region57: #{gpt_forward.1} parent=35 // pred_check
          %p644 = pneg %p229
        $region58: #{gpt_forward.1} parent=35 // pred_check_branch
          %646 = sbr.rel (%p644) target = $region60
        $region59: #{gpt_forward.1} parent=35 // pred_region
          %s647 = sand.u32 %s46, 1
          %s648 = scalar_lea.sflag [#allocation10], %s647
          %s649 = sand.u32 %s219, 1
          %s650 = smul.addr %s649, 2
          %s651 = scalar_lea.vmem [#allocation9], %s650
          %s653 = ssub.s32 32, 32
          %654 = vsyncadd %s648, %s653
          %s655 = smul.addr %s54, 2
          %s656 = smul.addr %s655, 16
          %s657 = scalar_lea.hbm %s6, %s656
          %s659 = sshll.u32 %s651, 4
          %s660 = int_to_ptr.vmem [resolvable:$true] %s659
          %662 = dma.hbm_to_vmem [thread:$0]  %s657, 32, %s660, %s648
        $region60: #{gpt_forward.1} parent=35 // pred_fallthru
          _
        // Predicated region
        $region61: #{gpt_forward.1} parent=35 // pred_check
          %p663 = pneg %p255
        $region62: #{gpt_forward.1} parent=35 // pred_check_branch
          %665 = sbr.rel (%p663) target = $region64
        $region63: #{gpt_forward.1} parent=35 // pred_region
          %s666 = sand.u32 %s46, 1
          %s667 = scalar_lea.sflag [#allocation10], %s666
          %s668 = sand.u32 %s245, 1
          %s669 = smul.addr %s668, 2
          %s670 = scalar_lea.vmem [#allocation11], %s669
          %s672 = ssub.s32 32, 32
          %673 = vsyncadd %s667, %s672
          %s674 = smul.addr %s54, 2
          %s675 = smul.addr %s674, 16
          %s676 = scalar_lea.hbm %s7, %s675
          %s678 = sshll.u32 %s670, 4
          %s679 = int_to_ptr.vmem [resolvable:$true] %s678
          %681 = dma.hbm_to_vmem [thread:$0]  %s676, 32, %s679, %s667
        $region64: #{gpt_forward.1} parent=35 // pred_fallthru
          _
        // Predicated region
        $region65: #{gpt_forward.1} parent=35 // pred_check
          %p682 = pneg %p281
        $region66: #{gpt_forward.1} parent=35 // pred_check_branch
          %684 = sbr.rel (%p682) target = $region68
        $region67: #{gpt_forward.1} parent=35 // pred_region
          %s685 = sand.u32 %s46, 1
          %s686 = scalar_lea.sflag [#allocation13], %s685
          %s687 = sand.u32 %s271, 1
          %s688 = smul.addr %s687, 2
          %s689 = scalar_lea.vmem [#allocation12], %s688
          %s691 = ssub.s32 32, 32
          %692 = vsyncadd %s686, %s691
          %s693 = smul.addr %s54, 2
          %s694 = smul.addr %s693, 16
          %s695 = scalar_lea.hbm %s8, %s694
          %s697 = sshll.u32 %s689, 4
          %s698 = int_to_ptr.vmem [resolvable:$true] %s697
          %700 = dma.hbm_to_vmem [thread:$0]  %s695, 32, %s698, %s686
        $region68: #{gpt_forward.1} parent=35 // pred_fallthru
          _
        // Predicated region
        $region69: #{gpt_forward.1} parent=35 // pred_check
          %p701 = pneg %p307
        $region70: #{gpt_forward.1} parent=35 // pred_check_branch
          %703 = sbr.rel (%p701) target = $region72
        $region71: #{gpt_forward.1} parent=35 // pred_region
          %s704 = sand.u32 %s46, 1
          %s705 = scalar_lea.sflag [#allocation13], %s704
          %s706 = sand.u32 %s297, 1
          %s707 = smul.addr %s706, 1024
          %s708 = scalar_lea.vmem [#allocation14], %s707
          %s710 = ssub.s32 16384, 16384
          %711 = vsyncadd %s705, %s710
          %s712 = smul.addr %s54, 256
          %s713 = smul.addr %s712, 64
          %s714 = scalar_lea.hbm %s9, %s713
          %s715 = sshll.u32 %s708, 4
          %s716 = int_to_ptr.vmem [resolvable:$true] %s715
          %721 = dma.hbm_to_vmem [thread:$0]  %s714, 16384, %s716, %s705, 512, 512, 32
        $region72: #{gpt_forward.1} parent=35 // pred_fallthru
          _
        // Predicated region
        $region73: #{gpt_forward.1} parent=35 // pred_check
          %p722 = pneg %p333
        $region74: #{gpt_forward.1} parent=35 // pred_check_branch
          %724 = sbr.rel (%p722) target = $region76
        $region75: #{gpt_forward.1} parent=35 // pred_region
          %s725 = sand.u32 %s46, 1
          %s726 = scalar_lea.sflag [#allocation16], %s725
          %s727 = sand.u32 %s323, 1
          %s728 = smul.addr %s727, 8
          %s729 = scalar_lea.vmem [#allocation15], %s728
          %s731 = ssub.s32 128, 128
          %732 = vsyncadd %s726, %s731
          %s733 = smul.addr %s54, 8
          %s734 = smul.addr %s733, 16
          %s735 = scalar_lea.hbm %s10, %s734
          %s737 = sshll.u32 %s729, 4
          %s738 = int_to_ptr.vmem [resolvable:$true] %s737
          %740 = dma.hbm_to_vmem [thread:$0]  %s735, 128, %s738, %s726
        $region76: #{gpt_forward.1} parent=35 // pred_fallthru
          _
        // Predicated region
        $region77: #{gpt_forward.1} parent=35 // pred_check
          %p741 = pneg %p359
        $region78: #{gpt_forward.1} parent=35 // pred_check_branch
          %743 = sbr.rel (%p741) target = $region80
        $region79: #{gpt_forward.1} parent=35 // pred_region
          %s744 = sand.u32 %s46, 1
          %s745 = scalar_lea.sflag [#allocation16], %s744
          %s746 = sand.u32 %s349, 1
          %s747 = smul.addr %s746, 1024
          %s748 = scalar_lea.vmem [#allocation17], %s747
          %s750 = ssub.s32 16384, 16384
          %751 = vsyncadd %s745, %s750
          %s752 = smul.addr %s54, 256
          %s753 = smul.addr %s752, 64
          %s754 = scalar_lea.hbm %s11, %s753
          %s755 = sshll.u32 %s748, 4
          %s756 = int_to_ptr.vmem [resolvable:$true] %s755
          %761 = dma.hbm_to_vmem [thread:$0]  %s754, 16384, %s756, %s745, 128, 128, 8
        $region80: #{gpt_forward.1} parent=35 // pred_fallthru
          _
        // Predicated region
        $region81: #{gpt_forward.1} parent=35 // pred_check
          %p762 = pneg %p385
        $region82: #{gpt_forward.1} parent=35 // pred_check_branch
          %764 = sbr.rel (%p762) target = $region84
        $region83: #{gpt_forward.1} parent=35 // pred_region
          %s765 = sand.u32 %s46, 1
          %s766 = scalar_lea.sflag [#allocation19], %s765
          %s767 = sand.u32 %s375, 1
          %s768 = smul.addr %s767, 2
          %s769 = scalar_lea.vmem [#allocation18], %s768
          %s771 = ssub.s32 32, 32
          %772 = vsyncadd %s766, %s771
          %s773 = smul.addr %s54, 2
          %s774 = smul.addr %s773, 16
          %s775 = scalar_lea.hbm %s12, %s774
          %s777 = sshll.u32 %s769, 4
          %s778 = int_to_ptr.vmem [resolvable:$true] %s777
          %780 = dma.hbm_to_vmem [thread:$0]  %s775, 32, %s778, %s766
        $region84: #{gpt_forward.1} parent=35 // pred_fallthru
          _
      $region36: #{gpt_forward.1} parent=5 // pred_fallthru
        _
      %p781 = scmp.le.s32.totalorder 1, %s46
      %p782 = scmp.lt.s32.totalorder %s46, 9
      %p783 = pnand %p781, %p782
      %p784 = pneg %p783
      // Predicated region
      $region85: #{gpt_forward.1} parent=5 // pred_check
        _
      $region86: #{gpt_forward.1} parent=5 // pred_check_branch
        %786 = sbr.rel (%p783) target = $region88
      $region87: #{gpt_forward.1} parent=5 // pred_region
        %s787 = ssub.s32 %s46, 1
        %s788 = sand.u32 %s118, 1
        %s789 = scalar_lea.sflag [#allocation4], %s788
        %s790 = sand.u32 %s118, 1
        %s791 = smul.addr %s790, 2
        %s792 = scalar_lea.vmem [#allocation3], %s791
        // Predicated region
        $region89: #{gpt_forward.1} parent=87 // pred_check
          %p793 = pneg %p131
        $region90: #{gpt_forward.1} parent=87 // pred_check_branch
          %795 = sbr.rel (%p793) target = $region92
        $region91: #{gpt_forward.1} parent=87 // pred_region
          %796 = dma.done %s789, 32
        $region92: #{gpt_forward.1} parent=87 // pred_fallthru
          _
        %s797 = sand.u32 %s51, 1
        %s798 = scalar_lea.sflag [#allocation7], %s797
        %s799 = sand.u32 %s144, 1
        %s800 = smul.addr %s799, 2
        %s801 = scalar_lea.vmem [#allocation6], %s800
        // Predicated region
        $region93: #{gpt_forward.1} parent=87 // pred_check
          %p802 = pneg %p157
        $region94: #{gpt_forward.1} parent=87 // pred_check_branch
          %804 = sbr.rel (%p802) target = $region96
        $region95: #{gpt_forward.1} parent=87 // pred_region
          %805 = dma.done %s798, 32
        $region96: #{gpt_forward.1} parent=87 // pred_fallthru
          _
        %s806 = sand.u32 %s51, 1
        %s807 = scalar_lea.sflag [#allocation7], %s806
        %s808 = sand.u32 %s196, 1
        %s809 = smul.addr %s808, 256
        %s810 = scalar_lea.vmem [#allocation8], %s809
        // Predicated region
        $region97: #{gpt_forward.1} parent=87 // pred_check
          %p811 = pneg %p209
        $region98: #{gpt_forward.1} parent=87 // pred_check_branch
          %813 = sbr.rel (%p811) target = $region100
        $region99: #{gpt_forward.1} parent=87 // pred_region
          %814 = dma.done %s807, 4096
        $region100: #{gpt_forward.1} parent=87 // pred_fallthru
          _
        %s815 = sand.u32 %s51, 1
        %s816 = scalar_lea.sflag [#allocation10], %s815
        %s817 = sand.u32 %s222, 1
        %s818 = smul.addr %s817, 2
        %s819 = scalar_lea.vmem [#allocation9], %s818
        // Predicated region
        $region101: #{gpt_forward.1} parent=87 // pred_check
          %p820 = pneg %p235
        $region102: #{gpt_forward.1} parent=87 // pred_check_branch
          %822 = sbr.rel (%p820) target = $region104
        $region103: #{gpt_forward.1} parent=87 // pred_region
          %823 = dma.done %s816, 32
        $region104: #{gpt_forward.1} parent=87 // pred_fallthru
          _
        %s824 = sand.u32 %s51, 1
        %s825 = scalar_lea.sflag [#allocation10], %s824
        %s826 = sand.u32 %s248, 1
        %s827 = smul.addr %s826, 2
        %s828 = scalar_lea.vmem [#allocation11], %s827
        // Predicated region
        $region105: #{gpt_forward.1} parent=87 // pred_check
          %p829 = pneg %p261
        $region106: #{gpt_forward.1} parent=87 // pred_check_branch
          %831 = sbr.rel (%p829) target = $region108
        $region107: #{gpt_forward.1} parent=87 // pred_region
          %832 = dma.done %s825, 32
        $region108: #{gpt_forward.1} parent=87 // pred_fallthru
          _
        %s833 = sand.u32 %s51, 1
        %s834 = scalar_lea.sflag [#allocation13], %s833
        %s835 = sand.u32 %s274, 1
        %s836 = smul.addr %s835, 2
        %s837 = scalar_lea.vmem [#allocation12], %s836
        // Predicated region
        $region109: #{gpt_forward.1} parent=87 // pred_check
          %p838 = pneg %p287
        $region110: #{gpt_forward.1} parent=87 // pred_check_branch
          %840 = sbr.rel (%p838) target = $region112
        $region111: #{gpt_forward.1} parent=87 // pred_region
          %841 = dma.done %s834, 32
        $region112: #{gpt_forward.1} parent=87 // pred_fallthru
          _
        %s842 = sand.u32 %s51, 1
        %s843 = scalar_lea.sflag [#allocation13], %s842
        %s844 = sand.u32 %s300, 1
        %s845 = smul.addr %s844, 1024
        %s846 = scalar_lea.vmem [#allocation14], %s845
        // Predicated region
        $region113: #{gpt_forward.1} parent=87 // pred_check
          %p847 = pneg %p313
        $region114: #{gpt_forward.1} parent=87 // pred_check_branch
          %849 = sbr.rel (%p847) target = $region116
        $region115: #{gpt_forward.1} parent=87 // pred_region
          %850 = dma.done %s843, 16384
        $region116: #{gpt_forward.1} parent=87 // pred_fallthru
          _
        %s851 = sand.u32 %s51, 1
        %s852 = scalar_lea.sflag [#allocation16], %s851
        %s853 = sand.u32 %s326, 1
        %s854 = smul.addr %s853, 8
        %s855 = scalar_lea.vmem [#allocation15], %s854
        // Predicated region
        $region117: #{gpt_forward.1} parent=87 // pred_check
          %p856 = pneg %p339
        $region118: #{gpt_forward.1} parent=87 // pred_check_branch
          %858 = sbr.rel (%p856) target = $region120
        $region119: #{gpt_forward.1} parent=87 // pred_region
          %859 = dma.done %s852, 128
        $region120: #{gpt_forward.1} parent=87 // pred_fallthru
          _
        %s860 = sand.u32 %s51, 1
        %s861 = scalar_lea.sflag [#allocation16], %s860
        %s862 = sand.u32 %s352, 1
        %s863 = smul.addr %s862, 1024
        %s864 = scalar_lea.vmem [#allocation17], %s863
        // Predicated region
        $region121: #{gpt_forward.1} parent=87 // pred_check
          %p865 = pneg %p365
        $region122: #{gpt_forward.1} parent=87 // pred_check_branch
          %867 = sbr.rel (%p865) target = $region124
        $region123: #{gpt_forward.1} parent=87 // pred_region
          %868 = dma.done %s861, 16384
        $region124: #{gpt_forward.1} parent=87 // pred_fallthru
          _
        %s869 = sand.u32 %s51, 1
        %s870 = scalar_lea.sflag [#allocation19], %s869
        %s871 = sand.u32 %s378, 1
        %s872 = smul.addr %s871, 2
        %s873 = scalar_lea.vmem [#allocation18], %s872
        // Predicated region
        $region125: #{gpt_forward.1} parent=87 // pred_check
          %p874 = pneg %p391
        $region126: #{gpt_forward.1} parent=87 // pred_check_branch
          %876 = sbr.rel (%p874) target = $region128
        $region127: #{gpt_forward.1} parent=87 // pred_region
          %877 = dma.done %s870, 32
        $region128: #{gpt_forward.1} parent=87 // pred_fallthru
          _
        // Predicated region
        $region129: #{gpt_forward.1} parent=87 // pred_check
          %p878 = pneg %p412
        $region130: #{gpt_forward.1} parent=87 // pred_check_branch
          %880 = sbr.rel (%p878) target = $region132
        $region131: #{gpt_forward.1} parent=87 // pred_region
          %881 = dma.done [#allocation19], 32
        $region132: #{gpt_forward.1} parent=87 // pred_fallthru
          _
        // Predicated region
        $region133: #{gpt_forward.1} parent=87 // pred_check
          %p882 = pneg %p433
        $region134: #{gpt_forward.1} parent=87 // pred_check_branch
          %884 = sbr.rel (%p882) target = $region136
        $region135: #{gpt_forward.1} parent=87 // pred_region
          %885 = dma.done [#allocation22], 32
        $region136: #{gpt_forward.1} parent=87 // pred_fallthru
          _
        // Predicated region
        $region137: #{gpt_forward.1} parent=87 // pred_check
          %p886 = pneg %p454
        $region138: #{gpt_forward.1} parent=87 // pred_check_branch
          %888 = sbr.rel (%p886) target = $region140
        $region139: #{gpt_forward.1} parent=87 // pred_region
          %889 = dma.done [#allocation22], 8192
        $region140: #{gpt_forward.1} parent=87 // pred_fallthru
          _
        // Predicated region
        $region141: #{gpt_forward.1} parent=87 // pred_check
          %p890 = pneg %p475
        $region142: #{gpt_forward.1} parent=87 // pred_check_branch
          %892 = sbr.rel (%p890) target = $region144
        $region143: #{gpt_forward.1} parent=87 // pred_region
          %893 = dma.done [#allocation25], 64
        $region144: #{gpt_forward.1} parent=87 // pred_fallthru
          _
        %p894 = scmp.lt.s32.totalorder %s55, 1
        %s895 = scalar_select %p894, %s55, 1
        %s896 = smul.addr %s895, 16
        %s897 = smul.addr %s896, 8
        %s898 = scalar_lea.vmem %s0, %s897
        %p899 = pneg %p84
        %p900 = pneg %p81
        %p901 = pneg %p105
        %p902 = pneg %p102
        %s903 = sand.u32 %s118, 1
        %s904 = scalar_lea.sflag [#allocation4], %s903
        %s905 = sand.u32 %s118, 1
        %s906 = smul.addr %s905, 2
        %s907 = scalar_lea.vmem [#allocation3], %s906
        %p908 = pneg %p131
        %p909 = pneg %p128
        %s910 = sand.u32 %s51, 1
        %s911 = scalar_lea.sflag [#allocation7], %s910
        %s912 = sand.u32 %s144, 1
        %s913 = smul.addr %s912, 2
        %s914 = scalar_lea.vmem [#allocation6], %s913
        %p915 = pneg %p157
        %p916 = pneg %p154
        %p917 = scmp.lt.s32.totalorder %s56, 3
        %s918 = scalar_select %p917, %s56, 3
        %s919 = smul.addr %s918, 192
        %s920 = smul.addr %s919, 4
        %s921 = scalar_lea.vmem %s4, %s920
        %p922 = pneg %p183
        %p923 = pneg %p180
        %s924 = sand.u32 %s51, 1
        %s925 = scalar_lea.sflag [#allocation7], %s924
        %s926 = sand.u32 %s196, 1
        %s927 = smul.addr %s926, 256
        %s928 = scalar_lea.vmem [#allocation8], %s927
        %p929 = pneg %p209
        %p930 = pneg %p206
        %s931 = sand.u32 %s51, 1
        %s932 = scalar_lea.sflag [#allocation10], %s931
        %s933 = sand.u32 %s222, 1
        %s934 = smul.addr %s933, 2
        %s935 = scalar_lea.vmem [#allocation9], %s934
        %p936 = pneg %p235
        %p937 = pneg %p232
        %s938 = sand.u32 %s51, 1
        %s939 = scalar_lea.sflag [#allocation10], %s938
        %s940 = sand.u32 %s248, 1
        %s941 = smul.addr %s940, 2
        %s942 = scalar_lea.vmem [#allocation11], %s941
        %p943 = pneg %p261
        %p944 = pneg %p258
        %s945 = sand.u32 %s51, 1
        %s946 = scalar_lea.sflag [#allocation13], %s945
        %s947 = sand.u32 %s274, 1
        %s948 = smul.addr %s947, 2
        %s949 = scalar_lea.vmem [#allocation12], %s948
        %p950 = pneg %p287
        %p951 = pneg %p284
        %s952 = sand.u32 %s51, 1
        %s953 = scalar_lea.sflag [#allocation13], %s952
        %s954 = sand.u32 %s300, 1
        %s955 = smul.addr %s954, 1024
        %s956 = scalar_lea.vmem [#allocation14], %s955
        %p957 = pneg %p313
        %p958 = pneg %p310
        %s959 = sand.u32 %s51, 1
        %s960 = scalar_lea.sflag [#allocation16], %s959
        %s961 = sand.u32 %s326, 1
        %s962 = smul.addr %s961, 8
        %s963 = scalar_lea.vmem [#allocation15], %s962
        %p964 = pneg %p339
        %p965 = pneg %p336
        %s966 = sand.u32 %s51, 1
        %s967 = scalar_lea.sflag [#allocation16], %s966
        %s968 = sand.u32 %s352, 1
        %s969 = smul.addr %s968, 1024
        %s970 = scalar_lea.vmem [#allocation17], %s969
        %p971 = pneg %p365
        %p972 = pneg %p362
        %s973 = sand.u32 %s51, 1
        %s974 = scalar_lea.sflag [#allocation19], %s973
        %s975 = sand.u32 %s378, 1
        %s976 = smul.addr %s975, 2
        %s977 = scalar_lea.vmem [#allocation18], %s976
        %p978 = pneg %p391
        %p979 = pneg %p388
        %p980 = pneg %p412
        %p981 = pneg %p409
        %p982 = pneg %p433
        %p983 = pneg %p430
        %p984 = pneg %p454
        %p985 = pneg %p451
        %p986 = pneg %p475
        %p987 = pneg %p472
        %p988 = pneg %p501
        %p989 = pneg %p498
        %s990 = sand.u32 %s488, 1
        %s991 = scalar_lea.sflag [#allocation5], %s990
        %s992 = sand.u32 %s488, 1
        %s993 = smul.addr %s992, 256
        %s994 = scalar_lea.vmem [#allocation26], %s993
        %p995 = scmp.lt.s32.totalorder %s55, 1
        %s996 = scalar_select %p995, %s55, 1
        %s997 = smul.addr %s996, 16
        %s998 = smul.addr %s997, 8
        %s999 = scalar_lea.vmem %s0, %s998
        %p1000 = scmp.lt.s32.totalorder %s56, 3
        %s1001 = scalar_select %p1000, %s56, 3
        %s1002 = smul.addr %s1001, 192
        %s1003 = smul.addr %s1002, 4
        %s1004 = scalar_lea.vmem %s4, %s1003
        %p1006 = scmp.eq.s32.totalorder %s56, 0
        // Predicated region
        $region145: #{gpt_forward.1} parent=87 // pred_check
          %p1007 = pneg %p1006
        $region146: #{gpt_forward.1} parent=87 // pred_check_branch
          %1009 = sbr.rel (%p1007) target = $region148
        $region147: #{gpt_forward.1} parent=87 // pred_region
          %v1010 = vld [vmem:[%s999] sm:$0xff]
          %v1011 = vld [vmem:[%s999 + $0x8] sm:$0xff]
          %v1012 = vld [vmem:[%s999 + $0x10] sm:$0xff]
          %v1013 = vld [vmem:[%s999 + $0x18] sm:$0xff]
          %v1014 = vld [vmem:[%s999 + $0x20] sm:$0xff]
          %v1015 = vld [vmem:[%s999 + $0x28] sm:$0xff]
          %v1016 = vld [vmem:[%s999 + $0x30] sm:$0xff]
          %v1017 = vld [vmem:[%s999 + $0x38] sm:$0xff]
          %v1018 = vld [vmem:[%s999 + $0x40] sm:$0xff]
          %v1019 = vld [vmem:[%s999 + $0x48] sm:$0xff]
          %v1020 = vld [vmem:[%s999 + $0x50] sm:$0xff]
          %v1021 = vld [vmem:[%s999 + $0x58] sm:$0xff]
          %v1022 = vld [vmem:[%s999 + $0x60] sm:$0xff]
          %v1023 = vld [vmem:[%s999 + $0x68] sm:$0xff]
          %v1024 = vld [vmem:[%s999 + $0x70] sm:$0xff]
          %v1025 = vld [vmem:[%s999 + $0x78] sm:$0xff]
          %1026 = vst [vmem:[#allocation2] sm:$0xff] %v1010
          %1027 = vst [vmem:[#allocation2 + $0x8] sm:$0xff] %v1011
          %1028 = vst [vmem:[#allocation2 + $0x10] sm:$0xff] %v1012
          %1029 = vst [vmem:[#allocation2 + $0x18] sm:$0xff] %v1013
          %1030 = vst [vmem:[#allocation2 + $0x20] sm:$0xff] %v1014
          %1031 = vst [vmem:[#allocation2 + $0x28] sm:$0xff] %v1015
          %1032 = vst [vmem:[#allocation2 + $0x30] sm:$0xff] %v1016
          %1033 = vst [vmem:[#allocation2 + $0x38] sm:$0xff] %v1017
          %1034 = vst [vmem:[#allocation2 + $0x40] sm:$0xff] %v1018
          %1035 = vst [vmem:[#allocation2 + $0x48] sm:$0xff] %v1019
          %1036 = vst [vmem:[#allocation2 + $0x50] sm:$0xff] %v1020
          %1037 = vst [vmem:[#allocation2 + $0x58] sm:$0xff] %v1021
          %1038 = vst [vmem:[#allocation2 + $0x60] sm:$0xff] %v1022
          %1039 = vst [vmem:[#allocation2 + $0x68] sm:$0xff] %v1023
          %1040 = vst [vmem:[#allocation2 + $0x70] sm:$0xff] %v1024
          %1041 = vst [vmem:[#allocation2 + $0x78] sm:$0xff] %v1025
        $region148: #{gpt_forward.1} parent=87 // pred_fallthru
          _
        %v1042 = vld [vmem:[#allocation2] sm:$0xff]
        %v1043 = vld [vmem:[#allocation2 + $0x8] sm:$0xff]
        %v1044 = vld [vmem:[#allocation2 + $0x10] sm:$0xff]
        %v1045 = vld [vmem:[#allocation2 + $0x18] sm:$0xff]
        %v1046 = vld [vmem:[#allocation2 + $0x20] sm:$0xff]
        %v1047 = vld [vmem:[#allocation2 + $0x28] sm:$0xff]
        %v1048 = vld [vmem:[#allocation2 + $0x30] sm:$0xff]
        %v1049 = vld [vmem:[#allocation2 + $0x38] sm:$0xff]
        %v1050 = vld [vmem:[#allocation2 + $0x40] sm:$0xff]
        %v1051 = vld [vmem:[#allocation2 + $0x48] sm:$0xff]
        %v1052 = vld [vmem:[#allocation2 + $0x50] sm:$0xff]
        %v1053 = vld [vmem:[#allocation2 + $0x58] sm:$0xff]
        %v1054 = vld [vmem:[#allocation2 + $0x60] sm:$0xff]
        %v1055 = vld [vmem:[#allocation2 + $0x68] sm:$0xff]
        %v1056 = vld [vmem:[#allocation2 + $0x70] sm:$0xff]
        %v1057 = vld [vmem:[#allocation2 + $0x78] sm:$0xff]
        %v1058 = vld [vmem:[%s792] sm:$0x3]
        %v1059 = vld [vmem:[%s801] sm:$0x3]
        %v1060 = vadd.f32 %v1042, %v1043
        %1061 = vadd.xlane.f32.xlu0 %v1060
        %v1062 = vpop.xlane.xlu0 %1061
        %v1063 = vadd.f32 %v1044, %v1045
        %1064 = vadd.xlane.f32.xlu0 %v1063
        %v1065 = vpop.xlane.xlu0 %1064
        %v1066 = vadd.f32 %v1046, %v1047
        %1067 = vadd.xlane.f32.xlu0 %v1066
        %v1068 = vpop.xlane.xlu0 %1067
        %v1069 = vadd.f32 %v1048, %v1049
        %1070 = vadd.xlane.f32.xlu0 %v1069
        %v1071 = vpop.xlane.xlu0 %1070
        %v1072 = vadd.f32 %v1050, %v1051
        %1073 = vadd.xlane.f32.xlu0 %v1072
        %v1074 = vpop.xlane.xlu0 %1073
        %v1075 = vadd.f32 %v1052, %v1053
        %1076 = vadd.xlane.f32.xlu0 %v1075
        %v1077 = vpop.xlane.xlu0 %1076
        %v1078 = vadd.f32 %v1054, %v1055
        %1079 = vadd.xlane.f32.xlu0 %v1078
        %v1080 = vpop.xlane.xlu0 %1079
        %v1081 = vadd.f32 %v1056, %v1057
        %1082 = vadd.xlane.f32.xlu0 %v1081
        %v1083 = vpop.xlane.xlu0 %1082
        %v1084 = vrcp.pop 256.0
        %v1085 = vmul.f32 %v1062, %v1084
        %v1086 = vmul.f32 %v1065, %v1084
        %v1087 = vmul.f32 %v1068, %v1084
        %v1088 = vmul.f32 %v1071, %v1084
        %v1089 = vmul.f32 %v1074, %v1084
        %v1090 = vmul.f32 %v1077, %v1084
        %v1091 = vmul.f32 %v1080, %v1084
        %v1092 = vmul.f32 %v1083, %v1084
        %v1093 = vsub.f32 %v1042, %v1085
        %v1094 = vsub.f32 %v1043, %v1085
        %v1095 = vsub.f32 %v1044, %v1086
        %v1096 = vsub.f32 %v1045, %v1086
        %v1097 = vsub.f32 %v1046, %v1087
        %v1098 = vsub.f32 %v1047, %v1087
        %v1099 = vsub.f32 %v1048, %v1088
        %v1100 = vsub.f32 %v1049, %v1088
        %v1101 = vsub.f32 %v1050, %v1089
        %v1102 = vsub.f32 %v1051, %v1089
        %v1103 = vsub.f32 %v1052, %v1090
        %v1104 = vsub.f32 %v1053, %v1090
        %v1105 = vsub.f32 %v1054, %v1091
        %v1106 = vsub.f32 %v1055, %v1091
        %v1107 = vsub.f32 %v1056, %v1092
        %v1108 = vsub.f32 %v1057, %v1092
        %v1109 = vmul.f32 %v1093, %v1093
        %v1110 = vmul.f32 %v1094, %v1094
        %v1111 = vmul.f32 %v1095, %v1095
        %v1112 = vmul.f32 %v1096, %v1096
        %v1113 = vmul.f32 %v1097, %v1097
        %v1114 = vmul.f32 %v1098, %v1098
        %v1115 = vmul.f32 %v1099, %v1099
        %v1116 = vmul.f32 %v1100, %v1100
        %v1117 = vmul.f32 %v1101, %v1101
        %v1118 = vmul.f32 %v1102, %v1102
        %v1119 = vmul.f32 %v1103, %v1103
        %v1120 = vmul.f32 %v1104, %v1104
        %v1121 = vmul.f32 %v1105, %v1105
        %v1122 = vmul.f32 %v1106, %v1106
        %v1123 = vmul.f32 %v1107, %v1107
        %v1124 = vmul.f32 %v1108, %v1108
        %v1125 = vadd.f32 %v1109, %v1110
        %1126 = vadd.xlane.f32.xlu0 %v1125
        %v1127 = vpop.xlane.xlu0 %1126
        %v1128 = vadd.f32 %v1111, %v1112
        %1129 = vadd.xlane.f32.xlu0 %v1128
        %v1130 = vpop.xlane.xlu0 %1129
        %v1131 = vadd.f32 %v1113, %v1114
        %1132 = vadd.xlane.f32.xlu0 %v1131
        %v1133 = vpop.xlane.xlu0 %1132
        %v1134 = vadd.f32 %v1115, %v1116
        %1135 = vadd.xlane.f32.xlu0 %v1134
        %v1136 = vpop.xlane.xlu0 %1135
        %v1137 = vadd.f32 %v1117, %v1118
        %1138 = vadd.xlane.f32.xlu0 %v1137
        %v1139 = vpop.xlane.xlu0 %1138
        %v1140 = vadd.f32 %v1119, %v1120
        %1141 = vadd.xlane.f32.xlu0 %v1140
        %v1142 = vpop.xlane.xlu0 %1141
        %v1143 = vadd.f32 %v1121, %v1122
        %1144 = vadd.xlane.f32.xlu0 %v1143
        %v1145 = vpop.xlane.xlu0 %1144
        %v1146 = vadd.f32 %v1123, %v1124
        %1147 = vadd.xlane.f32.xlu0 %v1146
        %v1148 = vpop.xlane.xlu0 %1147
        %v1149 = vmul.f32 %v1127, %v1084
        %v1150 = vmul.f32 %v1130, %v1084
        %v1151 = vmul.f32 %v1133, %v1084
        %v1152 = vmul.f32 %v1136, %v1084
        %v1153 = vmul.f32 %v1139, %v1084
        %v1154 = vmul.f32 %v1142, %v1084
        %v1155 = vmul.f32 %v1145, %v1084
        %v1156 = vmul.f32 %v1148, %v1084
        %v1157 = vadd.f32 %v1149, 1e-05
        %v1158 = vadd.f32 %v1150, 1e-05
        %v1159 = vadd.f32 %v1151, 1e-05
        %v1160 = vadd.f32 %v1152, 1e-05
        %v1161 = vadd.f32 %v1153, 1e-05
        %v1162 = vadd.f32 %v1154, 1e-05
        %v1163 = vadd.f32 %v1155, 1e-05
        %v1164 = vadd.f32 %v1156, 1e-05
        %v1165 = vrsqrt.pop %v1157
        %v1166 = vrsqrt.pop %v1158
        %v1167 = vrsqrt.pop %v1159
        %v1168 = vrsqrt.pop %v1160
        %v1169 = vrsqrt.pop %v1161
        %v1170 = vrsqrt.pop %v1162
        %v1171 = vrsqrt.pop %v1163
        %v1172 = vrsqrt.pop %v1164
        %v1173 = vmul.f32 %v1093, %v1165
        %v1174 = vmul.f32 %v1094, %v1165
        %v1175 = vmul.f32 %v1095, %v1166
        %v1176 = vmul.f32 %v1096, %v1166
        %v1177 = vmul.f32 %v1097, %v1167
        %v1178 = vmul.f32 %v1098, %v1167
        %v1179 = vmul.f32 %v1099, %v1168
        %v1180 = vmul.f32 %v1100, %v1168
        %v1181 = vmul.f32 %v1101, %v1169
        %v1182 = vmul.f32 %v1102, %v1169
        %v1183 = vmul.f32 %v1103, %v1170
        %v1184 = vmul.f32 %v1104, %v1170
        %v1185 = vmul.f32 %v1105, %v1171
        %v1186 = vmul.f32 %v1106, %v1171
        %v1187 = vmul.f32 %v1107, %v1172
        %v1188 = vmul.f32 %v1108, %v1172
        %v1190 = vlaneseq
        %v1191 = vshrl.u32 %v1190, 7
        %v1192 = vsub.s32 0, %v1191
        %v1193 = vrot.slane %v1058, %v1192
        %v1194 = vlaneseq
        %v1195 = vshrl.u32 %v1194, 7
        %v1196 = vsub.s32 1, %v1195
        %v1197 = vrot.slane %v1058, %v1196
        %v1200 = vmul.f32 %v1173, %v1193
        %v1201 = vmul.f32 %v1174, %v1197
        %v1202 = vmul.f32 %v1175, %v1193
        %v1203 = vmul.f32 %v1176, %v1197
        %v1204 = vmul.f32 %v1177, %v1193
        %v1205 = vmul.f32 %v1178, %v1197
        %v1206 = vmul.f32 %v1179, %v1193
        %v1207 = vmul.f32 %v1180, %v1197
        %v1208 = vmul.f32 %v1181, %v1193
        %v1209 = vmul.f32 %v1182, %v1197
        %v1210 = vmul.f32 %v1183, %v1193
        %v1211 = vmul.f32 %v1184, %v1197
        %v1212 = vmul.f32 %v1185, %v1193
        %v1213 = vmul.f32 %v1186, %v1197
        %v1214 = vmul.f32 %v1187, %v1193
        %v1215 = vmul.f32 %v1188, %v1197
        %v1217 = vlaneseq
        %v1218 = vshrl.u32 %v1217, 7
        %v1219 = vsub.s32 0, %v1218
        %v1220 = vrot.slane %v1059, %v1219
        %v1221 = vlaneseq
        %v1222 = vshrl.u32 %v1221, 7
        %v1223 = vsub.s32 1, %v1222
        %v1224 = vrot.slane %v1059, %v1223
        %v1227 = vadd.f32 %v1200, %v1220
        %v1228 = vadd.f32 %v1201, %v1224
        %v1229 = vadd.f32 %v1202, %v1220
        %v1230 = vadd.f32 %v1203, %v1224
        %v1231 = vadd.f32 %v1204, %v1220
        %v1232 = vadd.f32 %v1205, %v1224
        %v1233 = vadd.f32 %v1206, %v1220
        %v1234 = vadd.f32 %v1207, %v1224
        %v1235 = vadd.f32 %v1208, %v1220
        %v1236 = vadd.f32 %v1209, %v1224
        %v1237 = vadd.f32 %v1210, %v1220
        %v1238 = vadd.f32 %v1211, %v1224
        %v1239 = vadd.f32 %v1212, %v1220
        %v1240 = vadd.f32 %v1213, %v1224
        %v1241 = vadd.f32 %v1214, %v1220
        %v1242 = vadd.f32 %v1215, %v1224
        %v1243 = vpack.c.bf16 %v1229, %v1227
        %v1244 = vpack.c.bf16 %v1230, %v1228
        %v1245 = vpack.c.bf16 %v1233, %v1231
        %v1246 = vpack.c.bf16 %v1234, %v1232
        %v1247 = vpack.c.bf16 %v1237, %v1235
        %v1248 = vpack.c.bf16 %v1238, %v1236
        %v1249 = vpack.c.bf16 %v1241, %v1239
        %v1250 = vpack.c.bf16 %v1242, %v1240
        %v1251 = vld [vmem:[%s1004] sm:$0xff]
        %v1252 = vld [vmem:[%s1004 + $0x8] sm:$0xff]
        %v1253 = vld [vmem:[%s1004 + $0x10] sm:$0xff]
        %v1254 = vld [vmem:[%s1004 + $0x18] sm:$0xff]
        %v1255 = vld [vmem:[%s1004 + $0x20] sm:$0xff]
        %v1256 = vld [vmem:[%s1004 + $0x28] sm:$0xff]
        %v1257 = vld [vmem:[%s1004 + $0x30] sm:$0xff]
        %v1258 = vld [vmem:[%s1004 + $0x38] sm:$0xff]
        %v1259 = vld [vmem:[%s1004 + $0x40] sm:$0xff]
        %v1260 = vld [vmem:[%s1004 + $0x48] sm:$0xff]
        %v1261 = vld [vmem:[%s1004 + $0x50] sm:$0xff]
        %v1262 = vld [vmem:[%s1004 + $0x58] sm:$0xff]
        %v1263 = vld [vmem:[%s1004 + $0x60] sm:$0xff]
        %v1264 = vld [vmem:[%s1004 + $0x68] sm:$0xff]
        %v1265 = vld [vmem:[%s1004 + $0x70] sm:$0xff]
        %v1266 = vld [vmem:[%s1004 + $0x78] sm:$0xff]
        %v1267 = vld [vmem:[%s1004 + $0x80] sm:$0xff]
        %v1268 = vld [vmem:[%s1004 + $0x88] sm:$0xff]
        %v1269 = vld [vmem:[%s1004 + $0x90] sm:$0xff]
        %v1270 = vld [vmem:[%s1004 + $0x98] sm:$0xff]
        %v1271 = vld [vmem:[%s1004 + $0xa0] sm:$0xff]
        %v1272 = vld [vmem:[%s1004 + $0xa8] sm:$0xff]
        %v1273 = vld [vmem:[%s1004 + $0xb0] sm:$0xff]
        %v1274 = vld [vmem:[%s1004 + $0xb8] sm:$0xff]
        %v1275 = vld [vmem:[%s1004 + $0xc0] sm:$0xff]
        %v1276 = vld [vmem:[%s1004 + $0xc8] sm:$0xff]
        %v1277 = vld [vmem:[%s1004 + $0xd0] sm:$0xff]
        %v1278 = vld [vmem:[%s1004 + $0xd8] sm:$0xff]
        %v1279 = vld [vmem:[%s1004 + $0xe0] sm:$0xff]
        %v1280 = vld [vmem:[%s1004 + $0xe8] sm:$0xff]
        %v1281 = vld [vmem:[%s1004 + $0xf0] sm:$0xff]
        %v1282 = vld [vmem:[%s1004 + $0xf8] sm:$0xff]
        %v1283 = vld [vmem:[%s1004 + $0x100] sm:$0xff]
        %v1284 = vld [vmem:[%s1004 + $0x108] sm:$0xff]
        %v1285 = vld [vmem:[%s1004 + $0x110] sm:$0xff]
        %v1286 = vld [vmem:[%s1004 + $0x118] sm:$0xff]
        %v1287 = vld [vmem:[%s1004 + $0x120] sm:$0xff]
        %v1288 = vld [vmem:[%s1004 + $0x128] sm:$0xff]
        %v1289 = vld [vmem:[%s1004 + $0x130] sm:$0xff]
        %v1290 = vld [vmem:[%s1004 + $0x138] sm:$0xff]
        %v1291 = vld [vmem:[%s1004 + $0x140] sm:$0xff]
        %v1292 = vld [vmem:[%s1004 + $0x148] sm:$0xff]
        %v1293 = vld [vmem:[%s1004 + $0x150] sm:$0xff]
        %v1294 = vld [vmem:[%s1004 + $0x158] sm:$0xff]
        %v1295 = vld [vmem:[%s1004 + $0x160] sm:$0xff]
        %v1296 = vld [vmem:[%s1004 + $0x168] sm:$0xff]
        %v1297 = vld [vmem:[%s1004 + $0x170] sm:$0xff]
        %v1298 = vld [vmem:[%s1004 + $0x178] sm:$0xff]
        %v1299 = vld [vmem:[%s1004 + $0x180] sm:$0xff]
        %v1300 = vld [vmem:[%s1004 + $0x188] sm:$0xff]
        %v1301 = vld [vmem:[%s1004 + $0x190] sm:$0xff]
        %v1302 = vld [vmem:[%s1004 + $0x198] sm:$0xff]
        %v1303 = vld [vmem:[%s1004 + $0x1a0] sm:$0xff]
        %v1304 = vld [vmem:[%s1004 + $0x1a8] sm:$0xff]
        %v1305 = vld [vmem:[%s1004 + $0x1b0] sm:$0xff]
        %v1306 = vld [vmem:[%s1004 + $0x1b8] sm:$0xff]
        %v1307 = vld [vmem:[%s1004 + $0x1c0] sm:$0xff]
        %v1308 = vld [vmem:[%s1004 + $0x1c8] sm:$0xff]
        %v1309 = vld [vmem:[%s1004 + $0x1d0] sm:$0xff]
        %v1310 = vld [vmem:[%s1004 + $0x1d8] sm:$0xff]
        %v1311 = vld [vmem:[%s1004 + $0x1e0] sm:$0xff]
        %v1312 = vld [vmem:[%s1004 + $0x1e8] sm:$0xff]
        %v1313 = vld [vmem:[%s1004 + $0x1f0] sm:$0xff]
        %v1314 = vld [vmem:[%s1004 + $0x1f8] sm:$0xff]
        %v1315 = vld [vmem:[%s1004 + $0x200] sm:$0xff]
        %v1316 = vld [vmem:[%s1004 + $0x208] sm:$0xff]
        %v1317 = vld [vmem:[%s1004 + $0x210] sm:$0xff]
        %v1318 = vld [vmem:[%s1004 + $0x218] sm:$0xff]
        %v1319 = vld [vmem:[%s1004 + $0x220] sm:$0xff]
        %v1320 = vld [vmem:[%s1004 + $0x228] sm:$0xff]
        %v1321 = vld [vmem:[%s1004 + $0x230] sm:$0xff]
        %v1322 = vld [vmem:[%s1004 + $0x238] sm:$0xff]
        %v1323 = vld [vmem:[%s1004 + $0x240] sm:$0xff]
        %v1324 = vld [vmem:[%s1004 + $0x248] sm:$0xff]
        %v1325 = vld [vmem:[%s1004 + $0x250] sm:$0xff]
        %v1326 = vld [vmem:[%s1004 + $0x258] sm:$0xff]
        %v1327 = vld [vmem:[%s1004 + $0x260] sm:$0xff]
        %v1328 = vld [vmem:[%s1004 + $0x268] sm:$0xff]
        %v1329 = vld [vmem:[%s1004 + $0x270] sm:$0xff]
        %v1330 = vld [vmem:[%s1004 + $0x278] sm:$0xff]
        %v1331 = vld [vmem:[%s1004 + $0x280] sm:$0xff]
        %v1332 = vld [vmem:[%s1004 + $0x288] sm:$0xff]
        %v1333 = vld [vmem:[%s1004 + $0x290] sm:$0xff]
        %v1334 = vld [vmem:[%s1004 + $0x298] sm:$0xff]
        %v1335 = vld [vmem:[%s1004 + $0x2a0] sm:$0xff]
        %v1336 = vld [vmem:[%s1004 + $0x2a8] sm:$0xff]
        %v1337 = vld [vmem:[%s1004 + $0x2b0] sm:$0xff]
        %v1338 = vld [vmem:[%s1004 + $0x2b8] sm:$0xff]
        %v1339 = vld [vmem:[%s1004 + $0x2c0] sm:$0xff]
        %v1340 = vld [vmem:[%s1004 + $0x2c8] sm:$0xff]
        %v1341 = vld [vmem:[%s1004 + $0x2d0] sm:$0xff]
        %v1342 = vld [vmem:[%s1004 + $0x2d8] sm:$0xff]
        %v1343 = vld [vmem:[%s1004 + $0x2e0] sm:$0xff]
        %v1344 = vld [vmem:[%s1004 + $0x2e8] sm:$0xff]
        %v1345 = vld [vmem:[%s1004 + $0x2f0] sm:$0xff]
        %v1346 = vld [vmem:[%s1004 + $0x2f8] sm:$0xff]
        %v1443 = vunpack.c.l.b16 %v1251
        %v1444 = vunpack.c.h.b16 %v1251
        %v1445 = vunpack.c.l.b16 %v1252
        %v1446 = vunpack.c.h.b16 %v1252
        %v1447 = vunpack.c.l.b16 %v1253
        %v1448 = vunpack.c.h.b16 %v1253
        %v1449 = vunpack.c.l.b16 %v1254
        %v1450 = vunpack.c.h.b16 %v1254
        %v1451 = vunpack.c.l.b16 %v1255
        %v1452 = vunpack.c.h.b16 %v1255
        %v1453 = vunpack.c.l.b16 %v1256
        %v1454 = vunpack.c.h.b16 %v1256
        %v1455 = vunpack.c.l.b16 %v1257
        %v1456 = vunpack.c.h.b16 %v1257
        %v1457 = vunpack.c.l.b16 %v1258
        %v1458 = vunpack.c.h.b16 %v1258
        %v1459 = vunpack.c.l.b16 %v1259
        %v1460 = vunpack.c.h.b16 %v1259
        %v1461 = vunpack.c.l.b16 %v1260
        %v1462 = vunpack.c.h.b16 %v1260
        %v1463 = vunpack.c.l.b16 %v1261
        %v1464 = vunpack.c.h.b16 %v1261
        %v1465 = vunpack.c.l.b16 %v1262
        %v1466 = vunpack.c.h.b16 %v1262
        %v1467 = vunpack.c.l.b16 %v1263
        %v1468 = vunpack.c.h.b16 %v1263
        %v1469 = vunpack.c.l.b16 %v1264
        %v1470 = vunpack.c.h.b16 %v1264
        %v1471 = vunpack.c.l.b16 %v1265
        %v1472 = vunpack.c.h.b16 %v1265
        %v1473 = vunpack.c.l.b16 %v1266
        %v1474 = vunpack.c.h.b16 %v1266
        %v1475 = vunpack.c.l.b16 %v1267
        %v1476 = vunpack.c.h.b16 %v1267
        %v1477 = vunpack.c.l.b16 %v1268
        %v1478 = vunpack.c.h.b16 %v1268
        %v1479 = vunpack.c.l.b16 %v1269
        %v1480 = vunpack.c.h.b16 %v1269
        %v1481 = vunpack.c.l.b16 %v1270
        %v1482 = vunpack.c.h.b16 %v1270
        %v1483 = vunpack.c.l.b16 %v1271
        %v1484 = vunpack.c.h.b16 %v1271
        %v1485 = vunpack.c.l.b16 %v1272
        %v1486 = vunpack.c.h.b16 %v1272
        %v1487 = vunpack.c.l.b16 %v1273
        %v1488 = vunpack.c.h.b16 %v1273
        %v1489 = vunpack.c.l.b16 %v1274
        %v1490 = vunpack.c.h.b16 %v1274
        %v1491 = vunpack.c.l.b16 %v1275
        %v1492 = vunpack.c.h.b16 %v1275
        %v1493 = vunpack.c.l.b16 %v1276
        %v1494 = vunpack.c.h.b16 %v1276
        %v1495 = vunpack.c.l.b16 %v1277
        %v1496 = vunpack.c.h.b16 %v1277
        %v1497 = vunpack.c.l.b16 %v1278
        %v1498 = vunpack.c.h.b16 %v1278
        %v1499 = vunpack.c.l.b16 %v1279
        %v1500 = vunpack.c.h.b16 %v1279
        %v1501 = vunpack.c.l.b16 %v1280
        %v1502 = vunpack.c.h.b16 %v1280
        %v1503 = vunpack.c.l.b16 %v1281
        %v1504 = vunpack.c.h.b16 %v1281
        %v1505 = vunpack.c.l.b16 %v1282
        %v1506 = vunpack.c.h.b16 %v1282
        %v1507 = vunpack.c.l.b16 %v1283
        %v1508 = vunpack.c.h.b16 %v1283
        %v1509 = vunpack.c.l.b16 %v1284
        %v1510 = vunpack.c.h.b16 %v1284
        %v1511 = vunpack.c.l.b16 %v1285
        %v1512 = vunpack.c.h.b16 %v1285
        %v1513 = vunpack.c.l.b16 %v1286
        %v1514 = vunpack.c.h.b16 %v1286
        %v1515 = vunpack.c.l.b16 %v1287
        %v1516 = vunpack.c.h.b16 %v1287
        %v1517 = vunpack.c.l.b16 %v1288
        %v1518 = vunpack.c.h.b16 %v1288
        %v1519 = vunpack.c.l.b16 %v1289
        %v1520 = vunpack.c.h.b16 %v1289
        %v1521 = vunpack.c.l.b16 %v1290
        %v1522 = vunpack.c.h.b16 %v1290
        %v1523 = vunpack.c.l.b16 %v1291
        %v1524 = vunpack.c.h.b16 %v1291
        %v1525 = vunpack.c.l.b16 %v1292
        %v1526 = vunpack.c.h.b16 %v1292
        %v1527 = vunpack.c.l.b16 %v1293
        %v1528 = vunpack.c.h.b16 %v1293
        %v1529 = vunpack.c.l.b16 %v1294
        %v1530 = vunpack.c.h.b16 %v1294
        %v1531 = vunpack.c.l.b16 %v1295
        %v1532 = vunpack.c.h.b16 %v1295
        %v1533 = vunpack.c.l.b16 %v1296
        %v1534 = vunpack.c.h.b16 %v1296
        %v1535 = vunpack.c.l.b16 %v1297
        %v1536 = vunpack.c.h.b16 %v1297
        %v1537 = vunpack.c.l.b16 %v1298
        %v1538 = vunpack.c.h.b16 %v1298
        %v1539 = vunpack.c.l.b16 %v1299
        %v1540 = vunpack.c.h.b16 %v1299
        %v1541 = vunpack.c.l.b16 %v1300
        %v1542 = vunpack.c.h.b16 %v1300
        %v1543 = vunpack.c.l.b16 %v1301
        %v1544 = vunpack.c.h.b16 %v1301
        %v1545 = vunpack.c.l.b16 %v1302
        %v1546 = vunpack.c.h.b16 %v1302
        %v1547 = vunpack.c.l.b16 %v1303
        %v1548 = vunpack.c.h.b16 %v1303
        %v1549 = vunpack.c.l.b16 %v1304
        %v1550 = vunpack.c.h.b16 %v1304
        %v1551 = vunpack.c.l.b16 %v1305
        %v1552 = vunpack.c.h.b16 %v1305
        %v1553 = vunpack.c.l.b16 %v1306
        %v1554 = vunpack.c.h.b16 %v1306
        %v1555 = vunpack.c.l.b16 %v1307
        %v1556 = vunpack.c.h.b16 %v1307
        %v1557 = vunpack.c.l.b16 %v1308
        %v1558 = vunpack.c.h.b16 %v1308
        %v1559 = vunpack.c.l.b16 %v1309
        %v1560 = vunpack.c.h.b16 %v1309
        %v1561 = vunpack.c.l.b16 %v1310
        %v1562 = vunpack.c.h.b16 %v1310
        %v1563 = vunpack.c.l.b16 %v1311
        %v1564 = vunpack.c.h.b16 %v1311
        %v1565 = vunpack.c.l.b16 %v1312
        %v1566 = vunpack.c.h.b16 %v1312
        %v1567 = vunpack.c.l.b16 %v1313
        %v1568 = vunpack.c.h.b16 %v1313
        %v1569 = vunpack.c.l.b16 %v1314
        %v1570 = vunpack.c.h.b16 %v1314
        %v1571 = vunpack.c.l.b16 %v1315
        %v1572 = vunpack.c.h.b16 %v1315
        %v1573 = vunpack.c.l.b16 %v1316
        %v1574 = vunpack.c.h.b16 %v1316
        %v1575 = vunpack.c.l.b16 %v1317
        %v1576 = vunpack.c.h.b16 %v1317
        %v1577 = vunpack.c.l.b16 %v1318
        %v1578 = vunpack.c.h.b16 %v1318
        %v1579 = vunpack.c.l.b16 %v1319
        %v1580 = vunpack.c.h.b16 %v1319
        %v1581 = vunpack.c.l.b16 %v1320
        %v1582 = vunpack.c.h.b16 %v1320
        %v1583 = vunpack.c.l.b16 %v1321
        %v1584 = vunpack.c.h.b16 %v1321
        %v1585 = vunpack.c.l.b16 %v1322
        %v1586 = vunpack.c.h.b16 %v1322
        %v1587 = vunpack.c.l.b16 %v1323
        %v1588 = vunpack.c.h.b16 %v1323
        %v1589 = vunpack.c.l.b16 %v1324
        %v1590 = vunpack.c.h.b16 %v1324
        %v1591 = vunpack.c.l.b16 %v1325
        %v1592 = vunpack.c.h.b16 %v1325
        %v1593 = vunpack.c.l.b16 %v1326
        %v1594 = vunpack.c.h.b16 %v1326
        %v1595 = vunpack.c.l.b16 %v1327
        %v1596 = vunpack.c.h.b16 %v1327
        %v1597 = vunpack.c.l.b16 %v1328
        %v1598 = vunpack.c.h.b16 %v1328
        %v1599 = vunpack.c.l.b16 %v1329
        %v1600 = vunpack.c.h.b16 %v1329
        %v1601 = vunpack.c.l.b16 %v1330
        %v1602 = vunpack.c.h.b16 %v1330
        %v1603 = vunpack.c.l.b16 %v1331
        %v1604 = vunpack.c.h.b16 %v1331
        %v1605 = vunpack.c.l.b16 %v1332
        %v1606 = vunpack.c.h.b16 %v1332
        %v1607 = vunpack.c.l.b16 %v1333
        %v1608 = vunpack.c.h.b16 %v1333
        %v1609 = vunpack.c.l.b16 %v1334
        %v1610 = vunpack.c.h.b16 %v1334
        %v1611 = vunpack.c.l.b16 %v1335
        %v1612 = vunpack.c.h.b16 %v1335
        %v1613 = vunpack.c.l.b16 %v1336
        %v1614 = vunpack.c.h.b16 %v1336
        %v1615 = vunpack.c.l.b16 %v1337
        %v1616 = vunpack.c.h.b16 %v1337
        %v1617 = vunpack.c.l.b16 %v1338
        %v1618 = vunpack.c.h.b16 %v1338
        %v1619 = vunpack.c.l.b16 %v1339
        %v1620 = vunpack.c.h.b16 %v1339
        %v1621 = vunpack.c.l.b16 %v1340
        %v1622 = vunpack.c.h.b16 %v1340
        %v1623 = vunpack.c.l.b16 %v1341
        %v1624 = vunpack.c.h.b16 %v1341
        %v1625 = vunpack.c.l.b16 %v1342
        %v1626 = vunpack.c.h.b16 %v1342
        %v1627 = vunpack.c.l.b16 %v1343
        %v1628 = vunpack.c.h.b16 %v1343
        %v1629 = vunpack.c.l.b16 %v1344
        %v1630 = vunpack.c.h.b16 %v1344
        %v1631 = vunpack.c.l.b16 %v1345
        %v1632 = vunpack.c.h.b16 %v1345
        %v1633 = vunpack.c.l.b16 %v1346
        %v1634 = vunpack.c.h.b16 %v1346
        %v1635 = vpack.c.b16 %v1449, %v1443
        %v1636 = vpack.c.b16 %v1450, %v1444
        %v1637 = vpack.c.b16 %v1451, %v1445
        %v1638 = vpack.c.b16 %v1452, %v1446
        %v1639 = vpack.c.b16 %v1453, %v1447
        %v1640 = vpack.c.b16 %v1454, %v1448
        %v1641 = vpack.c.b16 %v1461, %v1455
        %v1642 = vpack.c.b16 %v1462, %v1456
        %v1643 = vpack.c.b16 %v1463, %v1457
        %v1644 = vpack.c.b16 %v1464, %v1458
        %v1645 = vpack.c.b16 %v1465, %v1459
        %v1646 = vpack.c.b16 %v1466, %v1460
        %v1647 = vpack.c.b16 %v1473, %v1467
        %v1648 = vpack.c.b16 %v1474, %v1468
        %v1649 = vpack.c.b16 %v1475, %v1469
        %v1650 = vpack.c.b16 %v1476, %v1470
        %v1651 = vpack.c.b16 %v1477, %v1471
        %v1652 = vpack.c.b16 %v1478, %v1472
        %v1653 = vpack.c.b16 %v1485, %v1479
        %v1654 = vpack.c.b16 %v1486, %v1480
        %v1655 = vpack.c.b16 %v1487, %v1481
        %v1656 = vpack.c.b16 %v1488, %v1482
        %v1657 = vpack.c.b16 %v1489, %v1483
        %v1658 = vpack.c.b16 %v1490, %v1484
        %v1659 = vpack.c.b16 %v1497, %v1491
        %v1660 = vpack.c.b16 %v1498, %v1492
        %v1661 = vpack.c.b16 %v1499, %v1493
        %v1662 = vpack.c.b16 %v1500, %v1494
        %v1663 = vpack.c.b16 %v1501, %v1495
        %v1664 = vpack.c.b16 %v1502, %v1496
        %v1665 = vpack.c.b16 %v1509, %v1503
        %v1666 = vpack.c.b16 %v1510, %v1504
        %v1667 = vpack.c.b16 %v1511, %v1505
        %v1668 = vpack.c.b16 %v1512, %v1506
        %v1669 = vpack.c.b16 %v1513, %v1507
        %v1670 = vpack.c.b16 %v1514, %v1508
        %v1671 = vpack.c.b16 %v1521, %v1515
        %v1672 = vpack.c.b16 %v1522, %v1516
        %v1673 = vpack.c.b16 %v1523, %v1517
        %v1674 = vpack.c.b16 %v1524, %v1518
        %v1675 = vpack.c.b16 %v1525, %v1519
        %v1676 = vpack.c.b16 %v1526, %v1520
        %v1677 = vpack.c.b16 %v1533, %v1527
        %v1678 = vpack.c.b16 %v1534, %v1528
        %v1679 = vpack.c.b16 %v1535, %v1529
        %v1680 = vpack.c.b16 %v1536, %v1530
        %v1681 = vpack.c.b16 %v1537, %v1531
        %v1682 = vpack.c.b16 %v1538, %v1532
        %v1683 = vpack.c.b16 %v1545, %v1539
        %v1684 = vpack.c.b16 %v1546, %v1540
        %v1685 = vpack.c.b16 %v1547, %v1541
        %v1686 = vpack.c.b16 %v1548, %v1542
        %v1687 = vpack.c.b16 %v1549, %v1543
        %v1688 = vpack.c.b16 %v1550, %v1544
        %v1689 = vpack.c.b16 %v1557, %v1551
        %v1690 = vpack.c.b16 %v1558, %v1552
        %v1691 = vpack.c.b16 %v1559, %v1553
        %v1692 = vpack.c.b16 %v1560, %v1554
        %v1693 = vpack.c.b16 %v1561, %v1555
        %v1694 = vpack.c.b16 %v1562, %v1556
        %v1695 = vpack.c.b16 %v1569, %v1563
        %v1696 = vpack.c.b16 %v1570, %v1564
        %v1697 = vpack.c.b16 %v1571, %v1565
        %v1698 = vpack.c.b16 %v1572, %v1566
        %v1699 = vpack.c.b16 %v1573, %v1567
        %v1700 = vpack.c.b16 %v1574, %v1568
        %v1701 = vpack.c.b16 %v1581, %v1575
        %v1702 = vpack.c.b16 %v1582, %v1576
        %v1703 = vpack.c.b16 %v1583, %v1577
        %v1704 = vpack.c.b16 %v1584, %v1578
        %v1705 = vpack.c.b16 %v1585, %v1579
        %v1706 = vpack.c.b16 %v1586, %v1580
        %v1707 = vpack.c.b16 %v1593, %v1587
        %v1708 = vpack.c.b16 %v1594, %v1588
        %v1709 = vpack.c.b16 %v1595, %v1589
        %v1710 = vpack.c.b16 %v1596, %v1590
        %v1711 = vpack.c.b16 %v1597, %v1591
        %v1712 = vpack.c.b16 %v1598, %v1592
        %v1713 = vpack.c.b16 %v1605, %v1599
        %v1714 = vpack.c.b16 %v1606, %v1600
        %v1715 = vpack.c.b16 %v1607, %v1601
        %v1716 = vpack.c.b16 %v1608, %v1602
        %v1717 = vpack.c.b16 %v1609, %v1603
        %v1718 = vpack.c.b16 %v1610, %v1604
        %v1719 = vpack.c.b16 %v1617, %v1611
        %v1720 = vpack.c.b16 %v1618, %v1612
        %v1721 = vpack.c.b16 %v1619, %v1613
        %v1722 = vpack.c.b16 %v1620, %v1614
        %v1723 = vpack.c.b16 %v1621, %v1615
        %v1724 = vpack.c.b16 %v1622, %v1616
        %v1725 = vpack.c.b16 %v1629, %v1623
        %v1726 = vpack.c.b16 %v1630, %v1624
        %v1727 = vpack.c.b16 %v1631, %v1625
        %v1728 = vpack.c.b16 %v1632, %v1626
        %v1729 = vpack.c.b16 %v1633, %v1627
        %v1730 = vpack.c.b16 %v1634, %v1628
        %1827 = vmatprep.subr.bf16.mxu0 %v1678
        %1828 = vmatpush1.bf16.msra.mxu0 %v1677
        %1829 = vmatprep.subr.bf16.mxu0 %v1672
        %1830 = vmatpush1.bf16.msra.mxu0 %v1671
        %1831 = vmatprep.subr.bf16.mxu0 %v1666
        %1832 = vmatpush1.bf16.msra.mxu0 %v1665
        %1833 = vmatprep.subr.bf16.mxu0 %v1660
        %1834 = vmatpush1.bf16.msra.mxu0 %v1659
        %1835 = vmatprep.subr.bf16.mxu0 %v1654
        %1836 = vmatpush1.bf16.msra.mxu0 %v1653
        %1837 = vmatprep.subr.bf16.mxu0 %v1648
        %1838 = vmatpush1.bf16.msra.mxu0 %v1647
        %1839 = vmatprep.subr.bf16.mxu0 %v1642
        %1840 = vmatpush1.bf16.msra.mxu0 %v1641
        %1841 = vmatprep.subr.bf16.mxu0 %v1636
        %1842 = vmatpush1.bf16.msra.mxu0 %v1635
        %1843 = vmatprep.subr.bf16.mxu0 %v1726
        %1844 = vmatpush2.bf16.msra.mxu0 %v1725
        %1845 = vmatprep.subr.bf16.mxu0 %v1720
        %1846 = vmatpush2.bf16.msra.mxu0 %v1719
        %1847 = vmatprep.subr.bf16.mxu0 %v1714
        %1848 = vmatpush2.bf16.msra.mxu0 %v1713
        %1849 = vmatprep.subr.bf16.mxu0 %v1708
        %1850 = vmatpush2.bf16.msra.mxu0 %v1707
        %1851 = vmatprep.subr.bf16.mxu0 %v1702
        %1852 = vmatpush2.bf16.msra.mxu0 %v1701
        %1853 = vmatprep.subr.bf16.mxu0 %v1696
        %1854 = vmatpush2.bf16.msra.mxu0 %v1695
        %1855 = vmatprep.subr.bf16.mxu0 %v1690
        %1856 = vmatpush2.bf16.msra.mxu0 %v1689
        %1857 = vmatprep.subr.bf16.mxu0 %v1684
        %1858 = vmatpush2.bf16.msra.mxu0 %v1683
        %1859 = vmatprep.mubr.bf16.mxu0 %v1244
        %1860 = vmatmul.mubr.bf16.gmra.mxu0 %v1243
        %v1861 = vpop.f32.mrf.mxu0
        %v1862 = vadd.f32 0.0, %v1861
        %v1863 = vpop.f32.mrf.mxu0
        %v1864 = vadd.f32 0.0, %v1863
        %v1865 = vpop.f32.mrf.mxu0
        %v1866 = vadd.f32 0.0, %v1865
        %v1867 = vpop.f32.mrf.mxu0
        %v1868 = vadd.f32 0.0, %v1867
        %1869 = vmatprep.mubr.bf16.mxu0 %v1246
        %1870 = vmatmul.mubr.bf16.gmra.mxu0 %v1245
        %v1871 = vpop.f32.mrf.mxu0
        %v1872 = vadd.f32 0.0, %v1871
        %v1873 = vpop.f32.mrf.mxu0
        %v1874 = vadd.f32 0.0, %v1873
        %v1875 = vpop.f32.mrf.mxu0
        %v1876 = vadd.f32 0.0, %v1875
        %v1877 = vpop.f32.mrf.mxu0
        %v1878 = vadd.f32 0.0, %v1877
        %1879 = vmatprep.mubr.bf16.mxu0 %v1248
        %1880 = vmatmul.mubr.bf16.gmra.mxu0 %v1247
        %v1881 = vpop.f32.mrf.mxu0
        %v1882 = vadd.f32 0.0, %v1881
        %v1883 = vpop.f32.mrf.mxu0
        %v1884 = vadd.f32 0.0, %v1883
        %v1885 = vpop.f32.mrf.mxu0
        %v1886 = vadd.f32 0.0, %v1885
        %v1887 = vpop.f32.mrf.mxu0
        %v1888 = vadd.f32 0.0, %v1887
        %1889 = vmatprep.mubr.bf16.mxu0 %v1250
        %1890 = vmatmul.mubr.bf16.gmra.mxu0 %v1249
        %v1891 = vpop.f32.mrf.mxu0
        %v1892 = vadd.f32 0.0, %v1891
        %v1893 = vpop.f32.mrf.mxu0
        %v1894 = vadd.f32 0.0, %v1893
        %v1895 = vpop.f32.mrf.mxu0
        %v1896 = vadd.f32 0.0, %v1895
        %v1897 = vpop.f32.mrf.mxu0
        %v1898 = vadd.f32 0.0, %v1897
        %1899 = vdwg.mxu0
        %1900 = vmatprep.subr.bf16.mxu0 %v1680
        %1901 = vmatpush1.bf16.msra.mxu0 %v1679
        %1902 = vmatprep.subr.bf16.mxu0 %v1674
        %1903 = vmatpush1.bf16.msra.mxu0 %v1673
        %1904 = vmatprep.subr.bf16.mxu0 %v1668
        %1905 = vmatpush1.bf16.msra.mxu0 %v1667
        %1906 = vmatprep.subr.bf16.mxu0 %v1662
        %1907 = vmatpush1.bf16.msra.mxu0 %v1661
        %1908 = vmatprep.subr.bf16.mxu0 %v1656
        %1909 = vmatpush1.bf16.msra.mxu0 %v1655
        %1910 = vmatprep.subr.bf16.mxu0 %v1650
        %1911 = vmatpush1.bf16.msra.mxu0 %v1649
        %1912 = vmatprep.subr.bf16.mxu0 %v1644
        %1913 = vmatpush1.bf16.msra.mxu0 %v1643
        %1914 = vmatprep.subr.bf16.mxu0 %v1638
        %1915 = vmatpush1.bf16.msra.mxu0 %v1637
        %1916 = vmatprep.subr.bf16.mxu0 %v1728
        %1917 = vmatpush2.bf16.msra.mxu0 %v1727
        %1918 = vmatprep.subr.bf16.mxu0 %v1722
        %1919 = vmatpush2.bf16.msra.mxu0 %v1721
        %1920 = vmatprep.subr.bf16.mxu0 %v1716
        %1921 = vmatpush2.bf16.msra.mxu0 %v1715
        %1922 = vmatprep.subr.bf16.mxu0 %v1710
        %1923 = vmatpush2.bf16.msra.mxu0 %v1709
        %1924 = vmatprep.subr.bf16.mxu0 %v1704
        %1925 = vmatpush2.bf16.msra.mxu0 %v1703
        %1926 = vmatprep.subr.bf16.mxu0 %v1698
        %1927 = vmatpush2.bf16.msra.mxu0 %v1697
        %1928 = vmatprep.subr.bf16.mxu0 %v1692
        %1929 = vmatpush2.bf16.msra.mxu0 %v1691
        %1930 = vmatprep.subr.bf16.mxu0 %v1686
        %1931 = vmatpush2.bf16.msra.mxu0 %v1685
        %1932 = vmatprep.mubr.bf16.mxu0 %v1244
        %1933 = vmatmul.mubr.bf16.gmra.mxu0 %v1243
        %v1934 = vpop.f32.mrf.mxu0
        %v1935 = vadd.f32 0.0, %v1934
        %v1936 = vpop.f32.mrf.mxu0
        %v1937 = vadd.f32 0.0, %v1936
        %v1938 = vpop.f32.mrf.mxu0
        %v1939 = vadd.f32 0.0, %v1938
        %v1940 = vpop.f32.mrf.mxu0
        %v1941 = vadd.f32 0.0, %v1940
        %1942 = vmatprep.mubr.bf16.mxu0 %v1246
        %1943 = vmatmul.mubr.bf16.gmra.mxu0 %v1245
        %v1944 = vpop.f32.mrf.mxu0
        %v1945 = vadd.f32 0.0, %v1944
        %v1946 = vpop.f32.mrf.mxu0
        %v1947 = vadd.f32 0.0, %v1946
        %v1948 = vpop.f32.mrf.mxu0
        %v1949 = vadd.f32 0.0, %v1948
        %v1950 = vpop.f32.mrf.mxu0
        %v1951 = vadd.f32 0.0, %v1950
        %1952 = vmatprep.mubr.bf16.mxu0 %v1248
        %1953 = vmatmul.mubr.bf16.gmra.mxu0 %v1247
        %v1954 = vpop.f32.mrf.mxu0
        %v1955 = vadd.f32 0.0, %v1954
        %v1956 = vpop.f32.mrf.mxu0
        %v1957 = vadd.f32 0.0, %v1956
        %v1958 = vpop.f32.mrf.mxu0
        %v1959 = vadd.f32 0.0, %v1958
        %v1960 = vpop.f32.mrf.mxu0
        %v1961 = vadd.f32 0.0, %v1960
        %1962 = vmatprep.mubr.bf16.mxu0 %v1250
        %1963 = vmatmul.mubr.bf16.gmra.mxu0 %v1249
        %v1964 = vpop.f32.mrf.mxu0
        %v1965 = vadd.f32 0.0, %v1964
        %v1966 = vpop.f32.mrf.mxu0
        %v1967 = vadd.f32 0.0, %v1966
        %v1968 = vpop.f32.mrf.mxu0
        %v1969 = vadd.f32 0.0, %v1968
        %v1970 = vpop.f32.mrf.mxu0
        %v1971 = vadd.f32 0.0, %v1970
        %1972 = vdwg.mxu0
        %1973 = vmatprep.subr.bf16.mxu0 %v1682
        %1974 = vmatpush1.bf16.msra.mxu0 %v1681
        %1975 = vmatprep.subr.bf16.mxu0 %v1676
        %1976 = vmatpush1.bf16.msra.mxu0 %v1675
        %1977 = vmatprep.subr.bf16.mxu0 %v1670
        %1978 = vmatpush1.bf16.msra.mxu0 %v1669
        %1979 = vmatprep.subr.bf16.mxu0 %v1664
        %1980 = vmatpush1.bf16.msra.mxu0 %v1663
        %1981 = vmatprep.subr.bf16.mxu0 %v1658
        %1982 = vmatpush1.bf16.msra.mxu0 %v1657
        %1983 = vmatprep.subr.bf16.mxu0 %v1652
        %1984 = vmatpush1.bf16.msra.mxu0 %v1651
        %1985 = vmatprep.subr.bf16.mxu0 %v1646
        %1986 = vmatpush1.bf16.msra.mxu0 %v1645
        %1987 = vmatprep.subr.bf16.mxu0 %v1640
        %1988 = vmatpush1.bf16.msra.mxu0 %v1639
        %1989 = vmatprep.subr.bf16.mxu0 %v1730
        %1990 = vmatpush2.bf16.msra.mxu0 %v1729
        %1991 = vmatprep.subr.bf16.mxu0 %v1724
        %1992 = vmatpush2.bf16.msra.mxu0 %v1723
        %1993 = vmatprep.subr.bf16.mxu0 %v1718
        %1994 = vmatpush2.bf16.msra.mxu0 %v1717
        %1995 = vmatprep.subr.bf16.mxu0 %v1712
        %1996 = vmatpush2.bf16.msra.mxu0 %v1711
        %1997 = vmatprep.subr.bf16.mxu0 %v1706
        %1998 = vmatpush2.bf16.msra.mxu0 %v1705
        %1999 = vmatprep.subr.bf16.mxu0 %v1700
        %2000 = vmatpush2.bf16.msra.mxu0 %v1699
        %2001 = vmatprep.subr.bf16.mxu0 %v1694
        %2002 = vmatpush2.bf16.msra.mxu0 %v1693
        %2003 = vmatprep.subr.bf16.mxu0 %v1688
        %2004 = vmatpush2.bf16.msra.mxu0 %v1687
        %2005 = vmatprep.mubr.bf16.mxu0 %v1244
        %2006 = vmatmul.mubr.bf16.gmra.mxu0 %v1243
        %v2007 = vpop.f32.mrf.mxu0
        %v2008 = vadd.f32 0.0, %v2007
        %v2009 = vpop.f32.mrf.mxu0
        %v2010 = vadd.f32 0.0, %v2009
        %v2011 = vpop.f32.mrf.mxu0
        %v2012 = vadd.f32 0.0, %v2011
        %v2013 = vpop.f32.mrf.mxu0
        %v2014 = vadd.f32 0.0, %v2013
        %2015 = vmatprep.mubr.bf16.mxu0 %v1246
        %2016 = vmatmul.mubr.bf16.gmra.mxu0 %v1245
        %v2017 = vpop.f32.mrf.mxu0
        %v2018 = vadd.f32 0.0, %v2017
        %v2019 = vpop.f32.mrf.mxu0
        %v2020 = vadd.f32 0.0, %v2019
        %v2021 = vpop.f32.mrf.mxu0
        %v2022 = vadd.f32 0.0, %v2021
        %v2023 = vpop.f32.mrf.mxu0
        %v2024 = vadd.f32 0.0, %v2023
        %2025 = vmatprep.mubr.bf16.mxu0 %v1248
        %2026 = vmatmul.mubr.bf16.gmra.mxu0 %v1247
        %v2027 = vpop.f32.mrf.mxu0
        %v2028 = vadd.f32 0.0, %v2027
        %v2029 = vpop.f32.mrf.mxu0
        %v2030 = vadd.f32 0.0, %v2029
        %v2031 = vpop.f32.mrf.mxu0
        %v2032 = vadd.f32 0.0, %v2031
        %v2033 = vpop.f32.mrf.mxu0
        %v2034 = vadd.f32 0.0, %v2033
        %2035 = vmatprep.mubr.bf16.mxu0 %v1250
        %2036 = vmatmul.mubr.bf16.gmra.mxu0 %v1249
        %v2037 = vpop.f32.mrf.mxu0
        %v2038 = vadd.f32 0.0, %v2037
        %v2039 = vpop.f32.mrf.mxu0
        %v2040 = vadd.f32 0.0, %v2039
        %v2041 = vpop.f32.mrf.mxu0
        %v2042 = vadd.f32 0.0, %v2041
        %v2043 = vpop.f32.mrf.mxu0
        %v2044 = vadd.f32 0.0, %v2043
        %2045 = vdwg.mxu0
        %v2046 = vmul.f32 %v1862, 0.125
        %v2047 = vmul.f32 %v1864, 0.125
        %v2048 = vmul.f32 %v1866, 0.125
        %v2049 = vmul.f32 %v1868, 0.125
        %v2050 = vmul.f32 %v1872, 0.125
        %v2051 = vmul.f32 %v1874, 0.125
        %v2052 = vmul.f32 %v1876, 0.125
        %v2053 = vmul.f32 %v1878, 0.125
        %v2054 = vmul.f32 %v1882, 0.125
        %v2055 = vmul.f32 %v1884, 0.125
        %v2056 = vmul.f32 %v1886, 0.125
        %v2057 = vmul.f32 %v1888, 0.125
        %v2058 = vmul.f32 %v1892, 0.125
        %v2059 = vmul.f32 %v1894, 0.125
        %v2060 = vmul.f32 %v1896, 0.125
        %v2061 = vmul.f32 %v1898, 0.125
        %v2062 = vld [vmem:[%s1] sm:$0xff]
        %v2063 = vld [vmem:[%s1 + $0x8] sm:$0xff]
        %v2064 = vld [vmem:[%s1 + $0x10] sm:$0xff]
        %v2065 = vld [vmem:[%s1 + $0x18] sm:$0xff]
        %v2066 = vld [vmem:[%s1 + $0x20] sm:$0xff]
        %v2067 = vld [vmem:[%s1 + $0x28] sm:$0xff]
        %v2068 = vld [vmem:[%s1 + $0x30] sm:$0xff]
        %v2069 = vld [vmem:[%s1 + $0x38] sm:$0xff]
        %v2070 = vld [vmem:[%s810] sm:$0xff]
        %v2071 = vld [vmem:[%s810 + $0x8] sm:$0xff]
        %v2072 = vld [vmem:[%s810 + $0x10] sm:$0xff]
        %v2073 = vld [vmem:[%s810 + $0x18] sm:$0xff]
        %v2074 = vld [vmem:[%s810 + $0x20] sm:$0xff]
        %v2075 = vld [vmem:[%s810 + $0x28] sm:$0xff]
        %v2076 = vld [vmem:[%s810 + $0x30] sm:$0xff]
        %v2077 = vld [vmem:[%s810 + $0x38] sm:$0xff]
        %v2078 = vld [vmem:[%s810 + $0x40] sm:$0xff]
        %v2079 = vld [vmem:[%s810 + $0x48] sm:$0xff]
        %v2080 = vld [vmem:[%s810 + $0x50] sm:$0xff]
        %v2081 = vld [vmem:[%s810 + $0x58] sm:$0xff]
        %v2082 = vld [vmem:[%s810 + $0x60] sm:$0xff]
        %v2083 = vld [vmem:[%s810 + $0x68] sm:$0xff]
        %v2084 = vld [vmem:[%s810 + $0x70] sm:$0xff]
        %v2085 = vld [vmem:[%s810 + $0x78] sm:$0xff]
        %v2086 = vld [vmem:[%s810 + $0x80] sm:$0xff]
        %v2087 = vld [vmem:[%s810 + $0x88] sm:$0xff]
        %v2088 = vld [vmem:[%s810 + $0x90] sm:$0xff]
        %v2089 = vld [vmem:[%s810 + $0x98] sm:$0xff]
        %v2090 = vld [vmem:[%s810 + $0xa0] sm:$0xff]
        %v2091 = vld [vmem:[%s810 + $0xa8] sm:$0xff]
        %v2092 = vld [vmem:[%s810 + $0xb0] sm:$0xff]
        %v2093 = vld [vmem:[%s810 + $0xb8] sm:$0xff]
        %v2094 = vld [vmem:[%s810 + $0xc0] sm:$0xff]
        %v2095 = vld [vmem:[%s810 + $0xc8] sm:$0xff]
        %v2096 = vld [vmem:[%s810 + $0xd0] sm:$0xff]
        %v2097 = vld [vmem:[%s810 + $0xd8] sm:$0xff]
        %v2098 = vld [vmem:[%s810 + $0xe0] sm:$0xff]
        %v2099 = vld [vmem:[%s810 + $0xe8] sm:$0xff]
        %v2100 = vld [vmem:[%s810 + $0xf0] sm:$0xff]
        %v2101 = vld [vmem:[%s810 + $0xf8] sm:$0xff]
        %v2102 = vpack.c.bf16 %v2048, %v2046
        %v2103 = vpack.c.bf16 %v2052, %v2050
        %v2104 = vpack.c.bf16 %v2056, %v2054
        %v2105 = vpack.c.bf16 %v2060, %v2058
        %v2106 = vpack.c.bf16 %v1939, %v1935
        %v2107 = vpack.c.bf16 %v1949, %v1945
        %v2108 = vpack.c.bf16 %v1959, %v1955
        %v2109 = vpack.c.bf16 %v1969, %v1965
        %v2110 = vpack.c.bf16 %v2012, %v2008
        %v2111 = vpack.c.bf16 %v2022, %v2018
        %v2112 = vpack.c.bf16 %v2032, %v2028
        %v2113 = vpack.c.bf16 %v2042, %v2038
        %vm2114 = vcmask 523264
        %v2116 = vsel %vm2114, %v2102, 0
        %v2119 = vsel %vm2114, %v2103, 0
        %v2122 = vsel %vm2114, %v2104, 0
        %v2125 = vsel %vm2114, %v2105, 0
        %v2128 = vsel %vm2114, %v2106, 0
        %v2131 = vsel %vm2114, %v2107, 0
        %v2134 = vsel %vm2114, %v2108, 0
        %v2137 = vsel %vm2114, %v2109, 0
        %2139 = vmatprep.subr.bf16.mxu0 0
        %2140 = vmatpush1.bf16.xpose.msra.mxu0 0
        %2141 = vmatprep.subr.bf16.mxu0 0
        %2142 = vmatpush1.bf16.xpose.msra.mxu0 0
        %2143 = vmatprep.subr.bf16.mxu0 0
        %2144 = vmatpush1.bf16.xpose.msra.mxu0 0
        %2145 = vmatprep.subr.bf16.mxu0 0
        %2146 = vmatpush1.bf16.xpose.msra.mxu0 0
        %2147 = vmatprep.subr.bf16.mxu0 0
        %2148 = vmatpush1.bf16.xpose.msra.mxu0 %v2137
        %2149 = vmatprep.subr.bf16.mxu0 0
        %2150 = vmatpush1.bf16.xpose.msra.mxu0 %v2134
        %2151 = vmatprep.subr.bf16.mxu0 0
        %2152 = vmatpush1.bf16.xpose.msra.mxu0 %v2131
        %2153 = vmatprep.subr.bf16.mxu0 0
        %2154 = vmatpush1.bf16.xpose.msra.mxu0 %v2128
        %2155 = vmatprep.subr.bf16.mxu0 0
        %2156 = vmatpush2.bf16.xpose.msra.mxu0 0
        %2157 = vmatprep.subr.bf16.mxu0 0
        %2158 = vmatpush2.bf16.xpose.msra.mxu0 0
        %2159 = vmatprep.subr.bf16.mxu0 0
        %2160 = vmatpush2.bf16.xpose.msra.mxu0 0
        %2161 = vmatprep.subr.bf16.mxu0 0
        %2162 = vmatpush2.bf16.xpose.msra.mxu0 0
        %2163 = vmatprep.subr.bf16.mxu0 0
        %2164 = vmatpush2.bf16.xpose.msra.mxu0 0
        %2165 = vmatprep.subr.bf16.mxu0 0
        %2166 = vmatpush2.bf16.xpose.msra.mxu0 0
        %2167 = vmatprep.subr.bf16.mxu0 0
        %2168 = vmatpush2.bf16.xpose.msra.mxu0 0
        %2169 = vmatprep.subr.bf16.mxu0 0
        %2170 = vmatpush2.bf16.xpose.msra.mxu0 0
        %2171 = vmatprep.mubr.bf16.mxu0 0
        %2172 = vmatmul.mubr.bf16.gmra.mxu0 %v2116
        %v2173 = vpop.f32.mrf.mxu0
        %v2174 = vadd.f32 %v2062, %v2173
        %v2175 = vpop.f32.mrf.mxu0
        %v2176 = vpop.f32.mrf.mxu0
        %v2177 = vadd.f32 %v2063, %v2176
        %v2178 = vpop.f32.mrf.mxu0
        %2179 = vmatprep.mubr.bf16.mxu0 0
        %2180 = vmatmul.mubr.bf16.gmra.mxu0 %v2119
        %v2181 = vpop.f32.mrf.mxu0
        %v2182 = vadd.f32 %v2064, %v2181
        %v2183 = vpop.f32.mrf.mxu0
        %v2184 = vpop.f32.mrf.mxu0
        %v2185 = vadd.f32 %v2065, %v2184
        %v2186 = vpop.f32.mrf.mxu0
        %2187 = vmatprep.mubr.bf16.mxu0 0
        %2188 = vmatmul.mubr.bf16.gmra.mxu0 %v2122
        %v2189 = vpop.f32.mrf.mxu0
        %v2190 = vadd.f32 %v2066, %v2189
        %v2191 = vpop.f32.mrf.mxu0
        %v2192 = vpop.f32.mrf.mxu0
        %v2193 = vadd.f32 %v2067, %v2192
        %v2194 = vpop.f32.mrf.mxu0
        %2195 = vmatprep.mubr.bf16.mxu0 0
        %2196 = vmatmul.mubr.bf16.gmra.mxu0 %v2125
        %v2197 = vpop.f32.mrf.mxu0
        %v2198 = vadd.f32 %v2068, %v2197
        %v2199 = vpop.f32.mrf.mxu0
        %v2200 = vpop.f32.mrf.mxu0
        %v2201 = vadd.f32 %v2069, %v2200
        %v2202 = vpop.f32.mrf.mxu0
        %2203 = vdwg.mxu0
        %v2204 = vsel %vm2114, %v2174, -inf
        %2205 = vmax.xlane.f32.xlu0 %v2204
        %v2206 = vpop.xlane.xlu0 %2205
        %v2207 = vsel %vm2114, %v2177, -inf
        %2208 = vmax.xlane.f32.xlu0 %v2207
        %v2209 = vpop.xlane.xlu0 %2208
        %v2210 = vsel %vm2114, %v2182, -inf
        %2211 = vmax.xlane.f32.xlu0 %v2210
        %v2212 = vpop.xlane.xlu0 %2211
        %v2213 = vsel %vm2114, %v2185, -inf
        %2214 = vmax.xlane.f32.xlu0 %v2213
        %v2215 = vpop.xlane.xlu0 %2214
        %v2216 = vsel %vm2114, %v2190, -inf
        %2217 = vmax.xlane.f32.xlu0 %v2216
        %v2218 = vpop.xlane.xlu0 %2217
        %v2219 = vsel %vm2114, %v2193, -inf
        %2220 = vmax.xlane.f32.xlu0 %v2219
        %v2221 = vpop.xlane.xlu0 %2220
        %v2222 = vsel %vm2114, %v2198, -inf
        %2223 = vmax.xlane.f32.xlu0 %v2222
        %v2224 = vpop.xlane.xlu0 %2223
        %v2225 = vsel %vm2114, %v2201, -inf
        %2226 = vmax.xlane.f32.xlu0 %v2225
        %v2227 = vpop.xlane.xlu0 %2226
        %v2228 = vsub.f32 %v2174, %v2206
        %v2229 = vsub.f32 %v2177, %v2209
        %v2230 = vsub.f32 %v2182, %v2212
        %v2231 = vsub.f32 %v2185, %v2215
        %v2232 = vsub.f32 %v2190, %v2218
        %v2233 = vsub.f32 %v2193, %v2221
        %v2234 = vsub.f32 %v2198, %v2224
        %v2235 = vsub.f32 %v2201, %v2227
        %v2236 = vmul.f32 %v2228, 1.442695
        %v2237 = vpow.pop %v2236
        %v2238 = vmul.f32 %v2229, 1.442695
        %v2239 = vpow.pop %v2238
        %v2240 = vmul.f32 %v2230, 1.442695
        %v2241 = vpow.pop %v2240
        %v2242 = vmul.f32 %v2231, 1.442695
        %v2243 = vpow.pop %v2242
        %v2244 = vmul.f32 %v2232, 1.442695
        %v2245 = vpow.pop %v2244
        %v2246 = vmul.f32 %v2233, 1.442695
        %v2247 = vpow.pop %v2246
        %v2248 = vmul.f32 %v2234, 1.442695
        %v2249 = vpow.pop %v2248
        %v2250 = vmul.f32 %v2235, 1.442695
        %v2251 = vpow.pop %v2250
        %v2252 = vsel %vm2114, %v2237, 0.0
        %2253 = vadd.xlane.f32.xlu0 %v2252
        %v2254 = vpop.xlane.xlu0 %2253
        %v2255 = vsel %vm2114, %v2239, 0.0
        %2256 = vadd.xlane.f32.xlu0 %v2255
        %v2257 = vpop.xlane.xlu0 %2256
        %v2258 = vsel %vm2114, %v2241, 0.0
        %2259 = vadd.xlane.f32.xlu0 %v2258
        %v2260 = vpop.xlane.xlu0 %2259
        %v2261 = vsel %vm2114, %v2243, 0.0
        %2262 = vadd.xlane.f32.xlu0 %v2261
        %v2263 = vpop.xlane.xlu0 %2262
        %v2264 = vsel %vm2114, %v2245, 0.0
        %2265 = vadd.xlane.f32.xlu0 %v2264
        %v2266 = vpop.xlane.xlu0 %2265
        %v2267 = vsel %vm2114, %v2247, 0.0
        %2268 = vadd.xlane.f32.xlu0 %v2267
        %v2269 = vpop.xlane.xlu0 %2268
        %v2270 = vsel %vm2114, %v2249, 0.0
        %2271 = vadd.xlane.f32.xlu0 %v2270
        %v2272 = vpop.xlane.xlu0 %2271
        %v2273 = vsel %vm2114, %v2251, 0.0
        %2274 = vadd.xlane.f32.xlu0 %v2273
        %v2275 = vpop.xlane.xlu0 %2274
        %v2276 = vrcp.pop %v2254
        %v2277 = vrcp.pop %v2257
        %v2278 = vrcp.pop %v2260
        %v2279 = vrcp.pop %v2263
        %v2280 = vrcp.pop %v2266
        %v2281 = vrcp.pop %v2269
        %v2282 = vrcp.pop %v2272
        %v2283 = vrcp.pop %v2275
        %v2284 = vpack.c.bf16 %v2239, %v2237
        %v2285 = vpack.c.bf16 %v2243, %v2241
        %v2286 = vpack.c.bf16 %v2247, %v2245
        %v2287 = vpack.c.bf16 %v2251, %v2249
        %v2289 = vsel %vm2114, %v2284, 0
        %v2292 = vsel %vm2114, %v2285, 0
        %v2295 = vsel %vm2114, %v2286, 0
        %v2298 = vsel %vm2114, %v2287, 0
        %2300 = vmatprep.subr.bf16.mxu0 0
        %2301 = vmatpush1.bf16.msra.mxu0 0
        %2302 = vmatprep.subr.bf16.mxu0 0
        %2303 = vmatpush1.bf16.msra.mxu0 0
        %2304 = vmatprep.subr.bf16.mxu0 0
        %2305 = vmatpush1.bf16.msra.mxu0 0
        %2306 = vmatprep.subr.bf16.mxu0 0
        %2307 = vmatpush1.bf16.msra.mxu0 0
        %2308 = vmatprep.subr.bf16.mxu0 0
        %2309 = vmatpush1.bf16.msra.mxu0 %v2113
        %2310 = vmatprep.subr.bf16.mxu0 0
        %2311 = vmatpush1.bf16.msra.mxu0 %v2112
        %2312 = vmatprep.subr.bf16.mxu0 0
        %2313 = vmatpush1.bf16.msra.mxu0 %v2111
        %2314 = vmatprep.subr.bf16.mxu0 0
        %2315 = vmatpush1.bf16.msra.mxu0 %v2110
        %2316 = vmatprep.subr.bf16.mxu0 0
        %2317 = vmatpush2.bf16.msra.mxu0 0
        %2318 = vmatprep.subr.bf16.mxu0 0
        %2319 = vmatpush2.bf16.msra.mxu0 0
        %2320 = vmatprep.subr.bf16.mxu0 0
        %2321 = vmatpush2.bf16.msra.mxu0 0
        %2322 = vmatprep.subr.bf16.mxu0 0
        %2323 = vmatpush2.bf16.msra.mxu0 0
        %2324 = vmatprep.subr.bf16.mxu0 0
        %2325 = vmatpush2.bf16.msra.mxu0 0
        %2326 = vmatprep.subr.bf16.mxu0 0
        %2327 = vmatpush2.bf16.msra.mxu0 0
        %2328 = vmatprep.subr.bf16.mxu0 0
        %2329 = vmatpush2.bf16.msra.mxu0 0
        %2330 = vmatprep.subr.bf16.mxu0 0
        %2331 = vmatpush2.bf16.msra.mxu0 0
        %2332 = vmatprep.mubr.bf16.mxu0 0
        %2333 = vmatmul.mubr.bf16.gmra.mxu0 %v2289
        %v2334 = vpop.f32.mrf.mxu0
        %v2335 = vadd.f32 0.0, %v2334
        %v2336 = vpop.f32.mrf.mxu0
        %v2337 = vpop.f32.mrf.mxu0
        %v2338 = vadd.f32 0.0, %v2337
        %v2339 = vpop.f32.mrf.mxu0
        %2340 = vmatprep.mubr.bf16.mxu0 0
        %2341 = vmatmul.mubr.bf16.gmra.mxu0 %v2292
        %v2342 = vpop.f32.mrf.mxu0
        %v2343 = vadd.f32 0.0, %v2342
        %v2344 = vpop.f32.mrf.mxu0
        %v2345 = vpop.f32.mrf.mxu0
        %v2346 = vadd.f32 0.0, %v2345
        %v2347 = vpop.f32.mrf.mxu0
        %2348 = vmatprep.mubr.bf16.mxu0 0
        %2349 = vmatmul.mubr.bf16.gmra.mxu0 %v2295
        %v2350 = vpop.f32.mrf.mxu0
        %v2351 = vadd.f32 0.0, %v2350
        %v2352 = vpop.f32.mrf.mxu0
        %v2353 = vpop.f32.mrf.mxu0
        %v2354 = vadd.f32 0.0, %v2353
        %v2355 = vpop.f32.mrf.mxu0
        %2356 = vmatprep.mubr.bf16.mxu0 0
        %2357 = vmatmul.mubr.bf16.gmra.mxu0 %v2298
        %v2358 = vpop.f32.mrf.mxu0
        %v2359 = vadd.f32 0.0, %v2358
        %v2360 = vpop.f32.mrf.mxu0
        %v2361 = vpop.f32.mrf.mxu0
        %v2362 = vadd.f32 0.0, %v2361
        %v2363 = vpop.f32.mrf.mxu0
        %2364 = vdwg.mxu0
        %v2365 = vmul.f32 %v2335, %v2276
        %v2366 = vmul.f32 %v2338, %v2277
        %v2367 = vmul.f32 %v2343, %v2278
        %v2368 = vmul.f32 %v2346, %v2279
        %v2369 = vmul.f32 %v2351, %v2280
        %v2370 = vmul.f32 %v2354, %v2281
        %v2371 = vmul.f32 %v2359, %v2282
        %v2372 = vmul.f32 %v2362, %v2283
        %v2373 = vpack.c.bf16 %v2366, %v2365
        %v2374 = vpack.c.bf16 %v2368, %v2367
        %v2375 = vpack.c.bf16 %v2370, %v2369
        %v2376 = vpack.c.bf16 %v2372, %v2371
        %2381 = vrot.lane.b32.xlu0 %v2102, 64
        %v2382 = vpop.permute.xlu0 %2381
        %2383 = vrot.lane.b32.xlu0 %v2103, 64
        %v2384 = vpop.permute.xlu0 %2383
        %2385 = vrot.lane.b32.xlu0 %v2104, 64
        %v2386 = vpop.permute.xlu0 %2385
        %2387 = vrot.lane.b32.xlu0 %v2105, 64
        %v2388 = vpop.permute.xlu0 %2387
        %2393 = vrot.lane.b32.xlu0 %v2106, 64
        %v2394 = vpop.permute.xlu0 %2393
        %2395 = vrot.lane.b32.xlu0 %v2107, 64
        %v2396 = vpop.permute.xlu0 %2395
        %2397 = vrot.lane.b32.xlu0 %v2108, 64
        %v2398 = vpop.permute.xlu0 %2397
        %2399 = vrot.lane.b32.xlu0 %v2109, 64
        %v2400 = vpop.permute.xlu0 %2399
        %v2402 = vsel %vm2114, %v2382, 0
        %v2405 = vsel %vm2114, %v2384, 0
        %v2408 = vsel %vm2114, %v2386, 0
        %v2411 = vsel %vm2114, %v2388, 0
        %v2414 = vsel %vm2114, %v2394, 0
        %v2417 = vsel %vm2114, %v2396, 0
        %v2420 = vsel %vm2114, %v2398, 0
        %v2423 = vsel %vm2114, %v2400, 0
        %2425 = vmatprep.subr.bf16.mxu0 0
        %2426 = vmatpush1.bf16.xpose.msra.mxu0 0
        %2427 = vmatprep.subr.bf16.mxu0 0
        %2428 = vmatpush1.bf16.xpose.msra.mxu0 0
        %2429 = vmatprep.subr.bf16.mxu0 0
        %2430 = vmatpush1.bf16.xpose.msra.mxu0 0
        %2431 = vmatprep.subr.bf16.mxu0 0
        %2432 = vmatpush1.bf16.xpose.msra.mxu0 0
        %2433 = vmatprep.subr.bf16.mxu0 0
        %2434 = vmatpush1.bf16.xpose.msra.mxu0 %v2423
        %2435 = vmatprep.subr.bf16.mxu0 0
        %2436 = vmatpush1.bf16.xpose.msra.mxu0 %v2420
        %2437 = vmatprep.subr.bf16.mxu0 0
        %2438 = vmatpush1.bf16.xpose.msra.mxu0 %v2417
        %2439 = vmatprep.subr.bf16.mxu0 0
        %2440 = vmatpush1.bf16.xpose.msra.mxu0 %v2414
        %2441 = vmatprep.subr.bf16.mxu0 0
        %2442 = vmatpush2.bf16.xpose.msra.mxu0 0
        %2443 = vmatprep.subr.bf16.mxu0 0
        %2444 = vmatpush2.bf16.xpose.msra.mxu0 0
        %2445 = vmatprep.subr.bf16.mxu0 0
        %2446 = vmatpush2.bf16.xpose.msra.mxu0 0
        %2447 = vmatprep.subr.bf16.mxu0 0
        %2448 = vmatpush2.bf16.xpose.msra.mxu0 0
        %2449 = vmatprep.subr.bf16.mxu0 0
        %2450 = vmatpush2.bf16.xpose.msra.mxu0 0
        %2451 = vmatprep.subr.bf16.mxu0 0
        %2452 = vmatpush2.bf16.xpose.msra.mxu0 0
        %2453 = vmatprep.subr.bf16.mxu0 0
        %2454 = vmatpush2.bf16.xpose.msra.mxu0 0
        %2455 = vmatprep.subr.bf16.mxu0 0
        %2456 = vmatpush2.bf16.xpose.msra.mxu0 0
        %2457 = vmatprep.mubr.bf16.mxu0 0
        %2458 = vmatmul.mubr.bf16.gmra.mxu0 %v2402
        %v2459 = vpop.f32.mrf.mxu0
        %v2460 = vadd.f32 %v2062, %v2459
        %v2461 = vpop.f32.mrf.mxu0
        %v2462 = vpop.f32.mrf.mxu0
        %v2463 = vadd.f32 %v2063, %v2462
        %v2464 = vpop.f32.mrf.mxu0
        %2465 = vmatprep.mubr.bf16.mxu0 0
        %2466 = vmatmul.mubr.bf16.gmra.mxu0 %v2405
        %v2467 = vpop.f32.mrf.mxu0
        %v2468 = vadd.f32 %v2064, %v2467
        %v2469 = vpop.f32.mrf.mxu0
        %v2470 = vpop.f32.mrf.mxu0
        %v2471 = vadd.f32 %v2065, %v2470
        %v2472 = vpop.f32.mrf.mxu0
        %2473 = vmatprep.mubr.bf16.mxu0 0
        %2474 = vmatmul.mubr.bf16.gmra.mxu0 %v2408
        %v2475 = vpop.f32.mrf.mxu0
        %v2476 = vadd.f32 %v2066, %v2475
        %v2477 = vpop.f32.mrf.mxu0
        %v2478 = vpop.f32.mrf.mxu0
        %v2479 = vadd.f32 %v2067, %v2478
        %v2480 = vpop.f32.mrf.mxu0
        %2481 = vmatprep.mubr.bf16.mxu0 0
        %2482 = vmatmul.mubr.bf16.gmra.mxu0 %v2411
        %v2483 = vpop.f32.mrf.mxu0
        %v2484 = vadd.f32 %v2068, %v2483
        %v2485 = vpop.f32.mrf.mxu0
        %v2486 = vpop.f32.mrf.mxu0
        %v2487 = vadd.f32 %v2069, %v2486
        %v2488 = vpop.f32.mrf.mxu0
        %2489 = vdwg.mxu0
        %v2490 = vsel %vm2114, %v2460, -inf
        %2491 = vmax.xlane.f32.xlu0 %v2490
        %v2492 = vpop.xlane.xlu0 %2491
        %v2493 = vsel %vm2114, %v2463, -inf
        %2494 = vmax.xlane.f32.xlu0 %v2493
        %v2495 = vpop.xlane.xlu0 %2494
        %v2496 = vsel %vm2114, %v2468, -inf
        %2497 = vmax.xlane.f32.xlu0 %v2496
        %v2498 = vpop.xlane.xlu0 %2497
        %v2499 = vsel %vm2114, %v2471, -inf
        %2500 = vmax.xlane.f32.xlu0 %v2499
        %v2501 = vpop.xlane.xlu0 %2500
        %v2502 = vsel %vm2114, %v2476, -inf
        %2503 = vmax.xlane.f32.xlu0 %v2502
        %v2504 = vpop.xlane.xlu0 %2503
        %v2505 = vsel %vm2114, %v2479, -inf
        %2506 = vmax.xlane.f32.xlu0 %v2505
        %v2507 = vpop.xlane.xlu0 %2506
        %v2508 = vsel %vm2114, %v2484, -inf
        %2509 = vmax.xlane.f32.xlu0 %v2508
        %v2510 = vpop.xlane.xlu0 %2509
        %v2511 = vsel %vm2114, %v2487, -inf
        %2512 = vmax.xlane.f32.xlu0 %v2511
        %v2513 = vpop.xlane.xlu0 %2512
        %v2514 = vsub.f32 %v2460, %v2492
        %v2515 = vsub.f32 %v2463, %v2495
        %v2516 = vsub.f32 %v2468, %v2498
        %v2517 = vsub.f32 %v2471, %v2501
        %v2518 = vsub.f32 %v2476, %v2504
        %v2519 = vsub.f32 %v2479, %v2507
        %v2520 = vsub.f32 %v2484, %v2510
        %v2521 = vsub.f32 %v2487, %v2513
        %v2522 = vmul.f32 %v2514, 1.442695
        %v2523 = vpow.pop %v2522
        %v2524 = vmul.f32 %v2515, 1.442695
        %v2525 = vpow.pop %v2524
        %v2526 = vmul.f32 %v2516, 1.442695
        %v2527 = vpow.pop %v2526
        %v2528 = vmul.f32 %v2517, 1.442695
        %v2529 = vpow.pop %v2528
        %v2530 = vmul.f32 %v2518, 1.442695
        %v2531 = vpow.pop %v2530
        %v2532 = vmul.f32 %v2519, 1.442695
        %v2533 = vpow.pop %v2532
        %v2534 = vmul.f32 %v2520, 1.442695
        %v2535 = vpow.pop %v2534
        %v2536 = vmul.f32 %v2521, 1.442695
        %v2537 = vpow.pop %v2536
        %v2538 = vsel %vm2114, %v2523, 0.0
        %2539 = vadd.xlane.f32.xlu0 %v2538
        %v2540 = vpop.xlane.xlu0 %2539
        %v2541 = vsel %vm2114, %v2525, 0.0
        %2542 = vadd.xlane.f32.xlu0 %v2541
        %v2543 = vpop.xlane.xlu0 %2542
        %v2544 = vsel %vm2114, %v2527, 0.0
        %2545 = vadd.xlane.f32.xlu0 %v2544
        %v2546 = vpop.xlane.xlu0 %2545
        %v2547 = vsel %vm2114, %v2529, 0.0
        %2548 = vadd.xlane.f32.xlu0 %v2547
        %v2549 = vpop.xlane.xlu0 %2548
        %v2550 = vsel %vm2114, %v2531, 0.0
        %2551 = vadd.xlane.f32.xlu0 %v2550
        %v2552 = vpop.xlane.xlu0 %2551
        %v2553 = vsel %vm2114, %v2533, 0.0
        %2554 = vadd.xlane.f32.xlu0 %v2553
        %v2555 = vpop.xlane.xlu0 %2554
        %v2556 = vsel %vm2114, %v2535, 0.0
        %2557 = vadd.xlane.f32.xlu0 %v2556
        %v2558 = vpop.xlane.xlu0 %2557
        %v2559 = vsel %vm2114, %v2537, 0.0
        %2560 = vadd.xlane.f32.xlu0 %v2559
        %v2561 = vpop.xlane.xlu0 %2560
        %v2562 = vrcp.pop %v2540
        %v2563 = vrcp.pop %v2543
        %v2564 = vrcp.pop %v2546
        %v2565 = vrcp.pop %v2549
        %v2566 = vrcp.pop %v2552
        %v2567 = vrcp.pop %v2555
        %v2568 = vrcp.pop %v2558
        %v2569 = vrcp.pop %v2561
        %v2570 = vpack.c.bf16 %v2525, %v2523
        %v2571 = vpack.c.bf16 %v2529, %v2527
        %v2572 = vpack.c.bf16 %v2533, %v2531
        %v2573 = vpack.c.bf16 %v2537, %v2535
        %2578 = vrot.lane.b32.xlu0 %v2110, 64
        %v2579 = vpop.permute.xlu0 %2578
        %2580 = vrot.lane.b32.xlu0 %v2111, 64
        %v2581 = vpop.permute.xlu0 %2580
        %2582 = vrot.lane.b32.xlu0 %v2112, 64
        %v2583 = vpop.permute.xlu0 %2582
        %2584 = vrot.lane.b32.xlu0 %v2113, 64
        %v2585 = vpop.permute.xlu0 %2584
        %v2591 = vsel %vm2114, %v2570, 0
        %v2594 = vsel %vm2114, %v2571, 0
        %v2597 = vsel %vm2114, %v2572, 0
        %v2600 = vsel %vm2114, %v2573, 0
        %2602 = vmatprep.subr.bf16.mxu0 0
        %2603 = vmatpush1.bf16.msra.mxu0 0
        %2604 = vmatprep.subr.bf16.mxu0 0
        %2605 = vmatpush1.bf16.msra.mxu0 0
        %2606 = vmatprep.subr.bf16.mxu0 0
        %2607 = vmatpush1.bf16.msra.mxu0 0
        %2608 = vmatprep.subr.bf16.mxu0 0
        %2609 = vmatpush1.bf16.msra.mxu0 0
        %2610 = vmatprep.subr.bf16.mxu0 0
        %2611 = vmatpush1.bf16.msra.mxu0 %v2585
        %2612 = vmatprep.subr.bf16.mxu0 0
        %2613 = vmatpush1.bf16.msra.mxu0 %v2583
        %2614 = vmatprep.subr.bf16.mxu0 0
        %2615 = vmatpush1.bf16.msra.mxu0 %v2581
        %2616 = vmatprep.subr.bf16.mxu0 0
        %2617 = vmatpush1.bf16.msra.mxu0 %v2579
        %2618 = vmatprep.subr.bf16.mxu0 0
        %2619 = vmatpush2.bf16.msra.mxu0 0
        %2620 = vmatprep.subr.bf16.mxu0 0
        %2621 = vmatpush2.bf16.msra.mxu0 0
        %2622 = vmatprep.subr.bf16.mxu0 0
        %2623 = vmatpush2.bf16.msra.mxu0 0
        %2624 = vmatprep.subr.bf16.mxu0 0
        %2625 = vmatpush2.bf16.msra.mxu0 0
        %2626 = vmatprep.subr.bf16.mxu0 0
        %2627 = vmatpush2.bf16.msra.mxu0 0
        %2628 = vmatprep.subr.bf16.mxu0 0
        %2629 = vmatpush2.bf16.msra.mxu0 0
        %2630 = vmatprep.subr.bf16.mxu0 0
        %2631 = vmatpush2.bf16.msra.mxu0 0
        %2632 = vmatprep.subr.bf16.mxu0 0
        %2633 = vmatpush2.bf16.msra.mxu0 0
        %2634 = vmatprep.mubr.bf16.mxu0 0
        %2635 = vmatmul.mubr.bf16.gmra.mxu0 %v2591
        %v2636 = vpop.f32.mrf.mxu0
        %v2637 = vadd.f32 0.0, %v2636
        %v2638 = vpop.f32.mrf.mxu0
        %v2639 = vpop.f32.mrf.mxu0
        %v2640 = vadd.f32 0.0, %v2639
        %v2641 = vpop.f32.mrf.mxu0
        %2642 = vmatprep.mubr.bf16.mxu0 0
        %2643 = vmatmul.mubr.bf16.gmra.mxu0 %v2594
        %v2644 = vpop.f32.mrf.mxu0
        %v2645 = vadd.f32 0.0, %v2644
        %v2646 = vpop.f32.mrf.mxu0
        %v2647 = vpop.f32.mrf.mxu0
        %v2648 = vadd.f32 0.0, %v2647
        %v2649 = vpop.f32.mrf.mxu0
        %2650 = vmatprep.mubr.bf16.mxu0 0
        %2651 = vmatmul.mubr.bf16.gmra.mxu0 %v2597
        %v2652 = vpop.f32.mrf.mxu0
        %v2653 = vadd.f32 0.0, %v2652
        %v2654 = vpop.f32.mrf.mxu0
        %v2655 = vpop.f32.mrf.mxu0
        %v2656 = vadd.f32 0.0, %v2655
        %v2657 = vpop.f32.mrf.mxu0
        %2658 = vmatprep.mubr.bf16.mxu0 0
        %2659 = vmatmul.mubr.bf16.gmra.mxu0 %v2600
        %v2660 = vpop.f32.mrf.mxu0
        %v2661 = vadd.f32 0.0, %v2660
        %v2662 = vpop.f32.mrf.mxu0
        %v2663 = vpop.f32.mrf.mxu0
        %v2664 = vadd.f32 0.0, %v2663
        %v2665 = vpop.f32.mrf.mxu0
        %2666 = vdwg.mxu0
        %v2667 = vmul.f32 %v2637, %v2562
        %v2668 = vmul.f32 %v2640, %v2563
        %v2669 = vmul.f32 %v2645, %v2564
        %v2670 = vmul.f32 %v2648, %v2565
        %v2671 = vmul.f32 %v2653, %v2566
        %v2672 = vmul.f32 %v2656, %v2567
        %v2673 = vmul.f32 %v2661, %v2568
        %v2674 = vmul.f32 %v2664, %v2569
        %v2675 = vpack.c.bf16 %v2668, %v2667
        %v2676 = vpack.c.bf16 %v2670, %v2669
        %v2677 = vpack.c.bf16 %v2672, %v2671
        %v2678 = vpack.c.bf16 %v2674, %v2673
        %v2687 = vunpack.c.l.b16 %v2078
        %v2688 = vunpack.c.h.b16 %v2078
        %v2689 = vunpack.c.l.b16 %v2079
        %v2690 = vunpack.c.h.b16 %v2079
        %v2691 = vunpack.c.l.b16 %v2080
        %v2692 = vunpack.c.h.b16 %v2080
        %v2693 = vunpack.c.l.b16 %v2081
        %v2694 = vunpack.c.h.b16 %v2081
        %v2695 = vunpack.c.l.b16 %v2082
        %v2696 = vunpack.c.h.b16 %v2082
        %v2697 = vunpack.c.l.b16 %v2083
        %v2698 = vunpack.c.h.b16 %v2083
        %v2699 = vunpack.c.l.b16 %v2084
        %v2700 = vunpack.c.h.b16 %v2084
        %v2701 = vunpack.c.l.b16 %v2085
        %v2702 = vunpack.c.h.b16 %v2085
        %v2703 = vpack.c.b16 %v2689, %v2687
        %v2704 = vpack.c.b16 %v2690, %v2688
        %v2705 = vpack.c.b16 %v2693, %v2691
        %v2706 = vpack.c.b16 %v2694, %v2692
        %v2707 = vpack.c.b16 %v2697, %v2695
        %v2708 = vpack.c.b16 %v2698, %v2696
        %v2709 = vpack.c.b16 %v2701, %v2699
        %v2710 = vpack.c.b16 %v2702, %v2700
        %v2720 = vsel %vm2114, %v2675, 0
        %v2723 = vsel %vm2114, %v2676, 0
        %v2726 = vsel %vm2114, %v2677, 0
        %v2729 = vsel %vm2114, %v2678, 0
        %2731 = vmatprep.subr.bf16.mxu0 0
        %2732 = vmatpush1.bf16.msra.mxu0 0
        %2733 = vmatprep.subr.bf16.mxu0 0
        %2734 = vmatpush1.bf16.msra.mxu0 0
        %2735 = vmatprep.subr.bf16.mxu0 0
        %2736 = vmatpush1.bf16.msra.mxu0 0
        %2737 = vmatprep.subr.bf16.mxu0 0
        %2738 = vmatpush1.bf16.msra.mxu0 0
        %2739 = vmatprep.subr.bf16.mxu0 %v2710
        %2740 = vmatpush1.bf16.msra.mxu0 %v2709
        %2741 = vmatprep.subr.bf16.mxu0 %v2708
        %2742 = vmatpush1.bf16.msra.mxu0 %v2707
        %2743 = vmatprep.subr.bf16.mxu0 %v2706
        %2744 = vmatpush1.bf16.msra.mxu0 %v2705
        %2745 = vmatprep.subr.bf16.mxu0 %v2704
        %2746 = vmatpush1.bf16.msra.mxu0 %v2703
        %2747 = vmatprep.subr.bf16.mxu0 0
        %2748 = vmatpush2.bf16.msra.mxu0 0
        %2749 = vmatprep.subr.bf16.mxu0 0
        %2750 = vmatpush2.bf16.msra.mxu0 0
        %2751 = vmatprep.subr.bf16.mxu0 0
        %2752 = vmatpush2.bf16.msra.mxu0 0
        %2753 = vmatprep.subr.bf16.mxu0 0
        %2754 = vmatpush2.bf16.msra.mxu0 0
        %2755 = vmatprep.subr.bf16.mxu0 0
        %2756 = vmatpush2.bf16.msra.mxu0 0
        %2757 = vmatprep.subr.bf16.mxu0 0
        %2758 = vmatpush2.bf16.msra.mxu0 0
        %2759 = vmatprep.subr.bf16.mxu0 0
        %2760 = vmatpush2.bf16.msra.mxu0 0
        %2761 = vmatprep.subr.bf16.mxu0 0
        %2762 = vmatpush2.bf16.msra.mxu0 0
        %2763 = vmatprep.mubr.bf16.mxu0 0
        %2764 = vmatmul.mubr.bf16.gmra.mxu0 %v2720
        %v2765 = vpop.f32.mrf.mxu0
        %v2766 = vadd.f32 0.0, %v2765
        %v2767 = vpop.f32.mrf.mxu0
        %v2768 = vadd.f32 0.0, %v2767
        %v2769 = vpop.f32.mrf.mxu0
        %v2770 = vadd.f32 0.0, %v2769
        %v2771 = vpop.f32.mrf.mxu0
        %v2772 = vadd.f32 0.0, %v2771
        %2773 = vmatprep.mubr.bf16.mxu0 0
        %2774 = vmatmul.mubr.bf16.gmra.mxu0 %v2723
        %v2775 = vpop.f32.mrf.mxu0
        %v2776 = vadd.f32 0.0, %v2775
        %v2777 = vpop.f32.mrf.mxu0
        %v2778 = vadd.f32 0.0, %v2777
        %v2779 = vpop.f32.mrf.mxu0
        %v2780 = vadd.f32 0.0, %v2779
        %v2781 = vpop.f32.mrf.mxu0
        %v2782 = vadd.f32 0.0, %v2781
        %2783 = vmatprep.mubr.bf16.mxu0 0
        %2784 = vmatmul.mubr.bf16.gmra.mxu0 %v2726
        %v2785 = vpop.f32.mrf.mxu0
        %v2786 = vadd.f32 0.0, %v2785
        %v2787 = vpop.f32.mrf.mxu0
        %v2788 = vadd.f32 0.0, %v2787
        %v2789 = vpop.f32.mrf.mxu0
        %v2790 = vadd.f32 0.0, %v2789
        %v2791 = vpop.f32.mrf.mxu0
        %v2792 = vadd.f32 0.0, %v2791
        %2793 = vmatprep.mubr.bf16.mxu0 0
        %2794 = vmatmul.mubr.bf16.gmra.mxu0 %v2729
        %v2795 = vpop.f32.mrf.mxu0
        %v2796 = vadd.f32 0.0, %v2795
        %v2797 = vpop.f32.mrf.mxu0
        %v2798 = vadd.f32 0.0, %v2797
        %v2799 = vpop.f32.mrf.mxu0
        %v2800 = vadd.f32 0.0, %v2799
        %v2801 = vpop.f32.mrf.mxu0
        %v2802 = vadd.f32 0.0, %v2801
        %2803 = vdwg.mxu0
        %v2812 = vunpack.c.l.b16 %v2070
        %v2813 = vunpack.c.h.b16 %v2070
        %v2814 = vunpack.c.l.b16 %v2071
        %v2815 = vunpack.c.h.b16 %v2071
        %v2816 = vunpack.c.l.b16 %v2072
        %v2817 = vunpack.c.h.b16 %v2072
        %v2818 = vunpack.c.l.b16 %v2073
        %v2819 = vunpack.c.h.b16 %v2073
        %v2820 = vunpack.c.l.b16 %v2074
        %v2821 = vunpack.c.h.b16 %v2074
        %v2822 = vunpack.c.l.b16 %v2075
        %v2823 = vunpack.c.h.b16 %v2075
        %v2824 = vunpack.c.l.b16 %v2076
        %v2825 = vunpack.c.h.b16 %v2076
        %v2826 = vunpack.c.l.b16 %v2077
        %v2827 = vunpack.c.h.b16 %v2077
        %v2828 = vpack.c.b16 %v2814, %v2812
        %v2829 = vpack.c.b16 %v2815, %v2813
        %v2830 = vpack.c.b16 %v2818, %v2816
        %v2831 = vpack.c.b16 %v2819, %v2817
        %v2832 = vpack.c.b16 %v2822, %v2820
        %v2833 = vpack.c.b16 %v2823, %v2821
        %v2834 = vpack.c.b16 %v2826, %v2824
        %v2835 = vpack.c.b16 %v2827, %v2825
        %v2845 = vsel %vm2114, %v2373, 0
        %v2848 = vsel %vm2114, %v2374, 0
        %v2851 = vsel %vm2114, %v2375, 0
        %v2854 = vsel %vm2114, %v2376, 0
        %2856 = vmatprep.subr.bf16.mxu0 0
        %2857 = vmatpush1.bf16.msra.mxu0 0
        %2858 = vmatprep.subr.bf16.mxu0 0
        %2859 = vmatpush1.bf16.msra.mxu0 0
        %2860 = vmatprep.subr.bf16.mxu0 0
        %2861 = vmatpush1.bf16.msra.mxu0 0
        %2862 = vmatprep.subr.bf16.mxu0 0
        %2863 = vmatpush1.bf16.msra.mxu0 0
        %2864 = vmatprep.subr.bf16.mxu0 %v2835
        %2865 = vmatpush1.bf16.msra.mxu0 %v2834
        %2866 = vmatprep.subr.bf16.mxu0 %v2833
        %2867 = vmatpush1.bf16.msra.mxu0 %v2832
        %2868 = vmatprep.subr.bf16.mxu0 %v2831
        %2869 = vmatpush1.bf16.msra.mxu0 %v2830
        %2870 = vmatprep.subr.bf16.mxu0 %v2829
        %2871 = vmatpush1.bf16.msra.mxu0 %v2828
        %2872 = vmatprep.subr.bf16.mxu0 0
        %2873 = vmatpush2.bf16.msra.mxu0 0
        %2874 = vmatprep.subr.bf16.mxu0 0
        %2875 = vmatpush2.bf16.msra.mxu0 0
        %2876 = vmatprep.subr.bf16.mxu0 0
        %2877 = vmatpush2.bf16.msra.mxu0 0
        %2878 = vmatprep.subr.bf16.mxu0 0
        %2879 = vmatpush2.bf16.msra.mxu0 0
        %2880 = vmatprep.subr.bf16.mxu0 0
        %2881 = vmatpush2.bf16.msra.mxu0 0
        %2882 = vmatprep.subr.bf16.mxu0 0
        %2883 = vmatpush2.bf16.msra.mxu0 0
        %2884 = vmatprep.subr.bf16.mxu0 0
        %2885 = vmatpush2.bf16.msra.mxu0 0
        %2886 = vmatprep.subr.bf16.mxu0 0
        %2887 = vmatpush2.bf16.msra.mxu0 0
        %2888 = vmatprep.mubr.bf16.mxu0 0
        %2889 = vmatmul.mubr.bf16.gmra.mxu0 %v2845
        %v2890 = vpop.f32.mrf.mxu0
        %v2891 = vadd.f32 %v2766, %v2890
        %v2892 = vpop.f32.mrf.mxu0
        %v2893 = vadd.f32 %v2768, %v2892
        %v2894 = vpop.f32.mrf.mxu0
        %v2895 = vadd.f32 %v2770, %v2894
        %v2896 = vpop.f32.mrf.mxu0
        %v2897 = vadd.f32 %v2772, %v2896
        %2898 = vmatprep.mubr.bf16.mxu0 0
        %2899 = vmatmul.mubr.bf16.gmra.mxu0 %v2848
        %v2900 = vpop.f32.mrf.mxu0
        %v2901 = vadd.f32 %v2776, %v2900
        %v2902 = vpop.f32.mrf.mxu0
        %v2903 = vadd.f32 %v2778, %v2902
        %v2904 = vpop.f32.mrf.mxu0
        %v2905 = vadd.f32 %v2780, %v2904
        %v2906 = vpop.f32.mrf.mxu0
        %v2907 = vadd.f32 %v2782, %v2906
        %2908 = vmatprep.mubr.bf16.mxu0 0
        %2909 = vmatmul.mubr.bf16.gmra.mxu0 %v2851
        %v2910 = vpop.f32.mrf.mxu0
        %v2911 = vadd.f32 %v2786, %v2910
        %v2912 = vpop.f32.mrf.mxu0
        %v2913 = vadd.f32 %v2788, %v2912
        %v2914 = vpop.f32.mrf.mxu0
        %v2915 = vadd.f32 %v2790, %v2914
        %v2916 = vpop.f32.mrf.mxu0
        %v2917 = vadd.f32 %v2792, %v2916
        %2918 = vmatprep.mubr.bf16.mxu0 0
        %2919 = vmatmul.mubr.bf16.gmra.mxu0 %v2854
        %v2920 = vpop.f32.mrf.mxu0
        %v2921 = vadd.f32 %v2796, %v2920
        %v2922 = vpop.f32.mrf.mxu0
        %v2923 = vadd.f32 %v2798, %v2922
        %v2924 = vpop.f32.mrf.mxu0
        %v2925 = vadd.f32 %v2800, %v2924
        %v2926 = vpop.f32.mrf.mxu0
        %v2927 = vadd.f32 %v2802, %v2926
        %2928 = vdwg.mxu0
        %v2929 = vpack.c.bf16 %v2049, %v2047
        %v2930 = vpack.c.bf16 %v2053, %v2051
        %v2931 = vpack.c.bf16 %v2057, %v2055
        %v2932 = vpack.c.bf16 %v2061, %v2059
        %v2933 = vpack.c.bf16 %v1941, %v1937
        %v2934 = vpack.c.bf16 %v1951, %v1947
        %v2935 = vpack.c.bf16 %v1961, %v1957
        %v2936 = vpack.c.bf16 %v1971, %v1967
        %v2937 = vpack.c.bf16 %v2014, %v2010
        %v2938 = vpack.c.bf16 %v2024, %v2020
        %v2939 = vpack.c.bf16 %v2034, %v2030
        %v2940 = vpack.c.bf16 %v2044, %v2040
        %v2942 = vsel %vm2114, %v2929, 0
        %v2945 = vsel %vm2114, %v2930, 0
        %v2948 = vsel %vm2114, %v2931, 0
        %v2951 = vsel %vm2114, %v2932, 0
        %v2954 = vsel %vm2114, %v2933, 0
        %v2957 = vsel %vm2114, %v2934, 0
        %v2960 = vsel %vm2114, %v2935, 0
        %v2963 = vsel %vm2114, %v2936, 0
        %2965 = vmatprep.subr.bf16.mxu0 0
        %2966 = vmatpush1.bf16.xpose.msra.mxu0 0
        %2967 = vmatprep.subr.bf16.mxu0 0
        %2968 = vmatpush1.bf16.xpose.msra.mxu0 0
        %2969 = vmatprep.subr.bf16.mxu0 0
        %2970 = vmatpush1.bf16.xpose.msra.mxu0 0
        %2971 = vmatprep.subr.bf16.mxu0 0
        %2972 = vmatpush1.bf16.xpose.msra.mxu0 0
        %2973 = vmatprep.subr.bf16.mxu0 0
        %2974 = vmatpush1.bf16.xpose.msra.mxu0 %v2963
        %2975 = vmatprep.subr.bf16.mxu0 0
        %2976 = vmatpush1.bf16.xpose.msra.mxu0 %v2960
        %2977 = vmatprep.subr.bf16.mxu0 0
        %2978 = vmatpush1.bf16.xpose.msra.mxu0 %v2957
        %2979 = vmatprep.subr.bf16.mxu0 0
        %2980 = vmatpush1.bf16.xpose.msra.mxu0 %v2954
        %2981 = vmatprep.subr.bf16.mxu0 0
        %2982 = vmatpush2.bf16.xpose.msra.mxu0 0
        %2983 = vmatprep.subr.bf16.mxu0 0
        %2984 = vmatpush2.bf16.xpose.msra.mxu0 0
        %2985 = vmatprep.subr.bf16.mxu0 0
        %2986 = vmatpush2.bf16.xpose.msra.mxu0 0
        %2987 = vmatprep.subr.bf16.mxu0 0
        %2988 = vmatpush2.bf16.xpose.msra.mxu0 0
        %2989 = vmatprep.subr.bf16.mxu0 0
        %2990 = vmatpush2.bf16.xpose.msra.mxu0 0
        %2991 = vmatprep.subr.bf16.mxu0 0
        %2992 = vmatpush2.bf16.xpose.msra.mxu0 0
        %2993 = vmatprep.subr.bf16.mxu0 0
        %2994 = vmatpush2.bf16.xpose.msra.mxu0 0
        %2995 = vmatprep.subr.bf16.mxu0 0
        %2996 = vmatpush2.bf16.xpose.msra.mxu0 0
        %2997 = vmatprep.mubr.bf16.mxu0 0
        %2998 = vmatmul.mubr.bf16.gmra.mxu0 %v2942
        %v2999 = vpop.f32.mrf.mxu0
        %v3000 = vadd.f32 %v2062, %v2999
        %v3001 = vpop.f32.mrf.mxu0
        %v3002 = vpop.f32.mrf.mxu0
        %v3003 = vadd.f32 %v2063, %v3002
        %v3004 = vpop.f32.mrf.mxu0
        %3005 = vmatprep.mubr.bf16.mxu0 0
        %3006 = vmatmul.mubr.bf16.gmra.mxu0 %v2945
        %v3007 = vpop.f32.mrf.mxu0
        %v3008 = vadd.f32 %v2064, %v3007
        %v3009 = vpop.f32.mrf.mxu0
        %v3010 = vpop.f32.mrf.mxu0
        %v3011 = vadd.f32 %v2065, %v3010
        %v3012 = vpop.f32.mrf.mxu0
        %3013 = vmatprep.mubr.bf16.mxu0 0
        %3014 = vmatmul.mubr.bf16.gmra.mxu0 %v2948
        %v3015 = vpop.f32.mrf.mxu0
        %v3016 = vadd.f32 %v2066, %v3015
        %v3017 = vpop.f32.mrf.mxu0
        %v3018 = vpop.f32.mrf.mxu0
        %v3019 = vadd.f32 %v2067, %v3018
        %v3020 = vpop.f32.mrf.mxu0
        %3021 = vmatprep.mubr.bf16.mxu0 0
        %3022 = vmatmul.mubr.bf16.gmra.mxu0 %v2951
        %v3023 = vpop.f32.mrf.mxu0
        %v3024 = vadd.f32 %v2068, %v3023
        %v3025 = vpop.f32.mrf.mxu0
        %v3026 = vpop.f32.mrf.mxu0
        %v3027 = vadd.f32 %v2069, %v3026
        %v3028 = vpop.f32.mrf.mxu0
        %3029 = vdwg.mxu0
        %v3030 = vsel %vm2114, %v3000, -inf
        %3031 = vmax.xlane.f32.xlu0 %v3030
        %v3032 = vpop.xlane.xlu0 %3031
        %v3033 = vsel %vm2114, %v3003, -inf
        %3034 = vmax.xlane.f32.xlu0 %v3033
        %v3035 = vpop.xlane.xlu0 %3034
        %v3036 = vsel %vm2114, %v3008, -inf
        %3037 = vmax.xlane.f32.xlu0 %v3036
        %v3038 = vpop.xlane.xlu0 %3037
        %v3039 = vsel %vm2114, %v3011, -inf
        %3040 = vmax.xlane.f32.xlu0 %v3039
        %v3041 = vpop.xlane.xlu0 %3040
        %v3042 = vsel %vm2114, %v3016, -inf
        %3043 = vmax.xlane.f32.xlu0 %v3042
        %v3044 = vpop.xlane.xlu0 %3043
        %v3045 = vsel %vm2114, %v3019, -inf
        %3046 = vmax.xlane.f32.xlu0 %v3045
        %v3047 = vpop.xlane.xlu0 %3046
        %v3048 = vsel %vm2114, %v3024, -inf
        %3049 = vmax.xlane.f32.xlu0 %v3048
        %v3050 = vpop.xlane.xlu0 %3049
        %v3051 = vsel %vm2114, %v3027, -inf
        %3052 = vmax.xlane.f32.xlu0 %v3051
        %v3053 = vpop.xlane.xlu0 %3052
        %v3054 = vsub.f32 %v3000, %v3032
        %v3055 = vsub.f32 %v3003, %v3035
        %v3056 = vsub.f32 %v3008, %v3038
        %v3057 = vsub.f32 %v3011, %v3041
        %v3058 = vsub.f32 %v3016, %v3044
        %v3059 = vsub.f32 %v3019, %v3047
        %v3060 = vsub.f32 %v3024, %v3050
        %v3061 = vsub.f32 %v3027, %v3053
        %v3062 = vmul.f32 %v3054, 1.442695
        %v3063 = vpow.pop %v3062
        %v3064 = vmul.f32 %v3055, 1.442695
        %v3065 = vpow.pop %v3064
        %v3066 = vmul.f32 %v3056, 1.442695
        %v3067 = vpow.pop %v3066
        %v3068 = vmul.f32 %v3057, 1.442695
        %v3069 = vpow.pop %v3068
        %v3070 = vmul.f32 %v3058, 1.442695
        %v3071 = vpow.pop %v3070
        %v3072 = vmul.f32 %v3059, 1.442695
        %v3073 = vpow.pop %v3072
        %v3074 = vmul.f32 %v3060, 1.442695
        %v3075 = vpow.pop %v3074
        %v3076 = vmul.f32 %v3061, 1.442695
        %v3077 = vpow.pop %v3076
        %v3078 = vsel %vm2114, %v3063, 0.0
        %3079 = vadd.xlane.f32.xlu0 %v3078
        %v3080 = vpop.xlane.xlu0 %3079
        %v3081 = vsel %vm2114, %v3065, 0.0
        %3082 = vadd.xlane.f32.xlu0 %v3081
        %v3083 = vpop.xlane.xlu0 %3082
        %v3084 = vsel %vm2114, %v3067, 0.0
        %3085 = vadd.xlane.f32.xlu0 %v3084
        %v3086 = vpop.xlane.xlu0 %3085
        %v3087 = vsel %vm2114, %v3069, 0.0
        %3088 = vadd.xlane.f32.xlu0 %v3087
        %v3089 = vpop.xlane.xlu0 %3088
        %v3090 = vsel %vm2114, %v3071, 0.0
        %3091 = vadd.xlane.f32.xlu0 %v3090
        %v3092 = vpop.xlane.xlu0 %3091
        %v3093 = vsel %vm2114, %v3073, 0.0
        %3094 = vadd.xlane.f32.xlu0 %v3093
        %v3095 = vpop.xlane.xlu0 %3094
        %v3096 = vsel %vm2114, %v3075, 0.0
        %3097 = vadd.xlane.f32.xlu0 %v3096
        %v3098 = vpop.xlane.xlu0 %3097
        %v3099 = vsel %vm2114, %v3077, 0.0
        %3100 = vadd.xlane.f32.xlu0 %v3099
        %v3101 = vpop.xlane.xlu0 %3100
        %v3102 = vrcp.pop %v3080
        %v3103 = vrcp.pop %v3083
        %v3104 = vrcp.pop %v3086
        %v3105 = vrcp.pop %v3089
        %v3106 = vrcp.pop %v3092
        %v3107 = vrcp.pop %v3095
        %v3108 = vrcp.pop %v3098
        %v3109 = vrcp.pop %v3101
        %v3110 = vpack.c.bf16 %v3065, %v3063
        %v3111 = vpack.c.bf16 %v3069, %v3067
        %v3112 = vpack.c.bf16 %v3073, %v3071
        %v3113 = vpack.c.bf16 %v3077, %v3075
        %v3115 = vsel %vm2114, %v3110, 0
        %v3118 = vsel %vm2114, %v3111, 0
        %v3121 = vsel %vm2114, %v3112, 0
        %v3124 = vsel %vm2114, %v3113, 0
        %3126 = vmatprep.subr.bf16.mxu0 0
        %3127 = vmatpush1.bf16.msra.mxu0 0
        %3128 = vmatprep.subr.bf16.mxu0 0
        %3129 = vmatpush1.bf16.msra.mxu0 0
        %3130 = vmatprep.subr.bf16.mxu0 0
        %3131 = vmatpush1.bf16.msra.mxu0 0
        %3132 = vmatprep.subr.bf16.mxu0 0
        %3133 = vmatpush1.bf16.msra.mxu0 0
        %3134 = vmatprep.subr.bf16.mxu0 0
        %3135 = vmatpush1.bf16.msra.mxu0 %v2940
        %3136 = vmatprep.subr.bf16.mxu0 0
        %3137 = vmatpush1.bf16.msra.mxu0 %v2939
        %3138 = vmatprep.subr.bf16.mxu0 0
        %3139 = vmatpush1.bf16.msra.mxu0 %v2938
        %3140 = vmatprep.subr.bf16.mxu0 0
        %3141 = vmatpush1.bf16.msra.mxu0 %v2937
        %3142 = vmatprep.subr.bf16.mxu0 0
        %3143 = vmatpush2.bf16.msra.mxu0 0
        %3144 = vmatprep.subr.bf16.mxu0 0
        %3145 = vmatpush2.bf16.msra.mxu0 0
        %3146 = vmatprep.subr.bf16.mxu0 0
        %3147 = vmatpush2.bf16.msra.mxu0 0
        %3148 = vmatprep.subr.bf16.mxu0 0
        %3149 = vmatpush2.bf16.msra.mxu0 0
        %3150 = vmatprep.subr.bf16.mxu0 0
        %3151 = vmatpush2.bf16.msra.mxu0 0
        %3152 = vmatprep.subr.bf16.mxu0 0
        %3153 = vmatpush2.bf16.msra.mxu0 0
        %3154 = vmatprep.subr.bf16.mxu0 0
        %3155 = vmatpush2.bf16.msra.mxu0 0
        %3156 = vmatprep.subr.bf16.mxu0 0
        %3157 = vmatpush2.bf16.msra.mxu0 0
        %3158 = vmatprep.mubr.bf16.mxu0 0
        %3159 = vmatmul.mubr.bf16.gmra.mxu0 %v3115
        %v3160 = vpop.f32.mrf.mxu0
        %v3161 = vadd.f32 0.0, %v3160
        %v3162 = vpop.f32.mrf.mxu0
        %v3163 = vpop.f32.mrf.mxu0
        %v3164 = vadd.f32 0.0, %v3163
        %v3165 = vpop.f32.mrf.mxu0
        %3166 = vmatprep.mubr.bf16.mxu0 0
        %3167 = vmatmul.mubr.bf16.gmra.mxu0 %v3118
        %v3168 = vpop.f32.mrf.mxu0
        %v3169 = vadd.f32 0.0, %v3168
        %v3170 = vpop.f32.mrf.mxu0
        %v3171 = vpop.f32.mrf.mxu0
        %v3172 = vadd.f32 0.0, %v3171
        %v3173 = vpop.f32.mrf.mxu0
        %3174 = vmatprep.mubr.bf16.mxu0 0
        %3175 = vmatmul.mubr.bf16.gmra.mxu0 %v3121
        %v3176 = vpop.f32.mrf.mxu0
        %v3177 = vadd.f32 0.0, %v3176
        %v3178 = vpop.f32.mrf.mxu0
        %v3179 = vpop.f32.mrf.mxu0
        %v3180 = vadd.f32 0.0, %v3179
        %v3181 = vpop.f32.mrf.mxu0
        %3182 = vmatprep.mubr.bf16.mxu0 0
        %3183 = vmatmul.mubr.bf16.gmra.mxu0 %v3124
        %v3184 = vpop.f32.mrf.mxu0
        %v3185 = vadd.f32 0.0, %v3184
        %v3186 = vpop.f32.mrf.mxu0
        %v3187 = vpop.f32.mrf.mxu0
        %v3188 = vadd.f32 0.0, %v3187
        %v3189 = vpop.f32.mrf.mxu0
        %3190 = vdwg.mxu0
        %v3191 = vmul.f32 %v3161, %v3102
        %v3192 = vmul.f32 %v3164, %v3103
        %v3193 = vmul.f32 %v3169, %v3104
        %v3194 = vmul.f32 %v3172, %v3105
        %v3195 = vmul.f32 %v3177, %v3106
        %v3196 = vmul.f32 %v3180, %v3107
        %v3197 = vmul.f32 %v3185, %v3108
        %v3198 = vmul.f32 %v3188, %v3109
        %v3199 = vpack.c.bf16 %v3192, %v3191
        %v3200 = vpack.c.bf16 %v3194, %v3193
        %v3201 = vpack.c.bf16 %v3196, %v3195
        %v3202 = vpack.c.bf16 %v3198, %v3197
        %v3211 = vunpack.c.l.b16 %v2086
        %v3212 = vunpack.c.h.b16 %v2086
        %v3213 = vunpack.c.l.b16 %v2087
        %v3214 = vunpack.c.h.b16 %v2087
        %v3215 = vunpack.c.l.b16 %v2088
        %v3216 = vunpack.c.h.b16 %v2088
        %v3217 = vunpack.c.l.b16 %v2089
        %v3218 = vunpack.c.h.b16 %v2089
        %v3219 = vunpack.c.l.b16 %v2090
        %v3220 = vunpack.c.h.b16 %v2090
        %v3221 = vunpack.c.l.b16 %v2091
        %v3222 = vunpack.c.h.b16 %v2091
        %v3223 = vunpack.c.l.b16 %v2092
        %v3224 = vunpack.c.h.b16 %v2092
        %v3225 = vunpack.c.l.b16 %v2093
        %v3226 = vunpack.c.h.b16 %v2093
        %v3227 = vpack.c.b16 %v3213, %v3211
        %v3228 = vpack.c.b16 %v3214, %v3212
        %v3229 = vpack.c.b16 %v3217, %v3215
        %v3230 = vpack.c.b16 %v3218, %v3216
        %v3231 = vpack.c.b16 %v3221, %v3219
        %v3232 = vpack.c.b16 %v3222, %v3220
        %v3233 = vpack.c.b16 %v3225, %v3223
        %v3234 = vpack.c.b16 %v3226, %v3224
        %v3244 = vsel %vm2114, %v3199, 0
        %v3247 = vsel %vm2114, %v3200, 0
        %v3250 = vsel %vm2114, %v3201, 0
        %v3253 = vsel %vm2114, %v3202, 0
        %3255 = vmatprep.subr.bf16.mxu0 0
        %3256 = vmatpush1.bf16.msra.mxu0 0
        %3257 = vmatprep.subr.bf16.mxu0 0
        %3258 = vmatpush1.bf16.msra.mxu0 0
        %3259 = vmatprep.subr.bf16.mxu0 0
        %3260 = vmatpush1.bf16.msra.mxu0 0
        %3261 = vmatprep.subr.bf16.mxu0 0
        %3262 = vmatpush1.bf16.msra.mxu0 0
        %3263 = vmatprep.subr.bf16.mxu0 %v3234
        %3264 = vmatpush1.bf16.msra.mxu0 %v3233
        %3265 = vmatprep.subr.bf16.mxu0 %v3232
        %3266 = vmatpush1.bf16.msra.mxu0 %v3231
        %3267 = vmatprep.subr.bf16.mxu0 %v3230
        %3268 = vmatpush1.bf16.msra.mxu0 %v3229
        %3269 = vmatprep.subr.bf16.mxu0 %v3228
        %3270 = vmatpush1.bf16.msra.mxu0 %v3227
        %3271 = vmatprep.subr.bf16.mxu0 0
        %3272 = vmatpush2.bf16.msra.mxu0 0
        %3273 = vmatprep.subr.bf16.mxu0 0
        %3274 = vmatpush2.bf16.msra.mxu0 0
        %3275 = vmatprep.subr.bf16.mxu0 0
        %3276 = vmatpush2.bf16.msra.mxu0 0
        %3277 = vmatprep.subr.bf16.mxu0 0
        %3278 = vmatpush2.bf16.msra.mxu0 0
        %3279 = vmatprep.subr.bf16.mxu0 0
        %3280 = vmatpush2.bf16.msra.mxu0 0
        %3281 = vmatprep.subr.bf16.mxu0 0
        %3282 = vmatpush2.bf16.msra.mxu0 0
        %3283 = vmatprep.subr.bf16.mxu0 0
        %3284 = vmatpush2.bf16.msra.mxu0 0
        %3285 = vmatprep.subr.bf16.mxu0 0
        %3286 = vmatpush2.bf16.msra.mxu0 0
        %3287 = vmatprep.mubr.bf16.mxu0 0
        %3288 = vmatmul.mubr.bf16.gmra.mxu0 %v3244
        %v3289 = vpop.f32.mrf.mxu0
        %v3290 = vadd.f32 0.0, %v3289
        %v3291 = vpop.f32.mrf.mxu0
        %v3292 = vadd.f32 0.0, %v3291
        %v3293 = vpop.f32.mrf.mxu0
        %v3294 = vadd.f32 0.0, %v3293
        %v3295 = vpop.f32.mrf.mxu0
        %v3296 = vadd.f32 0.0, %v3295
        %3297 = vmatprep.mubr.bf16.mxu0 0
        %3298 = vmatmul.mubr.bf16.gmra.mxu0 %v3247
        %v3299 = vpop.f32.mrf.mxu0
        %v3300 = vadd.f32 0.0, %v3299
        %v3301 = vpop.f32.mrf.mxu0
        %v3302 = vadd.f32 0.0, %v3301
        %v3303 = vpop.f32.mrf.mxu0
        %v3304 = vadd.f32 0.0, %v3303
        %v3305 = vpop.f32.mrf.mxu0
        %v3306 = vadd.f32 0.0, %v3305
        %3307 = vmatprep.mubr.bf16.mxu0 0
        %3308 = vmatmul.mubr.bf16.gmra.mxu0 %v3250
        %v3309 = vpop.f32.mrf.mxu0
        %v3310 = vadd.f32 0.0, %v3309
        %v3311 = vpop.f32.mrf.mxu0
        %v3312 = vadd.f32 0.0, %v3311
        %v3313 = vpop.f32.mrf.mxu0
        %v3314 = vadd.f32 0.0, %v3313
        %v3315 = vpop.f32.mrf.mxu0
        %v3316 = vadd.f32 0.0, %v3315
        %3317 = vmatprep.mubr.bf16.mxu0 0
        %3318 = vmatmul.mubr.bf16.gmra.mxu0 %v3253
        %v3319 = vpop.f32.mrf.mxu0
        %v3320 = vadd.f32 0.0, %v3319
        %v3321 = vpop.f32.mrf.mxu0
        %v3322 = vadd.f32 0.0, %v3321
        %v3323 = vpop.f32.mrf.mxu0
        %v3324 = vadd.f32 0.0, %v3323
        %v3325 = vpop.f32.mrf.mxu0
        %v3326 = vadd.f32 0.0, %v3325
        %3327 = vdwg.mxu0
        %v3328 = vadd.f32 %v2891, %v3290
        %v3329 = vadd.f32 %v2893, %v3292
        %v3330 = vadd.f32 %v2895, %v3294
        %v3331 = vadd.f32 %v2897, %v3296
        %v3332 = vadd.f32 %v2901, %v3300
        %v3333 = vadd.f32 %v2903, %v3302
        %v3334 = vadd.f32 %v2905, %v3304
        %v3335 = vadd.f32 %v2907, %v3306
        %v3336 = vadd.f32 %v2911, %v3310
        %v3337 = vadd.f32 %v2913, %v3312
        %v3338 = vadd.f32 %v2915, %v3314
        %v3339 = vadd.f32 %v2917, %v3316
        %v3340 = vadd.f32 %v2921, %v3320
        %v3341 = vadd.f32 %v2923, %v3322
        %v3342 = vadd.f32 %v2925, %v3324
        %v3343 = vadd.f32 %v2927, %v3326
        %3348 = vrot.lane.b32.xlu0 %v2929, 64
        %v3349 = vpop.permute.xlu0 %3348
        %3350 = vrot.lane.b32.xlu0 %v2930, 64
        %v3351 = vpop.permute.xlu0 %3350
        %3352 = vrot.lane.b32.xlu0 %v2931, 64
        %v3353 = vpop.permute.xlu0 %3352
        %3354 = vrot.lane.b32.xlu0 %v2932, 64
        %v3355 = vpop.permute.xlu0 %3354
        %3360 = vrot.lane.b32.xlu0 %v2933, 64
        %v3361 = vpop.permute.xlu0 %3360
        %3362 = vrot.lane.b32.xlu0 %v2934, 64
        %v3363 = vpop.permute.xlu0 %3362
        %3364 = vrot.lane.b32.xlu0 %v2935, 64
        %v3365 = vpop.permute.xlu0 %3364
        %3366 = vrot.lane.b32.xlu0 %v2936, 64
        %v3367 = vpop.permute.xlu0 %3366
        %v3369 = vsel %vm2114, %v3349, 0
        %v3372 = vsel %vm2114, %v3351, 0
        %v3375 = vsel %vm2114, %v3353, 0
        %v3378 = vsel %vm2114, %v3355, 0
        %v3381 = vsel %vm2114, %v3361, 0
        %v3384 = vsel %vm2114, %v3363, 0
        %v3387 = vsel %vm2114, %v3365, 0
        %v3390 = vsel %vm2114, %v3367, 0
        %3392 = vmatprep.subr.bf16.mxu0 0
        %3393 = vmatpush1.bf16.xpose.msra.mxu0 0
        %3394 = vmatprep.subr.bf16.mxu0 0
        %3395 = vmatpush1.bf16.xpose.msra.mxu0 0
        %3396 = vmatprep.subr.bf16.mxu0 0
        %3397 = vmatpush1.bf16.xpose.msra.mxu0 0
        %3398 = vmatprep.subr.bf16.mxu0 0
        %3399 = vmatpush1.bf16.xpose.msra.mxu0 0
        %3400 = vmatprep.subr.bf16.mxu0 0
        %3401 = vmatpush1.bf16.xpose.msra.mxu0 %v3390
        %3402 = vmatprep.subr.bf16.mxu0 0
        %3403 = vmatpush1.bf16.xpose.msra.mxu0 %v3387
        %3404 = vmatprep.subr.bf16.mxu0 0
        %3405 = vmatpush1.bf16.xpose.msra.mxu0 %v3384
        %3406 = vmatprep.subr.bf16.mxu0 0
        %3407 = vmatpush1.bf16.xpose.msra.mxu0 %v3381
        %3408 = vmatprep.subr.bf16.mxu0 0
        %3409 = vmatpush2.bf16.xpose.msra.mxu0 0
        %3410 = vmatprep.subr.bf16.mxu0 0
        %3411 = vmatpush2.bf16.xpose.msra.mxu0 0
        %3412 = vmatprep.subr.bf16.mxu0 0
        %3413 = vmatpush2.bf16.xpose.msra.mxu0 0
        %3414 = vmatprep.subr.bf16.mxu0 0
        %3415 = vmatpush2.bf16.xpose.msra.mxu0 0
        %3416 = vmatprep.subr.bf16.mxu0 0
        %3417 = vmatpush2.bf16.xpose.msra.mxu0 0
        %3418 = vmatprep.subr.bf16.mxu0 0
        %3419 = vmatpush2.bf16.xpose.msra.mxu0 0
        %3420 = vmatprep.subr.bf16.mxu0 0
        %3421 = vmatpush2.bf16.xpose.msra.mxu0 0
        %3422 = vmatprep.subr.bf16.mxu0 0
        %3423 = vmatpush2.bf16.xpose.msra.mxu0 0
        %3424 = vmatprep.mubr.bf16.mxu0 0
        %3425 = vmatmul.mubr.bf16.gmra.mxu0 %v3369
        %v3426 = vpop.f32.mrf.mxu0
        %v3427 = vadd.f32 %v2062, %v3426
        %v3428 = vpop.f32.mrf.mxu0
        %v3429 = vpop.f32.mrf.mxu0
        %v3430 = vadd.f32 %v2063, %v3429
        %v3431 = vpop.f32.mrf.mxu0
        %3432 = vmatprep.mubr.bf16.mxu0 0
        %3433 = vmatmul.mubr.bf16.gmra.mxu0 %v3372
        %v3434 = vpop.f32.mrf.mxu0
        %v3435 = vadd.f32 %v2064, %v3434
        %v3436 = vpop.f32.mrf.mxu0
        %v3437 = vpop.f32.mrf.mxu0
        %v3438 = vadd.f32 %v2065, %v3437
        %v3439 = vpop.f32.mrf.mxu0
        %3440 = vmatprep.mubr.bf16.mxu0 0
        %3441 = vmatmul.mubr.bf16.gmra.mxu0 %v3375
        %v3442 = vpop.f32.mrf.mxu0
        %v3443 = vadd.f32 %v2066, %v3442
        %v3444 = vpop.f32.mrf.mxu0
        %v3445 = vpop.f32.mrf.mxu0
        %v3446 = vadd.f32 %v2067, %v3445
        %v3447 = vpop.f32.mrf.mxu0
        %3448 = vmatprep.mubr.bf16.mxu0 0
        %3449 = vmatmul.mubr.bf16.gmra.mxu0 %v3378
        %v3450 = vpop.f32.mrf.mxu0
        %v3451 = vadd.f32 %v2068, %v3450
        %v3452 = vpop.f32.mrf.mxu0
        %v3453 = vpop.f32.mrf.mxu0
        %v3454 = vadd.f32 %v2069, %v3453
        %v3455 = vpop.f32.mrf.mxu0
        %3456 = vdwg.mxu0
        %v3457 = vsel %vm2114, %v3427, -inf
        %3458 = vmax.xlane.f32.xlu0 %v3457
        %v3459 = vpop.xlane.xlu0 %3458
        %v3460 = vsel %vm2114, %v3430, -inf
        %3461 = vmax.xlane.f32.xlu0 %v3460
        %v3462 = vpop.xlane.xlu0 %3461
        %v3463 = vsel %vm2114, %v3435, -inf
        %3464 = vmax.xlane.f32.xlu0 %v3463
        %v3465 = vpop.xlane.xlu0 %3464
        %v3466 = vsel %vm2114, %v3438, -inf
        %3467 = vmax.xlane.f32.xlu0 %v3466
        %v3468 = vpop.xlane.xlu0 %3467
        %v3469 = vsel %vm2114, %v3443, -inf
        %3470 = vmax.xlane.f32.xlu0 %v3469
        %v3471 = vpop.xlane.xlu0 %3470
        %v3472 = vsel %vm2114, %v3446, -inf
        %3473 = vmax.xlane.f32.xlu0 %v3472
        %v3474 = vpop.xlane.xlu0 %3473
        %v3475 = vsel %vm2114, %v3451, -inf
        %3476 = vmax.xlane.f32.xlu0 %v3475
        %v3477 = vpop.xlane.xlu0 %3476
        %v3478 = vsel %vm2114, %v3454, -inf
        %3479 = vmax.xlane.f32.xlu0 %v3478
        %v3480 = vpop.xlane.xlu0 %3479
        %v3481 = vsub.f32 %v3427, %v3459
        %v3482 = vsub.f32 %v3430, %v3462
        %v3483 = vsub.f32 %v3435, %v3465
        %v3484 = vsub.f32 %v3438, %v3468
        %v3485 = vsub.f32 %v3443, %v3471
        %v3486 = vsub.f32 %v3446, %v3474
        %v3487 = vsub.f32 %v3451, %v3477
        %v3488 = vsub.f32 %v3454, %v3480
        %v3489 = vmul.f32 %v3481, 1.442695
        %v3490 = vpow.pop %v3489
        %v3491 = vmul.f32 %v3482, 1.442695
        %v3492 = vpow.pop %v3491
        %v3493 = vmul.f32 %v3483, 1.442695
        %v3494 = vpow.pop %v3493
        %v3495 = vmul.f32 %v3484, 1.442695
        %v3496 = vpow.pop %v3495
        %v3497 = vmul.f32 %v3485, 1.442695
        %v3498 = vpow.pop %v3497
        %v3499 = vmul.f32 %v3486, 1.442695
        %v3500 = vpow.pop %v3499
        %v3501 = vmul.f32 %v3487, 1.442695
        %v3502 = vpow.pop %v3501
        %v3503 = vmul.f32 %v3488, 1.442695
        %v3504 = vpow.pop %v3503
        %v3505 = vsel %vm2114, %v3490, 0.0
        %3506 = vadd.xlane.f32.xlu0 %v3505
        %v3507 = vpop.xlane.xlu0 %3506
        %v3508 = vsel %vm2114, %v3492, 0.0
        %3509 = vadd.xlane.f32.xlu0 %v3508
        %v3510 = vpop.xlane.xlu0 %3509
        %v3511 = vsel %vm2114, %v3494, 0.0
        %3512 = vadd.xlane.f32.xlu0 %v3511
        %v3513 = vpop.xlane.xlu0 %3512
        %v3514 = vsel %vm2114, %v3496, 0.0
        %3515 = vadd.xlane.f32.xlu0 %v3514
        %v3516 = vpop.xlane.xlu0 %3515
        %v3517 = vsel %vm2114, %v3498, 0.0
        %3518 = vadd.xlane.f32.xlu0 %v3517
        %v3519 = vpop.xlane.xlu0 %3518
        %v3520 = vsel %vm2114, %v3500, 0.0
        %3521 = vadd.xlane.f32.xlu0 %v3520
        %v3522 = vpop.xlane.xlu0 %3521
        %v3523 = vsel %vm2114, %v3502, 0.0
        %3524 = vadd.xlane.f32.xlu0 %v3523
        %v3525 = vpop.xlane.xlu0 %3524
        %v3526 = vsel %vm2114, %v3504, 0.0
        %3527 = vadd.xlane.f32.xlu0 %v3526
        %v3528 = vpop.xlane.xlu0 %3527
        %v3529 = vrcp.pop %v3507
        %v3530 = vrcp.pop %v3510
        %v3531 = vrcp.pop %v3513
        %v3532 = vrcp.pop %v3516
        %v3533 = vrcp.pop %v3519
        %v3534 = vrcp.pop %v3522
        %v3535 = vrcp.pop %v3525
        %v3536 = vrcp.pop %v3528
        %v3537 = vpack.c.bf16 %v3492, %v3490
        %v3538 = vpack.c.bf16 %v3496, %v3494
        %v3539 = vpack.c.bf16 %v3500, %v3498
        %v3540 = vpack.c.bf16 %v3504, %v3502
        %3545 = vrot.lane.b32.xlu0 %v2937, 64
        %v3546 = vpop.permute.xlu0 %3545
        %3547 = vrot.lane.b32.xlu0 %v2938, 64
        %v3548 = vpop.permute.xlu0 %3547
        %3549 = vrot.lane.b32.xlu0 %v2939, 64
        %v3550 = vpop.permute.xlu0 %3549
        %3551 = vrot.lane.b32.xlu0 %v2940, 64
        %v3552 = vpop.permute.xlu0 %3551
        %v3558 = vsel %vm2114, %v3537, 0
        %v3561 = vsel %vm2114, %v3538, 0
        %v3564 = vsel %vm2114, %v3539, 0
        %v3567 = vsel %vm2114, %v3540, 0
        %3569 = vmatprep.subr.bf16.mxu0 0
        %3570 = vmatpush1.bf16.msra.mxu0 0
        %3571 = vmatprep.subr.bf16.mxu0 0
        %3572 = vmatpush1.bf16.msra.mxu0 0
        %3573 = vmatprep.subr.bf16.mxu0 0
        %3574 = vmatpush1.bf16.msra.mxu0 0
        %3575 = vmatprep.subr.bf16.mxu0 0
        %3576 = vmatpush1.bf16.msra.mxu0 0
        %3577 = vmatprep.subr.bf16.mxu0 0
        %3578 = vmatpush1.bf16.msra.mxu0 %v3552
        %3579 = vmatprep.subr.bf16.mxu0 0
        %3580 = vmatpush1.bf16.msra.mxu0 %v3550
        %3581 = vmatprep.subr.bf16.mxu0 0
        %3582 = vmatpush1.bf16.msra.mxu0 %v3548
        %3583 = vmatprep.subr.bf16.mxu0 0
        %3584 = vmatpush1.bf16.msra.mxu0 %v3546
        %3585 = vmatprep.subr.bf16.mxu0 0
        %3586 = vmatpush2.bf16.msra.mxu0 0
        %3587 = vmatprep.subr.bf16.mxu0 0
        %3588 = vmatpush2.bf16.msra.mxu0 0
        %3589 = vmatprep.subr.bf16.mxu0 0
        %3590 = vmatpush2.bf16.msra.mxu0 0
        %3591 = vmatprep.subr.bf16.mxu0 0
        %3592 = vmatpush2.bf16.msra.mxu0 0
        %3593 = vmatprep.subr.bf16.mxu0 0
        %3594 = vmatpush2.bf16.msra.mxu0 0
        %3595 = vmatprep.subr.bf16.mxu0 0
        %3596 = vmatpush2.bf16.msra.mxu0 0
        %3597 = vmatprep.subr.bf16.mxu0 0
        %3598 = vmatpush2.bf16.msra.mxu0 0
        %3599 = vmatprep.subr.bf16.mxu0 0
        %3600 = vmatpush2.bf16.msra.mxu0 0
        %3601 = vmatprep.mubr.bf16.mxu0 0
        %3602 = vmatmul.mubr.bf16.gmra.mxu0 %v3558
        %v3603 = vpop.f32.mrf.mxu0
        %v3604 = vadd.f32 0.0, %v3603
        %v3605 = vpop.f32.mrf.mxu0
        %v3606 = vpop.f32.mrf.mxu0
        %v3607 = vadd.f32 0.0, %v3606
        %v3608 = vpop.f32.mrf.mxu0
        %3609 = vmatprep.mubr.bf16.mxu0 0
        %3610 = vmatmul.mubr.bf16.gmra.mxu0 %v3561
        %v3611 = vpop.f32.mrf.mxu0
        %v3612 = vadd.f32 0.0, %v3611
        %v3613 = vpop.f32.mrf.mxu0
        %v3614 = vpop.f32.mrf.mxu0
        %v3615 = vadd.f32 0.0, %v3614
        %v3616 = vpop.f32.mrf.mxu0
        %3617 = vmatprep.mubr.bf16.mxu0 0
        %3618 = vmatmul.mubr.bf16.gmra.mxu0 %v3564
        %v3619 = vpop.f32.mrf.mxu0
        %v3620 = vadd.f32 0.0, %v3619
        %v3621 = vpop.f32.mrf.mxu0
        %v3622 = vpop.f32.mrf.mxu0
        %v3623 = vadd.f32 0.0, %v3622
        %v3624 = vpop.f32.mrf.mxu0
        %3625 = vmatprep.mubr.bf16.mxu0 0
        %3626 = vmatmul.mubr.bf16.gmra.mxu0 %v3567
        %v3627 = vpop.f32.mrf.mxu0
        %v3628 = vadd.f32 0.0, %v3627
        %v3629 = vpop.f32.mrf.mxu0
        %v3630 = vpop.f32.mrf.mxu0
        %v3631 = vadd.f32 0.0, %v3630
        %v3632 = vpop.f32.mrf.mxu0
        %3633 = vdwg.mxu0
        %v3634 = vmul.f32 %v3604, %v3529
        %v3635 = vmul.f32 %v3607, %v3530
        %v3636 = vmul.f32 %v3612, %v3531
        %v3637 = vmul.f32 %v3615, %v3532
        %v3638 = vmul.f32 %v3620, %v3533
        %v3639 = vmul.f32 %v3623, %v3534
        %v3640 = vmul.f32 %v3628, %v3535
        %v3641 = vmul.f32 %v3631, %v3536
        %v3642 = vpack.c.bf16 %v3635, %v3634
        %v3643 = vpack.c.bf16 %v3637, %v3636
        %v3644 = vpack.c.bf16 %v3639, %v3638
        %v3645 = vpack.c.bf16 %v3641, %v3640
        %v3654 = vunpack.c.l.b16 %v2094
        %v3655 = vunpack.c.h.b16 %v2094
        %v3656 = vunpack.c.l.b16 %v2095
        %v3657 = vunpack.c.h.b16 %v2095
        %v3658 = vunpack.c.l.b16 %v2096
        %v3659 = vunpack.c.h.b16 %v2096
        %v3660 = vunpack.c.l.b16 %v2097
        %v3661 = vunpack.c.h.b16 %v2097
        %v3662 = vunpack.c.l.b16 %v2098
        %v3663 = vunpack.c.h.b16 %v2098
        %v3664 = vunpack.c.l.b16 %v2099
        %v3665 = vunpack.c.h.b16 %v2099
        %v3666 = vunpack.c.l.b16 %v2100
        %v3667 = vunpack.c.h.b16 %v2100
        %v3668 = vunpack.c.l.b16 %v2101
        %v3669 = vunpack.c.h.b16 %v2101
        %v3670 = vpack.c.b16 %v3656, %v3654
        %v3671 = vpack.c.b16 %v3657, %v3655
        %v3672 = vpack.c.b16 %v3660, %v3658
        %v3673 = vpack.c.b16 %v3661, %v3659
        %v3674 = vpack.c.b16 %v3664, %v3662
        %v3675 = vpack.c.b16 %v3665, %v3663
        %v3676 = vpack.c.b16 %v3668, %v3666
        %v3677 = vpack.c.b16 %v3669, %v3667
        %v3687 = vsel %vm2114, %v3642, 0
        %v3690 = vsel %vm2114, %v3643, 0
        %v3693 = vsel %vm2114, %v3644, 0
        %v3696 = vsel %vm2114, %v3645, 0
        %3698 = vmatprep.subr.bf16.mxu0 0
        %3699 = vmatpush1.bf16.msra.mxu0 0
        %3700 = vmatprep.subr.bf16.mxu0 0
        %3701 = vmatpush1.bf16.msra.mxu0 0
        %3702 = vmatprep.subr.bf16.mxu0 0
        %3703 = vmatpush1.bf16.msra.mxu0 0
        %3704 = vmatprep.subr.bf16.mxu0 0
        %3705 = vmatpush1.bf16.msra.mxu0 0
        %3706 = vmatprep.subr.bf16.mxu0 %v3677
        %3707 = vmatpush1.bf16.msra.mxu0 %v3676
        %3708 = vmatprep.subr.bf16.mxu0 %v3675
        %3709 = vmatpush1.bf16.msra.mxu0 %v3674
        %3710 = vmatprep.subr.bf16.mxu0 %v3673
        %3711 = vmatpush1.bf16.msra.mxu0 %v3672
        %3712 = vmatprep.subr.bf16.mxu0 %v3671
        %3713 = vmatpush1.bf16.msra.mxu0 %v3670
        %3714 = vmatprep.subr.bf16.mxu0 0
        %3715 = vmatpush2.bf16.msra.mxu0 0
        %3716 = vmatprep.subr.bf16.mxu0 0
        %3717 = vmatpush2.bf16.msra.mxu0 0
        %3718 = vmatprep.subr.bf16.mxu0 0
        %3719 = vmatpush2.bf16.msra.mxu0 0
        %3720 = vmatprep.subr.bf16.mxu0 0
        %3721 = vmatpush2.bf16.msra.mxu0 0
        %3722 = vmatprep.subr.bf16.mxu0 0
        %3723 = vmatpush2.bf16.msra.mxu0 0
        %3724 = vmatprep.subr.bf16.mxu0 0
        %3725 = vmatpush2.bf16.msra.mxu0 0
        %3726 = vmatprep.subr.bf16.mxu0 0
        %3727 = vmatpush2.bf16.msra.mxu0 0
        %3728 = vmatprep.subr.bf16.mxu0 0
        %3729 = vmatpush2.bf16.msra.mxu0 0
        %3730 = vmatprep.mubr.bf16.mxu0 0
        %3731 = vmatmul.mubr.bf16.gmra.mxu0 %v3687
        %v3732 = vpop.f32.mrf.mxu0
        %v3733 = vadd.f32 0.0, %v3732
        %v3734 = vpop.f32.mrf.mxu0
        %v3735 = vadd.f32 0.0, %v3734
        %v3736 = vpop.f32.mrf.mxu0
        %v3737 = vadd.f32 0.0, %v3736
        %v3738 = vpop.f32.mrf.mxu0
        %v3739 = vadd.f32 0.0, %v3738
        %3740 = vmatprep.mubr.bf16.mxu0 0
        %3741 = vmatmul.mubr.bf16.gmra.mxu0 %v3690
        %v3742 = vpop.f32.mrf.mxu0
        %v3743 = vadd.f32 0.0, %v3742
        %v3744 = vpop.f32.mrf.mxu0
        %v3745 = vadd.f32 0.0, %v3744
        %v3746 = vpop.f32.mrf.mxu0
        %v3747 = vadd.f32 0.0, %v3746
        %v3748 = vpop.f32.mrf.mxu0
        %v3749 = vadd.f32 0.0, %v3748
        %3750 = vmatprep.mubr.bf16.mxu0 0
        %3751 = vmatmul.mubr.bf16.gmra.mxu0 %v3693
        %v3752 = vpop.f32.mrf.mxu0
        %v3753 = vadd.f32 0.0, %v3752
        %v3754 = vpop.f32.mrf.mxu0
        %v3755 = vadd.f32 0.0, %v3754
        %v3756 = vpop.f32.mrf.mxu0
        %v3757 = vadd.f32 0.0, %v3756
        %v3758 = vpop.f32.mrf.mxu0
        %v3759 = vadd.f32 0.0, %v3758
        %3760 = vmatprep.mubr.bf16.mxu0 0
        %3761 = vmatmul.mubr.bf16.gmra.mxu0 %v3696
        %v3762 = vpop.f32.mrf.mxu0
        %v3763 = vadd.f32 0.0, %v3762
        %v3764 = vpop.f32.mrf.mxu0
        %v3765 = vadd.f32 0.0, %v3764
        %v3766 = vpop.f32.mrf.mxu0
        %v3767 = vadd.f32 0.0, %v3766
        %v3768 = vpop.f32.mrf.mxu0
        %v3769 = vadd.f32 0.0, %v3768
        %3770 = vdwg.mxu0
        %v3771 = vadd.f32 %v3328, %v3733
        %v3772 = vadd.f32 %v3329, %v3735
        %v3773 = vadd.f32 %v3330, %v3737
        %v3774 = vadd.f32 %v3331, %v3739
        %v3775 = vadd.f32 %v3332, %v3743
        %v3776 = vadd.f32 %v3333, %v3745
        %v3777 = vadd.f32 %v3334, %v3747
        %v3778 = vadd.f32 %v3335, %v3749
        %v3779 = vadd.f32 %v3336, %v3753
        %v3780 = vadd.f32 %v3337, %v3755
        %v3781 = vadd.f32 %v3338, %v3757
        %v3782 = vadd.f32 %v3339, %v3759
        %v3783 = vadd.f32 %v3340, %v3763
        %v3784 = vadd.f32 %v3341, %v3765
        %v3785 = vadd.f32 %v3342, %v3767
        %v3786 = vadd.f32 %v3343, %v3769
        %v3787 = vadd.f32 %v1042, %v3771
        %v3788 = vadd.f32 %v1043, %v3772
        %v3789 = vadd.f32 %v1044, %v3773
        %v3790 = vadd.f32 %v1045, %v3774
        %v3791 = vadd.f32 %v1046, %v3775
        %v3792 = vadd.f32 %v1047, %v3776
        %v3793 = vadd.f32 %v1048, %v3777
        %v3794 = vadd.f32 %v1049, %v3778
        %v3795 = vadd.f32 %v1050, %v3779
        %v3796 = vadd.f32 %v1051, %v3780
        %v3797 = vadd.f32 %v1052, %v3781
        %v3798 = vadd.f32 %v1053, %v3782
        %v3799 = vadd.f32 %v1054, %v3783
        %v3800 = vadd.f32 %v1055, %v3784
        %v3801 = vadd.f32 %v1056, %v3785
        %v3802 = vadd.f32 %v1057, %v3786
        %v3803 = vld [vmem:[%s819] sm:$0x3]
        %v3805 = vlaneseq
        %v3806 = vshrl.u32 %v3805, 7
        %v3807 = vsub.s32 0, %v3806
        %v3808 = vrot.slane %v3803, %v3807
        %v3809 = vlaneseq
        %v3810 = vshrl.u32 %v3809, 7
        %v3811 = vsub.s32 1, %v3810
        %v3812 = vrot.slane %v3803, %v3811
        %v3815 = vadd.f32 %v3787, %v3808
        %v3816 = vadd.f32 %v3788, %v3812
        %v3817 = vadd.f32 %v3789, %v3808
        %v3818 = vadd.f32 %v3790, %v3812
        %v3819 = vadd.f32 %v3791, %v3808
        %v3820 = vadd.f32 %v3792, %v3812
        %v3821 = vadd.f32 %v3793, %v3808
        %v3822 = vadd.f32 %v3794, %v3812
        %v3823 = vadd.f32 %v3795, %v3808
        %v3824 = vadd.f32 %v3796, %v3812
        %v3825 = vadd.f32 %v3797, %v3808
        %v3826 = vadd.f32 %v3798, %v3812
        %v3827 = vadd.f32 %v3799, %v3808
        %v3828 = vadd.f32 %v3800, %v3812
        %v3829 = vadd.f32 %v3801, %v3808
        %v3830 = vadd.f32 %v3802, %v3812
        %v3831 = vld [vmem:[%s828] sm:$0x3]
        %v3832 = vld [vmem:[%s837] sm:$0x3]
        %v3833 = vadd.f32 %v3815, %v3816
        %3834 = vadd.xlane.f32.xlu0 %v3833
        %v3835 = vpop.xlane.xlu0 %3834
        %v3836 = vadd.f32 %v3817, %v3818
        %3837 = vadd.xlane.f32.xlu0 %v3836
        %v3838 = vpop.xlane.xlu0 %3837
        %v3839 = vadd.f32 %v3819, %v3820
        %3840 = vadd.xlane.f32.xlu0 %v3839
        %v3841 = vpop.xlane.xlu0 %3840
        %v3842 = vadd.f32 %v3821, %v3822
        %3843 = vadd.xlane.f32.xlu0 %v3842
        %v3844 = vpop.xlane.xlu0 %3843
        %v3845 = vadd.f32 %v3823, %v3824
        %3846 = vadd.xlane.f32.xlu0 %v3845
        %v3847 = vpop.xlane.xlu0 %3846
        %v3848 = vadd.f32 %v3825, %v3826
        %3849 = vadd.xlane.f32.xlu0 %v3848
        %v3850 = vpop.xlane.xlu0 %3849
        %v3851 = vadd.f32 %v3827, %v3828
        %3852 = vadd.xlane.f32.xlu0 %v3851
        %v3853 = vpop.xlane.xlu0 %3852
        %v3854 = vadd.f32 %v3829, %v3830
        %3855 = vadd.xlane.f32.xlu0 %v3854
        %v3856 = vpop.xlane.xlu0 %3855
        %v3857 = vmul.f32 %v3835, %v1084
        %v3858 = vmul.f32 %v3838, %v1084
        %v3859 = vmul.f32 %v3841, %v1084
        %v3860 = vmul.f32 %v3844, %v1084
        %v3861 = vmul.f32 %v3847, %v1084
        %v3862 = vmul.f32 %v3850, %v1084
        %v3863 = vmul.f32 %v3853, %v1084
        %v3864 = vmul.f32 %v3856, %v1084
        %v3865 = vsub.f32 %v3815, %v3857
        %v3866 = vsub.f32 %v3816, %v3857
        %v3867 = vsub.f32 %v3817, %v3858
        %v3868 = vsub.f32 %v3818, %v3858
        %v3869 = vsub.f32 %v3819, %v3859
        %v3870 = vsub.f32 %v3820, %v3859
        %v3871 = vsub.f32 %v3821, %v3860
        %v3872 = vsub.f32 %v3822, %v3860
        %v3873 = vsub.f32 %v3823, %v3861
        %v3874 = vsub.f32 %v3824, %v3861
        %v3875 = vsub.f32 %v3825, %v3862
        %v3876 = vsub.f32 %v3826, %v3862
        %v3877 = vsub.f32 %v3827, %v3863
        %v3878 = vsub.f32 %v3828, %v3863
        %v3879 = vsub.f32 %v3829, %v3864
        %v3880 = vsub.f32 %v3830, %v3864
        %v3881 = vmul.f32 %v3865, %v3865
        %v3882 = vmul.f32 %v3866, %v3866
        %v3883 = vmul.f32 %v3867, %v3867
        %v3884 = vmul.f32 %v3868, %v3868
        %v3885 = vmul.f32 %v3869, %v3869
        %v3886 = vmul.f32 %v3870, %v3870
        %v3887 = vmul.f32 %v3871, %v3871
        %v3888 = vmul.f32 %v3872, %v3872
        %v3889 = vmul.f32 %v3873, %v3873
        %v3890 = vmul.f32 %v3874, %v3874
        %v3891 = vmul.f32 %v3875, %v3875
        %v3892 = vmul.f32 %v3876, %v3876
        %v3893 = vmul.f32 %v3877, %v3877
        %v3894 = vmul.f32 %v3878, %v3878
        %v3895 = vmul.f32 %v3879, %v3879
        %v3896 = vmul.f32 %v3880, %v3880
        %v3897 = vadd.f32 %v3881, %v3882
        %3898 = vadd.xlane.f32.xlu0 %v3897
        %v3899 = vpop.xlane.xlu0 %3898
        %v3900 = vadd.f32 %v3883, %v3884
        %3901 = vadd.xlane.f32.xlu0 %v3900
        %v3902 = vpop.xlane.xlu0 %3901
        %v3903 = vadd.f32 %v3885, %v3886
        %3904 = vadd.xlane.f32.xlu0 %v3903
        %v3905 = vpop.xlane.xlu0 %3904
        %v3906 = vadd.f32 %v3887, %v3888
        %3907 = vadd.xlane.f32.xlu0 %v3906
        %v3908 = vpop.xlane.xlu0 %3907
        %v3909 = vadd.f32 %v3889, %v3890
        %3910 = vadd.xlane.f32.xlu0 %v3909
        %v3911 = vpop.xlane.xlu0 %3910
        %v3912 = vadd.f32 %v3891, %v3892
        %3913 = vadd.xlane.f32.xlu0 %v3912
        %v3914 = vpop.xlane.xlu0 %3913
        %v3915 = vadd.f32 %v3893, %v3894
        %3916 = vadd.xlane.f32.xlu0 %v3915
        %v3917 = vpop.xlane.xlu0 %3916
        %v3918 = vadd.f32 %v3895, %v3896
        %3919 = vadd.xlane.f32.xlu0 %v3918
        %v3920 = vpop.xlane.xlu0 %3919
        %v3921 = vmul.f32 %v3899, %v1084
        %v3922 = vmul.f32 %v3902, %v1084
        %v3923 = vmul.f32 %v3905, %v1084
        %v3924 = vmul.f32 %v3908, %v1084
        %v3925 = vmul.f32 %v3911, %v1084
        %v3926 = vmul.f32 %v3914, %v1084
        %v3927 = vmul.f32 %v3917, %v1084
        %v3928 = vmul.f32 %v3920, %v1084
        %v3929 = vadd.f32 %v3921, 1e-05
        %v3930 = vadd.f32 %v3922, 1e-05
        %v3931 = vadd.f32 %v3923, 1e-05
        %v3932 = vadd.f32 %v3924, 1e-05
        %v3933 = vadd.f32 %v3925, 1e-05
        %v3934 = vadd.f32 %v3926, 1e-05
        %v3935 = vadd.f32 %v3927, 1e-05
        %v3936 = vadd.f32 %v3928, 1e-05
        %v3937 = vrsqrt.pop %v3929
        %v3938 = vrsqrt.pop %v3930
        %v3939 = vrsqrt.pop %v3931
        %v3940 = vrsqrt.pop %v3932
        %v3941 = vrsqrt.pop %v3933
        %v3942 = vrsqrt.pop %v3934
        %v3943 = vrsqrt.pop %v3935
        %v3944 = vrsqrt.pop %v3936
        %v3945 = vmul.f32 %v3865, %v3937
        %v3946 = vmul.f32 %v3866, %v3937
        %v3947 = vmul.f32 %v3867, %v3938
        %v3948 = vmul.f32 %v3868, %v3938
        %v3949 = vmul.f32 %v3869, %v3939
        %v3950 = vmul.f32 %v3870, %v3939
        %v3951 = vmul.f32 %v3871, %v3940
        %v3952 = vmul.f32 %v3872, %v3940
        %v3953 = vmul.f32 %v3873, %v3941
        %v3954 = vmul.f32 %v3874, %v3941
        %v3955 = vmul.f32 %v3875, %v3942
        %v3956 = vmul.f32 %v3876, %v3942
        %v3957 = vmul.f32 %v3877, %v3943
        %v3958 = vmul.f32 %v3878, %v3943
        %v3959 = vmul.f32 %v3879, %v3944
        %v3960 = vmul.f32 %v3880, %v3944
        %v3962 = vlaneseq
        %v3963 = vshrl.u32 %v3962, 7
        %v3964 = vsub.s32 0, %v3963
        %v3965 = vrot.slane %v3831, %v3964
        %v3966 = vlaneseq
        %v3967 = vshrl.u32 %v3966, 7
        %v3968 = vsub.s32 1, %v3967
        %v3969 = vrot.slane %v3831, %v3968
        %v3972 = vmul.f32 %v3945, %v3965
        %v3973 = vmul.f32 %v3946, %v3969
        %v3974 = vmul.f32 %v3947, %v3965
        %v3975 = vmul.f32 %v3948, %v3969
        %v3976 = vmul.f32 %v3949, %v3965
        %v3977 = vmul.f32 %v3950, %v3969
        %v3978 = vmul.f32 %v3951, %v3965
        %v3979 = vmul.f32 %v3952, %v3969
        %v3980 = vmul.f32 %v3953, %v3965
        %v3981 = vmul.f32 %v3954, %v3969
        %v3982 = vmul.f32 %v3955, %v3965
        %v3983 = vmul.f32 %v3956, %v3969
        %v3984 = vmul.f32 %v3957, %v3965
        %v3985 = vmul.f32 %v3958, %v3969
        %v3986 = vmul.f32 %v3959, %v3965
        %v3987 = vmul.f32 %v3960, %v3969
        %v3989 = vlaneseq
        %v3990 = vshrl.u32 %v3989, 7
        %v3991 = vsub.s32 0, %v3990
        %v3992 = vrot.slane %v3832, %v3991
        %v3993 = vlaneseq
        %v3994 = vshrl.u32 %v3993, 7
        %v3995 = vsub.s32 1, %v3994
        %v3996 = vrot.slane %v3832, %v3995
        %v3999 = vadd.f32 %v3972, %v3992
        %v4000 = vadd.f32 %v3973, %v3996
        %v4001 = vadd.f32 %v3974, %v3992
        %v4002 = vadd.f32 %v3975, %v3996
        %v4003 = vadd.f32 %v3976, %v3992
        %v4004 = vadd.f32 %v3977, %v3996
        %v4005 = vadd.f32 %v3978, %v3992
        %v4006 = vadd.f32 %v3979, %v3996
        %v4007 = vadd.f32 %v3980, %v3992
        %v4008 = vadd.f32 %v3981, %v3996
        %v4009 = vadd.f32 %v3982, %v3992
        %v4010 = vadd.f32 %v3983, %v3996
        %v4011 = vadd.f32 %v3984, %v3992
        %v4012 = vadd.f32 %v3985, %v3996
        %v4013 = vadd.f32 %v3986, %v3992
        %v4014 = vadd.f32 %v3987, %v3996
        %v4015 = vpack.c.bf16 %v4001, %v3999
        %v4016 = vpack.c.bf16 %v4002, %v4000
        %v4017 = vpack.c.bf16 %v4005, %v4003
        %v4018 = vpack.c.bf16 %v4006, %v4004
        %v4019 = vpack.c.bf16 %v4009, %v4007
        %v4020 = vpack.c.bf16 %v4010, %v4008
        %v4021 = vpack.c.bf16 %v4013, %v4011
        %v4022 = vpack.c.bf16 %v4014, %v4012
        %v4023 = vld [vmem:[%s846] sm:$0xff]
        %v4024 = vld [vmem:[%s846 + $0x8] sm:$0xff]
        %v4025 = vld [vmem:[%s846 + $0x10] sm:$0xff]
        %v4026 = vld [vmem:[%s846 + $0x18] sm:$0xff]
        %v4027 = vld [vmem:[%s846 + $0x20] sm:$0xff]
        %v4028 = vld [vmem:[%s846 + $0x28] sm:$0xff]
        %v4029 = vld [vmem:[%s846 + $0x30] sm:$0xff]
        %v4030 = vld [vmem:[%s846 + $0x38] sm:$0xff]
        %v4031 = vld [vmem:[%s846 + $0x40] sm:$0xff]
        %v4032 = vld [vmem:[%s846 + $0x48] sm:$0xff]
        %v4033 = vld [vmem:[%s846 + $0x50] sm:$0xff]
        %v4034 = vld [vmem:[%s846 + $0x58] sm:$0xff]
        %v4035 = vld [vmem:[%s846 + $0x60] sm:$0xff]
        %v4036 = vld [vmem:[%s846 + $0x68] sm:$0xff]
        %v4037 = vld [vmem:[%s846 + $0x70] sm:$0xff]
        %v4038 = vld [vmem:[%s846 + $0x78] sm:$0xff]
        %v4039 = vld [vmem:[%s846 + $0x80] sm:$0xff]
        %v4040 = vld [vmem:[%s846 + $0x88] sm:$0xff]
        %v4041 = vld [vmem:[%s846 + $0x90] sm:$0xff]
        %v4042 = vld [vmem:[%s846 + $0x98] sm:$0xff]
        %v4043 = vld [vmem:[%s846 + $0xa0] sm:$0xff]
        %v4044 = vld [vmem:[%s846 + $0xa8] sm:$0xff]
        %v4045 = vld [vmem:[%s846 + $0xb0] sm:$0xff]
        %v4046 = vld [vmem:[%s846 + $0xb8] sm:$0xff]
        %v4047 = vld [vmem:[%s846 + $0xc0] sm:$0xff]
        %v4048 = vld [vmem:[%s846 + $0xc8] sm:$0xff]
        %v4049 = vld [vmem:[%s846 + $0xd0] sm:$0xff]
        %v4050 = vld [vmem:[%s846 + $0xd8] sm:$0xff]
        %v4051 = vld [vmem:[%s846 + $0xe0] sm:$0xff]
        %v4052 = vld [vmem:[%s846 + $0xe8] sm:$0xff]
        %v4053 = vld [vmem:[%s846 + $0xf0] sm:$0xff]
        %v4054 = vld [vmem:[%s846 + $0xf8] sm:$0xff]
        %v4055 = vld [vmem:[%s846 + $0x100] sm:$0xff]
        %v4056 = vld [vmem:[%s846 + $0x108] sm:$0xff]
        %v4057 = vld [vmem:[%s846 + $0x110] sm:$0xff]
        %v4058 = vld [vmem:[%s846 + $0x118] sm:$0xff]
        %v4059 = vld [vmem:[%s846 + $0x120] sm:$0xff]
        %v4060 = vld [vmem:[%s846 + $0x128] sm:$0xff]
        %v4061 = vld [vmem:[%s846 + $0x130] sm:$0xff]
        %v4062 = vld [vmem:[%s846 + $0x138] sm:$0xff]
        %v4063 = vld [vmem:[%s846 + $0x140] sm:$0xff]
        %v4064 = vld [vmem:[%s846 + $0x148] sm:$0xff]
        %v4065 = vld [vmem:[%s846 + $0x150] sm:$0xff]
        %v4066 = vld [vmem:[%s846 + $0x158] sm:$0xff]
        %v4067 = vld [vmem:[%s846 + $0x160] sm:$0xff]
        %v4068 = vld [vmem:[%s846 + $0x168] sm:$0xff]
        %v4069 = vld [vmem:[%s846 + $0x170] sm:$0xff]
        %v4070 = vld [vmem:[%s846 + $0x178] sm:$0xff]
        %v4071 = vld [vmem:[%s846 + $0x180] sm:$0xff]
        %v4072 = vld [vmem:[%s846 + $0x188] sm:$0xff]
        %v4073 = vld [vmem:[%s846 + $0x190] sm:$0xff]
        %v4074 = vld [vmem:[%s846 + $0x198] sm:$0xff]
        %v4075 = vld [vmem:[%s846 + $0x1a0] sm:$0xff]
        %v4076 = vld [vmem:[%s846 + $0x1a8] sm:$0xff]
        %v4077 = vld [vmem:[%s846 + $0x1b0] sm:$0xff]
        %v4078 = vld [vmem:[%s846 + $0x1b8] sm:$0xff]
        %v4079 = vld [vmem:[%s846 + $0x1c0] sm:$0xff]
        %v4080 = vld [vmem:[%s846 + $0x1c8] sm:$0xff]
        %v4081 = vld [vmem:[%s846 + $0x1d0] sm:$0xff]
        %v4082 = vld [vmem:[%s846 + $0x1d8] sm:$0xff]
        %v4083 = vld [vmem:[%s846 + $0x1e0] sm:$0xff]
        %v4084 = vld [vmem:[%s846 + $0x1e8] sm:$0xff]
        %v4085 = vld [vmem:[%s846 + $0x1f0] sm:$0xff]
        %v4086 = vld [vmem:[%s846 + $0x1f8] sm:$0xff]
        %v4087 = vld [vmem:[%s846 + $0x200] sm:$0xff]
        %v4088 = vld [vmem:[%s846 + $0x208] sm:$0xff]
        %v4089 = vld [vmem:[%s846 + $0x210] sm:$0xff]
        %v4090 = vld [vmem:[%s846 + $0x218] sm:$0xff]
        %v4091 = vld [vmem:[%s846 + $0x220] sm:$0xff]
        %v4092 = vld [vmem:[%s846 + $0x228] sm:$0xff]
        %v4093 = vld [vmem:[%s846 + $0x230] sm:$0xff]
        %v4094 = vld [vmem:[%s846 + $0x238] sm:$0xff]
        %v4095 = vld [vmem:[%s846 + $0x240] sm:$0xff]
        %v4096 = vld [vmem:[%s846 + $0x248] sm:$0xff]
        %v4097 = vld [vmem:[%s846 + $0x250] sm:$0xff]
        %v4098 = vld [vmem:[%s846 + $0x258] sm:$0xff]
        %v4099 = vld [vmem:[%s846 + $0x260] sm:$0xff]
        %v4100 = vld [vmem:[%s846 + $0x268] sm:$0xff]
        %v4101 = vld [vmem:[%s846 + $0x270] sm:$0xff]
        %v4102 = vld [vmem:[%s846 + $0x278] sm:$0xff]
        %v4103 = vld [vmem:[%s846 + $0x280] sm:$0xff]
        %v4104 = vld [vmem:[%s846 + $0x288] sm:$0xff]
        %v4105 = vld [vmem:[%s846 + $0x290] sm:$0xff]
        %v4106 = vld [vmem:[%s846 + $0x298] sm:$0xff]
        %v4107 = vld [vmem:[%s846 + $0x2a0] sm:$0xff]
        %v4108 = vld [vmem:[%s846 + $0x2a8] sm:$0xff]
        %v4109 = vld [vmem:[%s846 + $0x2b0] sm:$0xff]
        %v4110 = vld [vmem:[%s846 + $0x2b8] sm:$0xff]
        %v4111 = vld [vmem:[%s846 + $0x2c0] sm:$0xff]
        %v4112 = vld [vmem:[%s846 + $0x2c8] sm:$0xff]
        %v4113 = vld [vmem:[%s846 + $0x2d0] sm:$0xff]
        %v4114 = vld [vmem:[%s846 + $0x2d8] sm:$0xff]
        %v4115 = vld [vmem:[%s846 + $0x2e0] sm:$0xff]
        %v4116 = vld [vmem:[%s846 + $0x2e8] sm:$0xff]
        %v4117 = vld [vmem:[%s846 + $0x2f0] sm:$0xff]
        %v4118 = vld [vmem:[%s846 + $0x2f8] sm:$0xff]
        %v4119 = vld [vmem:[%s846 + $0x300] sm:$0xff]
        %v4120 = vld [vmem:[%s846 + $0x308] sm:$0xff]
        %v4121 = vld [vmem:[%s846 + $0x310] sm:$0xff]
        %v4122 = vld [vmem:[%s846 + $0x318] sm:$0xff]
        %v4123 = vld [vmem:[%s846 + $0x320] sm:$0xff]
        %v4124 = vld [vmem:[%s846 + $0x328] sm:$0xff]
        %v4125 = vld [vmem:[%s846 + $0x330] sm:$0xff]
        %v4126 = vld [vmem:[%s846 + $0x338] sm:$0xff]
        %v4127 = vld [vmem:[%s846 + $0x340] sm:$0xff]
        %v4128 = vld [vmem:[%s846 + $0x348] sm:$0xff]
        %v4129 = vld [vmem:[%s846 + $0x350] sm:$0xff]
        %v4130 = vld [vmem:[%s846 + $0x358] sm:$0xff]
        %v4131 = vld [vmem:[%s846 + $0x360] sm:$0xff]
        %v4132 = vld [vmem:[%s846 + $0x368] sm:$0xff]
        %v4133 = vld [vmem:[%s846 + $0x370] sm:$0xff]
        %v4134 = vld [vmem:[%s846 + $0x378] sm:$0xff]
        %v4135 = vld [vmem:[%s846 + $0x380] sm:$0xff]
        %v4136 = vld [vmem:[%s846 + $0x388] sm:$0xff]
        %v4137 = vld [vmem:[%s846 + $0x390] sm:$0xff]
        %v4138 = vld [vmem:[%s846 + $0x398] sm:$0xff]
        %v4139 = vld [vmem:[%s846 + $0x3a0] sm:$0xff]
        %v4140 = vld [vmem:[%s846 + $0x3a8] sm:$0xff]
        %v4141 = vld [vmem:[%s846 + $0x3b0] sm:$0xff]
        %v4142 = vld [vmem:[%s846 + $0x3b8] sm:$0xff]
        %v4143 = vld [vmem:[%s846 + $0x3c0] sm:$0xff]
        %v4144 = vld [vmem:[%s846 + $0x3c8] sm:$0xff]
        %v4145 = vld [vmem:[%s846 + $0x3d0] sm:$0xff]
        %v4146 = vld [vmem:[%s846 + $0x3d8] sm:$0xff]
        %v4147 = vld [vmem:[%s846 + $0x3e0] sm:$0xff]
        %v4148 = vld [vmem:[%s846 + $0x3e8] sm:$0xff]
        %v4149 = vld [vmem:[%s846 + $0x3f0] sm:$0xff]
        %v4150 = vld [vmem:[%s846 + $0x3f8] sm:$0xff]
        %v4151 = vld [vmem:[%s855] sm:$0xff]
        %v4153 = vlaneseq
        %v4154 = vshrl.u32 %v4153, 7
        %v4155 = vsub.s32 0, %v4154
        %v4156 = vrot.slane %v4151, %v4155
        %v4157 = vlaneseq
        %v4158 = vshrl.u32 %v4157, 7
        %v4159 = vsub.s32 1, %v4158
        %v4160 = vrot.slane %v4151, %v4159
        %v4161 = vlaneseq
        %v4162 = vshrl.u32 %v4161, 7
        %v4163 = vsub.s32 2, %v4162
        %v4164 = vrot.slane %v4151, %v4163
        %v4165 = vlaneseq
        %v4166 = vshrl.u32 %v4165, 7
        %v4167 = vsub.s32 3, %v4166
        %v4168 = vrot.slane %v4151, %v4167
        %v4169 = vlaneseq
        %v4170 = vshrl.u32 %v4169, 7
        %v4171 = vsub.s32 4, %v4170
        %v4172 = vrot.slane %v4151, %v4171
        %v4173 = vlaneseq
        %v4174 = vshrl.u32 %v4173, 7
        %v4175 = vsub.s32 5, %v4174
        %v4176 = vrot.slane %v4151, %v4175
        %v4177 = vlaneseq
        %v4178 = vshrl.u32 %v4177, 7
        %v4179 = vsub.s32 6, %v4178
        %v4180 = vrot.slane %v4151, %v4179
        %v4181 = vlaneseq
        %v4182 = vshrl.u32 %v4181, 7
        %v4183 = vsub.s32 7, %v4182
        %v4184 = vrot.slane %v4151, %v4183
        %v4321 = vunpack.c.l.b16 %v4023
        %v4322 = vunpack.c.h.b16 %v4023
        %v4323 = vunpack.c.l.b16 %v4024
        %v4324 = vunpack.c.h.b16 %v4024
        %v4325 = vunpack.c.l.b16 %v4025
        %v4326 = vunpack.c.h.b16 %v4025
        %v4327 = vunpack.c.l.b16 %v4026
        %v4328 = vunpack.c.h.b16 %v4026
        %v4329 = vunpack.c.l.b16 %v4027
        %v4330 = vunpack.c.h.b16 %v4027
        %v4331 = vunpack.c.l.b16 %v4028
        %v4332 = vunpack.c.h.b16 %v4028
        %v4333 = vunpack.c.l.b16 %v4029
        %v4334 = vunpack.c.h.b16 %v4029
        %v4335 = vunpack.c.l.b16 %v4030
        %v4336 = vunpack.c.h.b16 %v4030
        %v4337 = vunpack.c.l.b16 %v4031
        %v4338 = vunpack.c.h.b16 %v4031
        %v4339 = vunpack.c.l.b16 %v4032
        %v4340 = vunpack.c.h.b16 %v4032
        %v4341 = vunpack.c.l.b16 %v4033
        %v4342 = vunpack.c.h.b16 %v4033
        %v4343 = vunpack.c.l.b16 %v4034
        %v4344 = vunpack.c.h.b16 %v4034
        %v4345 = vunpack.c.l.b16 %v4035
        %v4346 = vunpack.c.h.b16 %v4035
        %v4347 = vunpack.c.l.b16 %v4036
        %v4348 = vunpack.c.h.b16 %v4036
        %v4349 = vunpack.c.l.b16 %v4037
        %v4350 = vunpack.c.h.b16 %v4037
        %v4351 = vunpack.c.l.b16 %v4038
        %v4352 = vunpack.c.h.b16 %v4038
        %v4353 = vunpack.c.l.b16 %v4039
        %v4354 = vunpack.c.h.b16 %v4039
        %v4355 = vunpack.c.l.b16 %v4040
        %v4356 = vunpack.c.h.b16 %v4040
        %v4357 = vunpack.c.l.b16 %v4041
        %v4358 = vunpack.c.h.b16 %v4041
        %v4359 = vunpack.c.l.b16 %v4042
        %v4360 = vunpack.c.h.b16 %v4042
        %v4361 = vunpack.c.l.b16 %v4043
        %v4362 = vunpack.c.h.b16 %v4043
        %v4363 = vunpack.c.l.b16 %v4044
        %v4364 = vunpack.c.h.b16 %v4044
        %v4365 = vunpack.c.l.b16 %v4045
        %v4366 = vunpack.c.h.b16 %v4045
        %v4367 = vunpack.c.l.b16 %v4046
        %v4368 = vunpack.c.h.b16 %v4046
        %v4369 = vunpack.c.l.b16 %v4047
        %v4370 = vunpack.c.h.b16 %v4047
        %v4371 = vunpack.c.l.b16 %v4048
        %v4372 = vunpack.c.h.b16 %v4048
        %v4373 = vunpack.c.l.b16 %v4049
        %v4374 = vunpack.c.h.b16 %v4049
        %v4375 = vunpack.c.l.b16 %v4050
        %v4376 = vunpack.c.h.b16 %v4050
        %v4377 = vunpack.c.l.b16 %v4051
        %v4378 = vunpack.c.h.b16 %v4051
        %v4379 = vunpack.c.l.b16 %v4052
        %v4380 = vunpack.c.h.b16 %v4052
        %v4381 = vunpack.c.l.b16 %v4053
        %v4382 = vunpack.c.h.b16 %v4053
        %v4383 = vunpack.c.l.b16 %v4054
        %v4384 = vunpack.c.h.b16 %v4054
        %v4385 = vunpack.c.l.b16 %v4055
        %v4386 = vunpack.c.h.b16 %v4055
        %v4387 = vunpack.c.l.b16 %v4056
        %v4388 = vunpack.c.h.b16 %v4056
        %v4389 = vunpack.c.l.b16 %v4057
        %v4390 = vunpack.c.h.b16 %v4057
        %v4391 = vunpack.c.l.b16 %v4058
        %v4392 = vunpack.c.h.b16 %v4058
        %v4393 = vunpack.c.l.b16 %v4059
        %v4394 = vunpack.c.h.b16 %v4059
        %v4395 = vunpack.c.l.b16 %v4060
        %v4396 = vunpack.c.h.b16 %v4060
        %v4397 = vunpack.c.l.b16 %v4061
        %v4398 = vunpack.c.h.b16 %v4061
        %v4399 = vunpack.c.l.b16 %v4062
        %v4400 = vunpack.c.h.b16 %v4062
        %v4401 = vunpack.c.l.b16 %v4063
        %v4402 = vunpack.c.h.b16 %v4063
        %v4403 = vunpack.c.l.b16 %v4064
        %v4404 = vunpack.c.h.b16 %v4064
        %v4405 = vunpack.c.l.b16 %v4065
        %v4406 = vunpack.c.h.b16 %v4065
        %v4407 = vunpack.c.l.b16 %v4066
        %v4408 = vunpack.c.h.b16 %v4066
        %v4409 = vunpack.c.l.b16 %v4067
        %v4410 = vunpack.c.h.b16 %v4067
        %v4411 = vunpack.c.l.b16 %v4068
        %v4412 = vunpack.c.h.b16 %v4068
        %v4413 = vunpack.c.l.b16 %v4069
        %v4414 = vunpack.c.h.b16 %v4069
        %v4415 = vunpack.c.l.b16 %v4070
        %v4416 = vunpack.c.h.b16 %v4070
        %v4417 = vunpack.c.l.b16 %v4071
        %v4418 = vunpack.c.h.b16 %v4071
        %v4419 = vunpack.c.l.b16 %v4072
        %v4420 = vunpack.c.h.b16 %v4072
        %v4421 = vunpack.c.l.b16 %v4073
        %v4422 = vunpack.c.h.b16 %v4073
        %v4423 = vunpack.c.l.b16 %v4074
        %v4424 = vunpack.c.h.b16 %v4074
        %v4425 = vunpack.c.l.b16 %v4075
        %v4426 = vunpack.c.h.b16 %v4075
        %v4427 = vunpack.c.l.b16 %v4076
        %v4428 = vunpack.c.h.b16 %v4076
        %v4429 = vunpack.c.l.b16 %v4077
        %v4430 = vunpack.c.h.b16 %v4077
        %v4431 = vunpack.c.l.b16 %v4078
        %v4432 = vunpack.c.h.b16 %v4078
        %v4433 = vunpack.c.l.b16 %v4079
        %v4434 = vunpack.c.h.b16 %v4079
        %v4435 = vunpack.c.l.b16 %v4080
        %v4436 = vunpack.c.h.b16 %v4080
        %v4437 = vunpack.c.l.b16 %v4081
        %v4438 = vunpack.c.h.b16 %v4081
        %v4439 = vunpack.c.l.b16 %v4082
        %v4440 = vunpack.c.h.b16 %v4082
        %v4441 = vunpack.c.l.b16 %v4083
        %v4442 = vunpack.c.h.b16 %v4083
        %v4443 = vunpack.c.l.b16 %v4084
        %v4444 = vunpack.c.h.b16 %v4084
        %v4445 = vunpack.c.l.b16 %v4085
        %v4446 = vunpack.c.h.b16 %v4085
        %v4447 = vunpack.c.l.b16 %v4086
        %v4448 = vunpack.c.h.b16 %v4086
        %v4449 = vunpack.c.l.b16 %v4087
        %v4450 = vunpack.c.h.b16 %v4087
        %v4451 = vunpack.c.l.b16 %v4088
        %v4452 = vunpack.c.h.b16 %v4088
        %v4453 = vunpack.c.l.b16 %v4089
        %v4454 = vunpack.c.h.b16 %v4089
        %v4455 = vunpack.c.l.b16 %v4090
        %v4456 = vunpack.c.h.b16 %v4090
        %v4457 = vunpack.c.l.b16 %v4091
        %v4458 = vunpack.c.h.b16 %v4091
        %v4459 = vunpack.c.l.b16 %v4092
        %v4460 = vunpack.c.h.b16 %v4092
        %v4461 = vunpack.c.l.b16 %v4093
        %v4462 = vunpack.c.h.b16 %v4093
        %v4463 = vunpack.c.l.b16 %v4094
        %v4464 = vunpack.c.h.b16 %v4094
        %v4465 = vunpack.c.l.b16 %v4095
        %v4466 = vunpack.c.h.b16 %v4095
        %v4467 = vunpack.c.l.b16 %v4096
        %v4468 = vunpack.c.h.b16 %v4096
        %v4469 = vunpack.c.l.b16 %v4097
        %v4470 = vunpack.c.h.b16 %v4097
        %v4471 = vunpack.c.l.b16 %v4098
        %v4472 = vunpack.c.h.b16 %v4098
        %v4473 = vunpack.c.l.b16 %v4099
        %v4474 = vunpack.c.h.b16 %v4099
        %v4475 = vunpack.c.l.b16 %v4100
        %v4476 = vunpack.c.h.b16 %v4100
        %v4477 = vunpack.c.l.b16 %v4101
        %v4478 = vunpack.c.h.b16 %v4101
        %v4479 = vunpack.c.l.b16 %v4102
        %v4480 = vunpack.c.h.b16 %v4102
        %v4481 = vunpack.c.l.b16 %v4103
        %v4482 = vunpack.c.h.b16 %v4103
        %v4483 = vunpack.c.l.b16 %v4104
        %v4484 = vunpack.c.h.b16 %v4104
        %v4485 = vunpack.c.l.b16 %v4105
        %v4486 = vunpack.c.h.b16 %v4105
        %v4487 = vunpack.c.l.b16 %v4106
        %v4488 = vunpack.c.h.b16 %v4106
        %v4489 = vunpack.c.l.b16 %v4107
        %v4490 = vunpack.c.h.b16 %v4107
        %v4491 = vunpack.c.l.b16 %v4108
        %v4492 = vunpack.c.h.b16 %v4108
        %v4493 = vunpack.c.l.b16 %v4109
        %v4494 = vunpack.c.h.b16 %v4109
        %v4495 = vunpack.c.l.b16 %v4110
        %v4496 = vunpack.c.h.b16 %v4110
        %v4497 = vunpack.c.l.b16 %v4111
        %v4498 = vunpack.c.h.b16 %v4111
        %v4499 = vunpack.c.l.b16 %v4112
        %v4500 = vunpack.c.h.b16 %v4112
        %v4501 = vunpack.c.l.b16 %v4113
        %v4502 = vunpack.c.h.b16 %v4113
        %v4503 = vunpack.c.l.b16 %v4114
        %v4504 = vunpack.c.h.b16 %v4114
        %v4505 = vunpack.c.l.b16 %v4115
        %v4506 = vunpack.c.h.b16 %v4115
        %v4507 = vunpack.c.l.b16 %v4116
        %v4508 = vunpack.c.h.b16 %v4116
        %v4509 = vunpack.c.l.b16 %v4117
        %v4510 = vunpack.c.h.b16 %v4117
        %v4511 = vunpack.c.l.b16 %v4118
        %v4512 = vunpack.c.h.b16 %v4118
        %v4513 = vunpack.c.l.b16 %v4119
        %v4514 = vunpack.c.h.b16 %v4119
        %v4515 = vunpack.c.l.b16 %v4120
        %v4516 = vunpack.c.h.b16 %v4120
        %v4517 = vunpack.c.l.b16 %v4121
        %v4518 = vunpack.c.h.b16 %v4121
        %v4519 = vunpack.c.l.b16 %v4122
        %v4520 = vunpack.c.h.b16 %v4122
        %v4521 = vunpack.c.l.b16 %v4123
        %v4522 = vunpack.c.h.b16 %v4123
        %v4523 = vunpack.c.l.b16 %v4124
        %v4524 = vunpack.c.h.b16 %v4124
        %v4525 = vunpack.c.l.b16 %v4125
        %v4526 = vunpack.c.h.b16 %v4125
        %v4527 = vunpack.c.l.b16 %v4126
        %v4528 = vunpack.c.h.b16 %v4126
        %v4529 = vunpack.c.l.b16 %v4127
        %v4530 = vunpack.c.h.b16 %v4127
        %v4531 = vunpack.c.l.b16 %v4128
        %v4532 = vunpack.c.h.b16 %v4128
        %v4533 = vunpack.c.l.b16 %v4129
        %v4534 = vunpack.c.h.b16 %v4129
        %v4535 = vunpack.c.l.b16 %v4130
        %v4536 = vunpack.c.h.b16 %v4130
        %v4537 = vunpack.c.l.b16 %v4131
        %v4538 = vunpack.c.h.b16 %v4131
        %v4539 = vunpack.c.l.b16 %v4132
        %v4540 = vunpack.c.h.b16 %v4132
        %v4541 = vunpack.c.l.b16 %v4133
        %v4542 = vunpack.c.h.b16 %v4133
        %v4543 = vunpack.c.l.b16 %v4134
        %v4544 = vunpack.c.h.b16 %v4134
        %v4545 = vunpack.c.l.b16 %v4135
        %v4546 = vunpack.c.h.b16 %v4135
        %v4547 = vunpack.c.l.b16 %v4136
        %v4548 = vunpack.c.h.b16 %v4136
        %v4549 = vunpack.c.l.b16 %v4137
        %v4550 = vunpack.c.h.b16 %v4137
        %v4551 = vunpack.c.l.b16 %v4138
        %v4552 = vunpack.c.h.b16 %v4138
        %v4553 = vunpack.c.l.b16 %v4139
        %v4554 = vunpack.c.h.b16 %v4139
        %v4555 = vunpack.c.l.b16 %v4140
        %v4556 = vunpack.c.h.b16 %v4140
        %v4557 = vunpack.c.l.b16 %v4141
        %v4558 = vunpack.c.h.b16 %v4141
        %v4559 = vunpack.c.l.b16 %v4142
        %v4560 = vunpack.c.h.b16 %v4142
        %v4561 = vunpack.c.l.b16 %v4143
        %v4562 = vunpack.c.h.b16 %v4143
        %v4563 = vunpack.c.l.b16 %v4144
        %v4564 = vunpack.c.h.b16 %v4144
        %v4565 = vunpack.c.l.b16 %v4145
        %v4566 = vunpack.c.h.b16 %v4145
        %v4567 = vunpack.c.l.b16 %v4146
        %v4568 = vunpack.c.h.b16 %v4146
        %v4569 = vunpack.c.l.b16 %v4147
        %v4570 = vunpack.c.h.b16 %v4147
        %v4571 = vunpack.c.l.b16 %v4148
        %v4572 = vunpack.c.h.b16 %v4148
        %v4573 = vunpack.c.l.b16 %v4149
        %v4574 = vunpack.c.h.b16 %v4149
        %v4575 = vunpack.c.l.b16 %v4150
        %v4576 = vunpack.c.h.b16 %v4150
        %v4577 = vpack.c.b16 %v4329, %v4321
        %v4578 = vpack.c.b16 %v4330, %v4322
        %v4579 = vpack.c.b16 %v4331, %v4323
        %v4580 = vpack.c.b16 %v4332, %v4324
        %v4581 = vpack.c.b16 %v4333, %v4325
        %v4582 = vpack.c.b16 %v4334, %v4326
        %v4583 = vpack.c.b16 %v4335, %v4327
        %v4584 = vpack.c.b16 %v4336, %v4328
        %v4585 = vpack.c.b16 %v4345, %v4337
        %v4586 = vpack.c.b16 %v4346, %v4338
        %v4587 = vpack.c.b16 %v4347, %v4339
        %v4588 = vpack.c.b16 %v4348, %v4340
        %v4589 = vpack.c.b16 %v4349, %v4341
        %v4590 = vpack.c.b16 %v4350, %v4342
        %v4591 = vpack.c.b16 %v4351, %v4343
        %v4592 = vpack.c.b16 %v4352, %v4344
        %v4593 = vpack.c.b16 %v4361, %v4353
        %v4594 = vpack.c.b16 %v4362, %v4354
        %v4595 = vpack.c.b16 %v4363, %v4355
        %v4596 = vpack.c.b16 %v4364, %v4356
        %v4597 = vpack.c.b16 %v4365, %v4357
        %v4598 = vpack.c.b16 %v4366, %v4358
        %v4599 = vpack.c.b16 %v4367, %v4359
        %v4600 = vpack.c.b16 %v4368, %v4360
        %v4601 = vpack.c.b16 %v4377, %v4369
        %v4602 = vpack.c.b16 %v4378, %v4370
        %v4603 = vpack.c.b16 %v4379, %v4371
        %v4604 = vpack.c.b16 %v4380, %v4372
        %v4605 = vpack.c.b16 %v4381, %v4373
        %v4606 = vpack.c.b16 %v4382, %v4374
        %v4607 = vpack.c.b16 %v4383, %v4375
        %v4608 = vpack.c.b16 %v4384, %v4376
        %v4609 = vpack.c.b16 %v4393, %v4385
        %v4610 = vpack.c.b16 %v4394, %v4386
        %v4611 = vpack.c.b16 %v4395, %v4387
        %v4612 = vpack.c.b16 %v4396, %v4388
        %v4613 = vpack.c.b16 %v4397, %v4389
        %v4614 = vpack.c.b16 %v4398, %v4390
        %v4615 = vpack.c.b16 %v4399, %v4391
        %v4616 = vpack.c.b16 %v4400, %v4392
        %v4617 = vpack.c.b16 %v4409, %v4401
        %v4618 = vpack.c.b16 %v4410, %v4402
        %v4619 = vpack.c.b16 %v4411, %v4403
        %v4620 = vpack.c.b16 %v4412, %v4404
        %v4621 = vpack.c.b16 %v4413, %v4405
        %v4622 = vpack.c.b16 %v4414, %v4406
        %v4623 = vpack.c.b16 %v4415, %v4407
        %v4624 = vpack.c.b16 %v4416, %v4408
        %v4625 = vpack.c.b16 %v4425, %v4417
        %v4626 = vpack.c.b16 %v4426, %v4418
        %v4627 = vpack.c.b16 %v4427, %v4419
        %v4628 = vpack.c.b16 %v4428, %v4420
        %v4629 = vpack.c.b16 %v4429, %v4421
        %v4630 = vpack.c.b16 %v4430, %v4422
        %v4631 = vpack.c.b16 %v4431, %v4423
        %v4632 = vpack.c.b16 %v4432, %v4424
        %v4633 = vpack.c.b16 %v4441, %v4433
        %v4634 = vpack.c.b16 %v4442, %v4434
        %v4635 = vpack.c.b16 %v4443, %v4435
        %v4636 = vpack.c.b16 %v4444, %v4436
        %v4637 = vpack.c.b16 %v4445, %v4437
        %v4638 = vpack.c.b16 %v4446, %v4438
        %v4639 = vpack.c.b16 %v4447, %v4439
        %v4640 = vpack.c.b16 %v4448, %v4440
        %v4641 = vpack.c.b16 %v4457, %v4449
        %v4642 = vpack.c.b16 %v4458, %v4450
        %v4643 = vpack.c.b16 %v4459, %v4451
        %v4644 = vpack.c.b16 %v4460, %v4452
        %v4645 = vpack.c.b16 %v4461, %v4453
        %v4646 = vpack.c.b16 %v4462, %v4454
        %v4647 = vpack.c.b16 %v4463, %v4455
        %v4648 = vpack.c.b16 %v4464, %v4456
        %v4649 = vpack.c.b16 %v4473, %v4465
        %v4650 = vpack.c.b16 %v4474, %v4466
        %v4651 = vpack.c.b16 %v4475, %v4467
        %v4652 = vpack.c.b16 %v4476, %v4468
        %v4653 = vpack.c.b16 %v4477, %v4469
        %v4654 = vpack.c.b16 %v4478, %v4470
        %v4655 = vpack.c.b16 %v4479, %v4471
        %v4656 = vpack.c.b16 %v4480, %v4472
        %v4657 = vpack.c.b16 %v4489, %v4481
        %v4658 = vpack.c.b16 %v4490, %v4482
        %v4659 = vpack.c.b16 %v4491, %v4483
        %v4660 = vpack.c.b16 %v4492, %v4484
        %v4661 = vpack.c.b16 %v4493, %v4485
        %v4662 = vpack.c.b16 %v4494, %v4486
        %v4663 = vpack.c.b16 %v4495, %v4487
        %v4664 = vpack.c.b16 %v4496, %v4488
        %v4665 = vpack.c.b16 %v4505, %v4497
        %v4666 = vpack.c.b16 %v4506, %v4498
        %v4667 = vpack.c.b16 %v4507, %v4499
        %v4668 = vpack.c.b16 %v4508, %v4500
        %v4669 = vpack.c.b16 %v4509, %v4501
        %v4670 = vpack.c.b16 %v4510, %v4502
        %v4671 = vpack.c.b16 %v4511, %v4503
        %v4672 = vpack.c.b16 %v4512, %v4504
        %v4673 = vpack.c.b16 %v4521, %v4513
        %v4674 = vpack.c.b16 %v4522, %v4514
        %v4675 = vpack.c.b16 %v4523, %v4515
        %v4676 = vpack.c.b16 %v4524, %v4516
        %v4677 = vpack.c.b16 %v4525, %v4517
        %v4678 = vpack.c.b16 %v4526, %v4518
        %v4679 = vpack.c.b16 %v4527, %v4519
        %v4680 = vpack.c.b16 %v4528, %v4520
        %v4681 = vpack.c.b16 %v4537, %v4529
        %v4682 = vpack.c.b16 %v4538, %v4530
        %v4683 = vpack.c.b16 %v4539, %v4531
        %v4684 = vpack.c.b16 %v4540, %v4532
        %v4685 = vpack.c.b16 %v4541, %v4533
        %v4686 = vpack.c.b16 %v4542, %v4534
        %v4687 = vpack.c.b16 %v4543, %v4535
        %v4688 = vpack.c.b16 %v4544, %v4536
        %v4689 = vpack.c.b16 %v4553, %v4545
        %v4690 = vpack.c.b16 %v4554, %v4546
        %v4691 = vpack.c.b16 %v4555, %v4547
        %v4692 = vpack.c.b16 %v4556, %v4548
        %v4693 = vpack.c.b16 %v4557, %v4549
        %v4694 = vpack.c.b16 %v4558, %v4550
        %v4695 = vpack.c.b16 %v4559, %v4551
        %v4696 = vpack.c.b16 %v4560, %v4552
        %v4697 = vpack.c.b16 %v4569, %v4561
        %v4698 = vpack.c.b16 %v4570, %v4562
        %v4699 = vpack.c.b16 %v4571, %v4563
        %v4700 = vpack.c.b16 %v4572, %v4564
        %v4701 = vpack.c.b16 %v4573, %v4565
        %v4702 = vpack.c.b16 %v4574, %v4566
        %v4703 = vpack.c.b16 %v4575, %v4567
        %v4704 = vpack.c.b16 %v4576, %v4568
        %4833 = vmatprep.subr.bf16.mxu0 %v4634
        %4834 = vmatpush1.bf16.msra.mxu0 %v4633
        %4835 = vmatprep.subr.bf16.mxu0 %v4626
        %4836 = vmatpush1.bf16.msra.mxu0 %v4625
        %4837 = vmatprep.subr.bf16.mxu0 %v4618
        %4838 = vmatpush1.bf16.msra.mxu0 %v4617
        %4839 = vmatprep.subr.bf16.mxu0 %v4610
        %4840 = vmatpush1.bf16.msra.mxu0 %v4609
        %4841 = vmatprep.subr.bf16.mxu0 %v4602
        %4842 = vmatpush1.bf16.msra.mxu0 %v4601
        %4843 = vmatprep.subr.bf16.mxu0 %v4594
        %4844 = vmatpush1.bf16.msra.mxu0 %v4593
        %4845 = vmatprep.subr.bf16.mxu0 %v4586
        %4846 = vmatpush1.bf16.msra.mxu0 %v4585
        %4847 = vmatprep.subr.bf16.mxu0 %v4578
        %4848 = vmatpush1.bf16.msra.mxu0 %v4577
        %4849 = vmatprep.subr.bf16.mxu0 %v4698
        %4850 = vmatpush2.bf16.msra.mxu0 %v4697
        %4851 = vmatprep.subr.bf16.mxu0 %v4690
        %4852 = vmatpush2.bf16.msra.mxu0 %v4689
        %4853 = vmatprep.subr.bf16.mxu0 %v4682
        %4854 = vmatpush2.bf16.msra.mxu0 %v4681
        %4855 = vmatprep.subr.bf16.mxu0 %v4674
        %4856 = vmatpush2.bf16.msra.mxu0 %v4673
        %4857 = vmatprep.subr.bf16.mxu0 %v4666
        %4858 = vmatpush2.bf16.msra.mxu0 %v4665
        %4859 = vmatprep.subr.bf16.mxu0 %v4658
        %4860 = vmatpush2.bf16.msra.mxu0 %v4657
        %4861 = vmatprep.subr.bf16.mxu0 %v4650
        %4862 = vmatpush2.bf16.msra.mxu0 %v4649
        %4863 = vmatprep.subr.bf16.mxu0 %v4642
        %4864 = vmatpush2.bf16.msra.mxu0 %v4641
        %4865 = vmatprep.mubr.bf16.mxu0 %v4016
        %4866 = vmatmul.mubr.bf16.gmra.mxu0 %v4015
        %v4867 = vpop.f32.mrf.mxu0
        %v4868 = vadd.f32 %v4156, %v4867
        %v4869 = vpop.f32.mrf.mxu0
        %v4870 = vadd.f32 %v4160, %v4869
        %v4871 = vpop.f32.mrf.mxu0
        %v4872 = vadd.f32 %v4156, %v4871
        %v4873 = vpop.f32.mrf.mxu0
        %v4874 = vadd.f32 %v4160, %v4873
        %4875 = vmatprep.mubr.bf16.mxu0 %v4018
        %4876 = vmatmul.mubr.bf16.gmra.mxu0 %v4017
        %v4877 = vpop.f32.mrf.mxu0
        %v4878 = vadd.f32 %v4156, %v4877
        %v4879 = vpop.f32.mrf.mxu0
        %v4880 = vadd.f32 %v4160, %v4879
        %v4881 = vpop.f32.mrf.mxu0
        %v4882 = vadd.f32 %v4156, %v4881
        %v4883 = vpop.f32.mrf.mxu0
        %v4884 = vadd.f32 %v4160, %v4883
        %4885 = vmatprep.mubr.bf16.mxu0 %v4020
        %4886 = vmatmul.mubr.bf16.gmra.mxu0 %v4019
        %v4887 = vpop.f32.mrf.mxu0
        %v4888 = vadd.f32 %v4156, %v4887
        %v4889 = vpop.f32.mrf.mxu0
        %v4890 = vadd.f32 %v4160, %v4889
        %v4891 = vpop.f32.mrf.mxu0
        %v4892 = vadd.f32 %v4156, %v4891
        %v4893 = vpop.f32.mrf.mxu0
        %v4894 = vadd.f32 %v4160, %v4893
        %4895 = vmatprep.mubr.bf16.mxu0 %v4022
        %4896 = vmatmul.mubr.bf16.gmra.mxu0 %v4021
        %v4897 = vpop.f32.mrf.mxu0
        %v4898 = vadd.f32 %v4156, %v4897
        %v4899 = vpop.f32.mrf.mxu0
        %v4900 = vadd.f32 %v4160, %v4899
        %v4901 = vpop.f32.mrf.mxu0
        %v4902 = vadd.f32 %v4156, %v4901
        %v4903 = vpop.f32.mrf.mxu0
        %v4904 = vadd.f32 %v4160, %v4903
        %4905 = vdwg.mxu0
        %4906 = vmatprep.subr.bf16.mxu0 %v4636
        %4907 = vmatpush1.bf16.msra.mxu0 %v4635
        %4908 = vmatprep.subr.bf16.mxu0 %v4628
        %4909 = vmatpush1.bf16.msra.mxu0 %v4627
        %4910 = vmatprep.subr.bf16.mxu0 %v4620
        %4911 = vmatpush1.bf16.msra.mxu0 %v4619
        %4912 = vmatprep.subr.bf16.mxu0 %v4612
        %4913 = vmatpush1.bf16.msra.mxu0 %v4611
        %4914 = vmatprep.subr.bf16.mxu0 %v4604
        %4915 = vmatpush1.bf16.msra.mxu0 %v4603
        %4916 = vmatprep.subr.bf16.mxu0 %v4596
        %4917 = vmatpush1.bf16.msra.mxu0 %v4595
        %4918 = vmatprep.subr.bf16.mxu0 %v4588
        %4919 = vmatpush1.bf16.msra.mxu0 %v4587
        %4920 = vmatprep.subr.bf16.mxu0 %v4580
        %4921 = vmatpush1.bf16.msra.mxu0 %v4579
        %4922 = vmatprep.subr.bf16.mxu0 %v4700
        %4923 = vmatpush2.bf16.msra.mxu0 %v4699
        %4924 = vmatprep.subr.bf16.mxu0 %v4692
        %4925 = vmatpush2.bf16.msra.mxu0 %v4691
        %4926 = vmatprep.subr.bf16.mxu0 %v4684
        %4927 = vmatpush2.bf16.msra.mxu0 %v4683
        %4928 = vmatprep.subr.bf16.mxu0 %v4676
        %4929 = vmatpush2.bf16.msra.mxu0 %v4675
        %4930 = vmatprep.subr.bf16.mxu0 %v4668
        %4931 = vmatpush2.bf16.msra.mxu0 %v4667
        %4932 = vmatprep.subr.bf16.mxu0 %v4660
        %4933 = vmatpush2.bf16.msra.mxu0 %v4659
        %4934 = vmatprep.subr.bf16.mxu0 %v4652
        %4935 = vmatpush2.bf16.msra.mxu0 %v4651
        %4936 = vmatprep.subr.bf16.mxu0 %v4644
        %4937 = vmatpush2.bf16.msra.mxu0 %v4643
        %4938 = vmatprep.mubr.bf16.mxu0 %v4016
        %4939 = vmatmul.mubr.bf16.gmra.mxu0 %v4015
        %v4940 = vpop.f32.mrf.mxu0
        %v4941 = vadd.f32 %v4164, %v4940
        %v4942 = vpop.f32.mrf.mxu0
        %v4943 = vadd.f32 %v4168, %v4942
        %v4944 = vpop.f32.mrf.mxu0
        %v4945 = vadd.f32 %v4164, %v4944
        %v4946 = vpop.f32.mrf.mxu0
        %v4947 = vadd.f32 %v4168, %v4946
        %4948 = vmatprep.mubr.bf16.mxu0 %v4018
        %4949 = vmatmul.mubr.bf16.gmra.mxu0 %v4017
        %v4950 = vpop.f32.mrf.mxu0
        %v4951 = vadd.f32 %v4164, %v4950
        %v4952 = vpop.f32.mrf.mxu0
        %v4953 = vadd.f32 %v4168, %v4952
        %v4954 = vpop.f32.mrf.mxu0
        %v4955 = vadd.f32 %v4164, %v4954
        %v4956 = vpop.f32.mrf.mxu0
        %v4957 = vadd.f32 %v4168, %v4956
        %4958 = vmatprep.mubr.bf16.mxu0 %v4020
        %4959 = vmatmul.mubr.bf16.gmra.mxu0 %v4019
        %v4960 = vpop.f32.mrf.mxu0
        %v4961 = vadd.f32 %v4164, %v4960
        %v4962 = vpop.f32.mrf.mxu0
        %v4963 = vadd.f32 %v4168, %v4962
        %v4964 = vpop.f32.mrf.mxu0
        %v4965 = vadd.f32 %v4164, %v4964
        %v4966 = vpop.f32.mrf.mxu0
        %v4967 = vadd.f32 %v4168, %v4966
        %4968 = vmatprep.mubr.bf16.mxu0 %v4022
        %4969 = vmatmul.mubr.bf16.gmra.mxu0 %v4021
        %v4970 = vpop.f32.mrf.mxu0
        %v4971 = vadd.f32 %v4164, %v4970
        %v4972 = vpop.f32.mrf.mxu0
        %v4973 = vadd.f32 %v4168, %v4972
        %v4974 = vpop.f32.mrf.mxu0
        %v4975 = vadd.f32 %v4164, %v4974
        %v4976 = vpop.f32.mrf.mxu0
        %v4977 = vadd.f32 %v4168, %v4976
        %4978 = vdwg.mxu0
        %4979 = vmatprep.subr.bf16.mxu0 %v4638
        %4980 = vmatpush1.bf16.msra.mxu0 %v4637
        %4981 = vmatprep.subr.bf16.mxu0 %v4630
        %4982 = vmatpush1.bf16.msra.mxu0 %v4629
        %4983 = vmatprep.subr.bf16.mxu0 %v4622
        %4984 = vmatpush1.bf16.msra.mxu0 %v4621
        %4985 = vmatprep.subr.bf16.mxu0 %v4614
        %4986 = vmatpush1.bf16.msra.mxu0 %v4613
        %4987 = vmatprep.subr.bf16.mxu0 %v4606
        %4988 = vmatpush1.bf16.msra.mxu0 %v4605
        %4989 = vmatprep.subr.bf16.mxu0 %v4598
        %4990 = vmatpush1.bf16.msra.mxu0 %v4597
        %4991 = vmatprep.subr.bf16.mxu0 %v4590
        %4992 = vmatpush1.bf16.msra.mxu0 %v4589
        %4993 = vmatprep.subr.bf16.mxu0 %v4582
        %4994 = vmatpush1.bf16.msra.mxu0 %v4581
        %4995 = vmatprep.subr.bf16.mxu0 %v4702
        %4996 = vmatpush2.bf16.msra.mxu0 %v4701
        %4997 = vmatprep.subr.bf16.mxu0 %v4694
        %4998 = vmatpush2.bf16.msra.mxu0 %v4693
        %4999 = vmatprep.subr.bf16.mxu0 %v4686
        %5000 = vmatpush2.bf16.msra.mxu0 %v4685
        %5001 = vmatprep.subr.bf16.mxu0 %v4678
        %5002 = vmatpush2.bf16.msra.mxu0 %v4677
        %5003 = vmatprep.subr.bf16.mxu0 %v4670
        %5004 = vmatpush2.bf16.msra.mxu0 %v4669
        %5005 = vmatprep.subr.bf16.mxu0 %v4662
        %5006 = vmatpush2.bf16.msra.mxu0 %v4661
        %5007 = vmatprep.subr.bf16.mxu0 %v4654
        %5008 = vmatpush2.bf16.msra.mxu0 %v4653
        %5009 = vmatprep.subr.bf16.mxu0 %v4646
        %5010 = vmatpush2.bf16.msra.mxu0 %v4645
        %5011 = vmatprep.mubr.bf16.mxu0 %v4016
        %5012 = vmatmul.mubr.bf16.gmra.mxu0 %v4015
        %v5013 = vpop.f32.mrf.mxu0
        %v5014 = vadd.f32 %v4172, %v5013
        %v5015 = vpop.f32.mrf.mxu0
        %v5016 = vadd.f32 %v4176, %v5015
        %v5017 = vpop.f32.mrf.mxu0
        %v5018 = vadd.f32 %v4172, %v5017
        %v5019 = vpop.f32.mrf.mxu0
        %v5020 = vadd.f32 %v4176, %v5019
        %5021 = vmatprep.mubr.bf16.mxu0 %v4018
        %5022 = vmatmul.mubr.bf16.gmra.mxu0 %v4017
        %v5023 = vpop.f32.mrf.mxu0
        %v5024 = vadd.f32 %v4172, %v5023
        %v5025 = vpop.f32.mrf.mxu0
        %v5026 = vadd.f32 %v4176, %v5025
        %v5027 = vpop.f32.mrf.mxu0
        %v5028 = vadd.f32 %v4172, %v5027
        %v5029 = vpop.f32.mrf.mxu0
        %v5030 = vadd.f32 %v4176, %v5029
        %5031 = vmatprep.mubr.bf16.mxu0 %v4020
        %5032 = vmatmul.mubr.bf16.gmra.mxu0 %v4019
        %v5033 = vpop.f32.mrf.mxu0
        %v5034 = vadd.f32 %v4172, %v5033
        %v5035 = vpop.f32.mrf.mxu0
        %v5036 = vadd.f32 %v4176, %v5035
        %v5037 = vpop.f32.mrf.mxu0
        %v5038 = vadd.f32 %v4172, %v5037
        %v5039 = vpop.f32.mrf.mxu0
        %v5040 = vadd.f32 %v4176, %v5039
        %5041 = vmatprep.mubr.bf16.mxu0 %v4022
        %5042 = vmatmul.mubr.bf16.gmra.mxu0 %v4021
        %v5043 = vpop.f32.mrf.mxu0
        %v5044 = vadd.f32 %v4172, %v5043
        %v5045 = vpop.f32.mrf.mxu0
        %v5046 = vadd.f32 %v4176, %v5045
        %v5047 = vpop.f32.mrf.mxu0
        %v5048 = vadd.f32 %v4172, %v5047
        %v5049 = vpop.f32.mrf.mxu0
        %v5050 = vadd.f32 %v4176, %v5049
        %5051 = vdwg.mxu0
        %5052 = vmatprep.subr.bf16.mxu0 %v4640
        %5053 = vmatpush1.bf16.msra.mxu0 %v4639
        %5054 = vmatprep.subr.bf16.mxu0 %v4632
        %5055 = vmatpush1.bf16.msra.mxu0 %v4631
        %5056 = vmatprep.subr.bf16.mxu0 %v4624
        %5057 = vmatpush1.bf16.msra.mxu0 %v4623
        %5058 = vmatprep.subr.bf16.mxu0 %v4616
        %5059 = vmatpush1.bf16.msra.mxu0 %v4615
        %5060 = vmatprep.subr.bf16.mxu0 %v4608
        %5061 = vmatpush1.bf16.msra.mxu0 %v4607
        %5062 = vmatprep.subr.bf16.mxu0 %v4600
        %5063 = vmatpush1.bf16.msra.mxu0 %v4599
        %5064 = vmatprep.subr.bf16.mxu0 %v4592
        %5065 = vmatpush1.bf16.msra.mxu0 %v4591
        %5066 = vmatprep.subr.bf16.mxu0 %v4584
        %5067 = vmatpush1.bf16.msra.mxu0 %v4583
        %5068 = vmatprep.subr.bf16.mxu0 %v4704
        %5069 = vmatpush2.bf16.msra.mxu0 %v4703
        %5070 = vmatprep.subr.bf16.mxu0 %v4696
        %5071 = vmatpush2.bf16.msra.mxu0 %v4695
        %5072 = vmatprep.subr.bf16.mxu0 %v4688
        %5073 = vmatpush2.bf16.msra.mxu0 %v4687
        %5074 = vmatprep.subr.bf16.mxu0 %v4680
        %5075 = vmatpush2.bf16.msra.mxu0 %v4679
        %5076 = vmatprep.subr.bf16.mxu0 %v4672
        %5077 = vmatpush2.bf16.msra.mxu0 %v4671
        %5078 = vmatprep.subr.bf16.mxu0 %v4664
        %5079 = vmatpush2.bf16.msra.mxu0 %v4663
        %5080 = vmatprep.subr.bf16.mxu0 %v4656
        %5081 = vmatpush2.bf16.msra.mxu0 %v4655
        %5082 = vmatprep.subr.bf16.mxu0 %v4648
        %5083 = vmatpush2.bf16.msra.mxu0 %v4647
        %5084 = vmatprep.mubr.bf16.mxu0 %v4016
        %5085 = vmatmul.mubr.bf16.gmra.mxu0 %v4015
        %v5086 = vpop.f32.mrf.mxu0
        %v5087 = vadd.f32 %v4180, %v5086
        %v5088 = vpop.f32.mrf.mxu0
        %v5089 = vadd.f32 %v4184, %v5088
        %v5090 = vpop.f32.mrf.mxu0
        %v5091 = vadd.f32 %v4180, %v5090
        %v5092 = vpop.f32.mrf.mxu0
        %v5093 = vadd.f32 %v4184, %v5092
        %5094 = vmatprep.mubr.bf16.mxu0 %v4018
        %5095 = vmatmul.mubr.bf16.gmra.mxu0 %v4017
        %v5096 = vpop.f32.mrf.mxu0
        %v5097 = vadd.f32 %v4180, %v5096
        %v5098 = vpop.f32.mrf.mxu0
        %v5099 = vadd.f32 %v4184, %v5098
        %v5100 = vpop.f32.mrf.mxu0
        %v5101 = vadd.f32 %v4180, %v5100
        %v5102 = vpop.f32.mrf.mxu0
        %v5103 = vadd.f32 %v4184, %v5102
        %5104 = vmatprep.mubr.bf16.mxu0 %v4020
        %5105 = vmatmul.mubr.bf16.gmra.mxu0 %v4019
        %v5106 = vpop.f32.mrf.mxu0
        %v5107 = vadd.f32 %v4180, %v5106
        %v5108 = vpop.f32.mrf.mxu0
        %v5109 = vadd.f32 %v4184, %v5108
        %v5110 = vpop.f32.mrf.mxu0
        %v5111 = vadd.f32 %v4180, %v5110
        %v5112 = vpop.f32.mrf.mxu0
        %v5113 = vadd.f32 %v4184, %v5112
        %5114 = vmatprep.mubr.bf16.mxu0 %v4022
        %5115 = vmatmul.mubr.bf16.gmra.mxu0 %v4021
        %v5116 = vpop.f32.mrf.mxu0
        %v5117 = vadd.f32 %v4180, %v5116
        %v5118 = vpop.f32.mrf.mxu0
        %v5119 = vadd.f32 %v4184, %v5118
        %v5120 = vpop.f32.mrf.mxu0
        %v5121 = vadd.f32 %v4180, %v5120
        %v5122 = vpop.f32.mrf.mxu0
        %v5123 = vadd.f32 %v4184, %v5122
        %5124 = vdwg.mxu0
        %v5125 = vmax.f32 %v4868, 0.0
        %v5126 = vmax.f32 %v4870, 0.0
        %v5127 = vmax.f32 %v4941, 0.0
        %v5128 = vmax.f32 %v4943, 0.0
        %v5129 = vmax.f32 %v5014, 0.0
        %v5130 = vmax.f32 %v5016, 0.0
        %v5131 = vmax.f32 %v5087, 0.0
        %v5132 = vmax.f32 %v5089, 0.0
        %v5133 = vmax.f32 %v4872, 0.0
        %v5134 = vmax.f32 %v4874, 0.0
        %v5135 = vmax.f32 %v4945, 0.0
        %v5136 = vmax.f32 %v4947, 0.0
        %v5137 = vmax.f32 %v5018, 0.0
        %v5138 = vmax.f32 %v5020, 0.0
        %v5139 = vmax.f32 %v5091, 0.0
        %v5140 = vmax.f32 %v5093, 0.0
        %v5141 = vmax.f32 %v4878, 0.0
        %v5142 = vmax.f32 %v4880, 0.0
        %v5143 = vmax.f32 %v4951, 0.0
        %v5144 = vmax.f32 %v4953, 0.0
        %v5145 = vmax.f32 %v5024, 0.0
        %v5146 = vmax.f32 %v5026, 0.0
        %v5147 = vmax.f32 %v5097, 0.0
        %v5148 = vmax.f32 %v5099, 0.0
        %v5149 = vmax.f32 %v4882, 0.0
        %v5150 = vmax.f32 %v4884, 0.0
        %v5151 = vmax.f32 %v4955, 0.0
        %v5152 = vmax.f32 %v4957, 0.0
        %v5153 = vmax.f32 %v5028, 0.0
        %v5154 = vmax.f32 %v5030, 0.0
        %v5155 = vmax.f32 %v5101, 0.0
        %v5156 = vmax.f32 %v5103, 0.0
        %v5157 = vmax.f32 %v4888, 0.0
        %v5158 = vmax.f32 %v4890, 0.0
        %v5159 = vmax.f32 %v4961, 0.0
        %v5160 = vmax.f32 %v4963, 0.0
        %v5161 = vmax.f32 %v5034, 0.0
        %v5162 = vmax.f32 %v5036, 0.0
        %v5163 = vmax.f32 %v5107, 0.0
        %v5164 = vmax.f32 %v5109, 0.0
        %v5165 = vmax.f32 %v4892, 0.0
        %v5166 = vmax.f32 %v4894, 0.0
        %v5167 = vmax.f32 %v4965, 0.0
        %v5168 = vmax.f32 %v4967, 0.0
        %v5169 = vmax.f32 %v5038, 0.0
        %v5170 = vmax.f32 %v5040, 0.0
        %v5171 = vmax.f32 %v5111, 0.0
        %v5172 = vmax.f32 %v5113, 0.0
        %v5173 = vmax.f32 %v4898, 0.0
        %v5174 = vmax.f32 %v4900, 0.0
        %v5175 = vmax.f32 %v4971, 0.0
        %v5176 = vmax.f32 %v4973, 0.0
        %v5177 = vmax.f32 %v5044, 0.0
        %v5178 = vmax.f32 %v5046, 0.0
        %v5179 = vmax.f32 %v5117, 0.0
        %v5180 = vmax.f32 %v5119, 0.0
        %v5181 = vmax.f32 %v4902, 0.0
        %v5182 = vmax.f32 %v4904, 0.0
        %v5183 = vmax.f32 %v4975, 0.0
        %v5184 = vmax.f32 %v4977, 0.0
        %v5185 = vmax.f32 %v5048, 0.0
        %v5186 = vmax.f32 %v5050, 0.0
        %v5187 = vmax.f32 %v5121, 0.0
        %v5188 = vmax.f32 %v5123, 0.0
        %v5189 = vpack.c.bf16 %v5133, %v5125
        %v5190 = vpack.c.bf16 %v5134, %v5126
        %v5191 = vpack.c.bf16 %v5135, %v5127
        %v5192 = vpack.c.bf16 %v5136, %v5128
        %v5193 = vpack.c.bf16 %v5137, %v5129
        %v5194 = vpack.c.bf16 %v5138, %v5130
        %v5195 = vpack.c.bf16 %v5139, %v5131
        %v5196 = vpack.c.bf16 %v5140, %v5132
        %v5197 = vpack.c.bf16 %v5149, %v5141
        %v5198 = vpack.c.bf16 %v5150, %v5142
        %v5199 = vpack.c.bf16 %v5151, %v5143
        %v5200 = vpack.c.bf16 %v5152, %v5144
        %v5201 = vpack.c.bf16 %v5153, %v5145
        %v5202 = vpack.c.bf16 %v5154, %v5146
        %v5203 = vpack.c.bf16 %v5155, %v5147
        %v5204 = vpack.c.bf16 %v5156, %v5148
        %v5205 = vpack.c.bf16 %v5165, %v5157
        %v5206 = vpack.c.bf16 %v5166, %v5158
        %v5207 = vpack.c.bf16 %v5167, %v5159
        %v5208 = vpack.c.bf16 %v5168, %v5160
        %v5209 = vpack.c.bf16 %v5169, %v5161
        %v5210 = vpack.c.bf16 %v5170, %v5162
        %v5211 = vpack.c.bf16 %v5171, %v5163
        %v5212 = vpack.c.bf16 %v5172, %v5164
        %v5213 = vpack.c.bf16 %v5181, %v5173
        %v5214 = vpack.c.bf16 %v5182, %v5174
        %v5215 = vpack.c.bf16 %v5183, %v5175
        %v5216 = vpack.c.bf16 %v5184, %v5176
        %v5217 = vpack.c.bf16 %v5185, %v5177
        %v5218 = vpack.c.bf16 %v5186, %v5178
        %v5219 = vpack.c.bf16 %v5187, %v5179
        %v5220 = vpack.c.bf16 %v5188, %v5180
        %v5221 = vld [vmem:[%s864] sm:$0xff]
        %v5222 = vld [vmem:[%s864 + $0x8] sm:$0xff]
        %v5223 = vld [vmem:[%s864 + $0x10] sm:$0xff]
        %v5224 = vld [vmem:[%s864 + $0x18] sm:$0xff]
        %v5225 = vld [vmem:[%s864 + $0x20] sm:$0xff]
        %v5226 = vld [vmem:[%s864 + $0x28] sm:$0xff]
        %v5227 = vld [vmem:[%s864 + $0x30] sm:$0xff]
        %v5228 = vld [vmem:[%s864 + $0x38] sm:$0xff]
        %v5229 = vld [vmem:[%s864 + $0x40] sm:$0xff]
        %v5230 = vld [vmem:[%s864 + $0x48] sm:$0xff]
        %v5231 = vld [vmem:[%s864 + $0x50] sm:$0xff]
        %v5232 = vld [vmem:[%s864 + $0x58] sm:$0xff]
        %v5233 = vld [vmem:[%s864 + $0x60] sm:$0xff]
        %v5234 = vld [vmem:[%s864 + $0x68] sm:$0xff]
        %v5235 = vld [vmem:[%s864 + $0x70] sm:$0xff]
        %v5236 = vld [vmem:[%s864 + $0x78] sm:$0xff]
        %v5237 = vld [vmem:[%s864 + $0x80] sm:$0xff]
        %v5238 = vld [vmem:[%s864 + $0x88] sm:$0xff]
        %v5239 = vld [vmem:[%s864 + $0x90] sm:$0xff]
        %v5240 = vld [vmem:[%s864 + $0x98] sm:$0xff]
        %v5241 = vld [vmem:[%s864 + $0xa0] sm:$0xff]
        %v5242 = vld [vmem:[%s864 + $0xa8] sm:$0xff]
        %v5243 = vld [vmem:[%s864 + $0xb0] sm:$0xff]
        %v5244 = vld [vmem:[%s864 + $0xb8] sm:$0xff]
        %v5245 = vld [vmem:[%s864 + $0xc0] sm:$0xff]
        %v5246 = vld [vmem:[%s864 + $0xc8] sm:$0xff]
        %v5247 = vld [vmem:[%s864 + $0xd0] sm:$0xff]
        %v5248 = vld [vmem:[%s864 + $0xd8] sm:$0xff]
        %v5249 = vld [vmem:[%s864 + $0xe0] sm:$0xff]
        %v5250 = vld [vmem:[%s864 + $0xe8] sm:$0xff]
        %v5251 = vld [vmem:[%s864 + $0xf0] sm:$0xff]
        %v5252 = vld [vmem:[%s864 + $0xf8] sm:$0xff]
        %v5253 = vld [vmem:[%s864 + $0x100] sm:$0xff]
        %v5254 = vld [vmem:[%s864 + $0x108] sm:$0xff]
        %v5255 = vld [vmem:[%s864 + $0x110] sm:$0xff]
        %v5256 = vld [vmem:[%s864 + $0x118] sm:$0xff]
        %v5257 = vld [vmem:[%s864 + $0x120] sm:$0xff]
        %v5258 = vld [vmem:[%s864 + $0x128] sm:$0xff]
        %v5259 = vld [vmem:[%s864 + $0x130] sm:$0xff]
        %v5260 = vld [vmem:[%s864 + $0x138] sm:$0xff]
        %v5261 = vld [vmem:[%s864 + $0x140] sm:$0xff]
        %v5262 = vld [vmem:[%s864 + $0x148] sm:$0xff]
        %v5263 = vld [vmem:[%s864 + $0x150] sm:$0xff]
        %v5264 = vld [vmem:[%s864 + $0x158] sm:$0xff]
        %v5265 = vld [vmem:[%s864 + $0x160] sm:$0xff]
        %v5266 = vld [vmem:[%s864 + $0x168] sm:$0xff]
        %v5267 = vld [vmem:[%s864 + $0x170] sm:$0xff]
        %v5268 = vld [vmem:[%s864 + $0x178] sm:$0xff]
        %v5269 = vld [vmem:[%s864 + $0x180] sm:$0xff]
        %v5270 = vld [vmem:[%s864 + $0x188] sm:$0xff]
        %v5271 = vld [vmem:[%s864 + $0x190] sm:$0xff]
        %v5272 = vld [vmem:[%s864 + $0x198] sm:$0xff]
        %v5273 = vld [vmem:[%s864 + $0x1a0] sm:$0xff]
        %v5274 = vld [vmem:[%s864 + $0x1a8] sm:$0xff]
        %v5275 = vld [vmem:[%s864 + $0x1b0] sm:$0xff]
        %v5276 = vld [vmem:[%s864 + $0x1b8] sm:$0xff]
        %v5277 = vld [vmem:[%s864 + $0x1c0] sm:$0xff]
        %v5278 = vld [vmem:[%s864 + $0x1c8] sm:$0xff]
        %v5279 = vld [vmem:[%s864 + $0x1d0] sm:$0xff]
        %v5280 = vld [vmem:[%s864 + $0x1d8] sm:$0xff]
        %v5281 = vld [vmem:[%s864 + $0x1e0] sm:$0xff]
        %v5282 = vld [vmem:[%s864 + $0x1e8] sm:$0xff]
        %v5283 = vld [vmem:[%s864 + $0x1f0] sm:$0xff]
        %v5284 = vld [vmem:[%s864 + $0x1f8] sm:$0xff]
        %v5285 = vld [vmem:[%s864 + $0x200] sm:$0xff]
        %v5286 = vld [vmem:[%s864 + $0x208] sm:$0xff]
        %v5287 = vld [vmem:[%s864 + $0x210] sm:$0xff]
        %v5288 = vld [vmem:[%s864 + $0x218] sm:$0xff]
        %v5289 = vld [vmem:[%s864 + $0x220] sm:$0xff]
        %v5290 = vld [vmem:[%s864 + $0x228] sm:$0xff]
        %v5291 = vld [vmem:[%s864 + $0x230] sm:$0xff]
        %v5292 = vld [vmem:[%s864 + $0x238] sm:$0xff]
        %v5293 = vld [vmem:[%s864 + $0x240] sm:$0xff]
        %v5294 = vld [vmem:[%s864 + $0x248] sm:$0xff]
        %v5295 = vld [vmem:[%s864 + $0x250] sm:$0xff]
        %v5296 = vld [vmem:[%s864 + $0x258] sm:$0xff]
        %v5297 = vld [vmem:[%s864 + $0x260] sm:$0xff]
        %v5298 = vld [vmem:[%s864 + $0x268] sm:$0xff]
        %v5299 = vld [vmem:[%s864 + $0x270] sm:$0xff]
        %v5300 = vld [vmem:[%s864 + $0x278] sm:$0xff]
        %v5301 = vld [vmem:[%s864 + $0x280] sm:$0xff]
        %v5302 = vld [vmem:[%s864 + $0x288] sm:$0xff]
        %v5303 = vld [vmem:[%s864 + $0x290] sm:$0xff]
        %v5304 = vld [vmem:[%s864 + $0x298] sm:$0xff]
        %v5305 = vld [vmem:[%s864 + $0x2a0] sm:$0xff]
        %v5306 = vld [vmem:[%s864 + $0x2a8] sm:$0xff]
        %v5307 = vld [vmem:[%s864 + $0x2b0] sm:$0xff]
        %v5308 = vld [vmem:[%s864 + $0x2b8] sm:$0xff]
        %v5309 = vld [vmem:[%s864 + $0x2c0] sm:$0xff]
        %v5310 = vld [vmem:[%s864 + $0x2c8] sm:$0xff]
        %v5311 = vld [vmem:[%s864 + $0x2d0] sm:$0xff]
        %v5312 = vld [vmem:[%s864 + $0x2d8] sm:$0xff]
        %v5313 = vld [vmem:[%s864 + $0x2e0] sm:$0xff]
        %v5314 = vld [vmem:[%s864 + $0x2e8] sm:$0xff]
        %v5315 = vld [vmem:[%s864 + $0x2f0] sm:$0xff]
        %v5316 = vld [vmem:[%s864 + $0x2f8] sm:$0xff]
        %v5317 = vld [vmem:[%s864 + $0x300] sm:$0xff]
        %v5318 = vld [vmem:[%s864 + $0x308] sm:$0xff]
        %v5319 = vld [vmem:[%s864 + $0x310] sm:$0xff]
        %v5320 = vld [vmem:[%s864 + $0x318] sm:$0xff]
        %v5321 = vld [vmem:[%s864 + $0x320] sm:$0xff]
        %v5322 = vld [vmem:[%s864 + $0x328] sm:$0xff]
        %v5323 = vld [vmem:[%s864 + $0x330] sm:$0xff]
        %v5324 = vld [vmem:[%s864 + $0x338] sm:$0xff]
        %v5325 = vld [vmem:[%s864 + $0x340] sm:$0xff]
        %v5326 = vld [vmem:[%s864 + $0x348] sm:$0xff]
        %v5327 = vld [vmem:[%s864 + $0x350] sm:$0xff]
        %v5328 = vld [vmem:[%s864 + $0x358] sm:$0xff]
        %v5329 = vld [vmem:[%s864 + $0x360] sm:$0xff]
        %v5330 = vld [vmem:[%s864 + $0x368] sm:$0xff]
        %v5331 = vld [vmem:[%s864 + $0x370] sm:$0xff]
        %v5332 = vld [vmem:[%s864 + $0x378] sm:$0xff]
        %v5333 = vld [vmem:[%s864 + $0x380] sm:$0xff]
        %v5334 = vld [vmem:[%s864 + $0x388] sm:$0xff]
        %v5335 = vld [vmem:[%s864 + $0x390] sm:$0xff]
        %v5336 = vld [vmem:[%s864 + $0x398] sm:$0xff]
        %v5337 = vld [vmem:[%s864 + $0x3a0] sm:$0xff]
        %v5338 = vld [vmem:[%s864 + $0x3a8] sm:$0xff]
        %v5339 = vld [vmem:[%s864 + $0x3b0] sm:$0xff]
        %v5340 = vld [vmem:[%s864 + $0x3b8] sm:$0xff]
        %v5341 = vld [vmem:[%s864 + $0x3c0] sm:$0xff]
        %v5342 = vld [vmem:[%s864 + $0x3c8] sm:$0xff]
        %v5343 = vld [vmem:[%s864 + $0x3d0] sm:$0xff]
        %v5344 = vld [vmem:[%s864 + $0x3d8] sm:$0xff]
        %v5345 = vld [vmem:[%s864 + $0x3e0] sm:$0xff]
        %v5346 = vld [vmem:[%s864 + $0x3e8] sm:$0xff]
        %v5347 = vld [vmem:[%s864 + $0x3f0] sm:$0xff]
        %v5348 = vld [vmem:[%s864 + $0x3f8] sm:$0xff]
        %v5349 = vld [vmem:[%s873] sm:$0x3]
        %v5351 = vlaneseq
        %v5352 = vshrl.u32 %v5351, 7
        %v5353 = vsub.s32 0, %v5352
        %v5354 = vrot.slane %v5349, %v5353
        %v5355 = vlaneseq
        %v5356 = vshrl.u32 %v5355, 7
        %v5357 = vsub.s32 1, %v5356
        %v5358 = vrot.slane %v5349, %v5357
        %v5489 = vunpack.c.l.b16 %v5221
        %v5490 = vunpack.c.h.b16 %v5221
        %v5491 = vunpack.c.l.b16 %v5222
        %v5492 = vunpack.c.h.b16 %v5222
        %v5493 = vunpack.c.l.b16 %v5223
        %v5494 = vunpack.c.h.b16 %v5223
        %v5495 = vunpack.c.l.b16 %v5224
        %v5496 = vunpack.c.h.b16 %v5224
        %v5497 = vunpack.c.l.b16 %v5225
        %v5498 = vunpack.c.h.b16 %v5225
        %v5499 = vunpack.c.l.b16 %v5226
        %v5500 = vunpack.c.h.b16 %v5226
        %v5501 = vunpack.c.l.b16 %v5227
        %v5502 = vunpack.c.h.b16 %v5227
        %v5503 = vunpack.c.l.b16 %v5228
        %v5504 = vunpack.c.h.b16 %v5228
        %v5505 = vunpack.c.l.b16 %v5229
        %v5506 = vunpack.c.h.b16 %v5229
        %v5507 = vunpack.c.l.b16 %v5230
        %v5508 = vunpack.c.h.b16 %v5230
        %v5509 = vunpack.c.l.b16 %v5231
        %v5510 = vunpack.c.h.b16 %v5231
        %v5511 = vunpack.c.l.b16 %v5232
        %v5512 = vunpack.c.h.b16 %v5232
        %v5513 = vunpack.c.l.b16 %v5233
        %v5514 = vunpack.c.h.b16 %v5233
        %v5515 = vunpack.c.l.b16 %v5234
        %v5516 = vunpack.c.h.b16 %v5234
        %v5517 = vunpack.c.l.b16 %v5235
        %v5518 = vunpack.c.h.b16 %v5235
        %v5519 = vunpack.c.l.b16 %v5236
        %v5520 = vunpack.c.h.b16 %v5236
        %v5521 = vunpack.c.l.b16 %v5237
        %v5522 = vunpack.c.h.b16 %v5237
        %v5523 = vunpack.c.l.b16 %v5238
        %v5524 = vunpack.c.h.b16 %v5238
        %v5525 = vunpack.c.l.b16 %v5239
        %v5526 = vunpack.c.h.b16 %v5239
        %v5527 = vunpack.c.l.b16 %v5240
        %v5528 = vunpack.c.h.b16 %v5240
        %v5529 = vunpack.c.l.b16 %v5241
        %v5530 = vunpack.c.h.b16 %v5241
        %v5531 = vunpack.c.l.b16 %v5242
        %v5532 = vunpack.c.h.b16 %v5242
        %v5533 = vunpack.c.l.b16 %v5243
        %v5534 = vunpack.c.h.b16 %v5243
        %v5535 = vunpack.c.l.b16 %v5244
        %v5536 = vunpack.c.h.b16 %v5244
        %v5537 = vunpack.c.l.b16 %v5245
        %v5538 = vunpack.c.h.b16 %v5245
        %v5539 = vunpack.c.l.b16 %v5246
        %v5540 = vunpack.c.h.b16 %v5246
        %v5541 = vunpack.c.l.b16 %v5247
        %v5542 = vunpack.c.h.b16 %v5247
        %v5543 = vunpack.c.l.b16 %v5248
        %v5544 = vunpack.c.h.b16 %v5248
        %v5545 = vunpack.c.l.b16 %v5249
        %v5546 = vunpack.c.h.b16 %v5249
        %v5547 = vunpack.c.l.b16 %v5250
        %v5548 = vunpack.c.h.b16 %v5250
        %v5549 = vunpack.c.l.b16 %v5251
        %v5550 = vunpack.c.h.b16 %v5251
        %v5551 = vunpack.c.l.b16 %v5252
        %v5552 = vunpack.c.h.b16 %v5252
        %v5553 = vunpack.c.l.b16 %v5253
        %v5554 = vunpack.c.h.b16 %v5253
        %v5555 = vunpack.c.l.b16 %v5254
        %v5556 = vunpack.c.h.b16 %v5254
        %v5557 = vunpack.c.l.b16 %v5255
        %v5558 = vunpack.c.h.b16 %v5255
        %v5559 = vunpack.c.l.b16 %v5256
        %v5560 = vunpack.c.h.b16 %v5256
        %v5561 = vunpack.c.l.b16 %v5257
        %v5562 = vunpack.c.h.b16 %v5257
        %v5563 = vunpack.c.l.b16 %v5258
        %v5564 = vunpack.c.h.b16 %v5258
        %v5565 = vunpack.c.l.b16 %v5259
        %v5566 = vunpack.c.h.b16 %v5259
        %v5567 = vunpack.c.l.b16 %v5260
        %v5568 = vunpack.c.h.b16 %v5260
        %v5569 = vunpack.c.l.b16 %v5261
        %v5570 = vunpack.c.h.b16 %v5261
        %v5571 = vunpack.c.l.b16 %v5262
        %v5572 = vunpack.c.h.b16 %v5262
        %v5573 = vunpack.c.l.b16 %v5263
        %v5574 = vunpack.c.h.b16 %v5263
        %v5575 = vunpack.c.l.b16 %v5264
        %v5576 = vunpack.c.h.b16 %v5264
        %v5577 = vunpack.c.l.b16 %v5265
        %v5578 = vunpack.c.h.b16 %v5265
        %v5579 = vunpack.c.l.b16 %v5266
        %v5580 = vunpack.c.h.b16 %v5266
        %v5581 = vunpack.c.l.b16 %v5267
        %v5582 = vunpack.c.h.b16 %v5267
        %v5583 = vunpack.c.l.b16 %v5268
        %v5584 = vunpack.c.h.b16 %v5268
        %v5585 = vunpack.c.l.b16 %v5269
        %v5586 = vunpack.c.h.b16 %v5269
        %v5587 = vunpack.c.l.b16 %v5270
        %v5588 = vunpack.c.h.b16 %v5270
        %v5589 = vunpack.c.l.b16 %v5271
        %v5590 = vunpack.c.h.b16 %v5271
        %v5591 = vunpack.c.l.b16 %v5272
        %v5592 = vunpack.c.h.b16 %v5272
        %v5593 = vunpack.c.l.b16 %v5273
        %v5594 = vunpack.c.h.b16 %v5273
        %v5595 = vunpack.c.l.b16 %v5274
        %v5596 = vunpack.c.h.b16 %v5274
        %v5597 = vunpack.c.l.b16 %v5275
        %v5598 = vunpack.c.h.b16 %v5275
        %v5599 = vunpack.c.l.b16 %v5276
        %v5600 = vunpack.c.h.b16 %v5276
        %v5601 = vunpack.c.l.b16 %v5277
        %v5602 = vunpack.c.h.b16 %v5277
        %v5603 = vunpack.c.l.b16 %v5278
        %v5604 = vunpack.c.h.b16 %v5278
        %v5605 = vunpack.c.l.b16 %v5279
        %v5606 = vunpack.c.h.b16 %v5279
        %v5607 = vunpack.c.l.b16 %v5280
        %v5608 = vunpack.c.h.b16 %v5280
        %v5609 = vunpack.c.l.b16 %v5281
        %v5610 = vunpack.c.h.b16 %v5281
        %v5611 = vunpack.c.l.b16 %v5282
        %v5612 = vunpack.c.h.b16 %v5282
        %v5613 = vunpack.c.l.b16 %v5283
        %v5614 = vunpack.c.h.b16 %v5283
        %v5615 = vunpack.c.l.b16 %v5284
        %v5616 = vunpack.c.h.b16 %v5284
        %v5617 = vunpack.c.l.b16 %v5285
        %v5618 = vunpack.c.h.b16 %v5285
        %v5619 = vunpack.c.l.b16 %v5286
        %v5620 = vunpack.c.h.b16 %v5286
        %v5621 = vunpack.c.l.b16 %v5287
        %v5622 = vunpack.c.h.b16 %v5287
        %v5623 = vunpack.c.l.b16 %v5288
        %v5624 = vunpack.c.h.b16 %v5288
        %v5625 = vunpack.c.l.b16 %v5289
        %v5626 = vunpack.c.h.b16 %v5289
        %v5627 = vunpack.c.l.b16 %v5290
        %v5628 = vunpack.c.h.b16 %v5290
        %v5629 = vunpack.c.l.b16 %v5291
        %v5630 = vunpack.c.h.b16 %v5291
        %v5631 = vunpack.c.l.b16 %v5292
        %v5632 = vunpack.c.h.b16 %v5292
        %v5633 = vunpack.c.l.b16 %v5293
        %v5634 = vunpack.c.h.b16 %v5293
        %v5635 = vunpack.c.l.b16 %v5294
        %v5636 = vunpack.c.h.b16 %v5294
        %v5637 = vunpack.c.l.b16 %v5295
        %v5638 = vunpack.c.h.b16 %v5295
        %v5639 = vunpack.c.l.b16 %v5296
        %v5640 = vunpack.c.h.b16 %v5296
        %v5641 = vunpack.c.l.b16 %v5297
        %v5642 = vunpack.c.h.b16 %v5297
        %v5643 = vunpack.c.l.b16 %v5298
        %v5644 = vunpack.c.h.b16 %v5298
        %v5645 = vunpack.c.l.b16 %v5299
        %v5646 = vunpack.c.h.b16 %v5299
        %v5647 = vunpack.c.l.b16 %v5300
        %v5648 = vunpack.c.h.b16 %v5300
        %v5649 = vunpack.c.l.b16 %v5301
        %v5650 = vunpack.c.h.b16 %v5301
        %v5651 = vunpack.c.l.b16 %v5302
        %v5652 = vunpack.c.h.b16 %v5302
        %v5653 = vunpack.c.l.b16 %v5303
        %v5654 = vunpack.c.h.b16 %v5303
        %v5655 = vunpack.c.l.b16 %v5304
        %v5656 = vunpack.c.h.b16 %v5304
        %v5657 = vunpack.c.l.b16 %v5305
        %v5658 = vunpack.c.h.b16 %v5305
        %v5659 = vunpack.c.l.b16 %v5306
        %v5660 = vunpack.c.h.b16 %v5306
        %v5661 = vunpack.c.l.b16 %v5307
        %v5662 = vunpack.c.h.b16 %v5307
        %v5663 = vunpack.c.l.b16 %v5308
        %v5664 = vunpack.c.h.b16 %v5308
        %v5665 = vunpack.c.l.b16 %v5309
        %v5666 = vunpack.c.h.b16 %v5309
        %v5667 = vunpack.c.l.b16 %v5310
        %v5668 = vunpack.c.h.b16 %v5310
        %v5669 = vunpack.c.l.b16 %v5311
        %v5670 = vunpack.c.h.b16 %v5311
        %v5671 = vunpack.c.l.b16 %v5312
        %v5672 = vunpack.c.h.b16 %v5312
        %v5673 = vunpack.c.l.b16 %v5313
        %v5674 = vunpack.c.h.b16 %v5313
        %v5675 = vunpack.c.l.b16 %v5314
        %v5676 = vunpack.c.h.b16 %v5314
        %v5677 = vunpack.c.l.b16 %v5315
        %v5678 = vunpack.c.h.b16 %v5315
        %v5679 = vunpack.c.l.b16 %v5316
        %v5680 = vunpack.c.h.b16 %v5316
        %v5681 = vunpack.c.l.b16 %v5317
        %v5682 = vunpack.c.h.b16 %v5317
        %v5683 = vunpack.c.l.b16 %v5318
        %v5684 = vunpack.c.h.b16 %v5318
        %v5685 = vunpack.c.l.b16 %v5319
        %v5686 = vunpack.c.h.b16 %v5319
        %v5687 = vunpack.c.l.b16 %v5320
        %v5688 = vunpack.c.h.b16 %v5320
        %v5689 = vunpack.c.l.b16 %v5321
        %v5690 = vunpack.c.h.b16 %v5321
        %v5691 = vunpack.c.l.b16 %v5322
        %v5692 = vunpack.c.h.b16 %v5322
        %v5693 = vunpack.c.l.b16 %v5323
        %v5694 = vunpack.c.h.b16 %v5323
        %v5695 = vunpack.c.l.b16 %v5324
        %v5696 = vunpack.c.h.b16 %v5324
        %v5697 = vunpack.c.l.b16 %v5325
        %v5698 = vunpack.c.h.b16 %v5325
        %v5699 = vunpack.c.l.b16 %v5326
        %v5700 = vunpack.c.h.b16 %v5326
        %v5701 = vunpack.c.l.b16 %v5327
        %v5702 = vunpack.c.h.b16 %v5327
        %v5703 = vunpack.c.l.b16 %v5328
        %v5704 = vunpack.c.h.b16 %v5328
        %v5705 = vunpack.c.l.b16 %v5329
        %v5706 = vunpack.c.h.b16 %v5329
        %v5707 = vunpack.c.l.b16 %v5330
        %v5708 = vunpack.c.h.b16 %v5330
        %v5709 = vunpack.c.l.b16 %v5331
        %v5710 = vunpack.c.h.b16 %v5331
        %v5711 = vunpack.c.l.b16 %v5332
        %v5712 = vunpack.c.h.b16 %v5332
        %v5713 = vunpack.c.l.b16 %v5333
        %v5714 = vunpack.c.h.b16 %v5333
        %v5715 = vunpack.c.l.b16 %v5334
        %v5716 = vunpack.c.h.b16 %v5334
        %v5717 = vunpack.c.l.b16 %v5335
        %v5718 = vunpack.c.h.b16 %v5335
        %v5719 = vunpack.c.l.b16 %v5336
        %v5720 = vunpack.c.h.b16 %v5336
        %v5721 = vunpack.c.l.b16 %v5337
        %v5722 = vunpack.c.h.b16 %v5337
        %v5723 = vunpack.c.l.b16 %v5338
        %v5724 = vunpack.c.h.b16 %v5338
        %v5725 = vunpack.c.l.b16 %v5339
        %v5726 = vunpack.c.h.b16 %v5339
        %v5727 = vunpack.c.l.b16 %v5340
        %v5728 = vunpack.c.h.b16 %v5340
        %v5729 = vunpack.c.l.b16 %v5341
        %v5730 = vunpack.c.h.b16 %v5341
        %v5731 = vunpack.c.l.b16 %v5342
        %v5732 = vunpack.c.h.b16 %v5342
        %v5733 = vunpack.c.l.b16 %v5343
        %v5734 = vunpack.c.h.b16 %v5343
        %v5735 = vunpack.c.l.b16 %v5344
        %v5736 = vunpack.c.h.b16 %v5344
        %v5737 = vunpack.c.l.b16 %v5345
        %v5738 = vunpack.c.h.b16 %v5345
        %v5739 = vunpack.c.l.b16 %v5346
        %v5740 = vunpack.c.h.b16 %v5346
        %v5741 = vunpack.c.l.b16 %v5347
        %v5742 = vunpack.c.h.b16 %v5347
        %v5743 = vunpack.c.l.b16 %v5348
        %v5744 = vunpack.c.h.b16 %v5348
        %v5745 = vpack.c.b16 %v5491, %v5489
        %v5746 = vpack.c.b16 %v5492, %v5490
        %v5747 = vpack.c.b16 %v5495, %v5493
        %v5748 = vpack.c.b16 %v5496, %v5494
        %v5749 = vpack.c.b16 %v5499, %v5497
        %v5750 = vpack.c.b16 %v5500, %v5498
        %v5751 = vpack.c.b16 %v5503, %v5501
        %v5752 = vpack.c.b16 %v5504, %v5502
        %v5753 = vpack.c.b16 %v5507, %v5505
        %v5754 = vpack.c.b16 %v5508, %v5506
        %v5755 = vpack.c.b16 %v5511, %v5509
        %v5756 = vpack.c.b16 %v5512, %v5510
        %v5757 = vpack.c.b16 %v5515, %v5513
        %v5758 = vpack.c.b16 %v5516, %v5514
        %v5759 = vpack.c.b16 %v5519, %v5517
        %v5760 = vpack.c.b16 %v5520, %v5518
        %v5761 = vpack.c.b16 %v5523, %v5521
        %v5762 = vpack.c.b16 %v5524, %v5522
        %v5763 = vpack.c.b16 %v5527, %v5525
        %v5764 = vpack.c.b16 %v5528, %v5526
        %v5765 = vpack.c.b16 %v5531, %v5529
        %v5766 = vpack.c.b16 %v5532, %v5530
        %v5767 = vpack.c.b16 %v5535, %v5533
        %v5768 = vpack.c.b16 %v5536, %v5534
        %v5769 = vpack.c.b16 %v5539, %v5537
        %v5770 = vpack.c.b16 %v5540, %v5538
        %v5771 = vpack.c.b16 %v5543, %v5541
        %v5772 = vpack.c.b16 %v5544, %v5542
        %v5773 = vpack.c.b16 %v5547, %v5545
        %v5774 = vpack.c.b16 %v5548, %v5546
        %v5775 = vpack.c.b16 %v5551, %v5549
        %v5776 = vpack.c.b16 %v5552, %v5550
        %v5777 = vpack.c.b16 %v5555, %v5553
        %v5778 = vpack.c.b16 %v5556, %v5554
        %v5779 = vpack.c.b16 %v5559, %v5557
        %v5780 = vpack.c.b16 %v5560, %v5558
        %v5781 = vpack.c.b16 %v5563, %v5561
        %v5782 = vpack.c.b16 %v5564, %v5562
        %v5783 = vpack.c.b16 %v5567, %v5565
        %v5784 = vpack.c.b16 %v5568, %v5566
        %v5785 = vpack.c.b16 %v5571, %v5569
        %v5786 = vpack.c.b16 %v5572, %v5570
        %v5787 = vpack.c.b16 %v5575, %v5573
        %v5788 = vpack.c.b16 %v5576, %v5574
        %v5789 = vpack.c.b16 %v5579, %v5577
        %v5790 = vpack.c.b16 %v5580, %v5578
        %v5791 = vpack.c.b16 %v5583, %v5581
        %v5792 = vpack.c.b16 %v5584, %v5582
        %v5793 = vpack.c.b16 %v5587, %v5585
        %v5794 = vpack.c.b16 %v5588, %v5586
        %v5795 = vpack.c.b16 %v5591, %v5589
        %v5796 = vpack.c.b16 %v5592, %v5590
        %v5797 = vpack.c.b16 %v5595, %v5593
        %v5798 = vpack.c.b16 %v5596, %v5594
        %v5799 = vpack.c.b16 %v5599, %v5597
        %v5800 = vpack.c.b16 %v5600, %v5598
        %v5801 = vpack.c.b16 %v5603, %v5601
        %v5802 = vpack.c.b16 %v5604, %v5602
        %v5803 = vpack.c.b16 %v5607, %v5605
        %v5804 = vpack.c.b16 %v5608, %v5606
        %v5805 = vpack.c.b16 %v5611, %v5609
        %v5806 = vpack.c.b16 %v5612, %v5610
        %v5807 = vpack.c.b16 %v5615, %v5613
        %v5808 = vpack.c.b16 %v5616, %v5614
        %v5809 = vpack.c.b16 %v5619, %v5617
        %v5810 = vpack.c.b16 %v5620, %v5618
        %v5811 = vpack.c.b16 %v5623, %v5621
        %v5812 = vpack.c.b16 %v5624, %v5622
        %v5813 = vpack.c.b16 %v5627, %v5625
        %v5814 = vpack.c.b16 %v5628, %v5626
        %v5815 = vpack.c.b16 %v5631, %v5629
        %v5816 = vpack.c.b16 %v5632, %v5630
        %v5817 = vpack.c.b16 %v5635, %v5633
        %v5818 = vpack.c.b16 %v5636, %v5634
        %v5819 = vpack.c.b16 %v5639, %v5637
        %v5820 = vpack.c.b16 %v5640, %v5638
        %v5821 = vpack.c.b16 %v5643, %v5641
        %v5822 = vpack.c.b16 %v5644, %v5642
        %v5823 = vpack.c.b16 %v5647, %v5645
        %v5824 = vpack.c.b16 %v5648, %v5646
        %v5825 = vpack.c.b16 %v5651, %v5649
        %v5826 = vpack.c.b16 %v5652, %v5650
        %v5827 = vpack.c.b16 %v5655, %v5653
        %v5828 = vpack.c.b16 %v5656, %v5654
        %v5829 = vpack.c.b16 %v5659, %v5657
        %v5830 = vpack.c.b16 %v5660, %v5658
        %v5831 = vpack.c.b16 %v5663, %v5661
        %v5832 = vpack.c.b16 %v5664, %v5662
        %v5833 = vpack.c.b16 %v5667, %v5665
        %v5834 = vpack.c.b16 %v5668, %v5666
        %v5835 = vpack.c.b16 %v5671, %v5669
        %v5836 = vpack.c.b16 %v5672, %v5670
        %v5837 = vpack.c.b16 %v5675, %v5673
        %v5838 = vpack.c.b16 %v5676, %v5674
        %v5839 = vpack.c.b16 %v5679, %v5677
        %v5840 = vpack.c.b16 %v5680, %v5678
        %v5841 = vpack.c.b16 %v5683, %v5681
        %v5842 = vpack.c.b16 %v5684, %v5682
        %v5843 = vpack.c.b16 %v5687, %v5685
        %v5844 = vpack.c.b16 %v5688, %v5686
        %v5845 = vpack.c.b16 %v5691, %v5689
        %v5846 = vpack.c.b16 %v5692, %v5690
        %v5847 = vpack.c.b16 %v5695, %v5693
        %v5848 = vpack.c.b16 %v5696, %v5694
        %v5849 = vpack.c.b16 %v5699, %v5697
        %v5850 = vpack.c.b16 %v5700, %v5698
        %v5851 = vpack.c.b16 %v5703, %v5701
        %v5852 = vpack.c.b16 %v5704, %v5702
        %v5853 = vpack.c.b16 %v5707, %v5705
        %v5854 = vpack.c.b16 %v5708, %v5706
        %v5855 = vpack.c.b16 %v5711, %v5709
        %v5856 = vpack.c.b16 %v5712, %v5710
        %v5857 = vpack.c.b16 %v5715, %v5713
        %v5858 = vpack.c.b16 %v5716, %v5714
        %v5859 = vpack.c.b16 %v5719, %v5717
        %v5860 = vpack.c.b16 %v5720, %v5718
        %v5861 = vpack.c.b16 %v5723, %v5721
        %v5862 = vpack.c.b16 %v5724, %v5722
        %v5863 = vpack.c.b16 %v5727, %v5725
        %v5864 = vpack.c.b16 %v5728, %v5726
        %v5865 = vpack.c.b16 %v5731, %v5729
        %v5866 = vpack.c.b16 %v5732, %v5730
        %v5867 = vpack.c.b16 %v5735, %v5733
        %v5868 = vpack.c.b16 %v5736, %v5734
        %v5869 = vpack.c.b16 %v5739, %v5737
        %v5870 = vpack.c.b16 %v5740, %v5738
        %v5871 = vpack.c.b16 %v5743, %v5741
        %v5872 = vpack.c.b16 %v5744, %v5742
        %6001 = vmatprep.subr.bf16.mxu0 %v5760
        %6002 = vmatpush1.bf16.msra.mxu0 %v5759
        %6003 = vmatprep.subr.bf16.mxu0 %v5758
        %6004 = vmatpush1.bf16.msra.mxu0 %v5757
        %6005 = vmatprep.subr.bf16.mxu0 %v5756
        %6006 = vmatpush1.bf16.msra.mxu0 %v5755
        %6007 = vmatprep.subr.bf16.mxu0 %v5754
        %6008 = vmatpush1.bf16.msra.mxu0 %v5753
        %6009 = vmatprep.subr.bf16.mxu0 %v5752
        %6010 = vmatpush1.bf16.msra.mxu0 %v5751
        %6011 = vmatprep.subr.bf16.mxu0 %v5750
        %6012 = vmatpush1.bf16.msra.mxu0 %v5749
        %6013 = vmatprep.subr.bf16.mxu0 %v5748
        %6014 = vmatpush1.bf16.msra.mxu0 %v5747
        %6015 = vmatprep.subr.bf16.mxu0 %v5746
        %6016 = vmatpush1.bf16.msra.mxu0 %v5745
        %6017 = vmatprep.subr.bf16.mxu0 %v5776
        %6018 = vmatpush2.bf16.msra.mxu0 %v5775
        %6019 = vmatprep.subr.bf16.mxu0 %v5774
        %6020 = vmatpush2.bf16.msra.mxu0 %v5773
        %6021 = vmatprep.subr.bf16.mxu0 %v5772
        %6022 = vmatpush2.bf16.msra.mxu0 %v5771
        %6023 = vmatprep.subr.bf16.mxu0 %v5770
        %6024 = vmatpush2.bf16.msra.mxu0 %v5769
        %6025 = vmatprep.subr.bf16.mxu0 %v5768
        %6026 = vmatpush2.bf16.msra.mxu0 %v5767
        %6027 = vmatprep.subr.bf16.mxu0 %v5766
        %6028 = vmatpush2.bf16.msra.mxu0 %v5765
        %6029 = vmatprep.subr.bf16.mxu0 %v5764
        %6030 = vmatpush2.bf16.msra.mxu0 %v5763
        %6031 = vmatprep.subr.bf16.mxu0 %v5762
        %6032 = vmatpush2.bf16.msra.mxu0 %v5761
        %6033 = vmatprep.mubr.bf16.mxu0 %v5190
        %6034 = vmatmul.mubr.bf16.gmra.mxu0 %v5189
        %v6035 = vpop.f32.mrf.mxu0
        %v6036 = vadd.f32 %v5354, %v6035
        %v6037 = vpop.f32.mrf.mxu0
        %v6038 = vadd.f32 %v5358, %v6037
        %v6039 = vpop.f32.mrf.mxu0
        %v6040 = vadd.f32 %v5354, %v6039
        %v6041 = vpop.f32.mrf.mxu0
        %v6042 = vadd.f32 %v5358, %v6041
        %6043 = vmatprep.mubr.bf16.mxu0 %v5198
        %6044 = vmatmul.mubr.bf16.gmra.mxu0 %v5197
        %v6045 = vpop.f32.mrf.mxu0
        %v6046 = vadd.f32 %v5354, %v6045
        %v6047 = vpop.f32.mrf.mxu0
        %v6048 = vadd.f32 %v5358, %v6047
        %v6049 = vpop.f32.mrf.mxu0
        %v6050 = vadd.f32 %v5354, %v6049
        %v6051 = vpop.f32.mrf.mxu0
        %v6052 = vadd.f32 %v5358, %v6051
        %6053 = vmatprep.mubr.bf16.mxu0 %v5206
        %6054 = vmatmul.mubr.bf16.gmra.mxu0 %v5205
        %v6055 = vpop.f32.mrf.mxu0
        %v6056 = vadd.f32 %v5354, %v6055
        %v6057 = vpop.f32.mrf.mxu0
        %v6058 = vadd.f32 %v5358, %v6057
        %v6059 = vpop.f32.mrf.mxu0
        %v6060 = vadd.f32 %v5354, %v6059
        %v6061 = vpop.f32.mrf.mxu0
        %v6062 = vadd.f32 %v5358, %v6061
        %6063 = vmatprep.mubr.bf16.mxu0 %v5214
        %6064 = vmatmul.mubr.bf16.gmra.mxu0 %v5213
        %v6065 = vpop.f32.mrf.mxu0
        %v6066 = vadd.f32 %v5354, %v6065
        %v6067 = vpop.f32.mrf.mxu0
        %v6068 = vadd.f32 %v5358, %v6067
        %v6069 = vpop.f32.mrf.mxu0
        %v6070 = vadd.f32 %v5354, %v6069
        %v6071 = vpop.f32.mrf.mxu0
        %v6072 = vadd.f32 %v5358, %v6071
        %6073 = vdwg.mxu0
        %6074 = vmatprep.subr.bf16.mxu0 %v5792
        %6075 = vmatpush1.bf16.msra.mxu0 %v5791
        %6076 = vmatprep.subr.bf16.mxu0 %v5790
        %6077 = vmatpush1.bf16.msra.mxu0 %v5789
        %6078 = vmatprep.subr.bf16.mxu0 %v5788
        %6079 = vmatpush1.bf16.msra.mxu0 %v5787
        %6080 = vmatprep.subr.bf16.mxu0 %v5786
        %6081 = vmatpush1.bf16.msra.mxu0 %v5785
        %6082 = vmatprep.subr.bf16.mxu0 %v5784
        %6083 = vmatpush1.bf16.msra.mxu0 %v5783
        %6084 = vmatprep.subr.bf16.mxu0 %v5782
        %6085 = vmatpush1.bf16.msra.mxu0 %v5781
        %6086 = vmatprep.subr.bf16.mxu0 %v5780
        %6087 = vmatpush1.bf16.msra.mxu0 %v5779
        %6088 = vmatprep.subr.bf16.mxu0 %v5778
        %6089 = vmatpush1.bf16.msra.mxu0 %v5777
        %6090 = vmatprep.subr.bf16.mxu0 %v5808
        %6091 = vmatpush2.bf16.msra.mxu0 %v5807
        %6092 = vmatprep.subr.bf16.mxu0 %v5806
        %6093 = vmatpush2.bf16.msra.mxu0 %v5805
        %6094 = vmatprep.subr.bf16.mxu0 %v5804
        %6095 = vmatpush2.bf16.msra.mxu0 %v5803
        %6096 = vmatprep.subr.bf16.mxu0 %v5802
        %6097 = vmatpush2.bf16.msra.mxu0 %v5801
        %6098 = vmatprep.subr.bf16.mxu0 %v5800
        %6099 = vmatpush2.bf16.msra.mxu0 %v5799
        %6100 = vmatprep.subr.bf16.mxu0 %v5798
        %6101 = vmatpush2.bf16.msra.mxu0 %v5797
        %6102 = vmatprep.subr.bf16.mxu0 %v5796
        %6103 = vmatpush2.bf16.msra.mxu0 %v5795
        %6104 = vmatprep.subr.bf16.mxu0 %v5794
        %6105 = vmatpush2.bf16.msra.mxu0 %v5793
        %6106 = vmatprep.mubr.bf16.mxu0 %v5192
        %6107 = vmatmul.mubr.bf16.gmra.mxu0 %v5191
        %v6108 = vpop.f32.mrf.mxu0
        %v6109 = vadd.f32 %v6036, %v6108
        %v6110 = vpop.f32.mrf.mxu0
        %v6111 = vadd.f32 %v6038, %v6110
        %v6112 = vpop.f32.mrf.mxu0
        %v6113 = vadd.f32 %v6040, %v6112
        %v6114 = vpop.f32.mrf.mxu0
        %v6115 = vadd.f32 %v6042, %v6114
        %6116 = vmatprep.mubr.bf16.mxu0 %v5200
        %6117 = vmatmul.mubr.bf16.gmra.mxu0 %v5199
        %v6118 = vpop.f32.mrf.mxu0
        %v6119 = vadd.f32 %v6046, %v6118
        %v6120 = vpop.f32.mrf.mxu0
        %v6121 = vadd.f32 %v6048, %v6120
        %v6122 = vpop.f32.mrf.mxu0
        %v6123 = vadd.f32 %v6050, %v6122
        %v6124 = vpop.f32.mrf.mxu0
        %v6125 = vadd.f32 %v6052, %v6124
        %6126 = vmatprep.mubr.bf16.mxu0 %v5208
        %6127 = vmatmul.mubr.bf16.gmra.mxu0 %v5207
        %v6128 = vpop.f32.mrf.mxu0
        %v6129 = vadd.f32 %v6056, %v6128
        %v6130 = vpop.f32.mrf.mxu0
        %v6131 = vadd.f32 %v6058, %v6130
        %v6132 = vpop.f32.mrf.mxu0
        %v6133 = vadd.f32 %v6060, %v6132
        %v6134 = vpop.f32.mrf.mxu0
        %v6135 = vadd.f32 %v6062, %v6134
        %6136 = vmatprep.mubr.bf16.mxu0 %v5216
        %6137 = vmatmul.mubr.bf16.gmra.mxu0 %v5215
        %v6138 = vpop.f32.mrf.mxu0
        %v6139 = vadd.f32 %v6066, %v6138
        %v6140 = vpop.f32.mrf.mxu0
        %v6141 = vadd.f32 %v6068, %v6140
        %v6142 = vpop.f32.mrf.mxu0
        %v6143 = vadd.f32 %v6070, %v6142
        %v6144 = vpop.f32.mrf.mxu0
        %v6145 = vadd.f32 %v6072, %v6144
        %6146 = vdwg.mxu0
        %6147 = vmatprep.subr.bf16.mxu0 %v5824
        %6148 = vmatpush1.bf16.msra.mxu0 %v5823
        %6149 = vmatprep.subr.bf16.mxu0 %v5822
        %6150 = vmatpush1.bf16.msra.mxu0 %v5821
        %6151 = vmatprep.subr.bf16.mxu0 %v5820
        %6152 = vmatpush1.bf16.msra.mxu0 %v5819
        %6153 = vmatprep.subr.bf16.mxu0 %v5818
        %6154 = vmatpush1.bf16.msra.mxu0 %v5817
        %6155 = vmatprep.subr.bf16.mxu0 %v5816
        %6156 = vmatpush1.bf16.msra.mxu0 %v5815
        %6157 = vmatprep.subr.bf16.mxu0 %v5814
        %6158 = vmatpush1.bf16.msra.mxu0 %v5813
        %6159 = vmatprep.subr.bf16.mxu0 %v5812
        %6160 = vmatpush1.bf16.msra.mxu0 %v5811
        %6161 = vmatprep.subr.bf16.mxu0 %v5810
        %6162 = vmatpush1.bf16.msra.mxu0 %v5809
        %6163 = vmatprep.subr.bf16.mxu0 %v5840
        %6164 = vmatpush2.bf16.msra.mxu0 %v5839
        %6165 = vmatprep.subr.bf16.mxu0 %v5838
        %6166 = vmatpush2.bf16.msra.mxu0 %v5837
        %6167 = vmatprep.subr.bf16.mxu0 %v5836
        %6168 = vmatpush2.bf16.msra.mxu0 %v5835
        %6169 = vmatprep.subr.bf16.mxu0 %v5834
        %6170 = vmatpush2.bf16.msra.mxu0 %v5833
        %6171 = vmatprep.subr.bf16.mxu0 %v5832
        %6172 = vmatpush2.bf16.msra.mxu0 %v5831
        %6173 = vmatprep.subr.bf16.mxu0 %v5830
        %6174 = vmatpush2.bf16.msra.mxu0 %v5829
        %6175 = vmatprep.subr.bf16.mxu0 %v5828
        %6176 = vmatpush2.bf16.msra.mxu0 %v5827
        %6177 = vmatprep.subr.bf16.mxu0 %v5826
        %6178 = vmatpush2.bf16.msra.mxu0 %v5825
        %6179 = vmatprep.mubr.bf16.mxu0 %v5194
        %6180 = vmatmul.mubr.bf16.gmra.mxu0 %v5193
        %v6181 = vpop.f32.mrf.mxu0
        %v6182 = vadd.f32 %v6109, %v6181
        %v6183 = vpop.f32.mrf.mxu0
        %v6184 = vadd.f32 %v6111, %v6183
        %v6185 = vpop.f32.mrf.mxu0
        %v6186 = vadd.f32 %v6113, %v6185
        %v6187 = vpop.f32.mrf.mxu0
        %v6188 = vadd.f32 %v6115, %v6187
        %6189 = vmatprep.mubr.bf16.mxu0 %v5202
        %6190 = vmatmul.mubr.bf16.gmra.mxu0 %v5201
        %v6191 = vpop.f32.mrf.mxu0
        %v6192 = vadd.f32 %v6119, %v6191
        %v6193 = vpop.f32.mrf.mxu0
        %v6194 = vadd.f32 %v6121, %v6193
        %v6195 = vpop.f32.mrf.mxu0
        %v6196 = vadd.f32 %v6123, %v6195
        %v6197 = vpop.f32.mrf.mxu0
        %v6198 = vadd.f32 %v6125, %v6197
        %6199 = vmatprep.mubr.bf16.mxu0 %v5210
        %6200 = vmatmul.mubr.bf16.gmra.mxu0 %v5209
        %v6201 = vpop.f32.mrf.mxu0
        %v6202 = vadd.f32 %v6129, %v6201
        %v6203 = vpop.f32.mrf.mxu0
        %v6204 = vadd.f32 %v6131, %v6203
        %v6205 = vpop.f32.mrf.mxu0
        %v6206 = vadd.f32 %v6133, %v6205
        %v6207 = vpop.f32.mrf.mxu0
        %v6208 = vadd.f32 %v6135, %v6207
        %6209 = vmatprep.mubr.bf16.mxu0 %v5218
        %6210 = vmatmul.mubr.bf16.gmra.mxu0 %v5217
        %v6211 = vpop.f32.mrf.mxu0
        %v6212 = vadd.f32 %v6139, %v6211
        %v6213 = vpop.f32.mrf.mxu0
        %v6214 = vadd.f32 %v6141, %v6213
        %v6215 = vpop.f32.mrf.mxu0
        %v6216 = vadd.f32 %v6143, %v6215
        %v6217 = vpop.f32.mrf.mxu0
        %v6218 = vadd.f32 %v6145, %v6217
        %6219 = vdwg.mxu0
        %6220 = vmatprep.subr.bf16.mxu0 %v5856
        %6221 = vmatpush1.bf16.msra.mxu0 %v5855
        %6222 = vmatprep.subr.bf16.mxu0 %v5854
        %6223 = vmatpush1.bf16.msra.mxu0 %v5853
        %6224 = vmatprep.subr.bf16.mxu0 %v5852
        %6225 = vmatpush1.bf16.msra.mxu0 %v5851
        %6226 = vmatprep.subr.bf16.mxu0 %v5850
        %6227 = vmatpush1.bf16.msra.mxu0 %v5849
        %6228 = vmatprep.subr.bf16.mxu0 %v5848
        %6229 = vmatpush1.bf16.msra.mxu0 %v5847
        %6230 = vmatprep.subr.bf16.mxu0 %v5846
        %6231 = vmatpush1.bf16.msra.mxu0 %v5845
        %6232 = vmatprep.subr.bf16.mxu0 %v5844
        %6233 = vmatpush1.bf16.msra.mxu0 %v5843
        %6234 = vmatprep.subr.bf16.mxu0 %v5842
        %6235 = vmatpush1.bf16.msra.mxu0 %v5841
        %6236 = vmatprep.subr.bf16.mxu0 %v5872
        %6237 = vmatpush2.bf16.msra.mxu0 %v5871
        %6238 = vmatprep.subr.bf16.mxu0 %v5870
        %6239 = vmatpush2.bf16.msra.mxu0 %v5869
        %6240 = vmatprep.subr.bf16.mxu0 %v5868
        %6241 = vmatpush2.bf16.msra.mxu0 %v5867
        %6242 = vmatprep.subr.bf16.mxu0 %v5866
        %6243 = vmatpush2.bf16.msra.mxu0 %v5865
        %6244 = vmatprep.subr.bf16.mxu0 %v5864
        %6245 = vmatpush2.bf16.msra.mxu0 %v5863
        %6246 = vmatprep.subr.bf16.mxu0 %v5862
        %6247 = vmatpush2.bf16.msra.mxu0 %v5861
        %6248 = vmatprep.subr.bf16.mxu0 %v5860
        %6249 = vmatpush2.bf16.msra.mxu0 %v5859
        %6250 = vmatprep.subr.bf16.mxu0 %v5858
        %6251 = vmatpush2.bf16.msra.mxu0 %v5857
        %6252 = vmatprep.mubr.bf16.mxu0 %v5196
        %6253 = vmatmul.mubr.bf16.gmra.mxu0 %v5195
        %v6254 = vpop.f32.mrf.mxu0
        %v6255 = vadd.f32 %v6182, %v6254
        %v6256 = vpop.f32.mrf.mxu0
        %v6257 = vadd.f32 %v6184, %v6256
        %v6258 = vpop.f32.mrf.mxu0
        %v6259 = vadd.f32 %v6186, %v6258
        %v6260 = vpop.f32.mrf.mxu0
        %v6261 = vadd.f32 %v6188, %v6260
        %6262 = vmatprep.mubr.bf16.mxu0 %v5204
        %6263 = vmatmul.mubr.bf16.gmra.mxu0 %v5203
        %v6264 = vpop.f32.mrf.mxu0
        %v6265 = vadd.f32 %v6192, %v6264
        %v6266 = vpop.f32.mrf.mxu0
        %v6267 = vadd.f32 %v6194, %v6266
        %v6268 = vpop.f32.mrf.mxu0
        %v6269 = vadd.f32 %v6196, %v6268
        %v6270 = vpop.f32.mrf.mxu0
        %v6271 = vadd.f32 %v6198, %v6270
        %6272 = vmatprep.mubr.bf16.mxu0 %v5212
        %6273 = vmatmul.mubr.bf16.gmra.mxu0 %v5211
        %v6274 = vpop.f32.mrf.mxu0
        %v6275 = vadd.f32 %v6202, %v6274
        %v6276 = vpop.f32.mrf.mxu0
        %v6277 = vadd.f32 %v6204, %v6276
        %v6278 = vpop.f32.mrf.mxu0
        %v6279 = vadd.f32 %v6206, %v6278
        %v6280 = vpop.f32.mrf.mxu0
        %v6281 = vadd.f32 %v6208, %v6280
        %6282 = vmatprep.mubr.bf16.mxu0 %v5220
        %6283 = vmatmul.mubr.bf16.gmra.mxu0 %v5219
        %v6284 = vpop.f32.mrf.mxu0
        %v6285 = vadd.f32 %v6212, %v6284
        %v6286 = vpop.f32.mrf.mxu0
        %v6287 = vadd.f32 %v6214, %v6286
        %v6288 = vpop.f32.mrf.mxu0
        %v6289 = vadd.f32 %v6216, %v6288
        %v6290 = vpop.f32.mrf.mxu0
        %v6291 = vadd.f32 %v6218, %v6290
        %6292 = vdwg.mxu0
        %v6293 = vadd.f32 %v3815, %v6255
        %v6294 = vadd.f32 %v3816, %v6257
        %v6295 = vadd.f32 %v3817, %v6259
        %v6296 = vadd.f32 %v3818, %v6261
        %v6297 = vadd.f32 %v3819, %v6265
        %v6298 = vadd.f32 %v3820, %v6267
        %v6299 = vadd.f32 %v3821, %v6269
        %v6300 = vadd.f32 %v3822, %v6271
        %v6301 = vadd.f32 %v3823, %v6275
        %v6302 = vadd.f32 %v3824, %v6277
        %v6303 = vadd.f32 %v3825, %v6279
        %v6304 = vadd.f32 %v3826, %v6281
        %v6305 = vadd.f32 %v3827, %v6285
        %v6306 = vadd.f32 %v3828, %v6287
        %v6307 = vadd.f32 %v3829, %v6289
        %v6308 = vadd.f32 %v3830, %v6291
        %6309 = vst [vmem:[#allocation2] sm:$0xff] %v6293
        %6310 = vst [vmem:[#allocation2 + $0x8] sm:$0xff] %v6294
        %6311 = vst [vmem:[#allocation2 + $0x10] sm:$0xff] %v6295
        %6312 = vst [vmem:[#allocation2 + $0x18] sm:$0xff] %v6296
        %6313 = vst [vmem:[#allocation2 + $0x20] sm:$0xff] %v6297
        %6314 = vst [vmem:[#allocation2 + $0x28] sm:$0xff] %v6298
        %6315 = vst [vmem:[#allocation2 + $0x30] sm:$0xff] %v6299
        %6316 = vst [vmem:[#allocation2 + $0x38] sm:$0xff] %v6300
        %6317 = vst [vmem:[#allocation2 + $0x40] sm:$0xff] %v6301
        %6318 = vst [vmem:[#allocation2 + $0x48] sm:$0xff] %v6302
        %6319 = vst [vmem:[#allocation2 + $0x50] sm:$0xff] %v6303
        %6320 = vst [vmem:[#allocation2 + $0x58] sm:$0xff] %v6304
        %6321 = vst [vmem:[#allocation2 + $0x60] sm:$0xff] %v6305
        %6322 = vst [vmem:[#allocation2 + $0x68] sm:$0xff] %v6306
        %6323 = vst [vmem:[#allocation2 + $0x70] sm:$0xff] %v6307
        %6324 = vst [vmem:[#allocation2 + $0x78] sm:$0xff] %v6308
        %p6325 = scmp.eq.s32.totalorder %s56, 3
        // Predicated region
        $region149: #{gpt_forward.1} parent=87 // pred_check
          %p6326 = pneg %p6325
        $region150: #{gpt_forward.1} parent=87 // pred_check_branch
          %6328 = sbr.rel (%p6326) target = $region152
        $region151: #{gpt_forward.1} parent=87 // pred_region
          %v6329 = vld [vmem:[#allocation20] sm:$0x3]
          %v6330 = vld [vmem:[#allocation21] sm:$0x3]
          %v6331 = vadd.f32 %v6293, %v6294
          %6332 = vadd.xlane.f32.xlu0 %v6331
          %v6333 = vpop.xlane.xlu0 %6332
          %v6334 = vadd.f32 %v6295, %v6296
          %6335 = vadd.xlane.f32.xlu0 %v6334
          %v6336 = vpop.xlane.xlu0 %6335
          %v6337 = vadd.f32 %v6297, %v6298
          %6338 = vadd.xlane.f32.xlu0 %v6337
          %v6339 = vpop.xlane.xlu0 %6338
          %v6340 = vadd.f32 %v6299, %v6300
          %6341 = vadd.xlane.f32.xlu0 %v6340
          %v6342 = vpop.xlane.xlu0 %6341
          %v6343 = vadd.f32 %v6301, %v6302
          %6344 = vadd.xlane.f32.xlu0 %v6343
          %v6345 = vpop.xlane.xlu0 %6344
          %v6346 = vadd.f32 %v6303, %v6304
          %6347 = vadd.xlane.f32.xlu0 %v6346
          %v6348 = vpop.xlane.xlu0 %6347
          %v6349 = vadd.f32 %v6305, %v6306
          %6350 = vadd.xlane.f32.xlu0 %v6349
          %v6351 = vpop.xlane.xlu0 %6350
          %v6352 = vadd.f32 %v6307, %v6308
          %6353 = vadd.xlane.f32.xlu0 %v6352
          %v6354 = vpop.xlane.xlu0 %6353
          %v6355 = vmul.f32 %v6333, %v1084
          %v6356 = vmul.f32 %v6336, %v1084
          %v6357 = vmul.f32 %v6339, %v1084
          %v6358 = vmul.f32 %v6342, %v1084
          %v6359 = vmul.f32 %v6345, %v1084
          %v6360 = vmul.f32 %v6348, %v1084
          %v6361 = vmul.f32 %v6351, %v1084
          %v6362 = vmul.f32 %v6354, %v1084
          %v6363 = vsub.f32 %v6293, %v6355
          %v6364 = vsub.f32 %v6294, %v6355
          %v6365 = vsub.f32 %v6295, %v6356
          %v6366 = vsub.f32 %v6296, %v6356
          %v6367 = vsub.f32 %v6297, %v6357
          %v6368 = vsub.f32 %v6298, %v6357
          %v6369 = vsub.f32 %v6299, %v6358
          %v6370 = vsub.f32 %v6300, %v6358
          %v6371 = vsub.f32 %v6301, %v6359
          %v6372 = vsub.f32 %v6302, %v6359
          %v6373 = vsub.f32 %v6303, %v6360
          %v6374 = vsub.f32 %v6304, %v6360
          %v6375 = vsub.f32 %v6305, %v6361
          %v6376 = vsub.f32 %v6306, %v6361
          %v6377 = vsub.f32 %v6307, %v6362
          %v6378 = vsub.f32 %v6308, %v6362
          %v6379 = vmul.f32 %v6363, %v6363
          %v6380 = vmul.f32 %v6364, %v6364
          %v6381 = vmul.f32 %v6365, %v6365
          %v6382 = vmul.f32 %v6366, %v6366
          %v6383 = vmul.f32 %v6367, %v6367
          %v6384 = vmul.f32 %v6368, %v6368
          %v6385 = vmul.f32 %v6369, %v6369
          %v6386 = vmul.f32 %v6370, %v6370
          %v6387 = vmul.f32 %v6371, %v6371
          %v6388 = vmul.f32 %v6372, %v6372
          %v6389 = vmul.f32 %v6373, %v6373
          %v6390 = vmul.f32 %v6374, %v6374
          %v6391 = vmul.f32 %v6375, %v6375
          %v6392 = vmul.f32 %v6376, %v6376
          %v6393 = vmul.f32 %v6377, %v6377
          %v6394 = vmul.f32 %v6378, %v6378
          %v6395 = vadd.f32 %v6379, %v6380
          %6396 = vadd.xlane.f32.xlu0 %v6395
          %v6397 = vpop.xlane.xlu0 %6396
          %v6398 = vadd.f32 %v6381, %v6382
          %6399 = vadd.xlane.f32.xlu0 %v6398
          %v6400 = vpop.xlane.xlu0 %6399
          %v6401 = vadd.f32 %v6383, %v6384
          %6402 = vadd.xlane.f32.xlu0 %v6401
          %v6403 = vpop.xlane.xlu0 %6402
          %v6404 = vadd.f32 %v6385, %v6386
          %6405 = vadd.xlane.f32.xlu0 %v6404
          %v6406 = vpop.xlane.xlu0 %6405
          %v6407 = vadd.f32 %v6387, %v6388
          %6408 = vadd.xlane.f32.xlu0 %v6407
          %v6409 = vpop.xlane.xlu0 %6408
          %v6410 = vadd.f32 %v6389, %v6390
          %6411 = vadd.xlane.f32.xlu0 %v6410
          %v6412 = vpop.xlane.xlu0 %6411
          %v6413 = vadd.f32 %v6391, %v6392
          %6414 = vadd.xlane.f32.xlu0 %v6413
          %v6415 = vpop.xlane.xlu0 %6414
          %v6416 = vadd.f32 %v6393, %v6394
          %6417 = vadd.xlane.f32.xlu0 %v6416
          %v6418 = vpop.xlane.xlu0 %6417
          %v6419 = vmul.f32 %v6397, %v1084
          %v6420 = vmul.f32 %v6400, %v1084
          %v6421 = vmul.f32 %v6403, %v1084
          %v6422 = vmul.f32 %v6406, %v1084
          %v6423 = vmul.f32 %v6409, %v1084
          %v6424 = vmul.f32 %v6412, %v1084
          %v6425 = vmul.f32 %v6415, %v1084
          %v6426 = vmul.f32 %v6418, %v1084
          %v6427 = vadd.f32 %v6419, 1e-05
          %v6428 = vadd.f32 %v6420, 1e-05
          %v6429 = vadd.f32 %v6421, 1e-05
          %v6430 = vadd.f32 %v6422, 1e-05
          %v6431 = vadd.f32 %v6423, 1e-05
          %v6432 = vadd.f32 %v6424, 1e-05
          %v6433 = vadd.f32 %v6425, 1e-05
          %v6434 = vadd.f32 %v6426, 1e-05
          %v6435 = vrsqrt.pop %v6427
          %v6436 = vrsqrt.pop %v6428
          %v6437 = vrsqrt.pop %v6429
          %v6438 = vrsqrt.pop %v6430
          %v6439 = vrsqrt.pop %v6431
          %v6440 = vrsqrt.pop %v6432
          %v6441 = vrsqrt.pop %v6433
          %v6442 = vrsqrt.pop %v6434
          %v6443 = vmul.f32 %v6363, %v6435
          %v6444 = vmul.f32 %v6364, %v6435
          %v6445 = vmul.f32 %v6365, %v6436
          %v6446 = vmul.f32 %v6366, %v6436
          %v6447 = vmul.f32 %v6367, %v6437
          %v6448 = vmul.f32 %v6368, %v6437
          %v6449 = vmul.f32 %v6369, %v6438
          %v6450 = vmul.f32 %v6370, %v6438
          %v6451 = vmul.f32 %v6371, %v6439
          %v6452 = vmul.f32 %v6372, %v6439
          %v6453 = vmul.f32 %v6373, %v6440
          %v6454 = vmul.f32 %v6374, %v6440
          %v6455 = vmul.f32 %v6375, %v6441
          %v6456 = vmul.f32 %v6376, %v6441
          %v6457 = vmul.f32 %v6377, %v6442
          %v6458 = vmul.f32 %v6378, %v6442
          %v6460 = vlaneseq
          %v6461 = vshrl.u32 %v6460, 7
          %v6462 = vsub.s32 0, %v6461
          %v6463 = vrot.slane %v6329, %v6462
          %v6464 = vlaneseq
          %v6465 = vshrl.u32 %v6464, 7
          %v6466 = vsub.s32 1, %v6465
          %v6467 = vrot.slane %v6329, %v6466
          %v6470 = vmul.f32 %v6443, %v6463
          %v6471 = vmul.f32 %v6444, %v6467
          %v6472 = vmul.f32 %v6445, %v6463
          %v6473 = vmul.f32 %v6446, %v6467
          %v6474 = vmul.f32 %v6447, %v6463
          %v6475 = vmul.f32 %v6448, %v6467
          %v6476 = vmul.f32 %v6449, %v6463
          %v6477 = vmul.f32 %v6450, %v6467
          %v6478 = vmul.f32 %v6451, %v6463
          %v6479 = vmul.f32 %v6452, %v6467
          %v6480 = vmul.f32 %v6453, %v6463
          %v6481 = vmul.f32 %v6454, %v6467
          %v6482 = vmul.f32 %v6455, %v6463
          %v6483 = vmul.f32 %v6456, %v6467
          %v6484 = vmul.f32 %v6457, %v6463
          %v6485 = vmul.f32 %v6458, %v6467
          %v6487 = vlaneseq
          %v6488 = vshrl.u32 %v6487, 7
          %v6489 = vsub.s32 0, %v6488
          %v6490 = vrot.slane %v6330, %v6489
          %v6491 = vlaneseq
          %v6492 = vshrl.u32 %v6491, 7
          %v6493 = vsub.s32 1, %v6492
          %v6494 = vrot.slane %v6330, %v6493
          %v6497 = vadd.f32 %v6470, %v6490
          %v6498 = vadd.f32 %v6471, %v6494
          %v6499 = vadd.f32 %v6472, %v6490
          %v6500 = vadd.f32 %v6473, %v6494
          %v6501 = vadd.f32 %v6474, %v6490
          %v6502 = vadd.f32 %v6475, %v6494
          %v6503 = vadd.f32 %v6476, %v6490
          %v6504 = vadd.f32 %v6477, %v6494
          %v6505 = vadd.f32 %v6478, %v6490
          %v6506 = vadd.f32 %v6479, %v6494
          %v6507 = vadd.f32 %v6480, %v6490
          %v6508 = vadd.f32 %v6481, %v6494
          %v6509 = vadd.f32 %v6482, %v6490
          %v6510 = vadd.f32 %v6483, %v6494
          %v6511 = vadd.f32 %v6484, %v6490
          %v6512 = vadd.f32 %v6485, %v6494
          %v6513 = vpack.c.bf16 %v6499, %v6497
          %v6514 = vpack.c.bf16 %v6500, %v6498
          %v6515 = vpack.c.bf16 %v6503, %v6501
          %v6516 = vpack.c.bf16 %v6504, %v6502
          %v6517 = vpack.c.bf16 %v6507, %v6505
          %v6518 = vpack.c.bf16 %v6508, %v6506
          %v6519 = vpack.c.bf16 %v6511, %v6509
          %v6520 = vpack.c.bf16 %v6512, %v6510
          %v6521 = vld [vmem:[#allocation23] sm:$0xff]
          %v6522 = vld [vmem:[#allocation23 + $0x8] sm:$0xff]
          %v6523 = vld [vmem:[#allocation23 + $0x10] sm:$0xff]
          %v6524 = vld [vmem:[#allocation23 + $0x18] sm:$0xff]
          %v6525 = vld [vmem:[#allocation23 + $0x20] sm:$0xff]
          %v6526 = vld [vmem:[#allocation23 + $0x28] sm:$0xff]
          %v6527 = vld [vmem:[#allocation23 + $0x30] sm:$0xff]
          %v6528 = vld [vmem:[#allocation23 + $0x38] sm:$0xff]
          %v6529 = vld [vmem:[#allocation23 + $0x40] sm:$0xff]
          %v6530 = vld [vmem:[#allocation23 + $0x48] sm:$0xff]
          %v6531 = vld [vmem:[#allocation23 + $0x50] sm:$0xff]
          %v6532 = vld [vmem:[#allocation23 + $0x58] sm:$0xff]
          %v6533 = vld [vmem:[#allocation23 + $0x60] sm:$0xff]
          %v6534 = vld [vmem:[#allocation23 + $0x68] sm:$0xff]
          %v6535 = vld [vmem:[#allocation23 + $0x70] sm:$0xff]
          %v6536 = vld [vmem:[#allocation23 + $0x78] sm:$0xff]
          %v6537 = vld [vmem:[#allocation23 + $0x80] sm:$0xff]
          %v6538 = vld [vmem:[#allocation23 + $0x88] sm:$0xff]
          %v6539 = vld [vmem:[#allocation23 + $0x90] sm:$0xff]
          %v6540 = vld [vmem:[#allocation23 + $0x98] sm:$0xff]
          %v6541 = vld [vmem:[#allocation23 + $0xa0] sm:$0xff]
          %v6542 = vld [vmem:[#allocation23 + $0xa8] sm:$0xff]
          %v6543 = vld [vmem:[#allocation23 + $0xb0] sm:$0xff]
          %v6544 = vld [vmem:[#allocation23 + $0xb8] sm:$0xff]
          %v6545 = vld [vmem:[#allocation23 + $0xc0] sm:$0xff]
          %v6546 = vld [vmem:[#allocation23 + $0xc8] sm:$0xff]
          %v6547 = vld [vmem:[#allocation23 + $0xd0] sm:$0xff]
          %v6548 = vld [vmem:[#allocation23 + $0xd8] sm:$0xff]
          %v6549 = vld [vmem:[#allocation23 + $0xe0] sm:$0xff]
          %v6550 = vld [vmem:[#allocation23 + $0xe8] sm:$0xff]
          %v6551 = vld [vmem:[#allocation23 + $0xf0] sm:$0xff]
          %v6552 = vld [vmem:[#allocation23 + $0xf8] sm:$0xff]
          %v6553 = vld [vmem:[#allocation23 + $0x100] sm:$0xff]
          %v6554 = vld [vmem:[#allocation23 + $0x108] sm:$0xff]
          %v6555 = vld [vmem:[#allocation23 + $0x110] sm:$0xff]
          %v6556 = vld [vmem:[#allocation23 + $0x118] sm:$0xff]
          %v6557 = vld [vmem:[#allocation23 + $0x120] sm:$0xff]
          %v6558 = vld [vmem:[#allocation23 + $0x128] sm:$0xff]
          %v6559 = vld [vmem:[#allocation23 + $0x130] sm:$0xff]
          %v6560 = vld [vmem:[#allocation23 + $0x138] sm:$0xff]
          %v6561 = vld [vmem:[#allocation23 + $0x140] sm:$0xff]
          %v6562 = vld [vmem:[#allocation23 + $0x148] sm:$0xff]
          %v6563 = vld [vmem:[#allocation23 + $0x150] sm:$0xff]
          %v6564 = vld [vmem:[#allocation23 + $0x158] sm:$0xff]
          %v6565 = vld [vmem:[#allocation23 + $0x160] sm:$0xff]
          %v6566 = vld [vmem:[#allocation23 + $0x168] sm:$0xff]
          %v6567 = vld [vmem:[#allocation23 + $0x170] sm:$0xff]
          %v6568 = vld [vmem:[#allocation23 + $0x178] sm:$0xff]
          %v6569 = vld [vmem:[#allocation23 + $0x180] sm:$0xff]
          %v6570 = vld [vmem:[#allocation23 + $0x188] sm:$0xff]
          %v6571 = vld [vmem:[#allocation23 + $0x190] sm:$0xff]
          %v6572 = vld [vmem:[#allocation23 + $0x198] sm:$0xff]
          %v6573 = vld [vmem:[#allocation23 + $0x1a0] sm:$0xff]
          %v6574 = vld [vmem:[#allocation23 + $0x1a8] sm:$0xff]
          %v6575 = vld [vmem:[#allocation23 + $0x1b0] sm:$0xff]
          %v6576 = vld [vmem:[#allocation23 + $0x1b8] sm:$0xff]
          %v6577 = vld [vmem:[#allocation23 + $0x1c0] sm:$0xff]
          %v6578 = vld [vmem:[#allocation23 + $0x1c8] sm:$0xff]
          %v6579 = vld [vmem:[#allocation23 + $0x1d0] sm:$0xff]
          %v6580 = vld [vmem:[#allocation23 + $0x1d8] sm:$0xff]
          %v6581 = vld [vmem:[#allocation23 + $0x1e0] sm:$0xff]
          %v6582 = vld [vmem:[#allocation23 + $0x1e8] sm:$0xff]
          %v6583 = vld [vmem:[#allocation23 + $0x1f0] sm:$0xff]
          %v6584 = vld [vmem:[#allocation23 + $0x1f8] sm:$0xff]
          %v6585 = vld [vmem:[#allocation24] sm:$0xf]
          %v6587 = vlaneseq
          %v6588 = vshrl.u32 %v6587, 7
          %v6589 = vsub.s32 0, %v6588
          %v6590 = vrot.slane %v6585, %v6589
          %v6591 = vlaneseq
          %v6592 = vshrl.u32 %v6591, 7
          %v6593 = vsub.s32 1, %v6592
          %v6594 = vrot.slane %v6585, %v6593
          %v6595 = vlaneseq
          %v6596 = vshrl.u32 %v6595, 7
          %v6597 = vsub.s32 2, %v6596
          %v6598 = vrot.slane %v6585, %v6597
          %v6599 = vlaneseq
          %v6600 = vshrl.u32 %v6599, 7
          %v6601 = vsub.s32 3, %v6600
          %v6602 = vrot.slane %v6585, %v6601
          %v6671 = vunpack.c.l.b16 %v6521
          %v6672 = vunpack.c.h.b16 %v6521
          %v6673 = vunpack.c.l.b16 %v6522
          %v6674 = vunpack.c.h.b16 %v6522
          %v6675 = vunpack.c.l.b16 %v6523
          %v6676 = vunpack.c.h.b16 %v6523
          %v6677 = vunpack.c.l.b16 %v6524
          %v6678 = vunpack.c.h.b16 %v6524
          %v6679 = vunpack.c.l.b16 %v6525
          %v6680 = vunpack.c.h.b16 %v6525
          %v6681 = vunpack.c.l.b16 %v6526
          %v6682 = vunpack.c.h.b16 %v6526
          %v6683 = vunpack.c.l.b16 %v6527
          %v6684 = vunpack.c.h.b16 %v6527
          %v6685 = vunpack.c.l.b16 %v6528
          %v6686 = vunpack.c.h.b16 %v6528
          %v6687 = vunpack.c.l.b16 %v6529
          %v6688 = vunpack.c.h.b16 %v6529
          %v6689 = vunpack.c.l.b16 %v6530
          %v6690 = vunpack.c.h.b16 %v6530
          %v6691 = vunpack.c.l.b16 %v6531
          %v6692 = vunpack.c.h.b16 %v6531
          %v6693 = vunpack.c.l.b16 %v6532
          %v6694 = vunpack.c.h.b16 %v6532
          %v6695 = vunpack.c.l.b16 %v6533
          %v6696 = vunpack.c.h.b16 %v6533
          %v6697 = vunpack.c.l.b16 %v6534
          %v6698 = vunpack.c.h.b16 %v6534
          %v6699 = vunpack.c.l.b16 %v6535
          %v6700 = vunpack.c.h.b16 %v6535
          %v6701 = vunpack.c.l.b16 %v6536
          %v6702 = vunpack.c.h.b16 %v6536
          %v6703 = vunpack.c.l.b16 %v6537
          %v6704 = vunpack.c.h.b16 %v6537
          %v6705 = vunpack.c.l.b16 %v6538
          %v6706 = vunpack.c.h.b16 %v6538
          %v6707 = vunpack.c.l.b16 %v6539
          %v6708 = vunpack.c.h.b16 %v6539
          %v6709 = vunpack.c.l.b16 %v6540
          %v6710 = vunpack.c.h.b16 %v6540
          %v6711 = vunpack.c.l.b16 %v6541
          %v6712 = vunpack.c.h.b16 %v6541
          %v6713 = vunpack.c.l.b16 %v6542
          %v6714 = vunpack.c.h.b16 %v6542
          %v6715 = vunpack.c.l.b16 %v6543
          %v6716 = vunpack.c.h.b16 %v6543
          %v6717 = vunpack.c.l.b16 %v6544
          %v6718 = vunpack.c.h.b16 %v6544
          %v6719 = vunpack.c.l.b16 %v6545
          %v6720 = vunpack.c.h.b16 %v6545
          %v6721 = vunpack.c.l.b16 %v6546
          %v6722 = vunpack.c.h.b16 %v6546
          %v6723 = vunpack.c.l.b16 %v6547
          %v6724 = vunpack.c.h.b16 %v6547
          %v6725 = vunpack.c.l.b16 %v6548
          %v6726 = vunpack.c.h.b16 %v6548
          %v6727 = vunpack.c.l.b16 %v6549
          %v6728 = vunpack.c.h.b16 %v6549
          %v6729 = vunpack.c.l.b16 %v6550
          %v6730 = vunpack.c.h.b16 %v6550
          %v6731 = vunpack.c.l.b16 %v6551
          %v6732 = vunpack.c.h.b16 %v6551
          %v6733 = vunpack.c.l.b16 %v6552
          %v6734 = vunpack.c.h.b16 %v6552
          %v6735 = vunpack.c.l.b16 %v6553
          %v6736 = vunpack.c.h.b16 %v6553
          %v6737 = vunpack.c.l.b16 %v6554
          %v6738 = vunpack.c.h.b16 %v6554
          %v6739 = vunpack.c.l.b16 %v6555
          %v6740 = vunpack.c.h.b16 %v6555
          %v6741 = vunpack.c.l.b16 %v6556
          %v6742 = vunpack.c.h.b16 %v6556
          %v6743 = vunpack.c.l.b16 %v6557
          %v6744 = vunpack.c.h.b16 %v6557
          %v6745 = vunpack.c.l.b16 %v6558
          %v6746 = vunpack.c.h.b16 %v6558
          %v6747 = vunpack.c.l.b16 %v6559
          %v6748 = vunpack.c.h.b16 %v6559
          %v6749 = vunpack.c.l.b16 %v6560
          %v6750 = vunpack.c.h.b16 %v6560
          %v6751 = vunpack.c.l.b16 %v6561
          %v6752 = vunpack.c.h.b16 %v6561
          %v6753 = vunpack.c.l.b16 %v6562
          %v6754 = vunpack.c.h.b16 %v6562
          %v6755 = vunpack.c.l.b16 %v6563
          %v6756 = vunpack.c.h.b16 %v6563
          %v6757 = vunpack.c.l.b16 %v6564
          %v6758 = vunpack.c.h.b16 %v6564
          %v6759 = vunpack.c.l.b16 %v6565
          %v6760 = vunpack.c.h.b16 %v6565
          %v6761 = vunpack.c.l.b16 %v6566
          %v6762 = vunpack.c.h.b16 %v6566
          %v6763 = vunpack.c.l.b16 %v6567
          %v6764 = vunpack.c.h.b16 %v6567
          %v6765 = vunpack.c.l.b16 %v6568
          %v6766 = vunpack.c.h.b16 %v6568
          %v6767 = vunpack.c.l.b16 %v6569
          %v6768 = vunpack.c.h.b16 %v6569
          %v6769 = vunpack.c.l.b16 %v6570
          %v6770 = vunpack.c.h.b16 %v6570
          %v6771 = vunpack.c.l.b16 %v6571
          %v6772 = vunpack.c.h.b16 %v6571
          %v6773 = vunpack.c.l.b16 %v6572
          %v6774 = vunpack.c.h.b16 %v6572
          %v6775 = vunpack.c.l.b16 %v6573
          %v6776 = vunpack.c.h.b16 %v6573
          %v6777 = vunpack.c.l.b16 %v6574
          %v6778 = vunpack.c.h.b16 %v6574
          %v6779 = vunpack.c.l.b16 %v6575
          %v6780 = vunpack.c.h.b16 %v6575
          %v6781 = vunpack.c.l.b16 %v6576
          %v6782 = vunpack.c.h.b16 %v6576
          %v6783 = vunpack.c.l.b16 %v6577
          %v6784 = vunpack.c.h.b16 %v6577
          %v6785 = vunpack.c.l.b16 %v6578
          %v6786 = vunpack.c.h.b16 %v6578
          %v6787 = vunpack.c.l.b16 %v6579
          %v6788 = vunpack.c.h.b16 %v6579
          %v6789 = vunpack.c.l.b16 %v6580
          %v6790 = vunpack.c.h.b16 %v6580
          %v6791 = vunpack.c.l.b16 %v6581
          %v6792 = vunpack.c.h.b16 %v6581
          %v6793 = vunpack.c.l.b16 %v6582
          %v6794 = vunpack.c.h.b16 %v6582
          %v6795 = vunpack.c.l.b16 %v6583
          %v6796 = vunpack.c.h.b16 %v6583
          %v6797 = vunpack.c.l.b16 %v6584
          %v6798 = vunpack.c.h.b16 %v6584
          %v6799 = vpack.c.b16 %v6675, %v6671
          %v6800 = vpack.c.b16 %v6676, %v6672
          %v6801 = vpack.c.b16 %v6677, %v6673
          %v6802 = vpack.c.b16 %v6678, %v6674
          %v6803 = vpack.c.b16 %v6683, %v6679
          %v6804 = vpack.c.b16 %v6684, %v6680
          %v6805 = vpack.c.b16 %v6685, %v6681
          %v6806 = vpack.c.b16 %v6686, %v6682
          %v6807 = vpack.c.b16 %v6691, %v6687
          %v6808 = vpack.c.b16 %v6692, %v6688
          %v6809 = vpack.c.b16 %v6693, %v6689
          %v6810 = vpack.c.b16 %v6694, %v6690
          %v6811 = vpack.c.b16 %v6699, %v6695
          %v6812 = vpack.c.b16 %v6700, %v6696
          %v6813 = vpack.c.b16 %v6701, %v6697
          %v6814 = vpack.c.b16 %v6702, %v6698
          %v6815 = vpack.c.b16 %v6707, %v6703
          %v6816 = vpack.c.b16 %v6708, %v6704
          %v6817 = vpack.c.b16 %v6709, %v6705
          %v6818 = vpack.c.b16 %v6710, %v6706
          %v6819 = vpack.c.b16 %v6715, %v6711
          %v6820 = vpack.c.b16 %v6716, %v6712
          %v6821 = vpack.c.b16 %v6717, %v6713
          %v6822 = vpack.c.b16 %v6718, %v6714
          %v6823 = vpack.c.b16 %v6723, %v6719
          %v6824 = vpack.c.b16 %v6724, %v6720
          %v6825 = vpack.c.b16 %v6725, %v6721
          %v6826 = vpack.c.b16 %v6726, %v6722
          %v6827 = vpack.c.b16 %v6731, %v6727
          %v6828 = vpack.c.b16 %v6732, %v6728
          %v6829 = vpack.c.b16 %v6733, %v6729
          %v6830 = vpack.c.b16 %v6734, %v6730
          %v6831 = vpack.c.b16 %v6739, %v6735
          %v6832 = vpack.c.b16 %v6740, %v6736
          %v6833 = vpack.c.b16 %v6741, %v6737
          %v6834 = vpack.c.b16 %v6742, %v6738
          %v6835 = vpack.c.b16 %v6747, %v6743
          %v6836 = vpack.c.b16 %v6748, %v6744
          %v6837 = vpack.c.b16 %v6749, %v6745
          %v6838 = vpack.c.b16 %v6750, %v6746
          %v6839 = vpack.c.b16 %v6755, %v6751
          %v6840 = vpack.c.b16 %v6756, %v6752
          %v6841 = vpack.c.b16 %v6757, %v6753
          %v6842 = vpack.c.b16 %v6758, %v6754
          %v6843 = vpack.c.b16 %v6763, %v6759
          %v6844 = vpack.c.b16 %v6764, %v6760
          %v6845 = vpack.c.b16 %v6765, %v6761
          %v6846 = vpack.c.b16 %v6766, %v6762
          %v6847 = vpack.c.b16 %v6771, %v6767
          %v6848 = vpack.c.b16 %v6772, %v6768
          %v6849 = vpack.c.b16 %v6773, %v6769
          %v6850 = vpack.c.b16 %v6774, %v6770
          %v6851 = vpack.c.b16 %v6779, %v6775
          %v6852 = vpack.c.b16 %v6780, %v6776
          %v6853 = vpack.c.b16 %v6781, %v6777
          %v6854 = vpack.c.b16 %v6782, %v6778
          %v6855 = vpack.c.b16 %v6787, %v6783
          %v6856 = vpack.c.b16 %v6788, %v6784
          %v6857 = vpack.c.b16 %v6789, %v6785
          %v6858 = vpack.c.b16 %v6790, %v6786
          %v6859 = vpack.c.b16 %v6795, %v6791
          %v6860 = vpack.c.b16 %v6796, %v6792
          %v6861 = vpack.c.b16 %v6797, %v6793
          %v6862 = vpack.c.b16 %v6798, %v6794
          %6927 = vmatprep.subr.bf16.mxu0 %v6828
          %6928 = vmatpush1.bf16.msra.mxu0 %v6827
          %6929 = vmatprep.subr.bf16.mxu0 %v6824
          %6930 = vmatpush1.bf16.msra.mxu0 %v6823
          %6931 = vmatprep.subr.bf16.mxu0 %v6820
          %6932 = vmatpush1.bf16.msra.mxu0 %v6819
          %6933 = vmatprep.subr.bf16.mxu0 %v6816
          %6934 = vmatpush1.bf16.msra.mxu0 %v6815
          %6935 = vmatprep.subr.bf16.mxu0 %v6812
          %6936 = vmatpush1.bf16.msra.mxu0 %v6811
          %6937 = vmatprep.subr.bf16.mxu0 %v6808
          %6938 = vmatpush1.bf16.msra.mxu0 %v6807
          %6939 = vmatprep.subr.bf16.mxu0 %v6804
          %6940 = vmatpush1.bf16.msra.mxu0 %v6803
          %6941 = vmatprep.subr.bf16.mxu0 %v6800
          %6942 = vmatpush1.bf16.msra.mxu0 %v6799
          %6943 = vmatprep.subr.bf16.mxu0 %v6860
          %6944 = vmatpush2.bf16.msra.mxu0 %v6859
          %6945 = vmatprep.subr.bf16.mxu0 %v6856
          %6946 = vmatpush2.bf16.msra.mxu0 %v6855
          %6947 = vmatprep.subr.bf16.mxu0 %v6852
          %6948 = vmatpush2.bf16.msra.mxu0 %v6851
          %6949 = vmatprep.subr.bf16.mxu0 %v6848
          %6950 = vmatpush2.bf16.msra.mxu0 %v6847
          %6951 = vmatprep.subr.bf16.mxu0 %v6844
          %6952 = vmatpush2.bf16.msra.mxu0 %v6843
          %6953 = vmatprep.subr.bf16.mxu0 %v6840
          %6954 = vmatpush2.bf16.msra.mxu0 %v6839
          %6955 = vmatprep.subr.bf16.mxu0 %v6836
          %6956 = vmatpush2.bf16.msra.mxu0 %v6835
          %6957 = vmatprep.subr.bf16.mxu0 %v6832
          %6958 = vmatpush2.bf16.msra.mxu0 %v6831
          %6959 = vmatprep.mubr.bf16.mxu0 %v6514
          %6960 = vmatmul.mubr.bf16.gmra.mxu0 %v6513
          %v6961 = vpop.f32.mrf.mxu0
          %v6962 = vadd.f32 %v6590, %v6961
          %v6963 = vpop.f32.mrf.mxu0
          %v6964 = vadd.f32 %v6594, %v6963
          %v6965 = vpop.f32.mrf.mxu0
          %v6966 = vadd.f32 %v6590, %v6965
          %v6967 = vpop.f32.mrf.mxu0
          %v6968 = vadd.f32 %v6594, %v6967
          %6969 = vmatprep.mubr.bf16.mxu0 %v6516
          %6970 = vmatmul.mubr.bf16.gmra.mxu0 %v6515
          %v6971 = vpop.f32.mrf.mxu0
          %v6972 = vadd.f32 %v6590, %v6971
          %v6973 = vpop.f32.mrf.mxu0
          %v6974 = vadd.f32 %v6594, %v6973
          %v6975 = vpop.f32.mrf.mxu0
          %v6976 = vadd.f32 %v6590, %v6975
          %v6977 = vpop.f32.mrf.mxu0
          %v6978 = vadd.f32 %v6594, %v6977
          %6979 = vmatprep.mubr.bf16.mxu0 %v6518
          %6980 = vmatmul.mubr.bf16.gmra.mxu0 %v6517
          %v6981 = vpop.f32.mrf.mxu0
          %v6982 = vadd.f32 %v6590, %v6981
          %v6983 = vpop.f32.mrf.mxu0
          %v6984 = vadd.f32 %v6594, %v6983
          %v6985 = vpop.f32.mrf.mxu0
          %v6986 = vadd.f32 %v6590, %v6985
          %v6987 = vpop.f32.mrf.mxu0
          %v6988 = vadd.f32 %v6594, %v6987
          %6989 = vmatprep.mubr.bf16.mxu0 %v6520
          %6990 = vmatmul.mubr.bf16.gmra.mxu0 %v6519
          %v6991 = vpop.f32.mrf.mxu0
          %v6992 = vadd.f32 %v6590, %v6991
          %v6993 = vpop.f32.mrf.mxu0
          %v6994 = vadd.f32 %v6594, %v6993
          %v6995 = vpop.f32.mrf.mxu0
          %v6996 = vadd.f32 %v6590, %v6995
          %v6997 = vpop.f32.mrf.mxu0
          %v6998 = vadd.f32 %v6594, %v6997
          %6999 = vdwg.mxu0
          %7000 = vmatprep.subr.bf16.mxu0 %v6830
          %7001 = vmatpush1.bf16.msra.mxu0 %v6829
          %7002 = vmatprep.subr.bf16.mxu0 %v6826
          %7003 = vmatpush1.bf16.msra.mxu0 %v6825
          %7004 = vmatprep.subr.bf16.mxu0 %v6822
          %7005 = vmatpush1.bf16.msra.mxu0 %v6821
          %7006 = vmatprep.subr.bf16.mxu0 %v6818
          %7007 = vmatpush1.bf16.msra.mxu0 %v6817
          %7008 = vmatprep.subr.bf16.mxu0 %v6814
          %7009 = vmatpush1.bf16.msra.mxu0 %v6813
          %7010 = vmatprep.subr.bf16.mxu0 %v6810
          %7011 = vmatpush1.bf16.msra.mxu0 %v6809
          %7012 = vmatprep.subr.bf16.mxu0 %v6806
          %7013 = vmatpush1.bf16.msra.mxu0 %v6805
          %7014 = vmatprep.subr.bf16.mxu0 %v6802
          %7015 = vmatpush1.bf16.msra.mxu0 %v6801
          %7016 = vmatprep.subr.bf16.mxu0 %v6862
          %7017 = vmatpush2.bf16.msra.mxu0 %v6861
          %7018 = vmatprep.subr.bf16.mxu0 %v6858
          %7019 = vmatpush2.bf16.msra.mxu0 %v6857
          %7020 = vmatprep.subr.bf16.mxu0 %v6854
          %7021 = vmatpush2.bf16.msra.mxu0 %v6853
          %7022 = vmatprep.subr.bf16.mxu0 %v6850
          %7023 = vmatpush2.bf16.msra.mxu0 %v6849
          %7024 = vmatprep.subr.bf16.mxu0 %v6846
          %7025 = vmatpush2.bf16.msra.mxu0 %v6845
          %7026 = vmatprep.subr.bf16.mxu0 %v6842
          %7027 = vmatpush2.bf16.msra.mxu0 %v6841
          %7028 = vmatprep.subr.bf16.mxu0 %v6838
          %7029 = vmatpush2.bf16.msra.mxu0 %v6837
          %7030 = vmatprep.subr.bf16.mxu0 %v6834
          %7031 = vmatpush2.bf16.msra.mxu0 %v6833
          %7032 = vmatprep.mubr.bf16.mxu0 %v6514
          %7033 = vmatmul.mubr.bf16.gmra.mxu0 %v6513
          %v7034 = vpop.f32.mrf.mxu0
          %v7035 = vadd.f32 %v6598, %v7034
          %v7036 = vpop.f32.mrf.mxu0
          %v7037 = vadd.f32 %v6602, %v7036
          %v7038 = vpop.f32.mrf.mxu0
          %v7039 = vadd.f32 %v6598, %v7038
          %v7040 = vpop.f32.mrf.mxu0
          %v7041 = vadd.f32 %v6602, %v7040
          %7042 = vmatprep.mubr.bf16.mxu0 %v6516
          %7043 = vmatmul.mubr.bf16.gmra.mxu0 %v6515
          %v7044 = vpop.f32.mrf.mxu0
          %v7045 = vadd.f32 %v6598, %v7044
          %v7046 = vpop.f32.mrf.mxu0
          %v7047 = vadd.f32 %v6602, %v7046
          %v7048 = vpop.f32.mrf.mxu0
          %v7049 = vadd.f32 %v6598, %v7048
          %v7050 = vpop.f32.mrf.mxu0
          %v7051 = vadd.f32 %v6602, %v7050
          %7052 = vmatprep.mubr.bf16.mxu0 %v6518
          %7053 = vmatmul.mubr.bf16.gmra.mxu0 %v6517
          %v7054 = vpop.f32.mrf.mxu0
          %v7055 = vadd.f32 %v6598, %v7054
          %v7056 = vpop.f32.mrf.mxu0
          %v7057 = vadd.f32 %v6602, %v7056
          %v7058 = vpop.f32.mrf.mxu0
          %v7059 = vadd.f32 %v6598, %v7058
          %v7060 = vpop.f32.mrf.mxu0
          %v7061 = vadd.f32 %v6602, %v7060
          %7062 = vmatprep.mubr.bf16.mxu0 %v6520
          %7063 = vmatmul.mubr.bf16.gmra.mxu0 %v6519
          %v7064 = vpop.f32.mrf.mxu0
          %v7065 = vadd.f32 %v6598, %v7064
          %v7066 = vpop.f32.mrf.mxu0
          %v7067 = vadd.f32 %v6602, %v7066
          %v7068 = vpop.f32.mrf.mxu0
          %v7069 = vadd.f32 %v6598, %v7068
          %v7070 = vpop.f32.mrf.mxu0
          %v7071 = vadd.f32 %v6602, %v7070
          %7072 = vdwg.mxu0
          %7073 = vst [vmem:[%s994] sm:$0xff] %v6962
          %7074 = vst [vmem:[%s994 + $0x8] sm:$0xff] %v6964
          %7075 = vst [vmem:[%s994 + $0x10] sm:$0xff] %v7035
          %7076 = vst [vmem:[%s994 + $0x18] sm:$0xff] %v7037
          %7077 = vst [vmem:[%s994 + $0x20] sm:$0xff] %v6966
          %7078 = vst [vmem:[%s994 + $0x28] sm:$0xff] %v6968
          %7079 = vst [vmem:[%s994 + $0x30] sm:$0xff] %v7039
          %7080 = vst [vmem:[%s994 + $0x38] sm:$0xff] %v7041
          %7081 = vst [vmem:[%s994 + $0x40] sm:$0xff] %v6972
          %7082 = vst [vmem:[%s994 + $0x48] sm:$0xff] %v6974
          %7083 = vst [vmem:[%s994 + $0x50] sm:$0xff] %v7045
          %7084 = vst [vmem:[%s994 + $0x58] sm:$0xff] %v7047
          %7085 = vst [vmem:[%s994 + $0x60] sm:$0xff] %v6976
          %7086 = vst [vmem:[%s994 + $0x68] sm:$0xff] %v6978
          %7087 = vst [vmem:[%s994 + $0x70] sm:$0xff] %v7049
          %7088 = vst [vmem:[%s994 + $0x78] sm:$0xff] %v7051
          %7089 = vst [vmem:[%s994 + $0x80] sm:$0xff] %v6982
          %7090 = vst [vmem:[%s994 + $0x88] sm:$0xff] %v6984
          %7091 = vst [vmem:[%s994 + $0x90] sm:$0xff] %v7055
          %7092 = vst [vmem:[%s994 + $0x98] sm:$0xff] %v7057
          %7093 = vst [vmem:[%s994 + $0xa0] sm:$0xff] %v6986
          %7094 = vst [vmem:[%s994 + $0xa8] sm:$0xff] %v6988
          %7095 = vst [vmem:[%s994 + $0xb0] sm:$0xff] %v7059
          %7096 = vst [vmem:[%s994 + $0xb8] sm:$0xff] %v7061
          %7097 = vst [vmem:[%s994 + $0xc0] sm:$0xff] %v6992
          %7098 = vst [vmem:[%s994 + $0xc8] sm:$0xff] %v6994
          %7099 = vst [vmem:[%s994 + $0xd0] sm:$0xff] %v7065
          %7100 = vst [vmem:[%s994 + $0xd8] sm:$0xff] %v7067
          %7101 = vst [vmem:[%s994 + $0xe0] sm:$0xff] %v6996
          %7102 = vst [vmem:[%s994 + $0xe8] sm:$0xff] %v6998
          %7103 = vst [vmem:[%s994 + $0xf0] sm:$0xff] %v7069
          %7104 = vst [vmem:[%s994 + $0xf8] sm:$0xff] %v7071
        $region152: #{gpt_forward.1} parent=87 // pred_fallthru
          _
        %s7105 = sand.u32 %s488, 1
        %s7106 = scalar_lea.sflag [#allocation5], %s7105
        %s7107 = sand.u32 %s488, 1
        %s7108 = smul.addr %s7107, 256
        %s7109 = scalar_lea.vmem [#allocation26], %s7108
        // Predicated region
        $region153: #{gpt_forward.1} parent=87 // pred_check
          %p7110 = pneg %p498
        $region154: #{gpt_forward.1} parent=87 // pred_check_branch
          %7112 = sbr.rel (%p7110) target = $region156
        $region155: #{gpt_forward.1} parent=87 // pred_region
          %s7114 = ssub.s32 4096, 4096
          %7115 = vsyncadd %s7106, %s7114
          %s7116 = smul.addr %s55, 32
          %s7117 = smul.addr %s7116, 128
          %s7118 = scalar_lea.hbm %s17, %s7117
          %s7119 = sshll.u32 %s7109, 4
          %s7120 = int_to_ptr.vmem [resolvable:$true] %s7119
          %7125 = dma.vmem_to_hbm [thread:$0]  %s7120, 4096, %s7118, %s7106, 512, 512, 32
        $region156: #{gpt_forward.1} parent=87 // pred_fallthru
          _
      $region88: #{gpt_forward.1} parent=5 // pred_fallthru
        _
      %p7126 = scmp.le.s32.totalorder 2, %s46
      // Predicated region
      $region157: #{gpt_forward.1} parent=5 // pred_check
        %p7127 = pneg %p7126
      $region158: #{gpt_forward.1} parent=5 // pred_check_branch
        %7129 = sbr.rel (%p7127) target = $region160
      $region159: #{gpt_forward.1} parent=5 // pred_region
        %s7130 = ssub.s32 %s46, 2
        // Predicated region
        $region161: #{gpt_forward.1} parent=159 // pred_check
          %p7131 = pneg %p504
        $region162: #{gpt_forward.1} parent=159 // pred_check_branch
          %7133 = sbr.rel (%p7131) target = $region164
        $region163: #{gpt_forward.1} parent=159 // pred_region
          %s7134 = sand.u32 %s489, 1
          %s7135 = scalar_lea.sflag [#allocation5], %s7134
          %s7136 = sand.u32 %s489, 1
          %s7137 = smul.addr %s7136, 256
          %s7138 = scalar_lea.vmem [#allocation26], %s7137
          %7139 = dma.done %s7135, 4096
        $region164: #{gpt_forward.1} parent=159 // pred_fallthru
          _
      $region160: #{gpt_forward.1} parent=5 // pred_fallthru
        _
    $region6: #{gpt_forward.1} parent=1 // loop_footer
      %s50 = sadd.s32 1, %s46
    $region7: #{gpt_forward.1} parent=1 // loop_footer_branch
      %45 = sbr.rel target = $region3
    $region8: #{gpt_forward.1} parent=1 // loop_exit
      _
    %7140 = vsyncpa [#allocation4], 1
    %s7141 = scalar_lea.sflag [#allocation4], 1
    %7142 = vsyncpa %s7141, 1
    %7143 = vsyncpa [#allocation7], 1
    %s7144 = scalar_lea.sflag [#allocation7], 1
    %7145 = vsyncpa %s7144, 1
    %7146 = vsyncpa [#allocation10], 1
    %s7147 = scalar_lea.sflag [#allocation10], 1
    %7148 = vsyncpa %s7147, 1
    %7149 = vsyncpa [#allocation13], 1
    %s7150 = scalar_lea.sflag [#allocation13], 1
    %7151 = vsyncpa %s7150, 1
    %7152 = vsyncpa [#allocation16], 1
    %s7153 = scalar_lea.sflag [#allocation16], 1
    %7154 = vsyncpa %s7153, 1
    %7155 = vsyncpa [#allocation19], 1
    %s7156 = scalar_lea.sflag [#allocation19], 1
    %7157 = vsyncpa %s7156, 1
    %7158 = vsyncpa [#allocation22], 1
    %7159 = vsyncpa [#allocation25], 1
    %7160 = vsyncpa [#allocation5], 1
    %s7161 = scalar_lea.sflag [#allocation5], 1
    %7162 = vsyncpa %s7161, 1

</llo_original>
